<compile_context>
chip_gen: v7x
topology: tpu7x:2x2x1
jax: 0.10.0
libtpu: 0.0.40
codegen_flags: <defaults>
</compile_context>

<pallas_src>
import functools

import numpy as np
import jax
import jax.numpy as jnp
from jax.experimental import pallas as pl
from jax.experimental.pallas import tpu as pltpu

EPS = 1e-5  # PyTorch BatchNorm2d default


# ----------------------------------------------------------------------------- kernel
def make_fused_kernel(dims):
    """dims: per-layer tuple (rows_out, rows_pad, cout*w_out) -- all static Python ints."""
    n_layers = len(dims)

    def kernel(*refs):
        x_ref = refs[0]
        u_refs = refs[1:1 + n_layers]                     # u[0] in VMEM; u[1:] are raw HBM refs
        lay_refs = refs[1 + n_layers:1 + 5 * n_layers]    # (rcat, bgb, bsum, bcast) per layer
        out_ref = refs[1 + 5 * n_layers]
        scratch = refs[2 + 5 * n_layers:]
        u_vmem = scratch[:n_layers - 1]                   # VMEM buffers for layer>=2 weights
        sem = scratch[n_layers - 1]                       # DMA semaphores

        # Kick off HBM->VMEM prefetch of the layer>=2 banded weight matrices right away; they
        # complete behind the earlier layers' compute and are waited on only just before use.
        copies = []
        for i in range(n_layers - 1):
            cp = pltpu.make_async_copy(u_refs[1 + i], u_vmem[i], sem.at[i])
            cp.start()
            copies.append(cp)

        x = x_ref[...]                                    # f32 activations, layout [(n,h),(c,w)]
        for l in range(n_layers):
            rows_out, rows_pad, _ = dims[l]
            r_ref, bgb_ref, bsum_ref, bcast_ref = lay_refs[4 * l:4 * l + 4]
            if l == 0:
                u = u_refs[0]
            else:
                copies[l - 1].wait()
                u = u_vmem[l - 1]

            # ---- conv(3x3, stride 2, pad 1): one stacked bf16 row-gather matmul + 3 banded
            #      bf16 weight matmuls, all with f32 accumulation ----
            xb = x.astype(jnp.bfloat16)
            t = jnp.dot(r_ref[...], xb, preferred_element_type=jnp.float32)  # [3*rows_pad, K]
            acc = jnp.dot(t[0:rows_out].astype(jnp.bfloat16), u[0],
                          preferred_element_type=jnp.float32)
            for kh in (1, 2):
                tk = t[kh * rows_pad: kh * rows_pad + rows_out].astype(jnp.bfloat16)
                acc = acc + jnp.dot(tk, u[kh], preferred_element_type=jnp.float32)

            # ---- conv bias + ReLU + training-mode BatchNorm (centered two-pass statistics,
            #      per-channel pooling/broadcast via factored 0/1 matrices) ----
            bgb = bgb_ref[...]                            # [3, Cout*Wo] = bias / gamma / beta
            y = jnp.maximum(acc + bgb[0:1, :], 0.0)
            csum = jnp.sum(y, axis=0, keepdims=True)                                    # [1,CW]
            mean_c = jnp.dot(csum, bsum_ref[...], preferred_element_type=jnp.float32)   # [1,C]
            mean = jnp.dot(mean_c, bcast_ref[...], preferred_element_type=jnp.float32)  # [1,CW]
            d = y - mean
            vsum = jnp.sum(d * d, axis=0, keepdims=True)
            var_c = jnp.dot(vsum, bsum_ref[...], preferred_element_type=jnp.float32)
            var = jnp.dot(var_c, bcast_ref[...], preferred_element_type=jnp.float32)
            inv = jax.lax.rsqrt(var + EPS)                # biased variance (PyTorch BN norm.)
            x = d * (inv * bgb[1:2, :]) + bgb[2:3, :]

        out_ref[...] = x

    return kernel


# ----------------------------------------------------------------------- constant setup
def _layer_constants(w, b, gamma, beta, n, h_in, w_in):
    """Weights-stationary matrices consumed by the kernel for one conv+BN layer."""
    cout, cin, _, _ = w.shape
    h_out = (h_in - 1) // 2 + 1
    w_out = (w_in - 1) // 2 + 1
    rows_out = n * h_out
    rows_pad = -(-rows_out // 8) * 8                      # per-kh segment padded to 8 sublanes

    # Stacked row-selection RCAT [3*rows_pad, N*Hin]: segment kh, row (nb, ho) selects input row
    # (nb, 2*ho + kh - 1); out-of-range and pad rows are zero.
    ho = np.arange(h_out)[:, None]
    hi = np.arange(h_in)[None, :]
    eye_n = np.eye(n, dtype=np.float32)
    segs = []
    for kh in range(3):
        sel = (hi == 2 * ho + kh - 1).astype(np.float32)                      # [Ho, Hin]
        rk = np.einsum('nm,ab->namb', eye_n, sel).reshape(rows_out, n * h_in)
        segs.append(np.concatenate(
            [rk, np.zeros((rows_pad - rows_out, n * h_in), np.float32)], axis=0))
    rcat = np.concatenate(segs, axis=0)

    # Banded weight matrix U[kh, (ci,wi), (co,wo)] = sum_kw W[co,ci,kh,kw] * [wi == 2*wo+kw-1];
    # the stride-2 / pad-1 column gather and kw-sum live in the band structure.
    wo = np.arange(w_out)[None, None, :]
    wi = np.arange(w_in)[None, :, None]
    kw = np.arange(3)[:, None, None]
    band = (wi == 2 * wo + kw - 1).astype(np.float32)                         # [3, Win, Wo]
    u = jnp.einsum('oihk,kab->hiaob', w.astype(jnp.float32), jnp.asarray(band))
    u = u.reshape(3, cin * w_in, cout * w_out).astype(jnp.bfloat16)           # bf16 MXU feed

    # Packed per-column vectors: conv bias / BN gamma / BN beta (each repeated W_out times).
    rep = lambda v: jnp.repeat(v.astype(jnp.float32), w_out)
    bgb = jnp.stack([rep(b), rep(gamma), rep(beta)])                          # [3, Cout*Wo]

    # Factored BN pooling (replaces the dense block-diagonal averaging matrix):
    #   BSUM  [Cout*Wo, Cout] : sums a channel's Wo columns and divides by the element count
    #   BCAST [Cout, Cout*Wo] : broadcasts a per-channel value back to its Wo columns
    cnt = float(n * h_out * w_out)
    bsum = np.kron(np.eye(cout, dtype=np.float32), np.ones((w_out, 1), np.float32)) / cnt
    bcast = np.kron(np.eye(cout, dtype=np.float32), np.ones((1, w_out), np.float32))

    consts = dict(rcat=jnp.asarray(rcat, jnp.bfloat16), u=u, bgb=bgb,
                  bsum=jnp.asarray(bsum), bcast=jnp.asarray(bcast))
    return consts, h_out, w_out


def prepare_constants(params, n, h, w):
    """One-time weights-stationary preprocessing, hoisted out of the per-forward jitted path."""
    layers = []
    h_cur, w_cur = h, w
    for (wt, b, gm, bt) in params:
        consts, h_cur, w_cur = _layer_constants(wt, b, gm, bt, n, h_cur, w_cur)
        layers.append(consts)
    return layers


# ----------------------------------------------------------------------------- wrapper
@jax.jit
def conv_input_model(img_nchw, layer_consts):
    """Forward pass of ConvInputModel.  img_nchw: [N, 3, H, W] -> [N, 24, H/16, W/16]."""
    n, c, h, w = img_nchw.shape
    n_layers = len(layer_consts)

    # NCHW -> [(n,h), (c,w)] with the channel*width axis on lanes (lane-dense activations).
    x0 = jnp.transpose(img_nchw, (0, 2, 1, 3)).reshape(n * h, c * w).astype(jnp.float32)

    # Static per-layer dims for the kernel closure.
    dims = []
    h_cur, w_cur = h, w
    cout = None
    for lc in layer_consts:
        h_cur = (h_cur - 1) // 2 + 1
        w_cur = (w_cur - 1) // 2 + 1
        cout = lc['bcast'].shape[0]
        dims.append((n * h_cur, lc['rcat'].shape[0] // 3, cout * w_cur))

    inputs = [x0] + [lc['u'] for lc in layer_consts]
    for lc in layer_consts:
        inputs += [lc['rcat'], lc['bgb'], lc['bsum'], lc['bcast']]

    vmem = pl.BlockSpec(memory_space=pltpu.MemorySpace.VMEM)   # whole array resident in VMEM
    hbm = pl.BlockSpec(memory_space=pl.ANY)                    # raw HBM ref, DMA'd manually
    in_specs = [vmem, vmem] + [hbm] * (n_layers - 1) + [vmem] * (4 * n_layers)
    scratch = [pltpu.VMEM(lc['u'].shape, jnp.bfloat16) for lc in layer_consts[1:]]
    scratch += [pltpu.SemaphoreType.DMA((n_layers - 1,))]

    out2d = pl.pallas_call(
        make_fused_kernel(tuple(dims)),
        out_shape=jax.ShapeDtypeStruct((n * h_cur, cout * w_cur), jnp.float32),
        in_specs=in_specs,
        out_specs=vmem,
        scratch_shapes=scratch,
    )(*inputs)

    # [(n,h4), (c,w4)] -> NCHW
    return out2d.reshape(n, h_cur, cout, w_cur).transpose(0, 2, 1, 3)


# ----------------------------------------------------------------------------- helpers
def init_params(key):
    """Deterministic synthetic parameters matching ConvInputModel.__init__ shapes."""
    layer_io = [(24, 3), (24, 24), (24, 24), (24, 24)]     # (Cout, Cin) per conv
    params = []
    for cout, cin in layer_io:
        key, kw_, kb_ = jax.random.split(key, 3)
        w = jax.random.normal(kw_, (cout, cin, 3, 3), jnp.float32) * 0.1
        b = jax.random.normal(kb_, (cout,), jnp.float32) * 0.01
        gamma = jnp.ones((cout,), jnp.float32)              # PyTorch BN init
        beta = jnp.zeros((cout,), jnp.float32)               # PyTorch BN init
        params.append((w, b, gamma, beta))
    return params


def reference_forward(img, params):
    """Pure-JAX (XLA, f32) reference: conv -> +bias -> ReLU -> training-mode BatchNorm, x4."""
    x = img
    for (w, b, gm, bt) in params:
        x = jax.lax.conv_general_dilated(
            x, w, window_strides=(2, 2), padding=((1, 1), (1, 1)),
            dimension_numbers=('NCHW', 'OIHW', 'NCHW'))
        x = x + b[None, :, None, None]
        x = jnp.maximum(x, 0.0)
        mean = jnp.mean(x, axis=(0, 2, 3), keepdims=True)
        var = jnp.mean(jnp.square(x - mean), axis=(0, 2, 3), keepdims=True)
        x = (x - mean) * jax.lax.rsqrt(var + EPS) * gm[None, :, None, None] \
            + bt[None, :, None, None]
    return x


# -------------------------------------------------------------------------------- main
if __name__ == "__main__":
    key = jax.random.PRNGKey(0)
    k_params, k_img = jax.random.split(key)
    params = init_params(k_params)

    # Batch=8 (so the final BatchNorm sees 32 samples/channel and its batch statistics are
    # well conditioned for the bf16-vs-f32 comparison), channels=3, spatial 32 -> 16 -> 8 -> 4 -> 2.
    img = jax.random.normal(k_img, (8, 3, 32, 32), jnp.float32)

    # Constant construction hoisted out of the per-forward path (inference-style).
    consts = prepare_constants(params, img.shape[0], img.shape[2], img.shape[3])

    out = conv_input_model(img, consts)
    out = jax.block_until_ready(out)

    assert out.shape == (8, 24, 2, 2), out.shape
    assert out.dtype == jnp.float32
    assert bool(jnp.all(jnp.isfinite(out)))

    ref = reference_forward(img, params)
    max_err = float(jnp.max(jnp.abs(out - ref)))
    # Error budget for the bf16-fed MXU (perf-review item): ~1e-3 relative rounding per bf16
    # operand, compounded through four BatchNorm re-normalizations with f32 accumulation
    # everywhere and exact 0/1 gather/pooling factors -> expected max |err| ~ 2e-2 on the O(1)
    # normalized outputs; assert with headroom.
    assert max_err < 6e-2, f"max abs error vs f32 reference: {max_err}"

    print("KERNEL_OK")
</pallas_src>

<mosaic_0001>
module attributes {stable_mosaic.version = 11 : i64} {
  func.func @kernel(%arg0: memref<256x96xf32, #tpu.memory_space<vmem>>, %arg1: memref<3x96x384xbf16, #tpu.memory_space<vmem>>, %arg2: memref<3x384x192xbf16, #tpu.memory_space<any>>, %arg3: memref<3x192x96xbf16, #tpu.memory_space<any>>, %arg4: memref<3x96x48xbf16, #tpu.memory_space<any>>, %arg5: memref<384x256xbf16, #tpu.memory_space<vmem>>, %arg6: memref<3x384xf32, #tpu.memory_space<vmem>>, %arg7: memref<384x24xf32, #tpu.memory_space<vmem>>, %arg8: memref<24x384xf32, #tpu.memory_space<vmem>>, %arg9: memref<192x128xbf16, #tpu.memory_space<vmem>>, %arg10: memref<3x192xf32, #tpu.memory_space<vmem>>, %arg11: memref<192x24xf32, #tpu.memory_space<vmem>>, %arg12: memref<24x192xf32, #tpu.memory_space<vmem>>, %arg13: memref<96x64xbf16, #tpu.memory_space<vmem>>, %arg14: memref<3x96xf32, #tpu.memory_space<vmem>>, %arg15: memref<96x24xf32, #tpu.memory_space<vmem>>, %arg16: memref<24x96xf32, #tpu.memory_space<vmem>>, %arg17: memref<48x32xbf16, #tpu.memory_space<vmem>>, %arg18: memref<3x48xf32, #tpu.memory_space<vmem>>, %arg19: memref<48x24xf32, #tpu.memory_space<vmem>>, %arg20: memref<24x48xf32, #tpu.memory_space<vmem>>, %arg21: memref<16x48xf32, #tpu.memory_space<vmem>>, %arg22: memref<3x384x192xbf16, #tpu.memory_space<vmem>>, %arg23: memref<3x192x96xbf16, #tpu.memory_space<vmem>>, %arg24: memref<3x96x48xbf16, #tpu.memory_space<vmem>>, %arg25: memref<3x!tpu.dma_semaphore, #tpu.memory_space<semaphore_mem>>) attributes {dimension_semantics = [], scalar_prefetch = 0 : i64, scratch_operands = 4 : i64, tpu.core_type = #tpu.core_type<tc>} {
    %c0_i32 = arith.constant 0 : i32
    %0 = tpu.memref_slice %arg25[%c0_i32] : memref<3x!tpu.dma_semaphore, #tpu.memory_space<semaphore_mem>> -> memref<1x!tpu.dma_semaphore, #tpu.memory_space<semaphore_mem>>
    %1 = tpu.memref_squeeze %0 : memref<1x!tpu.dma_semaphore, #tpu.memory_space<semaphore_mem>> -> memref<!tpu.dma_semaphore, #tpu.memory_space<semaphore_mem>>
    tpu.enqueue_dma source(%arg2 : memref<3x384x192xbf16, #tpu.memory_space<any>>) target(%arg22 : memref<3x384x192xbf16, #tpu.memory_space<vmem>>) target_semaphore(%1 : memref<!tpu.dma_semaphore, #tpu.memory_space<semaphore_mem>>)
    %c1_i32 = arith.constant 1 : i32
    %2 = tpu.memref_slice %arg25[%c1_i32] : memref<3x!tpu.dma_semaphore, #tpu.memory_space<semaphore_mem>> -> memref<1x!tpu.dma_semaphore, #tpu.memory_space<semaphore_mem>>
    %3 = tpu.memref_squeeze %2 : memref<1x!tpu.dma_semaphore, #tpu.memory_space<semaphore_mem>> -> memref<!tpu.dma_semaphore, #tpu.memory_space<semaphore_mem>>
    tpu.enqueue_dma source(%arg3 : memref<3x192x96xbf16, #tpu.memory_space<any>>) target(%arg23 : memref<3x192x96xbf16, #tpu.memory_space<vmem>>) target_semaphore(%3 : memref<!tpu.dma_semaphore, #tpu.memory_space<semaphore_mem>>)
    %c2_i32 = arith.constant 2 : i32
    %4 = tpu.memref_slice %arg25[%c2_i32] : memref<3x!tpu.dma_semaphore, #tpu.memory_space<semaphore_mem>> -> memref<1x!tpu.dma_semaphore, #tpu.memory_space<semaphore_mem>>
    %5 = tpu.memref_squeeze %4 : memref<1x!tpu.dma_semaphore, #tpu.memory_space<semaphore_mem>> -> memref<!tpu.dma_semaphore, #tpu.memory_space<semaphore_mem>>
    tpu.enqueue_dma source(%arg4 : memref<3x96x48xbf16, #tpu.memory_space<any>>) target(%arg24 : memref<3x96x48xbf16, #tpu.memory_space<vmem>>) target_semaphore(%5 : memref<!tpu.dma_semaphore, #tpu.memory_space<semaphore_mem>>)
    %c0 = arith.constant 0 : index
    %c0_0 = arith.constant 0 : index
    %6 = vector.load %arg0[%c0, %c0_0] : memref<256x96xf32, #tpu.memory_space<vmem>>, vector<256x96xf32>
    %7 = arith.truncf %6 : vector<256x96xf32> to vector<256x96xbf16>
    %c0_1 = arith.constant 0 : index
    %c0_2 = arith.constant 0 : index
    %8 = vector.load %arg5[%c0_1, %c0_2] : memref<384x256xbf16, #tpu.memory_space<vmem>>, vector<384x256xbf16>
    %cst = arith.constant dense<0.000000e+00> : vector<384x96xf32>
    %9 = tpu.matmul %8, %7, %cst {dimension_numbers = #tpu.dot_dimension_numbers<[1], [0], [0], [1], [0, 0, 1, 1], [], []>} : vector<384x256xbf16>, vector<256x96xbf16>, vector<384x96xf32> -> vector<384x96xf32>
    %10 = vector.extract_strided_slice %9 {offsets = [0, 0], sizes = [128, 96], strides = [1, 1]} : vector<384x96xf32> to vector<128x96xf32>
    %11 = arith.truncf %10 : vector<128x96xf32> to vector<128x96xbf16>
    %c0_3 = arith.constant 0 : index
    %c0_4 = arith.constant 0 : index
    %c0_5 = arith.constant 0 : index
    %12 = vector.load %arg1[%c0_3, %c0_4, %c0_5] : memref<3x96x384xbf16, #tpu.memory_space<vmem>>, vector<1x96x384xbf16>
    %13 = vector.shape_cast %12 : vector<1x96x384xbf16> to vector<96x384xbf16>
    %cst_6 = arith.constant dense<0.000000e+00> : vector<128x384xf32>
    %14 = tpu.matmul %11, %13, %cst_6 {dimension_numbers = #tpu.dot_dimension_numbers<[1], [0], [0], [1], [0, 0, 1, 1], [], []>} : vector<128x96xbf16>, vector<96x384xbf16>, vector<128x384xf32> -> vector<128x384xf32>
    %15 = vector.extract_strided_slice %9 {offsets = [128, 0], sizes = [128, 96], strides = [1, 1]} : vector<384x96xf32> to vector<128x96xf32>
    %16 = arith.truncf %15 : vector<128x96xf32> to vector<128x96xbf16>
    %c1 = arith.constant 1 : index
    %c0_7 = arith.constant 0 : index
    %c0_8 = arith.constant 0 : index
    %17 = vector.load %arg1[%c1, %c0_7, %c0_8] : memref<3x96x384xbf16, #tpu.memory_space<vmem>>, vector<1x96x384xbf16>
    %18 = vector.shape_cast %17 : vector<1x96x384xbf16> to vector<96x384xbf16>
    %cst_9 = arith.constant dense<0.000000e+00> : vector<128x384xf32>
    %19 = tpu.matmul %16, %18, %cst_9 {dimension_numbers = #tpu.dot_dimension_numbers<[1], [0], [0], [1], [0, 0, 1, 1], [], []>} : vector<128x96xbf16>, vector<96x384xbf16>, vector<128x384xf32> -> vector<128x384xf32>
    %20 = arith.addf %14, %19 : vector<128x384xf32>
    %21 = vector.extract_strided_slice %9 {offsets = [256, 0], sizes = [128, 96], strides = [1, 1]} : vector<384x96xf32> to vector<128x96xf32>
    %22 = arith.truncf %21 : vector<128x96xf32> to vector<128x96xbf16>
    %c2 = arith.constant 2 : index
    %c0_10 = arith.constant 0 : index
    %c0_11 = arith.constant 0 : index
    %23 = vector.load %arg1[%c2, %c0_10, %c0_11] : memref<3x96x384xbf16, #tpu.memory_space<vmem>>, vector<1x96x384xbf16>
    %24 = vector.shape_cast %23 : vector<1x96x384xbf16> to vector<96x384xbf16>
    %cst_12 = arith.constant dense<0.000000e+00> : vector<128x384xf32>
    %25 = tpu.matmul %22, %24, %cst_12 {dimension_numbers = #tpu.dot_dimension_numbers<[1], [0], [0], [1], [0, 0, 1, 1], [], []>} : vector<128x96xbf16>, vector<96x384xbf16>, vector<128x384xf32> -> vector<128x384xf32>
    %26 = arith.addf %20, %25 : vector<128x384xf32>
    %c0_13 = arith.constant 0 : index
    %c0_14 = arith.constant 0 : index
    %27 = vector.load %arg6[%c0_13, %c0_14] : memref<3x384xf32, #tpu.memory_space<vmem>>, vector<3x384xf32>
    %28 = vector.extract_strided_slice %27 {offsets = [0, 0], sizes = [1, 384], strides = [1, 1]} : vector<3x384xf32> to vector<1x384xf32>
    %29 = vector.broadcast %28 : vector<1x384xf32> to vector<128x384xf32>
    %30 = arith.addf %26, %29 : vector<128x384xf32>
    %cst_15 = arith.constant 0.000000e+00 : f32
    %31 = vector.broadcast %cst_15 : f32 to vector<128x384xf32>
    %32 = arith.maximumf %30, %31 : vector<128x384xf32>
    %cst_16 = arith.constant dense<0.000000e+00> : vector<384xf32>
    %33 = vector.multi_reduction <add>, %32, %cst_16 [0] : vector<128x384xf32> to vector<384xf32>
    %34 = vector.shape_cast %33 : vector<384xf32> to vector<1x384xf32>
    %c0_17 = arith.constant 0 : index
    %c0_18 = arith.constant 0 : index
    %35 = vector.load %arg7[%c0_17, %c0_18] : memref<384x24xf32, #tpu.memory_space<vmem>>, vector<384x24xf32>
    %cst_19 = arith.constant dense<0.000000e+00> : vector<1x24xf32>
    %36 = tpu.matmul %34, %35, %cst_19 {dimension_numbers = #tpu.dot_dimension_numbers<[1], [0], [0], [1], [0, 0, 1, 1], [], []>} : vector<1x384xf32>, vector<384x24xf32>, vector<1x24xf32> -> vector<1x24xf32>
    %c0_20 = arith.constant 0 : index
    %c0_21 = arith.constant 0 : index
    %37 = vector.load %arg8[%c0_20, %c0_21] : memref<24x384xf32, #tpu.memory_space<vmem>>, vector<24x384xf32>
    %cst_22 = arith.constant dense<0.000000e+00> : vector<1x384xf32>
    %38 = tpu.matmul %36, %37, %cst_22 {dimension_numbers = #tpu.dot_dimension_numbers<[1], [0], [0], [1], [0, 0, 1, 1], [], []>} : vector<1x24xf32>, vector<24x384xf32>, vector<1x384xf32> -> vector<1x384xf32>
    %39 = vector.broadcast %38 : vector<1x384xf32> to vector<128x384xf32>
    %40 = arith.subf %32, %39 : vector<128x384xf32>
    %41 = arith.mulf %40, %40 : vector<128x384xf32>
    %cst_23 = arith.constant dense<0.000000e+00> : vector<384xf32>
    %42 = vector.multi_reduction <add>, %41, %cst_23 [0] : vector<128x384xf32> to vector<384xf32>
    %43 = vector.shape_cast %42 : vector<384xf32> to vector<1x384xf32>
    %c0_24 = arith.constant 0 : index
    %c0_25 = arith.constant 0 : index
    %44 = vector.load %arg7[%c0_24, %c0_25] : memref<384x24xf32, #tpu.memory_space<vmem>>, vector<384x24xf32>
    %cst_26 = arith.constant dense<0.000000e+00> : vector<1x24xf32>
    %45 = tpu.matmul %43, %44, %cst_26 {dimension_numbers = #tpu.dot_dimension_numbers<[1], [0], [0], [1], [0, 0, 1, 1], [], []>} : vector<1x384xf32>, vector<384x24xf32>, vector<1x24xf32> -> vector<1x24xf32>
    %c0_27 = arith.constant 0 : index
    %c0_28 = arith.constant 0 : index
    %46 = vector.load %arg8[%c0_27, %c0_28] : memref<24x384xf32, #tpu.memory_space<vmem>>, vector<24x384xf32>
    %cst_29 = arith.constant dense<0.000000e+00> : vector<1x384xf32>
    %47 = tpu.matmul %45, %46, %cst_29 {dimension_numbers = #tpu.dot_dimension_numbers<[1], [0], [0], [1], [0, 0, 1, 1], [], []>} : vector<1x24xf32>, vector<24x384xf32>, vector<1x384xf32> -> vector<1x384xf32>
    %cst_30 = arith.constant 9.99999974E-6 : f32
    %48 = vector.broadcast %cst_30 : f32 to vector<1x384xf32>
    %49 = arith.addf %47, %48 : vector<1x384xf32>
    %50 = math.rsqrt %49 : vector<1x384xf32>
    %51 = vector.extract_strided_slice %27 {offsets = [1, 0], sizes = [1, 384], strides = [1, 1]} : vector<3x384xf32> to vector<1x384xf32>
    %52 = arith.mulf %50, %51 : vector<1x384xf32>
    %53 = vector.broadcast %52 : vector<1x384xf32> to vector<128x384xf32>
    %54 = arith.mulf %40, %53 : vector<128x384xf32>
    %55 = vector.extract_strided_slice %27 {offsets = [2, 0], sizes = [1, 384], strides = [1, 1]} : vector<3x384xf32> to vector<1x384xf32>
    %56 = vector.broadcast %55 : vector<1x384xf32> to vector<128x384xf32>
    %57 = arith.addf %54, %56 : vector<128x384xf32>
    %c0_i32_31 = arith.constant 0 : i32
    %58 = tpu.memref_slice %arg25[%c0_i32_31] : memref<3x!tpu.dma_semaphore, #tpu.memory_space<semaphore_mem>> -> memref<1x!tpu.dma_semaphore, #tpu.memory_space<semaphore_mem>>
    %59 = tpu.memref_squeeze %58 : memref<1x!tpu.dma_semaphore, #tpu.memory_space<semaphore_mem>> -> memref<!tpu.dma_semaphore, #tpu.memory_space<semaphore_mem>>
    tpu.wait_dma2 semaphore(%59 : memref<!tpu.dma_semaphore, #tpu.memory_space<semaphore_mem>>) src(%arg2 : memref<3x384x192xbf16, #tpu.memory_space<any>>) dst(%arg22 : memref<3x384x192xbf16, #tpu.memory_space<vmem>>)
    %60 = arith.truncf %57 : vector<128x384xf32> to vector<128x384xbf16>
    %c0_32 = arith.constant 0 : index
    %c0_33 = arith.constant 0 : index
    %61 = vector.load %arg9[%c0_32, %c0_33] : memref<192x128xbf16, #tpu.memory_space<vmem>>, vector<192x128xbf16>
    %cst_34 = arith.constant dense<0.000000e+00> : vector<192x384xf32>
    %62 = tpu.matmul %61, %60, %cst_34 {dimension_numbers = #tpu.dot_dimension_numbers<[1], [0], [0], [1], [0, 0, 1, 1], [], []>} : vector<192x128xbf16>, vector<128x384xbf16>, vector<192x384xf32> -> vector<192x384xf32>
    %63 = vector.extract_strided_slice %62 {offsets = [0, 0], sizes = [64, 384], strides = [1, 1]} : vector<192x384xf32> to vector<64x384xf32>
    %64 = arith.truncf %63 : vector<64x384xf32> to vector<64x384xbf16>
    %c0_35 = arith.constant 0 : index
    %c0_36 = arith.constant 0 : index
    %c0_37 = arith.constant 0 : index
    %65 = vector.load %arg22[%c0_35, %c0_36, %c0_37] : memref<3x384x192xbf16, #tpu.memory_space<vmem>>, vector<1x384x192xbf16>
    %66 = vector.shape_cast %65 : vector<1x384x192xbf16> to vector<384x192xbf16>
    %cst_38 = arith.constant dense<0.000000e+00> : vector<64x192xf32>
    %67 = tpu.matmul %64, %66, %cst_38 {dimension_numbers = #tpu.dot_dimension_numbers<[1], [0], [0], [1], [0, 0, 1, 1], [], []>} : vector<64x384xbf16>, vector<384x192xbf16>, vector<64x192xf32> -> vector<64x192xf32>
    %68 = vector.extract_strided_slice %62 {offsets = [64, 0], sizes = [64, 384], strides = [1, 1]} : vector<192x384xf32> to vector<64x384xf32>
    %69 = arith.truncf %68 : vector<64x384xf32> to vector<64x384xbf16>
    %c1_39 = arith.constant 1 : index
    %c0_40 = arith.constant 0 : index
    %c0_41 = arith.constant 0 : index
    %70 = vector.load %arg22[%c1_39, %c0_40, %c0_41] : memref<3x384x192xbf16, #tpu.memory_space<vmem>>, vector<1x384x192xbf16>
    %71 = vector.shape_cast %70 : vector<1x384x192xbf16> to vector<384x192xbf16>
    %cst_42 = arith.constant dense<0.000000e+00> : vector<64x192xf32>
    %72 = tpu.matmul %69, %71, %cst_42 {dimension_numbers = #tpu.dot_dimension_numbers<[1], [0], [0], [1], [0, 0, 1, 1], [], []>} : vector<64x384xbf16>, vector<384x192xbf16>, vector<64x192xf32> -> vector<64x192xf32>
    %73 = arith.addf %67, %72 : vector<64x192xf32>
    %74 = vector.extract_strided_slice %62 {offsets = [128, 0], sizes = [64, 384], strides = [1, 1]} : vector<192x384xf32> to vector<64x384xf32>
    %75 = arith.truncf %74 : vector<64x384xf32> to vector<64x384xbf16>
    %c2_43 = arith.constant 2 : index
    %c0_44 = arith.constant 0 : index
    %c0_45 = arith.constant 0 : index
    %76 = vector.load %arg22[%c2_43, %c0_44, %c0_45] : memref<3x384x192xbf16, #tpu.memory_space<vmem>>, vector<1x384x192xbf16>
    %77 = vector.shape_cast %76 : vector<1x384x192xbf16> to vector<384x192xbf16>
    %cst_46 = arith.constant dense<0.000000e+00> : vector<64x192xf32>
    %78 = tpu.matmul %75, %77, %cst_46 {dimension_numbers = #tpu.dot_dimension_numbers<[1], [0], [0], [1], [0, 0, 1, 1], [], []>} : vector<64x384xbf16>, vector<384x192xbf16>, vector<64x192xf32> -> vector<64x192xf32>
    %79 = arith.addf %73, %78 : vector<64x192xf32>
    %c0_47 = arith.constant 0 : index
    %c0_48 = arith.constant 0 : index
    %80 = vector.load %arg10[%c0_47, %c0_48] : memref<3x192xf32, #tpu.memory_space<vmem>>, vector<3x192xf32>
    %81 = vector.extract_strided_slice %80 {offsets = [0, 0], sizes = [1, 192], strides = [1, 1]} : vector<3x192xf32> to vector<1x192xf32>
    %82 = vector.broadcast %81 : vector<1x192xf32> to vector<64x192xf32>
    %83 = arith.addf %79, %82 : vector<64x192xf32>
    %cst_49 = arith.constant 0.000000e+00 : f32
    %84 = vector.broadcast %cst_49 : f32 to vector<64x192xf32>
    %85 = arith.maximumf %83, %84 : vector<64x192xf32>
    %cst_50 = arith.constant dense<0.000000e+00> : vector<192xf32>
    %86 = vector.multi_reduction <add>, %85, %cst_50 [0] : vector<64x192xf32> to vector<192xf32>
    %87 = vector.shape_cast %86 : vector<192xf32> to vector<1x192xf32>
    %c0_51 = arith.constant 0 : index
    %c0_52 = arith.constant 0 : index
    %88 = vector.load %arg11[%c0_51, %c0_52] : memref<192x24xf32, #tpu.memory_space<vmem>>, vector<192x24xf32>
    %cst_53 = arith.constant dense<0.000000e+00> : vector<1x24xf32>
    %89 = tpu.matmul %87, %88, %cst_53 {dimension_numbers = #tpu.dot_dimension_numbers<[1], [0], [0], [1], [0, 0, 1, 1], [], []>} : vector<1x192xf32>, vector<192x24xf32>, vector<1x24xf32> -> vector<1x24xf32>
    %c0_54 = arith.constant 0 : index
    %c0_55 = arith.constant 0 : index
    %90 = vector.load %arg12[%c0_54, %c0_55] : memref<24x192xf32, #tpu.memory_space<vmem>>, vector<24x192xf32>
    %cst_56 = arith.constant dense<0.000000e+00> : vector<1x192xf32>
    %91 = tpu.matmul %89, %90, %cst_56 {dimension_numbers = #tpu.dot_dimension_numbers<[1], [0], [0], [1], [0, 0, 1, 1], [], []>} : vector<1x24xf32>, vector<24x192xf32>, vector<1x192xf32> -> vector<1x192xf32>
    %92 = vector.broadcast %91 : vector<1x192xf32> to vector<64x192xf32>
    %93 = arith.subf %85, %92 : vector<64x192xf32>
    %94 = arith.mulf %93, %93 : vector<64x192xf32>
    %cst_57 = arith.constant dense<0.000000e+00> : vector<192xf32>
    %95 = vector.multi_reduction <add>, %94, %cst_57 [0] : vector<64x192xf32> to vector<192xf32>
    %96 = vector.shape_cast %95 : vector<192xf32> to vector<1x192xf32>
    %c0_58 = arith.constant 0 : index
    %c0_59 = arith.constant 0 : index
    %97 = vector.load %arg11[%c0_58, %c0_59] : memref<192x24xf32, #tpu.memory_space<vmem>>, vector<192x24xf32>
    %cst_60 = arith.constant dense<0.000000e+00> : vector<1x24xf32>
    %98 = tpu.matmul %96, %97, %cst_60 {dimension_numbers = #tpu.dot_dimension_numbers<[1], [0], [0], [1], [0, 0, 1, 1], [], []>} : vector<1x192xf32>, vector<192x24xf32>, vector<1x24xf32> -> vector<1x24xf32>
    %c0_61 = arith.constant 0 : index
    %c0_62 = arith.constant 0 : index
    %99 = vector.load %arg12[%c0_61, %c0_62] : memref<24x192xf32, #tpu.memory_space<vmem>>, vector<24x192xf32>
    %cst_63 = arith.constant dense<0.000000e+00> : vector<1x192xf32>
    %100 = tpu.matmul %98, %99, %cst_63 {dimension_numbers = #tpu.dot_dimension_numbers<[1], [0], [0], [1], [0, 0, 1, 1], [], []>} : vector<1x24xf32>, vector<24x192xf32>, vector<1x192xf32> -> vector<1x192xf32>
    %cst_64 = arith.constant 9.99999974E-6 : f32
    %101 = vector.broadcast %cst_64 : f32 to vector<1x192xf32>
    %102 = arith.addf %100, %101 : vector<1x192xf32>
    %103 = math.rsqrt %102 : vector<1x192xf32>
    %104 = vector.extract_strided_slice %80 {offsets = [1, 0], sizes = [1, 192], strides = [1, 1]} : vector<3x192xf32> to vector<1x192xf32>
    %105 = arith.mulf %103, %104 : vector<1x192xf32>
    %106 = vector.broadcast %105 : vector<1x192xf32> to vector<64x192xf32>
    %107 = arith.mulf %93, %106 : vector<64x192xf32>
    %108 = vector.extract_strided_slice %80 {offsets = [2, 0], sizes = [1, 192], strides = [1, 1]} : vector<3x192xf32> to vector<1x192xf32>
    %109 = vector.broadcast %108 : vector<1x192xf32> to vector<64x192xf32>
    %110 = arith.addf %107, %109 : vector<64x192xf32>
    %c1_i32_65 = arith.constant 1 : i32
    %111 = tpu.memref_slice %arg25[%c1_i32_65] : memref<3x!tpu.dma_semaphore, #tpu.memory_space<semaphore_mem>> -> memref<1x!tpu.dma_semaphore, #tpu.memory_space<semaphore_mem>>
    %112 = tpu.memref_squeeze %111 : memref<1x!tpu.dma_semaphore, #tpu.memory_space<semaphore_mem>> -> memref<!tpu.dma_semaphore, #tpu.memory_space<semaphore_mem>>
    tpu.wait_dma2 semaphore(%112 : memref<!tpu.dma_semaphore, #tpu.memory_space<semaphore_mem>>) src(%arg3 : memref<3x192x96xbf16, #tpu.memory_space<any>>) dst(%arg23 : memref<3x192x96xbf16, #tpu.memory_space<vmem>>)
    %113 = arith.truncf %110 : vector<64x192xf32> to vector<64x192xbf16>
    %c0_66 = arith.constant 0 : index
    %c0_67 = arith.constant 0 : index
    %114 = vector.load %arg13[%c0_66, %c0_67] : memref<96x64xbf16, #tpu.memory_space<vmem>>, vector<96x64xbf16>
    %cst_68 = arith.constant dense<0.000000e+00> : vector<96x192xf32>
    %115 = tpu.matmul %114, %113, %cst_68 {dimension_numbers = #tpu.dot_dimension_numbers<[1], [0], [0], [1], [0, 0, 1, 1], [], []>} : vector<96x64xbf16>, vector<64x192xbf16>, vector<96x192xf32> -> vector<96x192xf32>
    %116 = vector.extract_strided_slice %115 {offsets = [0, 0], sizes = [32, 192], strides = [1, 1]} : vector<96x192xf32> to vector<32x192xf32>
    %117 = arith.truncf %116 : vector<32x192xf32> to vector<32x192xbf16>
    %c0_69 = arith.constant 0 : index
    %c0_70 = arith.constant 0 : index
    %c0_71 = arith.constant 0 : index
    %118 = vector.load %arg23[%c0_69, %c0_70, %c0_71] : memref<3x192x96xbf16, #tpu.memory_space<vmem>>, vector<1x192x96xbf16>
    %119 = vector.shape_cast %118 : vector<1x192x96xbf16> to vector<192x96xbf16>
    %cst_72 = arith.constant dense<0.000000e+00> : vector<32x96xf32>
    %120 = tpu.matmul %117, %119, %cst_72 {dimension_numbers = #tpu.dot_dimension_numbers<[1], [0], [0], [1], [0, 0, 1, 1], [], []>} : vector<32x192xbf16>, vector<192x96xbf16>, vector<32x96xf32> -> vector<32x96xf32>
    %121 = vector.extract_strided_slice %115 {offsets = [32, 0], sizes = [32, 192], strides = [1, 1]} : vector<96x192xf32> to vector<32x192xf32>
    %122 = arith.truncf %121 : vector<32x192xf32> to vector<32x192xbf16>
    %c1_73 = arith.constant 1 : index
    %c0_74 = arith.constant 0 : index
    %c0_75 = arith.constant 0 : index
    %123 = vector.load %arg23[%c1_73, %c0_74, %c0_75] : memref<3x192x96xbf16, #tpu.memory_space<vmem>>, vector<1x192x96xbf16>
    %124 = vector.shape_cast %123 : vector<1x192x96xbf16> to vector<192x96xbf16>
    %cst_76 = arith.constant dense<0.000000e+00> : vector<32x96xf32>
    %125 = tpu.matmul %122, %124, %cst_76 {dimension_numbers = #tpu.dot_dimension_numbers<[1], [0], [0], [1], [0, 0, 1, 1], [], []>} : vector<32x192xbf16>, vector<192x96xbf16>, vector<32x96xf32> -> vector<32x96xf32>
    %126 = arith.addf %120, %125 : vector<32x96xf32>
    %127 = vector.extract_strided_slice %115 {offsets = [64, 0], sizes = [32, 192], strides = [1, 1]} : vector<96x192xf32> to vector<32x192xf32>
    %128 = arith.truncf %127 : vector<32x192xf32> to vector<32x192xbf16>
    %c2_77 = arith.constant 2 : index
    %c0_78 = arith.constant 0 : index
    %c0_79 = arith.constant 0 : index
    %129 = vector.load %arg23[%c2_77, %c0_78, %c0_79] : memref<3x192x96xbf16, #tpu.memory_space<vmem>>, vector<1x192x96xbf16>
    %130 = vector.shape_cast %129 : vector<1x192x96xbf16> to vector<192x96xbf16>
    %cst_80 = arith.constant dense<0.000000e+00> : vector<32x96xf32>
    %131 = tpu.matmul %128, %130, %cst_80 {dimension_numbers = #tpu.dot_dimension_numbers<[1], [0], [0], [1], [0, 0, 1, 1], [], []>} : vector<32x192xbf16>, vector<192x96xbf16>, vector<32x96xf32> -> vector<32x96xf32>
    %132 = arith.addf %126, %131 : vector<32x96xf32>
    %c0_81 = arith.constant 0 : index
    %c0_82 = arith.constant 0 : index
    %133 = vector.load %arg14[%c0_81, %c0_82] : memref<3x96xf32, #tpu.memory_space<vmem>>, vector<3x96xf32>
    %134 = vector.extract_strided_slice %133 {offsets = [0, 0], sizes = [1, 96], strides = [1, 1]} : vector<3x96xf32> to vector<1x96xf32>
    %135 = vector.broadcast %134 : vector<1x96xf32> to vector<32x96xf32>
    %136 = arith.addf %132, %135 : vector<32x96xf32>
    %cst_83 = arith.constant 0.000000e+00 : f32
    %137 = vector.broadcast %cst_83 : f32 to vector<32x96xf32>
    %138 = arith.maximumf %136, %137 : vector<32x96xf32>
    %cst_84 = arith.constant dense<0.000000e+00> : vector<96xf32>
    %139 = vector.multi_reduction <add>, %138, %cst_84 [0] : vector<32x96xf32> to vector<96xf32>
    %140 = vector.shape_cast %139 : vector<96xf32> to vector<1x96xf32>
    %c0_85 = arith.constant 0 : index
    %c0_86 = arith.constant 0 : index
    %141 = vector.load %arg15[%c0_85, %c0_86] : memref<96x24xf32, #tpu.memory_space<vmem>>, vector<96x24xf32>
    %cst_87 = arith.constant dense<0.000000e+00> : vector<1x24xf32>
    %142 = tpu.matmul %140, %141, %cst_87 {dimension_numbers = #tpu.dot_dimension_numbers<[1], [0], [0], [1], [0, 0, 1, 1], [], []>} : vector<1x96xf32>, vector<96x24xf32>, vector<1x24xf32> -> vector<1x24xf32>
    %c0_88 = arith.constant 0 : index
    %c0_89 = arith.constant 0 : index
    %143 = vector.load %arg16[%c0_88, %c0_89] : memref<24x96xf32, #tpu.memory_space<vmem>>, vector<24x96xf32>
    %cst_90 = arith.constant dense<0.000000e+00> : vector<1x96xf32>
    %144 = tpu.matmul %142, %143, %cst_90 {dimension_numbers = #tpu.dot_dimension_numbers<[1], [0], [0], [1], [0, 0, 1, 1], [], []>} : vector<1x24xf32>, vector<24x96xf32>, vector<1x96xf32> -> vector<1x96xf32>
    %145 = vector.broadcast %144 : vector<1x96xf32> to vector<32x96xf32>
    %146 = arith.subf %138, %145 : vector<32x96xf32>
    %147 = arith.mulf %146, %146 : vector<32x96xf32>
    %cst_91 = arith.constant dense<0.000000e+00> : vector<96xf32>
    %148 = vector.multi_reduction <add>, %147, %cst_91 [0] : vector<32x96xf32> to vector<96xf32>
    %149 = vector.shape_cast %148 : vector<96xf32> to vector<1x96xf32>
    %c0_92 = arith.constant 0 : index
    %c0_93 = arith.constant 0 : index
    %150 = vector.load %arg15[%c0_92, %c0_93] : memref<96x24xf32, #tpu.memory_space<vmem>>, vector<96x24xf32>
    %cst_94 = arith.constant dense<0.000000e+00> : vector<1x24xf32>
    %151 = tpu.matmul %149, %150, %cst_94 {dimension_numbers = #tpu.dot_dimension_numbers<[1], [0], [0], [1], [0, 0, 1, 1], [], []>} : vector<1x96xf32>, vector<96x24xf32>, vector<1x24xf32> -> vector<1x24xf32>
    %c0_95 = arith.constant 0 : index
    %c0_96 = arith.constant 0 : index
    %152 = vector.load %arg16[%c0_95, %c0_96] : memref<24x96xf32, #tpu.memory_space<vmem>>, vector<24x96xf32>
    %cst_97 = arith.constant dense<0.000000e+00> : vector<1x96xf32>
    %153 = tpu.matmul %151, %152, %cst_97 {dimension_numbers = #tpu.dot_dimension_numbers<[1], [0], [0], [1], [0, 0, 1, 1], [], []>} : vector<1x24xf32>, vector<24x96xf32>, vector<1x96xf32> -> vector<1x96xf32>
    %cst_98 = arith.constant 9.99999974E-6 : f32
    %154 = vector.broadcast %cst_98 : f32 to vector<1x96xf32>
    %155 = arith.addf %153, %154 : vector<1x96xf32>
    %156 = math.rsqrt %155 : vector<1x96xf32>
    %157 = vector.extract_strided_slice %133 {offsets = [1, 0], sizes = [1, 96], strides = [1, 1]} : vector<3x96xf32> to vector<1x96xf32>
    %158 = arith.mulf %156, %157 : vector<1x96xf32>
    %159 = vector.broadcast %158 : vector<1x96xf32> to vector<32x96xf32>
    %160 = arith.mulf %146, %159 : vector<32x96xf32>
    %161 = vector.extract_strided_slice %133 {offsets = [2, 0], sizes = [1, 96], strides = [1, 1]} : vector<3x96xf32> to vector<1x96xf32>
    %162 = vector.broadcast %161 : vector<1x96xf32> to vector<32x96xf32>
    %163 = arith.addf %160, %162 : vector<32x96xf32>
    %c2_i32_99 = arith.constant 2 : i32
    %164 = tpu.memref_slice %arg25[%c2_i32_99] : memref<3x!tpu.dma_semaphore, #tpu.memory_space<semaphore_mem>> -> memref<1x!tpu.dma_semaphore, #tpu.memory_space<semaphore_mem>>
    %165 = tpu.memref_squeeze %164 : memref<1x!tpu.dma_semaphore, #tpu.memory_space<semaphore_mem>> -> memref<!tpu.dma_semaphore, #tpu.memory_space<semaphore_mem>>
    tpu.wait_dma2 semaphore(%165 : memref<!tpu.dma_semaphore, #tpu.memory_space<semaphore_mem>>) src(%arg4 : memref<3x96x48xbf16, #tpu.memory_space<any>>) dst(%arg24 : memref<3x96x48xbf16, #tpu.memory_space<vmem>>)
    %166 = arith.truncf %163 : vector<32x96xf32> to vector<32x96xbf16>
    %c0_100 = arith.constant 0 : index
    %c0_101 = arith.constant 0 : index
    %167 = vector.load %arg17[%c0_100, %c0_101] : memref<48x32xbf16, #tpu.memory_space<vmem>>, vector<48x32xbf16>
    %cst_102 = arith.constant dense<0.000000e+00> : vector<48x96xf32>
    %168 = tpu.matmul %167, %166, %cst_102 {dimension_numbers = #tpu.dot_dimension_numbers<[1], [0], [0], [1], [0, 0, 1, 1], [], []>} : vector<48x32xbf16>, vector<32x96xbf16>, vector<48x96xf32> -> vector<48x96xf32>
    %169 = vector.extract_strided_slice %168 {offsets = [0, 0], sizes = [16, 96], strides = [1, 1]} : vector<48x96xf32> to vector<16x96xf32>
    %170 = arith.truncf %169 : vector<16x96xf32> to vector<16x96xbf16>
    %c0_103 = arith.constant 0 : index
    %c0_104 = arith.constant 0 : index
    %c0_105 = arith.constant 0 : index
    %171 = vector.load %arg24[%c0_103, %c0_104, %c0_105] : memref<3x96x48xbf16, #tpu.memory_space<vmem>>, vector<1x96x48xbf16>
    %172 = vector.shape_cast %171 : vector<1x96x48xbf16> to vector<96x48xbf16>
    %cst_106 = arith.constant dense<0.000000e+00> : vector<16x48xf32>
    %173 = tpu.matmul %170, %172, %cst_106 {dimension_numbers = #tpu.dot_dimension_numbers<[1], [0], [0], [1], [0, 0, 1, 1], [], []>} : vector<16x96xbf16>, vector<96x48xbf16>, vector<16x48xf32> -> vector<16x48xf32>
    %174 = vector.extract_strided_slice %168 {offsets = [16, 0], sizes = [16, 96], strides = [1, 1]} : vector<48x96xf32> to vector<16x96xf32>
    %175 = arith.truncf %174 : vector<16x96xf32> to vector<16x96xbf16>
    %c1_107 = arith.constant 1 : index
    %c0_108 = arith.constant 0 : index
    %c0_109 = arith.constant 0 : index
    %176 = vector.load %arg24[%c1_107, %c0_108, %c0_109] : memref<3x96x48xbf16, #tpu.memory_space<vmem>>, vector<1x96x48xbf16>
    %177 = vector.shape_cast %176 : vector<1x96x48xbf16> to vector<96x48xbf16>
    %cst_110 = arith.constant dense<0.000000e+00> : vector<16x48xf32>
    %178 = tpu.matmul %175, %177, %cst_110 {dimension_numbers = #tpu.dot_dimension_numbers<[1], [0], [0], [1], [0, 0, 1, 1], [], []>} : vector<16x96xbf16>, vector<96x48xbf16>, vector<16x48xf32> -> vector<16x48xf32>
    %179 = arith.addf %173, %178 : vector<16x48xf32>
    %180 = vector.extract_strided_slice %168 {offsets = [32, 0], sizes = [16, 96], strides = [1, 1]} : vector<48x96xf32> to vector<16x96xf32>
    %181 = arith.truncf %180 : vector<16x96xf32> to vector<16x96xbf16>
    %c2_111 = arith.constant 2 : index
    %c0_112 = arith.constant 0 : index
    %c0_113 = arith.constant 0 : index
    %182 = vector.load %arg24[%c2_111, %c0_112, %c0_113] : memref<3x96x48xbf16, #tpu.memory_space<vmem>>, vector<1x96x48xbf16>
    %183 = vector.shape_cast %182 : vector<1x96x48xbf16> to vector<96x48xbf16>
    %cst_114 = arith.constant dense<0.000000e+00> : vector<16x48xf32>
    %184 = tpu.matmul %181, %183, %cst_114 {dimension_numbers = #tpu.dot_dimension_numbers<[1], [0], [0], [1], [0, 0, 1, 1], [], []>} : vector<16x96xbf16>, vector<96x48xbf16>, vector<16x48xf32> -> vector<16x48xf32>
    %185 = arith.addf %179, %184 : vector<16x48xf32>
    %c0_115 = arith.constant 0 : index
    %c0_116 = arith.constant 0 : index
    %186 = vector.load %arg18[%c0_115, %c0_116] : memref<3x48xf32, #tpu.memory_space<vmem>>, vector<3x48xf32>
    %187 = vector.extract_strided_slice %186 {offsets = [0, 0], sizes = [1, 48], strides = [1, 1]} : vector<3x48xf32> to vector<1x48xf32>
    %188 = vector.broadcast %187 : vector<1x48xf32> to vector<16x48xf32>
    %189 = arith.addf %185, %188 : vector<16x48xf32>
    %cst_117 = arith.constant 0.000000e+00 : f32
    %190 = vector.broadcast %cst_117 : f32 to vector<16x48xf32>
    %191 = arith.maximumf %189, %190 : vector<16x48xf32>
    %cst_118 = arith.constant dense<0.000000e+00> : vector<48xf32>
    %192 = vector.multi_reduction <add>, %191, %cst_118 [0] : vector<16x48xf32> to vector<48xf32>
    %193 = vector.shape_cast %192 : vector<48xf32> to vector<1x48xf32>
    %c0_119 = arith.constant 0 : index
    %c0_120 = arith.constant 0 : index
    %194 = vector.load %arg19[%c0_119, %c0_120] : memref<48x24xf32, #tpu.memory_space<vmem>>, vector<48x24xf32>
    %cst_121 = arith.constant dense<0.000000e+00> : vector<1x24xf32>
    %195 = tpu.matmul %193, %194, %cst_121 {dimension_numbers = #tpu.dot_dimension_numbers<[1], [0], [0], [1], [0, 0, 1, 1], [], []>} : vector<1x48xf32>, vector<48x24xf32>, vector<1x24xf32> -> vector<1x24xf32>
    %c0_122 = arith.constant 0 : index
    %c0_123 = arith.constant 0 : index
    %196 = vector.load %arg20[%c0_122, %c0_123] : memref<24x48xf32, #tpu.memory_space<vmem>>, vector<24x48xf32>
    %cst_124 = arith.constant dense<0.000000e+00> : vector<1x48xf32>
    %197 = tpu.matmul %195, %196, %cst_124 {dimension_numbers = #tpu.dot_dimension_numbers<[1], [0], [0], [1], [0, 0, 1, 1], [], []>} : vector<1x24xf32>, vector<24x48xf32>, vector<1x48xf32> -> vector<1x48xf32>
    %198 = vector.broadcast %197 : vector<1x48xf32> to vector<16x48xf32>
    %199 = arith.subf %191, %198 : vector<16x48xf32>
    %200 = arith.mulf %199, %199 : vector<16x48xf32>
    %cst_125 = arith.constant dense<0.000000e+00> : vector<48xf32>
    %201 = vector.multi_reduction <add>, %200, %cst_125 [0] : vector<16x48xf32> to vector<48xf32>
    %202 = vector.shape_cast %201 : vector<48xf32> to vector<1x48xf32>
    %c0_126 = arith.constant 0 : index
    %c0_127 = arith.constant 0 : index
    %203 = vector.load %arg19[%c0_126, %c0_127] : memref<48x24xf32, #tpu.memory_space<vmem>>, vector<48x24xf32>
    %cst_128 = arith.constant dense<0.000000e+00> : vector<1x24xf32>
    %204 = tpu.matmul %202, %203, %cst_128 {dimension_numbers = #tpu.dot_dimension_numbers<[1], [0], [0], [1], [0, 0, 1, 1], [], []>} : vector<1x48xf32>, vector<48x24xf32>, vector<1x24xf32> -> vector<1x24xf32>
    %c0_129 = arith.constant 0 : index
    %c0_130 = arith.constant 0 : index
    %205 = vector.load %arg20[%c0_129, %c0_130] : memref<24x48xf32, #tpu.memory_space<vmem>>, vector<24x48xf32>
    %cst_131 = arith.constant dense<0.000000e+00> : vector<1x48xf32>
    %206 = tpu.matmul %204, %205, %cst_131 {dimension_numbers = #tpu.dot_dimension_numbers<[1], [0], [0], [1], [0, 0, 1, 1], [], []>} : vector<1x24xf32>, vector<24x48xf32>, vector<1x48xf32> -> vector<1x48xf32>
    %cst_132 = arith.constant 9.99999974E-6 : f32
    %207 = vector.broadcast %cst_132 : f32 to vector<1x48xf32>
    %208 = arith.addf %206, %207 : vector<1x48xf32>
    %209 = math.rsqrt %208 : vector<1x48xf32>
    %210 = vector.extract_strided_slice %186 {offsets = [1, 0], sizes = [1, 48], strides = [1, 1]} : vector<3x48xf32> to vector<1x48xf32>
    %211 = arith.mulf %209, %210 : vector<1x48xf32>
    %212 = vector.broadcast %211 : vector<1x48xf32> to vector<16x48xf32>
    %213 = arith.mulf %199, %212 : vector<16x48xf32>
    %214 = vector.extract_strided_slice %186 {offsets = [2, 0], sizes = [1, 48], strides = [1, 1]} : vector<3x48xf32> to vector<1x48xf32>
    %215 = vector.broadcast %214 : vector<1x48xf32> to vector<16x48xf32>
    %216 = arith.addf %213, %215 : vector<16x48xf32>
    %c0_133 = arith.constant 0 : index
    %c0_134 = arith.constant 0 : index
    %217 = vector.load %arg21[%c0_133, %c0_134] : memref<16x48xf32, #tpu.memory_space<vmem>>, vector<16x48xf32>
    tpu.vector_store %arg21[%c0_133, %c0_134], %216 {strides = array<i32>} : memref<16x48xf32, #tpu.memory_space<vmem>>, vector<16x48xf32>,
    return
  }
}

</mosaic_0001>

<llo_original>
// kernel: conv_input_model.1
$region0: #{conv_input_model.1}
  #allocation0 [shape = 'u32[]', space=smem, size = 0x4, offset = 0x4, fixed_abs, tag = 'smem constant byte address 0x4 - core index']
  #allocation1 [shape = 'u32[144,128]{1,0:T(1,128)}', space=vmem, size = 0x12000, scoped, tag = 'internal scratch']
  #allocation2 [shape = 'bf16[3,384,192]{2,1,0:T(16,128)(2,1)}', space=vmem, size = 0x90000, scoped, tag = 'scratch operand']
  #allocation3 [shape = 'bf16[3,192,96]{2,1,0:T(16,128)(2,1)}', space=vmem, size = 0x24000, scoped, tag = 'scratch operand']
  #allocation4 [shape = 'bf16[3,96,48]{2,1,0:T(16,128)(2,1)}', space=vmem, size = 0x12000, scoped, tag = 'scratch operand']
  #allocation5 [shape = 's32[3]{0}', space=sflag, size = 0xc, scoped, tag = 'scratch operand']
  #allocation6 [shape = 's32[]', space=sflag, size = 0x4, offset = 0, fixed_abs, tag = 'sflag constant byte address 0x0 - dummy sync flag']
  #allocation7 [shape = 's32[]', space=sflag, size = 0x4, offset = 0, fixed_abs, tag = 'sflag constant byte address 0x0 - dummy sync flag']
  #allocation8 [shape = 's32[]', space=sflag, size = 0x4, offset = 0, fixed_abs, tag = 'sflag constant byte address 0x0 - dummy sync flag']
  %s0 = inlined_call_operand.vmem [shape: f32[256,96], index: 0, kind: input, shape index: {}]
  %s1 = inlined_call_operand.vmem [shape: bf16[3,96,384], index: 1, kind: input, shape index: {}]
  %s2 = inlined_call_operand.vmem [shape: bf16[3,384,192], index: 2, kind: input, shape index: {}]
  %s3 = inlined_call_operand.vmem [shape: bf16[3,192,96], index: 3, kind: input, shape index: {}]
  %s4 = inlined_call_operand.vmem [shape: bf16[3,96,48], index: 4, kind: input, shape index: {}]
  %s5 = inlined_call_operand.vmem [shape: bf16[384,256], index: 5, kind: input, shape index: {}]
  %s6 = inlined_call_operand.vmem [shape: f32[3,384], index: 6, kind: input, shape index: {}]
  %s7 = inlined_call_operand.vmem [shape: f32[384,24], index: 7, kind: input, shape index: {}]
  %s8 = inlined_call_operand.vmem [shape: f32[24,384], index: 8, kind: input, shape index: {}]
  %s9 = inlined_call_operand.vmem [shape: bf16[192,128], index: 9, kind: input, shape index: {}]
  %s10 = inlined_call_operand.vmem [shape: f32[3,192], index: 10, kind: input, shape index: {}]
  %s11 = inlined_call_operand.vmem [shape: f32[192,24], index: 11, kind: input, shape index: {}]
  %s12 = inlined_call_operand.vmem [shape: f32[24,192], index: 12, kind: input, shape index: {}]
  %s13 = inlined_call_operand.vmem [shape: bf16[96,64], index: 13, kind: input, shape index: {}]
  %s14 = inlined_call_operand.vmem [shape: f32[3,96], index: 14, kind: input, shape index: {}]
  %s15 = inlined_call_operand.vmem [shape: f32[96,24], index: 15, kind: input, shape index: {}]
  %s16 = inlined_call_operand.vmem [shape: f32[24,96], index: 16, kind: input, shape index: {}]
  %s17 = inlined_call_operand.vmem [shape: bf16[48,32], index: 17, kind: input, shape index: {}]
  %s18 = inlined_call_operand.vmem [shape: f32[3,48], index: 18, kind: input, shape index: {}]
  %s19 = inlined_call_operand.vmem [shape: f32[48,24], index: 19, kind: input, shape index: {}]
  %s20 = inlined_call_operand.vmem [shape: f32[24,48], index: 20, kind: input, shape index: {}]
  %s21 = inlined_call_operand.vmem [shape: f32[16,48], index: 21, kind: output, shape index: {}]
  %s22 = sld [smem:[#allocation0]]
  $region187: #{conv_input_model.1} parent=0
    _
  %s24 = ssub.s32 1, %s22
  %s25 = scalar_select 0, %s24, %s22
  // Predicated region
  $region2: #{conv_input_model.1} parent=0 // pred_check
    _
  $region3: #{conv_input_model.1} parent=0 // pred_check_branch
    %27 = sbr.rel (0) target = $region5
  $region4: #{conv_input_model.1} parent=0 // pred_region
    _
  $region5: #{conv_input_model.1} parent=0 // pred_fallthru
    _
  // Predicated region
  $region6: #{conv_input_model.1} parent=0 // pred_check
    _
  $region7: #{conv_input_model.1} parent=0 // pred_check_branch
    %29 = sbr.rel (0) target = $region9
  $region8: #{conv_input_model.1} parent=0 // pred_region
    _
  $region9: #{conv_input_model.1} parent=0 // pred_fallthru
    _
  // Predicated region
  $region10: #{conv_input_model.1} parent=0 // pred_check
    _
  $region11: #{conv_input_model.1} parent=0 // pred_check_branch
    %31 = sbr.rel (0) target = $region13
  $region12: #{conv_input_model.1} parent=0 // pred_region
    _
  $region13: #{conv_input_model.1} parent=0 // pred_fallthru
    _
  // Predicated region
  $region14: #{conv_input_model.1} parent=0 // pred_check
    _
  $region15: #{conv_input_model.1} parent=0 // pred_check_branch
    %33 = sbr.rel (0) target = $region17
  $region16: #{conv_input_model.1} parent=0 // pred_region
    _
  $region17: #{conv_input_model.1} parent=0 // pred_fallthru
    _
  // Predicated region
  $region18: #{conv_input_model.1} parent=0 // pred_check
    _
  $region19: #{conv_input_model.1} parent=0 // pred_check_branch
    %35 = sbr.rel (0) target = $region21
  $region20: #{conv_input_model.1} parent=0 // pred_region
    _
  $region21: #{conv_input_model.1} parent=0 // pred_fallthru
    _
  // Predicated region
  $region22: #{conv_input_model.1} parent=0 // pred_check
    _
  $region23: #{conv_input_model.1} parent=0 // pred_check_branch
    %37 = sbr.rel (0) target = $region25
  $region24: #{conv_input_model.1} parent=0 // pred_region
    _
  $region25: #{conv_input_model.1} parent=0 // pred_fallthru
    _
  // Predicated region
  $region26: #{conv_input_model.1} parent=0 // pred_check
    _
  $region27: #{conv_input_model.1} parent=0 // pred_check_branch
    %39 = sbr.rel (0) target = $region29
  $region28: #{conv_input_model.1} parent=0 // pred_region
    _
  $region29: #{conv_input_model.1} parent=0 // pred_fallthru
    _
  // Predicated region
  $region30: #{conv_input_model.1} parent=0 // pred_check
    _
  $region31: #{conv_input_model.1} parent=0 // pred_check_branch
    %41 = sbr.rel (0) target = $region33
  $region32: #{conv_input_model.1} parent=0 // pred_region
    _
  $region33: #{conv_input_model.1} parent=0 // pred_fallthru
    _
  // Predicated region
  $region34: #{conv_input_model.1} parent=0 // pred_check
    _
  $region35: #{conv_input_model.1} parent=0 // pred_check_branch
    %43 = sbr.rel (0) target = $region37
  $region36: #{conv_input_model.1} parent=0 // pred_region
    _
  $region37: #{conv_input_model.1} parent=0 // pred_fallthru
    _
  // Predicated region
  $region38: #{conv_input_model.1} parent=0 // pred_check
    _
  $region39: #{conv_input_model.1} parent=0 // pred_check_branch
    %45 = sbr.rel (0) target = $region41
  $region40: #{conv_input_model.1} parent=0 // pred_region
    _
  $region41: #{conv_input_model.1} parent=0 // pred_fallthru
    _
  // Predicated region
  $region42: #{conv_input_model.1} parent=0 // pred_check
    _
  $region43: #{conv_input_model.1} parent=0 // pred_check_branch
    %47 = sbr.rel (0) target = $region45
  $region44: #{conv_input_model.1} parent=0 // pred_region
    _
  $region45: #{conv_input_model.1} parent=0 // pred_fallthru
    _
  // Predicated region
  $region46: #{conv_input_model.1} parent=0 // pred_check
    _
  $region47: #{conv_input_model.1} parent=0 // pred_check_branch
    %49 = sbr.rel (0) target = $region49
  $region48: #{conv_input_model.1} parent=0 // pred_region
    _
  $region49: #{conv_input_model.1} parent=0 // pred_fallthru
    _
  // Predicated region
  $region50: #{conv_input_model.1} parent=0 // pred_check
    _
  $region51: #{conv_input_model.1} parent=0 // pred_check_branch
    %51 = sbr.rel (0) target = $region53
  $region52: #{conv_input_model.1} parent=0 // pred_region
    _
  $region53: #{conv_input_model.1} parent=0 // pred_fallthru
    _
  // Predicated region
  $region54: #{conv_input_model.1} parent=0 // pred_check
    _
  $region55: #{conv_input_model.1} parent=0 // pred_check_branch
    %53 = sbr.rel (0) target = $region57
  $region56: #{conv_input_model.1} parent=0 // pred_region
    _
  $region57: #{conv_input_model.1} parent=0 // pred_fallthru
    _
  // Predicated region
  $region58: #{conv_input_model.1} parent=0 // pred_check
    _
  $region59: #{conv_input_model.1} parent=0 // pred_check_branch
    %55 = sbr.rel (0) target = $region61
  $region60: #{conv_input_model.1} parent=0 // pred_region
    _
  $region61: #{conv_input_model.1} parent=0 // pred_fallthru
    _
  // Predicated region
  $region62: #{conv_input_model.1} parent=0 // pred_check
    _
  $region63: #{conv_input_model.1} parent=0 // pred_check_branch
    %57 = sbr.rel (0) target = $region65
  $region64: #{conv_input_model.1} parent=0 // pred_region
    _
  $region65: #{conv_input_model.1} parent=0 // pred_fallthru
    _
  // Predicated region
  $region66: #{conv_input_model.1} parent=0 // pred_check
    _
  $region67: #{conv_input_model.1} parent=0 // pred_check_branch
    %59 = sbr.rel (0) target = $region69
  $region68: #{conv_input_model.1} parent=0 // pred_region
    _
  $region69: #{conv_input_model.1} parent=0 // pred_fallthru
    _
  // Predicated region
  $region70: #{conv_input_model.1} parent=0 // pred_check
    _
  $region71: #{conv_input_model.1} parent=0 // pred_check_branch
    %61 = sbr.rel (0) target = $region73
  $region72: #{conv_input_model.1} parent=0 // pred_region
    _
  $region73: #{conv_input_model.1} parent=0 // pred_fallthru
    _
  %p64 = scmp.lt.u32.totalorder 4, 8
  %p65 = pneg %p64
  // Predicated region
  $region74: #{conv_input_model.1} parent=0 // pred_check
    _
  $region75: #{conv_input_model.1} parent=0 // pred_check_branch
    %67 = sbr.rel (%p64) target = $region77
  $region76: #{conv_input_model.1} parent=0 // pred_region
    %s656 = sand.u32 4, 7
    %p657 = scmp.eq.s32.totalorder %s656, 0
    %p658 = pneg %p657
    // Predicated region
    $region89: #{conv_input_model.1} parent=76 // pred_check
      _
    $region90: #{conv_input_model.1} parent=76 // pred_check_branch
      %660 = sbr.rel (%p657) target = $region92
    $region91: #{conv_input_model.1} parent=76 // pred_region
      %s661 = sand.u32 4, 7
      %s662 = ssub.s32 4, %s661
      %s663 = scalar_lea.vmem %s2, %s662
      %s664 = ssub.s32 4, %s661
      %s665 = scalar_lea.vmem [#allocation2], %s664
      loop: start=0, step=1, limit=1
      $region93: #{conv_input_model.1} parent=91 // loop_pre_header
        _
      $region94: #{conv_input_model.1} parent=91 // loop_header
        %s667 = sphi 0, %s671
        %p668 = scmp.ge.s32.totalorder %s667, 1
        %s672 = sphi %s2, %s2
        %s673 = sphi [#allocation2], [#allocation2]
      $region95: #{conv_input_model.1} parent=91 // loop_header_branch
        %670 = sbr.rel (%p668) target = $region99
      $region96: #{conv_input_model.1} parent=91 // loop_body
        _
      $region97: #{conv_input_model.1} parent=91 // loop_footer
        %s671 = sadd.s32 1, %s667
      $region98: #{conv_input_model.1} parent=91 // loop_footer_branch
        %666 = sbr.rel target = $region94
      $region99: #{conv_input_model.1} parent=91 // loop_exit
        _
      %s674 = sshllo.u32 0, %s661
      loop: start=0, step=1, limit=1
      $region100: #{conv_input_model.1} parent=91 // loop_pre_header
        _
      $region101: #{conv_input_model.1} parent=91 // loop_header
        %s676 = sphi 0, %s680
        %p677 = scmp.ge.s32.totalorder %s676, 1
        %s681 = sphi %s663, %s663
        %s682 = sphi %s665, %s665
      $region102: #{conv_input_model.1} parent=91 // loop_header_branch
        %679 = sbr.rel (%p677) target = $region106
      $region103: #{conv_input_model.1} parent=91 // loop_body
        %v683 = vld [vmem:[%s681] sm:%s674]
        %684 = vst [vmem:[%s682] sm:%s674] %v683
        %v685 = vld [vmem:[%s681 + $0x8] sm:%s674]
        %686 = vst [vmem:[%s682 + $0x4] sm:%s674] %v685
        %v687 = vld [vmem:[%s681 + $0x4] sm:%s674]
        %688 = vst [vmem:[%s682 + $0x8] sm:%s674] %v687
        %v689 = vld [vmem:[%s681 + $0xc] sm:%s674]
        %690 = vst [vmem:[%s682 + $0xc] sm:%s674] %v689
        %v691 = vld [vmem:[%s681 + $0x10] sm:%s674]
        %692 = vst [vmem:[%s682 + $0x10] sm:%s674] %v691
        %v693 = vld [vmem:[%s681 + $0x18] sm:%s674]
        %694 = vst [vmem:[%s682 + $0x14] sm:%s674] %v693
        %v695 = vld [vmem:[%s681 + $0x14] sm:%s674]
        %696 = vst [vmem:[%s682 + $0x18] sm:%s674] %v695
        %v697 = vld [vmem:[%s681 + $0x1c] sm:%s674]
        %698 = vst [vmem:[%s682 + $0x1c] sm:%s674] %v697
        %v699 = vld [vmem:[%s681 + $0x20] sm:%s674]
        %700 = vst [vmem:[%s682 + $0x20] sm:%s674] %v699
        %v701 = vld [vmem:[%s681 + $0x28] sm:%s674]
        %702 = vst [vmem:[%s682 + $0x24] sm:%s674] %v701
        %v703 = vld [vmem:[%s681 + $0x24] sm:%s674]
        %704 = vst [vmem:[%s682 + $0x28] sm:%s674] %v703
        %v705 = vld [vmem:[%s681 + $0x2c] sm:%s674]
        %706 = vst [vmem:[%s682 + $0x2c] sm:%s674] %v705
        %v707 = vld [vmem:[%s681 + $0x30] sm:%s674]
        %708 = vst [vmem:[%s682 + $0x30] sm:%s674] %v707
        %v709 = vld [vmem:[%s681 + $0x38] sm:%s674]
        %710 = vst [vmem:[%s682 + $0x34] sm:%s674] %v709
        %v711 = vld [vmem:[%s681 + $0x34] sm:%s674]
        %712 = vst [vmem:[%s682 + $0x38] sm:%s674] %v711
        %v713 = vld [vmem:[%s681 + $0x3c] sm:%s674]
        %714 = vst [vmem:[%s682 + $0x3c] sm:%s674] %v713
        %v715 = vld [vmem:[%s681 + $0x40] sm:%s674]
        %716 = vst [vmem:[%s682 + $0x40] sm:%s674] %v715
        %v717 = vld [vmem:[%s681 + $0x48] sm:%s674]
        %718 = vst [vmem:[%s682 + $0x44] sm:%s674] %v717
        %v719 = vld [vmem:[%s681 + $0x44] sm:%s674]
        %720 = vst [vmem:[%s682 + $0x48] sm:%s674] %v719
        %v721 = vld [vmem:[%s681 + $0x4c] sm:%s674]
        %722 = vst [vmem:[%s682 + $0x4c] sm:%s674] %v721
        %v723 = vld [vmem:[%s681 + $0x50] sm:%s674]
        %724 = vst [vmem:[%s682 + $0x50] sm:%s674] %v723
        %v725 = vld [vmem:[%s681 + $0x58] sm:%s674]
        %726 = vst [vmem:[%s682 + $0x54] sm:%s674] %v725
        %v727 = vld [vmem:[%s681 + $0x54] sm:%s674]
        %728 = vst [vmem:[%s682 + $0x58] sm:%s674] %v727
        %v729 = vld [vmem:[%s681 + $0x5c] sm:%s674]
        %730 = vst [vmem:[%s682 + $0x5c] sm:%s674] %v729
        %v731 = vld [vmem:[%s681 + $0x60] sm:%s674]
        %732 = vst [vmem:[%s682 + $0x60] sm:%s674] %v731
        %v733 = vld [vmem:[%s681 + $0x68] sm:%s674]
        %734 = vst [vmem:[%s682 + $0x64] sm:%s674] %v733
        %v735 = vld [vmem:[%s681 + $0x64] sm:%s674]
        %736 = vst [vmem:[%s682 + $0x68] sm:%s674] %v735
        %v737 = vld [vmem:[%s681 + $0x6c] sm:%s674]
        %738 = vst [vmem:[%s682 + $0x6c] sm:%s674] %v737
        %v739 = vld [vmem:[%s681 + $0x70] sm:%s674]
        %740 = vst [vmem:[%s682 + $0x70] sm:%s674] %v739
        %v741 = vld [vmem:[%s681 + $0x78] sm:%s674]
        %742 = vst [vmem:[%s682 + $0x74] sm:%s674] %v741
        %v743 = vld [vmem:[%s681 + $0x74] sm:%s674]
        %744 = vst [vmem:[%s682 + $0x78] sm:%s674] %v743
        %v745 = vld [vmem:[%s681 + $0x7c] sm:%s674]
        %746 = vst [vmem:[%s682 + $0x7c] sm:%s674] %v745
        %v747 = vld [vmem:[%s681 + $0x80] sm:%s674]
        %748 = vst [vmem:[%s682 + $0x80] sm:%s674] %v747
        %v749 = vld [vmem:[%s681 + $0x88] sm:%s674]
        %750 = vst [vmem:[%s682 + $0x84] sm:%s674] %v749
        %v751 = vld [vmem:[%s681 + $0x84] sm:%s674]
        %752 = vst [vmem:[%s682 + $0x88] sm:%s674] %v751
        %v753 = vld [vmem:[%s681 + $0x8c] sm:%s674]
        %754 = vst [vmem:[%s682 + $0x8c] sm:%s674] %v753
        %v755 = vld [vmem:[%s681 + $0x90] sm:%s674]
        %756 = vst [vmem:[%s682 + $0x90] sm:%s674] %v755
        %v757 = vld [vmem:[%s681 + $0x98] sm:%s674]
        %758 = vst [vmem:[%s682 + $0x94] sm:%s674] %v757
        %v759 = vld [vmem:[%s681 + $0x94] sm:%s674]
        %760 = vst [vmem:[%s682 + $0x98] sm:%s674] %v759
        %v761 = vld [vmem:[%s681 + $0x9c] sm:%s674]
        %762 = vst [vmem:[%s682 + $0x9c] sm:%s674] %v761
        %v763 = vld [vmem:[%s681 + $0xa0] sm:%s674]
        %764 = vst [vmem:[%s682 + $0xa0] sm:%s674] %v763
        %v765 = vld [vmem:[%s681 + $0xa8] sm:%s674]
        %766 = vst [vmem:[%s682 + $0xa4] sm:%s674] %v765
        %v767 = vld [vmem:[%s681 + $0xa4] sm:%s674]
        %768 = vst [vmem:[%s682 + $0xa8] sm:%s674] %v767
        %v769 = vld [vmem:[%s681 + $0xac] sm:%s674]
        %770 = vst [vmem:[%s682 + $0xac] sm:%s674] %v769
        %v771 = vld [vmem:[%s681 + $0xb0] sm:%s674]
        %772 = vst [vmem:[%s682 + $0xb0] sm:%s674] %v771
        %v773 = vld [vmem:[%s681 + $0xb8] sm:%s674]
        %774 = vst [vmem:[%s682 + $0xb4] sm:%s674] %v773
        %v775 = vld [vmem:[%s681 + $0xb4] sm:%s674]
        %776 = vst [vmem:[%s682 + $0xb8] sm:%s674] %v775
        %v777 = vld [vmem:[%s681 + $0xbc] sm:%s674]
        %778 = vst [vmem:[%s682 + $0xbc] sm:%s674] %v777
        %v779 = vld [vmem:[%s681 + $0xc0] sm:%s674]
        %780 = vst [vmem:[%s682 + $0xc0] sm:%s674] %v779
        %v781 = vld [vmem:[%s681 + $0xc8] sm:%s674]
        %782 = vst [vmem:[%s682 + $0xc4] sm:%s674] %v781
        %v783 = vld [vmem:[%s681 + $0xc4] sm:%s674]
        %784 = vst [vmem:[%s682 + $0xc8] sm:%s674] %v783
        %v785 = vld [vmem:[%s681 + $0xcc] sm:%s674]
        %786 = vst [vmem:[%s682 + $0xcc] sm:%s674] %v785
        %v787 = vld [vmem:[%s681 + $0xd0] sm:%s674]
        %788 = vst [vmem:[%s682 + $0xd0] sm:%s674] %v787
        %v789 = vld [vmem:[%s681 + $0xd8] sm:%s674]
        %790 = vst [vmem:[%s682 + $0xd4] sm:%s674] %v789
        %v791 = vld [vmem:[%s681 + $0xd4] sm:%s674]
        %792 = vst [vmem:[%s682 + $0xd8] sm:%s674] %v791
        %v793 = vld [vmem:[%s681 + $0xdc] sm:%s674]
        %794 = vst [vmem:[%s682 + $0xdc] sm:%s674] %v793
        %v795 = vld [vmem:[%s681 + $0xe0] sm:%s674]
        %796 = vst [vmem:[%s682 + $0xe0] sm:%s674] %v795
        %v797 = vld [vmem:[%s681 + $0xe8] sm:%s674]
        %798 = vst [vmem:[%s682 + $0xe4] sm:%s674] %v797
        %v799 = vld [vmem:[%s681 + $0xe4] sm:%s674]
        %800 = vst [vmem:[%s682 + $0xe8] sm:%s674] %v799
        %v801 = vld [vmem:[%s681 + $0xec] sm:%s674]
        %802 = vst [vmem:[%s682 + $0xec] sm:%s674] %v801
        %v803 = vld [vmem:[%s681 + $0xf0] sm:%s674]
        %804 = vst [vmem:[%s682 + $0xf0] sm:%s674] %v803
        %v805 = vld [vmem:[%s681 + $0xf8] sm:%s674]
        %806 = vst [vmem:[%s682 + $0xf4] sm:%s674] %v805
        %v807 = vld [vmem:[%s681 + $0xf4] sm:%s674]
        %808 = vst [vmem:[%s682 + $0xf8] sm:%s674] %v807
        %v809 = vld [vmem:[%s681 + $0xfc] sm:%s674]
        %810 = vst [vmem:[%s682 + $0xfc] sm:%s674] %v809
        %v811 = vld [vmem:[%s681 + $0x100] sm:%s674]
        %812 = vst [vmem:[%s682 + $0x100] sm:%s674] %v811
        %v813 = vld [vmem:[%s681 + $0x108] sm:%s674]
        %814 = vst [vmem:[%s682 + $0x104] sm:%s674] %v813
        %v815 = vld [vmem:[%s681 + $0x104] sm:%s674]
        %816 = vst [vmem:[%s682 + $0x108] sm:%s674] %v815
        %v817 = vld [vmem:[%s681 + $0x10c] sm:%s674]
        %818 = vst [vmem:[%s682 + $0x10c] sm:%s674] %v817
        %v819 = vld [vmem:[%s681 + $0x110] sm:%s674]
        %820 = vst [vmem:[%s682 + $0x110] sm:%s674] %v819
        %v821 = vld [vmem:[%s681 + $0x118] sm:%s674]
        %822 = vst [vmem:[%s682 + $0x114] sm:%s674] %v821
        %v823 = vld [vmem:[%s681 + $0x114] sm:%s674]
        %824 = vst [vmem:[%s682 + $0x118] sm:%s674] %v823
        %v825 = vld [vmem:[%s681 + $0x11c] sm:%s674]
        %826 = vst [vmem:[%s682 + $0x11c] sm:%s674] %v825
        %v827 = vld [vmem:[%s681 + $0x120] sm:%s674]
        %828 = vst [vmem:[%s682 + $0x120] sm:%s674] %v827
        %v829 = vld [vmem:[%s681 + $0x128] sm:%s674]
        %830 = vst [vmem:[%s682 + $0x124] sm:%s674] %v829
        %v831 = vld [vmem:[%s681 + $0x124] sm:%s674]
        %832 = vst [vmem:[%s682 + $0x128] sm:%s674] %v831
        %v833 = vld [vmem:[%s681 + $0x12c] sm:%s674]
        %834 = vst [vmem:[%s682 + $0x12c] sm:%s674] %v833
        %v835 = vld [vmem:[%s681 + $0x130] sm:%s674]
        %836 = vst [vmem:[%s682 + $0x130] sm:%s674] %v835
        %v837 = vld [vmem:[%s681 + $0x138] sm:%s674]
        %838 = vst [vmem:[%s682 + $0x134] sm:%s674] %v837
        %v839 = vld [vmem:[%s681 + $0x134] sm:%s674]
        %840 = vst [vmem:[%s682 + $0x138] sm:%s674] %v839
        %v841 = vld [vmem:[%s681 + $0x13c] sm:%s674]
        %842 = vst [vmem:[%s682 + $0x13c] sm:%s674] %v841
        %v843 = vld [vmem:[%s681 + $0x140] sm:%s674]
        %844 = vst [vmem:[%s682 + $0x140] sm:%s674] %v843
        %v845 = vld [vmem:[%s681 + $0x148] sm:%s674]
        %846 = vst [vmem:[%s682 + $0x144] sm:%s674] %v845
        %v847 = vld [vmem:[%s681 + $0x144] sm:%s674]
        %848 = vst [vmem:[%s682 + $0x148] sm:%s674] %v847
        %v849 = vld [vmem:[%s681 + $0x14c] sm:%s674]
        %850 = vst [vmem:[%s682 + $0x14c] sm:%s674] %v849
        %v851 = vld [vmem:[%s681 + $0x150] sm:%s674]
        %852 = vst [vmem:[%s682 + $0x150] sm:%s674] %v851
        %v853 = vld [vmem:[%s681 + $0x158] sm:%s674]
        %854 = vst [vmem:[%s682 + $0x154] sm:%s674] %v853
        %v855 = vld [vmem:[%s681 + $0x154] sm:%s674]
        %856 = vst [vmem:[%s682 + $0x158] sm:%s674] %v855
        %v857 = vld [vmem:[%s681 + $0x15c] sm:%s674]
        %858 = vst [vmem:[%s682 + $0x15c] sm:%s674] %v857
        %v859 = vld [vmem:[%s681 + $0x160] sm:%s674]
        %860 = vst [vmem:[%s682 + $0x160] sm:%s674] %v859
        %v861 = vld [vmem:[%s681 + $0x168] sm:%s674]
        %862 = vst [vmem:[%s682 + $0x164] sm:%s674] %v861
        %v863 = vld [vmem:[%s681 + $0x164] sm:%s674]
        %864 = vst [vmem:[%s682 + $0x168] sm:%s674] %v863
        %v865 = vld [vmem:[%s681 + $0x16c] sm:%s674]
        %866 = vst [vmem:[%s682 + $0x16c] sm:%s674] %v865
        %v867 = vld [vmem:[%s681 + $0x170] sm:%s674]
        %868 = vst [vmem:[%s682 + $0x170] sm:%s674] %v867
        %v869 = vld [vmem:[%s681 + $0x178] sm:%s674]
        %870 = vst [vmem:[%s682 + $0x174] sm:%s674] %v869
        %v871 = vld [vmem:[%s681 + $0x174] sm:%s674]
        %872 = vst [vmem:[%s682 + $0x178] sm:%s674] %v871
        %v873 = vld [vmem:[%s681 + $0x17c] sm:%s674]
        %874 = vst [vmem:[%s682 + $0x17c] sm:%s674] %v873
        %v875 = vld [vmem:[%s681 + $0x180] sm:%s674]
        %876 = vst [vmem:[%s682 + $0x180] sm:%s674] %v875
        %v877 = vld [vmem:[%s681 + $0x188] sm:%s674]
        %878 = vst [vmem:[%s682 + $0x184] sm:%s674] %v877
        %v879 = vld [vmem:[%s681 + $0x184] sm:%s674]
        %880 = vst [vmem:[%s682 + $0x188] sm:%s674] %v879
        %v881 = vld [vmem:[%s681 + $0x18c] sm:%s674]
        %882 = vst [vmem:[%s682 + $0x18c] sm:%s674] %v881
        %v883 = vld [vmem:[%s681 + $0x190] sm:%s674]
        %884 = vst [vmem:[%s682 + $0x190] sm:%s674] %v883
        %v885 = vld [vmem:[%s681 + $0x198] sm:%s674]
        %886 = vst [vmem:[%s682 + $0x194] sm:%s674] %v885
        %v887 = vld [vmem:[%s681 + $0x194] sm:%s674]
        %888 = vst [vmem:[%s682 + $0x198] sm:%s674] %v887
        %v889 = vld [vmem:[%s681 + $0x19c] sm:%s674]
        %890 = vst [vmem:[%s682 + $0x19c] sm:%s674] %v889
        %v891 = vld [vmem:[%s681 + $0x1a0] sm:%s674]
        %892 = vst [vmem:[%s682 + $0x1a0] sm:%s674] %v891
        %v893 = vld [vmem:[%s681 + $0x1a8] sm:%s674]
        %894 = vst [vmem:[%s682 + $0x1a4] sm:%s674] %v893
        %v895 = vld [vmem:[%s681 + $0x1a4] sm:%s674]
        %896 = vst [vmem:[%s682 + $0x1a8] sm:%s674] %v895
        %v897 = vld [vmem:[%s681 + $0x1ac] sm:%s674]
        %898 = vst [vmem:[%s682 + $0x1ac] sm:%s674] %v897
        %v899 = vld [vmem:[%s681 + $0x1b0] sm:%s674]
        %900 = vst [vmem:[%s682 + $0x1b0] sm:%s674] %v899
        %v901 = vld [vmem:[%s681 + $0x1b8] sm:%s674]
        %902 = vst [vmem:[%s682 + $0x1b4] sm:%s674] %v901
        %v903 = vld [vmem:[%s681 + $0x1b4] sm:%s674]
        %904 = vst [vmem:[%s682 + $0x1b8] sm:%s674] %v903
        %v905 = vld [vmem:[%s681 + $0x1bc] sm:%s674]
        %906 = vst [vmem:[%s682 + $0x1bc] sm:%s674] %v905
        %v907 = vld [vmem:[%s681 + $0x1c0] sm:%s674]
        %908 = vst [vmem:[%s682 + $0x1c0] sm:%s674] %v907
        %v909 = vld [vmem:[%s681 + $0x1c8] sm:%s674]
        %910 = vst [vmem:[%s682 + $0x1c4] sm:%s674] %v909
        %v911 = vld [vmem:[%s681 + $0x1c4] sm:%s674]
        %912 = vst [vmem:[%s682 + $0x1c8] sm:%s674] %v911
        %v913 = vld [vmem:[%s681 + $0x1cc] sm:%s674]
        %914 = vst [vmem:[%s682 + $0x1cc] sm:%s674] %v913
        %v915 = vld [vmem:[%s681 + $0x1d0] sm:%s674]
        %916 = vst [vmem:[%s682 + $0x1d0] sm:%s674] %v915
        %v917 = vld [vmem:[%s681 + $0x1d8] sm:%s674]
        %918 = vst [vmem:[%s682 + $0x1d4] sm:%s674] %v917
        %v919 = vld [vmem:[%s681 + $0x1d4] sm:%s674]
        %920 = vst [vmem:[%s682 + $0x1d8] sm:%s674] %v919
        %v921 = vld [vmem:[%s681 + $0x1dc] sm:%s674]
        %922 = vst [vmem:[%s682 + $0x1dc] sm:%s674] %v921
        %v923 = vld [vmem:[%s681 + $0x1e0] sm:%s674]
        %924 = vst [vmem:[%s682 + $0x1e0] sm:%s674] %v923
        %v925 = vld [vmem:[%s681 + $0x1e8] sm:%s674]
        %926 = vst [vmem:[%s682 + $0x1e4] sm:%s674] %v925
        %v927 = vld [vmem:[%s681 + $0x1e4] sm:%s674]
        %928 = vst [vmem:[%s682 + $0x1e8] sm:%s674] %v927
        %v929 = vld [vmem:[%s681 + $0x1ec] sm:%s674]
        %930 = vst [vmem:[%s682 + $0x1ec] sm:%s674] %v929
        %v931 = vld [vmem:[%s681 + $0x1f0] sm:%s674]
        %932 = vst [vmem:[%s682 + $0x1f0] sm:%s674] %v931
        %v933 = vld [vmem:[%s681 + $0x1f8] sm:%s674]
        %934 = vst [vmem:[%s682 + $0x1f4] sm:%s674] %v933
        %v935 = vld [vmem:[%s681 + $0x1f4] sm:%s674]
        %936 = vst [vmem:[%s682 + $0x1f8] sm:%s674] %v935
        %v937 = vld [vmem:[%s681 + $0x1fc] sm:%s674]
        %938 = vst [vmem:[%s682 + $0x1fc] sm:%s674] %v937
        %v939 = vld [vmem:[%s681 + $0x200] sm:%s674]
        %940 = vst [vmem:[%s682 + $0x200] sm:%s674] %v939
        %v941 = vld [vmem:[%s681 + $0x208] sm:%s674]
        %942 = vst [vmem:[%s682 + $0x204] sm:%s674] %v941
        %v943 = vld [vmem:[%s681 + $0x204] sm:%s674]
        %944 = vst [vmem:[%s682 + $0x208] sm:%s674] %v943
        %v945 = vld [vmem:[%s681 + $0x20c] sm:%s674]
        %946 = vst [vmem:[%s682 + $0x20c] sm:%s674] %v945
        %v947 = vld [vmem:[%s681 + $0x210] sm:%s674]
        %948 = vst [vmem:[%s682 + $0x210] sm:%s674] %v947
        %v949 = vld [vmem:[%s681 + $0x218] sm:%s674]
        %950 = vst [vmem:[%s682 + $0x214] sm:%s674] %v949
        %v951 = vld [vmem:[%s681 + $0x214] sm:%s674]
        %952 = vst [vmem:[%s682 + $0x218] sm:%s674] %v951
        %v953 = vld [vmem:[%s681 + $0x21c] sm:%s674]
        %954 = vst [vmem:[%s682 + $0x21c] sm:%s674] %v953
        %v955 = vld [vmem:[%s681 + $0x220] sm:%s674]
        %956 = vst [vmem:[%s682 + $0x220] sm:%s674] %v955
        %v957 = vld [vmem:[%s681 + $0x228] sm:%s674]
        %958 = vst [vmem:[%s682 + $0x224] sm:%s674] %v957
        %v959 = vld [vmem:[%s681 + $0x224] sm:%s674]
        %960 = vst [vmem:[%s682 + $0x228] sm:%s674] %v959
        %v961 = vld [vmem:[%s681 + $0x22c] sm:%s674]
        %962 = vst [vmem:[%s682 + $0x22c] sm:%s674] %v961
        %v963 = vld [vmem:[%s681 + $0x230] sm:%s674]
        %964 = vst [vmem:[%s682 + $0x230] sm:%s674] %v963
        %v965 = vld [vmem:[%s681 + $0x238] sm:%s674]
        %966 = vst [vmem:[%s682 + $0x234] sm:%s674] %v965
        %v967 = vld [vmem:[%s681 + $0x234] sm:%s674]
        %968 = vst [vmem:[%s682 + $0x238] sm:%s674] %v967
        %v969 = vld [vmem:[%s681 + $0x23c] sm:%s674]
        %970 = vst [vmem:[%s682 + $0x23c] sm:%s674] %v969
        %v971 = vld [vmem:[%s681 + $0x240] sm:%s674]
        %972 = vst [vmem:[%s682 + $0x240] sm:%s674] %v971
        %v973 = vld [vmem:[%s681 + $0x248] sm:%s674]
        %974 = vst [vmem:[%s682 + $0x244] sm:%s674] %v973
        %v975 = vld [vmem:[%s681 + $0x244] sm:%s674]
        %976 = vst [vmem:[%s682 + $0x248] sm:%s674] %v975
        %v977 = vld [vmem:[%s681 + $0x24c] sm:%s674]
        %978 = vst [vmem:[%s682 + $0x24c] sm:%s674] %v977
        %v979 = vld [vmem:[%s681 + $0x250] sm:%s674]
        %980 = vst [vmem:[%s682 + $0x250] sm:%s674] %v979
        %v981 = vld [vmem:[%s681 + $0x258] sm:%s674]
        %982 = vst [vmem:[%s682 + $0x254] sm:%s674] %v981
        %v983 = vld [vmem:[%s681 + $0x254] sm:%s674]
        %984 = vst [vmem:[%s682 + $0x258] sm:%s674] %v983
        %v985 = vld [vmem:[%s681 + $0x25c] sm:%s674]
        %986 = vst [vmem:[%s682 + $0x25c] sm:%s674] %v985
        %v987 = vld [vmem:[%s681 + $0x260] sm:%s674]
        %988 = vst [vmem:[%s682 + $0x260] sm:%s674] %v987
        %v989 = vld [vmem:[%s681 + $0x268] sm:%s674]
        %990 = vst [vmem:[%s682 + $0x264] sm:%s674] %v989
        %v991 = vld [vmem:[%s681 + $0x264] sm:%s674]
        %992 = vst [vmem:[%s682 + $0x268] sm:%s674] %v991
        %v993 = vld [vmem:[%s681 + $0x26c] sm:%s674]
        %994 = vst [vmem:[%s682 + $0x26c] sm:%s674] %v993
        %v995 = vld [vmem:[%s681 + $0x270] sm:%s674]
        %996 = vst [vmem:[%s682 + $0x270] sm:%s674] %v995
        %v997 = vld [vmem:[%s681 + $0x278] sm:%s674]
        %998 = vst [vmem:[%s682 + $0x274] sm:%s674] %v997
        %v999 = vld [vmem:[%s681 + $0x274] sm:%s674]
        %1000 = vst [vmem:[%s682 + $0x278] sm:%s674] %v999
        %v1001 = vld [vmem:[%s681 + $0x27c] sm:%s674]
        %1002 = vst [vmem:[%s682 + $0x27c] sm:%s674] %v1001
        %v1003 = vld [vmem:[%s681 + $0x280] sm:%s674]
        %1004 = vst [vmem:[%s682 + $0x280] sm:%s674] %v1003
        %v1005 = vld [vmem:[%s681 + $0x288] sm:%s674]
        %1006 = vst [vmem:[%s682 + $0x284] sm:%s674] %v1005
        %v1007 = vld [vmem:[%s681 + $0x284] sm:%s674]
        %1008 = vst [vmem:[%s682 + $0x288] sm:%s674] %v1007
        %v1009 = vld [vmem:[%s681 + $0x28c] sm:%s674]
        %1010 = vst [vmem:[%s682 + $0x28c] sm:%s674] %v1009
        %v1011 = vld [vmem:[%s681 + $0x290] sm:%s674]
        %1012 = vst [vmem:[%s682 + $0x290] sm:%s674] %v1011
        %v1013 = vld [vmem:[%s681 + $0x298] sm:%s674]
        %1014 = vst [vmem:[%s682 + $0x294] sm:%s674] %v1013
        %v1015 = vld [vmem:[%s681 + $0x294] sm:%s674]
        %1016 = vst [vmem:[%s682 + $0x298] sm:%s674] %v1015
        %v1017 = vld [vmem:[%s681 + $0x29c] sm:%s674]
        %1018 = vst [vmem:[%s682 + $0x29c] sm:%s674] %v1017
        %v1019 = vld [vmem:[%s681 + $0x2a0] sm:%s674]
        %1020 = vst [vmem:[%s682 + $0x2a0] sm:%s674] %v1019
        %v1021 = vld [vmem:[%s681 + $0x2a8] sm:%s674]
        %1022 = vst [vmem:[%s682 + $0x2a4] sm:%s674] %v1021
        %v1023 = vld [vmem:[%s681 + $0x2a4] sm:%s674]
        %1024 = vst [vmem:[%s682 + $0x2a8] sm:%s674] %v1023
        %v1025 = vld [vmem:[%s681 + $0x2ac] sm:%s674]
        %1026 = vst [vmem:[%s682 + $0x2ac] sm:%s674] %v1025
        %v1027 = vld [vmem:[%s681 + $0x2b0] sm:%s674]
        %1028 = vst [vmem:[%s682 + $0x2b0] sm:%s674] %v1027
        %v1029 = vld [vmem:[%s681 + $0x2b8] sm:%s674]
        %1030 = vst [vmem:[%s682 + $0x2b4] sm:%s674] %v1029
        %v1031 = vld [vmem:[%s681 + $0x2b4] sm:%s674]
        %1032 = vst [vmem:[%s682 + $0x2b8] sm:%s674] %v1031
        %v1033 = vld [vmem:[%s681 + $0x2bc] sm:%s674]
        %1034 = vst [vmem:[%s682 + $0x2bc] sm:%s674] %v1033
        %v1035 = vld [vmem:[%s681 + $0x2c0] sm:%s674]
        %1036 = vst [vmem:[%s682 + $0x2c0] sm:%s674] %v1035
        %v1037 = vld [vmem:[%s681 + $0x2c8] sm:%s674]
        %1038 = vst [vmem:[%s682 + $0x2c4] sm:%s674] %v1037
        %v1039 = vld [vmem:[%s681 + $0x2c4] sm:%s674]
        %1040 = vst [vmem:[%s682 + $0x2c8] sm:%s674] %v1039
        %v1041 = vld [vmem:[%s681 + $0x2cc] sm:%s674]
        %1042 = vst [vmem:[%s682 + $0x2cc] sm:%s674] %v1041
        %v1043 = vld [vmem:[%s681 + $0x2d0] sm:%s674]
        %1044 = vst [vmem:[%s682 + $0x2d0] sm:%s674] %v1043
        %v1045 = vld [vmem:[%s681 + $0x2d8] sm:%s674]
        %1046 = vst [vmem:[%s682 + $0x2d4] sm:%s674] %v1045
        %v1047 = vld [vmem:[%s681 + $0x2d4] sm:%s674]
        %1048 = vst [vmem:[%s682 + $0x2d8] sm:%s674] %v1047
        %v1049 = vld [vmem:[%s681 + $0x2dc] sm:%s674]
        %1050 = vst [vmem:[%s682 + $0x2dc] sm:%s674] %v1049
        %v1051 = vld [vmem:[%s681 + $0x2e0] sm:%s674]
        %1052 = vst [vmem:[%s682 + $0x2e0] sm:%s674] %v1051
        %v1053 = vld [vmem:[%s681 + $0x2e8] sm:%s674]
        %1054 = vst [vmem:[%s682 + $0x2e4] sm:%s674] %v1053
        %v1055 = vld [vmem:[%s681 + $0x2e4] sm:%s674]
        %1056 = vst [vmem:[%s682 + $0x2e8] sm:%s674] %v1055
        %v1057 = vld [vmem:[%s681 + $0x2ec] sm:%s674]
        %1058 = vst [vmem:[%s682 + $0x2ec] sm:%s674] %v1057
        %v1059 = vld [vmem:[%s681 + $0x2f0] sm:%s674]
        %1060 = vst [vmem:[%s682 + $0x2f0] sm:%s674] %v1059
        %v1061 = vld [vmem:[%s681 + $0x2f8] sm:%s674]
        %1062 = vst [vmem:[%s682 + $0x2f4] sm:%s674] %v1061
        %v1063 = vld [vmem:[%s681 + $0x2f4] sm:%s674]
        %1064 = vst [vmem:[%s682 + $0x2f8] sm:%s674] %v1063
        %v1065 = vld [vmem:[%s681 + $0x2fc] sm:%s674]
        %1066 = vst [vmem:[%s682 + $0x2fc] sm:%s674] %v1065
        %v1067 = vld [vmem:[%s681 + $0x300] sm:%s674]
        %1068 = vst [vmem:[%s682 + $0x300] sm:%s674] %v1067
        %v1069 = vld [vmem:[%s681 + $0x308] sm:%s674]
        %1070 = vst [vmem:[%s682 + $0x304] sm:%s674] %v1069
        %v1071 = vld [vmem:[%s681 + $0x304] sm:%s674]
        %1072 = vst [vmem:[%s682 + $0x308] sm:%s674] %v1071
        %v1073 = vld [vmem:[%s681 + $0x30c] sm:%s674]
        %1074 = vst [vmem:[%s682 + $0x30c] sm:%s674] %v1073
        %v1075 = vld [vmem:[%s681 + $0x310] sm:%s674]
        %1076 = vst [vmem:[%s682 + $0x310] sm:%s674] %v1075
        %v1077 = vld [vmem:[%s681 + $0x318] sm:%s674]
        %1078 = vst [vmem:[%s682 + $0x314] sm:%s674] %v1077
        %v1079 = vld [vmem:[%s681 + $0x314] sm:%s674]
        %1080 = vst [vmem:[%s682 + $0x318] sm:%s674] %v1079
        %v1081 = vld [vmem:[%s681 + $0x31c] sm:%s674]
        %1082 = vst [vmem:[%s682 + $0x31c] sm:%s674] %v1081
        %v1083 = vld [vmem:[%s681 + $0x320] sm:%s674]
        %1084 = vst [vmem:[%s682 + $0x320] sm:%s674] %v1083
        %v1085 = vld [vmem:[%s681 + $0x328] sm:%s674]
        %1086 = vst [vmem:[%s682 + $0x324] sm:%s674] %v1085
        %v1087 = vld [vmem:[%s681 + $0x324] sm:%s674]
        %1088 = vst [vmem:[%s682 + $0x328] sm:%s674] %v1087
        %v1089 = vld [vmem:[%s681 + $0x32c] sm:%s674]
        %1090 = vst [vmem:[%s682 + $0x32c] sm:%s674] %v1089
        %v1091 = vld [vmem:[%s681 + $0x330] sm:%s674]
        %1092 = vst [vmem:[%s682 + $0x330] sm:%s674] %v1091
        %v1093 = vld [vmem:[%s681 + $0x338] sm:%s674]
        %1094 = vst [vmem:[%s682 + $0x334] sm:%s674] %v1093
        %v1095 = vld [vmem:[%s681 + $0x334] sm:%s674]
        %1096 = vst [vmem:[%s682 + $0x338] sm:%s674] %v1095
        %v1097 = vld [vmem:[%s681 + $0x33c] sm:%s674]
        %1098 = vst [vmem:[%s682 + $0x33c] sm:%s674] %v1097
        %v1099 = vld [vmem:[%s681 + $0x340] sm:%s674]
        %1100 = vst [vmem:[%s682 + $0x340] sm:%s674] %v1099
        %v1101 = vld [vmem:[%s681 + $0x348] sm:%s674]
        %1102 = vst [vmem:[%s682 + $0x344] sm:%s674] %v1101
        %v1103 = vld [vmem:[%s681 + $0x344] sm:%s674]
        %1104 = vst [vmem:[%s682 + $0x348] sm:%s674] %v1103
        %v1105 = vld [vmem:[%s681 + $0x34c] sm:%s674]
        %1106 = vst [vmem:[%s682 + $0x34c] sm:%s674] %v1105
        %v1107 = vld [vmem:[%s681 + $0x350] sm:%s674]
        %1108 = vst [vmem:[%s682 + $0x350] sm:%s674] %v1107
        %v1109 = vld [vmem:[%s681 + $0x358] sm:%s674]
        %1110 = vst [vmem:[%s682 + $0x354] sm:%s674] %v1109
        %v1111 = vld [vmem:[%s681 + $0x354] sm:%s674]
        %1112 = vst [vmem:[%s682 + $0x358] sm:%s674] %v1111
        %v1113 = vld [vmem:[%s681 + $0x35c] sm:%s674]
        %1114 = vst [vmem:[%s682 + $0x35c] sm:%s674] %v1113
        %v1115 = vld [vmem:[%s681 + $0x360] sm:%s674]
        %1116 = vst [vmem:[%s682 + $0x360] sm:%s674] %v1115
        %v1117 = vld [vmem:[%s681 + $0x368] sm:%s674]
        %1118 = vst [vmem:[%s682 + $0x364] sm:%s674] %v1117
        %v1119 = vld [vmem:[%s681 + $0x364] sm:%s674]
        %1120 = vst [vmem:[%s682 + $0x368] sm:%s674] %v1119
        %v1121 = vld [vmem:[%s681 + $0x36c] sm:%s674]
        %1122 = vst [vmem:[%s682 + $0x36c] sm:%s674] %v1121
        %v1123 = vld [vmem:[%s681 + $0x370] sm:%s674]
        %1124 = vst [vmem:[%s682 + $0x370] sm:%s674] %v1123
        %v1125 = vld [vmem:[%s681 + $0x378] sm:%s674]
        %1126 = vst [vmem:[%s682 + $0x374] sm:%s674] %v1125
        %v1127 = vld [vmem:[%s681 + $0x374] sm:%s674]
        %1128 = vst [vmem:[%s682 + $0x378] sm:%s674] %v1127
        %v1129 = vld [vmem:[%s681 + $0x37c] sm:%s674]
        %1130 = vst [vmem:[%s682 + $0x37c] sm:%s674] %v1129
        %v1131 = vld [vmem:[%s681 + $0x380] sm:%s674]
        %1132 = vst [vmem:[%s682 + $0x380] sm:%s674] %v1131
        %v1133 = vld [vmem:[%s681 + $0x388] sm:%s674]
        %1134 = vst [vmem:[%s682 + $0x384] sm:%s674] %v1133
        %v1135 = vld [vmem:[%s681 + $0x384] sm:%s674]
        %1136 = vst [vmem:[%s682 + $0x388] sm:%s674] %v1135
        %v1137 = vld [vmem:[%s681 + $0x38c] sm:%s674]
        %1138 = vst [vmem:[%s682 + $0x38c] sm:%s674] %v1137
        %v1139 = vld [vmem:[%s681 + $0x390] sm:%s674]
        %1140 = vst [vmem:[%s682 + $0x390] sm:%s674] %v1139
        %v1141 = vld [vmem:[%s681 + $0x398] sm:%s674]
        %1142 = vst [vmem:[%s682 + $0x394] sm:%s674] %v1141
        %v1143 = vld [vmem:[%s681 + $0x394] sm:%s674]
        %1144 = vst [vmem:[%s682 + $0x398] sm:%s674] %v1143
        %v1145 = vld [vmem:[%s681 + $0x39c] sm:%s674]
        %1146 = vst [vmem:[%s682 + $0x39c] sm:%s674] %v1145
        %v1147 = vld [vmem:[%s681 + $0x3a0] sm:%s674]
        %1148 = vst [vmem:[%s682 + $0x3a0] sm:%s674] %v1147
        %v1149 = vld [vmem:[%s681 + $0x3a8] sm:%s674]
        %1150 = vst [vmem:[%s682 + $0x3a4] sm:%s674] %v1149
        %v1151 = vld [vmem:[%s681 + $0x3a4] sm:%s674]
        %1152 = vst [vmem:[%s682 + $0x3a8] sm:%s674] %v1151
        %v1153 = vld [vmem:[%s681 + $0x3ac] sm:%s674]
        %1154 = vst [vmem:[%s682 + $0x3ac] sm:%s674] %v1153
        %v1155 = vld [vmem:[%s681 + $0x3b0] sm:%s674]
        %1156 = vst [vmem:[%s682 + $0x3b0] sm:%s674] %v1155
        %v1157 = vld [vmem:[%s681 + $0x3b8] sm:%s674]
        %1158 = vst [vmem:[%s682 + $0x3b4] sm:%s674] %v1157
        %v1159 = vld [vmem:[%s681 + $0x3b4] sm:%s674]
        %1160 = vst [vmem:[%s682 + $0x3b8] sm:%s674] %v1159
        %v1161 = vld [vmem:[%s681 + $0x3bc] sm:%s674]
        %1162 = vst [vmem:[%s682 + $0x3bc] sm:%s674] %v1161
        %v1163 = vld [vmem:[%s681 + $0x3c0] sm:%s674]
        %1164 = vst [vmem:[%s682 + $0x3c0] sm:%s674] %v1163
        %v1165 = vld [vmem:[%s681 + $0x3c8] sm:%s674]
        %1166 = vst [vmem:[%s682 + $0x3c4] sm:%s674] %v1165
        %v1167 = vld [vmem:[%s681 + $0x3c4] sm:%s674]
        %1168 = vst [vmem:[%s682 + $0x3c8] sm:%s674] %v1167
        %v1169 = vld [vmem:[%s681 + $0x3cc] sm:%s674]
        %1170 = vst [vmem:[%s682 + $0x3cc] sm:%s674] %v1169
        %v1171 = vld [vmem:[%s681 + $0x3d0] sm:%s674]
        %1172 = vst [vmem:[%s682 + $0x3d0] sm:%s674] %v1171
        %v1173 = vld [vmem:[%s681 + $0x3d8] sm:%s674]
        %1174 = vst [vmem:[%s682 + $0x3d4] sm:%s674] %v1173
        %v1175 = vld [vmem:[%s681 + $0x3d4] sm:%s674]
        %1176 = vst [vmem:[%s682 + $0x3d8] sm:%s674] %v1175
        %v1177 = vld [vmem:[%s681 + $0x3dc] sm:%s674]
        %1178 = vst [vmem:[%s682 + $0x3dc] sm:%s674] %v1177
        %v1179 = vld [vmem:[%s681 + $0x3e0] sm:%s674]
        %1180 = vst [vmem:[%s682 + $0x3e0] sm:%s674] %v1179
        %v1181 = vld [vmem:[%s681 + $0x3e8] sm:%s674]
        %1182 = vst [vmem:[%s682 + $0x3e4] sm:%s674] %v1181
        %v1183 = vld [vmem:[%s681 + $0x3e4] sm:%s674]
        %1184 = vst [vmem:[%s682 + $0x3e8] sm:%s674] %v1183
        %v1185 = vld [vmem:[%s681 + $0x3ec] sm:%s674]
        %1186 = vst [vmem:[%s682 + $0x3ec] sm:%s674] %v1185
        %v1187 = vld [vmem:[%s681 + $0x3f0] sm:%s674]
        %1188 = vst [vmem:[%s682 + $0x3f0] sm:%s674] %v1187
        %v1189 = vld [vmem:[%s681 + $0x3f8] sm:%s674]
        %1190 = vst [vmem:[%s682 + $0x3f4] sm:%s674] %v1189
        %v1191 = vld [vmem:[%s681 + $0x3f4] sm:%s674]
        %1192 = vst [vmem:[%s682 + $0x3f8] sm:%s674] %v1191
        %v1193 = vld [vmem:[%s681 + $0x3fc] sm:%s674]
        %1194 = vst [vmem:[%s682 + $0x3fc] sm:%s674] %v1193
        %v1195 = vld [vmem:[%s681 + $0x400] sm:%s674]
        %1196 = vst [vmem:[%s682 + $0x400] sm:%s674] %v1195
        %v1197 = vld [vmem:[%s681 + $0x408] sm:%s674]
        %1198 = vst [vmem:[%s682 + $0x404] sm:%s674] %v1197
        %v1199 = vld [vmem:[%s681 + $0x404] sm:%s674]
        %1200 = vst [vmem:[%s682 + $0x408] sm:%s674] %v1199
        %v1201 = vld [vmem:[%s681 + $0x40c] sm:%s674]
        %1202 = vst [vmem:[%s682 + $0x40c] sm:%s674] %v1201
        %v1203 = vld [vmem:[%s681 + $0x410] sm:%s674]
        %1204 = vst [vmem:[%s682 + $0x410] sm:%s674] %v1203
        %v1205 = vld [vmem:[%s681 + $0x418] sm:%s674]
        %1206 = vst [vmem:[%s682 + $0x414] sm:%s674] %v1205
        %v1207 = vld [vmem:[%s681 + $0x414] sm:%s674]
        %1208 = vst [vmem:[%s682 + $0x418] sm:%s674] %v1207
        %v1209 = vld [vmem:[%s681 + $0x41c] sm:%s674]
        %1210 = vst [vmem:[%s682 + $0x41c] sm:%s674] %v1209
        %v1211 = vld [vmem:[%s681 + $0x420] sm:%s674]
        %1212 = vst [vmem:[%s682 + $0x420] sm:%s674] %v1211
        %v1213 = vld [vmem:[%s681 + $0x428] sm:%s674]
        %1214 = vst [vmem:[%s682 + $0x424] sm:%s674] %v1213
        %v1215 = vld [vmem:[%s681 + $0x424] sm:%s674]
        %1216 = vst [vmem:[%s682 + $0x428] sm:%s674] %v1215
        %v1217 = vld [vmem:[%s681 + $0x42c] sm:%s674]
        %1218 = vst [vmem:[%s682 + $0x42c] sm:%s674] %v1217
        %v1219 = vld [vmem:[%s681 + $0x430] sm:%s674]
        %1220 = vst [vmem:[%s682 + $0x430] sm:%s674] %v1219
        %v1221 = vld [vmem:[%s681 + $0x438] sm:%s674]
        %1222 = vst [vmem:[%s682 + $0x434] sm:%s674] %v1221
        %v1223 = vld [vmem:[%s681 + $0x434] sm:%s674]
        %1224 = vst [vmem:[%s682 + $0x438] sm:%s674] %v1223
        %v1225 = vld [vmem:[%s681 + $0x43c] sm:%s674]
        %1226 = vst [vmem:[%s682 + $0x43c] sm:%s674] %v1225
        %v1227 = vld [vmem:[%s681 + $0x440] sm:%s674]
        %1228 = vst [vmem:[%s682 + $0x440] sm:%s674] %v1227
        %v1229 = vld [vmem:[%s681 + $0x448] sm:%s674]
        %1230 = vst [vmem:[%s682 + $0x444] sm:%s674] %v1229
        %v1231 = vld [vmem:[%s681 + $0x444] sm:%s674]
        %1232 = vst [vmem:[%s682 + $0x448] sm:%s674] %v1231
        %v1233 = vld [vmem:[%s681 + $0x44c] sm:%s674]
        %1234 = vst [vmem:[%s682 + $0x44c] sm:%s674] %v1233
        %v1235 = vld [vmem:[%s681 + $0x450] sm:%s674]
        %1236 = vst [vmem:[%s682 + $0x450] sm:%s674] %v1235
        %v1237 = vld [vmem:[%s681 + $0x458] sm:%s674]
        %1238 = vst [vmem:[%s682 + $0x454] sm:%s674] %v1237
        %v1239 = vld [vmem:[%s681 + $0x454] sm:%s674]
        %1240 = vst [vmem:[%s682 + $0x458] sm:%s674] %v1239
        %v1241 = vld [vmem:[%s681 + $0x45c] sm:%s674]
        %1242 = vst [vmem:[%s682 + $0x45c] sm:%s674] %v1241
        %v1243 = vld [vmem:[%s681 + $0x460] sm:%s674]
        %1244 = vst [vmem:[%s682 + $0x460] sm:%s674] %v1243
        %v1245 = vld [vmem:[%s681 + $0x468] sm:%s674]
        %1246 = vst [vmem:[%s682 + $0x464] sm:%s674] %v1245
        %v1247 = vld [vmem:[%s681 + $0x464] sm:%s674]
        %1248 = vst [vmem:[%s682 + $0x468] sm:%s674] %v1247
        %v1249 = vld [vmem:[%s681 + $0x46c] sm:%s674]
        %1250 = vst [vmem:[%s682 + $0x46c] sm:%s674] %v1249
        %v1251 = vld [vmem:[%s681 + $0x470] sm:%s674]
        %1252 = vst [vmem:[%s682 + $0x470] sm:%s674] %v1251
        %v1253 = vld [vmem:[%s681 + $0x478] sm:%s674]
        %1254 = vst [vmem:[%s682 + $0x474] sm:%s674] %v1253
        %v1255 = vld [vmem:[%s681 + $0x474] sm:%s674]
        %1256 = vst [vmem:[%s682 + $0x478] sm:%s674] %v1255
        %v1257 = vld [vmem:[%s681 + $0x47c] sm:%s674]
        %1258 = vst [vmem:[%s682 + $0x47c] sm:%s674] %v1257
      $region104: #{conv_input_model.1} parent=91 // loop_footer
        %s680 = sadd.s32 1, %s676
      $region105: #{conv_input_model.1} parent=91 // loop_footer_branch
        %675 = sbr.rel target = $region101
      $region106: #{conv_input_model.1} parent=91 // loop_exit
        _
    $region92: #{conv_input_model.1} parent=76 // pred_fallthru
      _
  $region77: #{conv_input_model.1} parent=0 // pred_fallthru
    _
  // Predicated region
  $region78: #{conv_input_model.1} parent=0 // pred_check
    %p68 = pneg %p64
  $region79: #{conv_input_model.1} parent=0 // pred_check_branch
    %70 = sbr.rel (%p68) target = $region81
  $region80: #{conv_input_model.1} parent=0 // pred_region
    %s71 = sshllo.u32 0, 4
    loop: start=0, step=1, limit=1
    $region82: #{conv_input_model.1} parent=80 // loop_pre_header
      _
    $region83: #{conv_input_model.1} parent=80 // loop_header
      %s73 = sphi 0, %s77
      %p74 = scmp.ge.s32.totalorder %s73, 1
      %s78 = sphi %s2, %s2
      %s79 = sphi [#allocation2], [#allocation2]
    $region84: #{conv_input_model.1} parent=80 // loop_header_branch
      %76 = sbr.rel (%p74) target = $region88
    $region85: #{conv_input_model.1} parent=80 // loop_body
      %v80 = vld [vmem:[%s78] sm:%s71]
      %81 = vst [vmem:[%s79] sm:%s71] %v80
      %v82 = vld [vmem:[%s78 + $0x8] sm:%s71]
      %83 = vst [vmem:[%s79 + $0x4] sm:%s71] %v82
      %v84 = vld [vmem:[%s78 + $0x4] sm:%s71]
      %85 = vst [vmem:[%s79 + $0x8] sm:%s71] %v84
      %v86 = vld [vmem:[%s78 + $0xc] sm:%s71]
      %87 = vst [vmem:[%s79 + $0xc] sm:%s71] %v86
      %v88 = vld [vmem:[%s78 + $0x10] sm:%s71]
      %89 = vst [vmem:[%s79 + $0x10] sm:%s71] %v88
      %v90 = vld [vmem:[%s78 + $0x18] sm:%s71]
      %91 = vst [vmem:[%s79 + $0x14] sm:%s71] %v90
      %v92 = vld [vmem:[%s78 + $0x14] sm:%s71]
      %93 = vst [vmem:[%s79 + $0x18] sm:%s71] %v92
      %v94 = vld [vmem:[%s78 + $0x1c] sm:%s71]
      %95 = vst [vmem:[%s79 + $0x1c] sm:%s71] %v94
      %v96 = vld [vmem:[%s78 + $0x20] sm:%s71]
      %97 = vst [vmem:[%s79 + $0x20] sm:%s71] %v96
      %v98 = vld [vmem:[%s78 + $0x28] sm:%s71]
      %99 = vst [vmem:[%s79 + $0x24] sm:%s71] %v98
      %v100 = vld [vmem:[%s78 + $0x24] sm:%s71]
      %101 = vst [vmem:[%s79 + $0x28] sm:%s71] %v100
      %v102 = vld [vmem:[%s78 + $0x2c] sm:%s71]
      %103 = vst [vmem:[%s79 + $0x2c] sm:%s71] %v102
      %v104 = vld [vmem:[%s78 + $0x30] sm:%s71]
      %105 = vst [vmem:[%s79 + $0x30] sm:%s71] %v104
      %v106 = vld [vmem:[%s78 + $0x38] sm:%s71]
      %107 = vst [vmem:[%s79 + $0x34] sm:%s71] %v106
      %v108 = vld [vmem:[%s78 + $0x34] sm:%s71]
      %109 = vst [vmem:[%s79 + $0x38] sm:%s71] %v108
      %v110 = vld [vmem:[%s78 + $0x3c] sm:%s71]
      %111 = vst [vmem:[%s79 + $0x3c] sm:%s71] %v110
      %v112 = vld [vmem:[%s78 + $0x40] sm:%s71]
      %113 = vst [vmem:[%s79 + $0x40] sm:%s71] %v112
      %v114 = vld [vmem:[%s78 + $0x48] sm:%s71]
      %115 = vst [vmem:[%s79 + $0x44] sm:%s71] %v114
      %v116 = vld [vmem:[%s78 + $0x44] sm:%s71]
      %117 = vst [vmem:[%s79 + $0x48] sm:%s71] %v116
      %v118 = vld [vmem:[%s78 + $0x4c] sm:%s71]
      %119 = vst [vmem:[%s79 + $0x4c] sm:%s71] %v118
      %v120 = vld [vmem:[%s78 + $0x50] sm:%s71]
      %121 = vst [vmem:[%s79 + $0x50] sm:%s71] %v120
      %v122 = vld [vmem:[%s78 + $0x58] sm:%s71]
      %123 = vst [vmem:[%s79 + $0x54] sm:%s71] %v122
      %v124 = vld [vmem:[%s78 + $0x54] sm:%s71]
      %125 = vst [vmem:[%s79 + $0x58] sm:%s71] %v124
      %v126 = vld [vmem:[%s78 + $0x5c] sm:%s71]
      %127 = vst [vmem:[%s79 + $0x5c] sm:%s71] %v126
      %v128 = vld [vmem:[%s78 + $0x60] sm:%s71]
      %129 = vst [vmem:[%s79 + $0x60] sm:%s71] %v128
      %v130 = vld [vmem:[%s78 + $0x68] sm:%s71]
      %131 = vst [vmem:[%s79 + $0x64] sm:%s71] %v130
      %v132 = vld [vmem:[%s78 + $0x64] sm:%s71]
      %133 = vst [vmem:[%s79 + $0x68] sm:%s71] %v132
      %v134 = vld [vmem:[%s78 + $0x6c] sm:%s71]
      %135 = vst [vmem:[%s79 + $0x6c] sm:%s71] %v134
      %v136 = vld [vmem:[%s78 + $0x70] sm:%s71]
      %137 = vst [vmem:[%s79 + $0x70] sm:%s71] %v136
      %v138 = vld [vmem:[%s78 + $0x78] sm:%s71]
      %139 = vst [vmem:[%s79 + $0x74] sm:%s71] %v138
      %v140 = vld [vmem:[%s78 + $0x74] sm:%s71]
      %141 = vst [vmem:[%s79 + $0x78] sm:%s71] %v140
      %v142 = vld [vmem:[%s78 + $0x7c] sm:%s71]
      %143 = vst [vmem:[%s79 + $0x7c] sm:%s71] %v142
      %v144 = vld [vmem:[%s78 + $0x80] sm:%s71]
      %145 = vst [vmem:[%s79 + $0x80] sm:%s71] %v144
      %v146 = vld [vmem:[%s78 + $0x88] sm:%s71]
      %147 = vst [vmem:[%s79 + $0x84] sm:%s71] %v146
      %v148 = vld [vmem:[%s78 + $0x84] sm:%s71]
      %149 = vst [vmem:[%s79 + $0x88] sm:%s71] %v148
      %v150 = vld [vmem:[%s78 + $0x8c] sm:%s71]
      %151 = vst [vmem:[%s79 + $0x8c] sm:%s71] %v150
      %v152 = vld [vmem:[%s78 + $0x90] sm:%s71]
      %153 = vst [vmem:[%s79 + $0x90] sm:%s71] %v152
      %v154 = vld [vmem:[%s78 + $0x98] sm:%s71]
      %155 = vst [vmem:[%s79 + $0x94] sm:%s71] %v154
      %v156 = vld [vmem:[%s78 + $0x94] sm:%s71]
      %157 = vst [vmem:[%s79 + $0x98] sm:%s71] %v156
      %v158 = vld [vmem:[%s78 + $0x9c] sm:%s71]
      %159 = vst [vmem:[%s79 + $0x9c] sm:%s71] %v158
      %v160 = vld [vmem:[%s78 + $0xa0] sm:%s71]
      %161 = vst [vmem:[%s79 + $0xa0] sm:%s71] %v160
      %v162 = vld [vmem:[%s78 + $0xa8] sm:%s71]
      %163 = vst [vmem:[%s79 + $0xa4] sm:%s71] %v162
      %v164 = vld [vmem:[%s78 + $0xa4] sm:%s71]
      %165 = vst [vmem:[%s79 + $0xa8] sm:%s71] %v164
      %v166 = vld [vmem:[%s78 + $0xac] sm:%s71]
      %167 = vst [vmem:[%s79 + $0xac] sm:%s71] %v166
      %v168 = vld [vmem:[%s78 + $0xb0] sm:%s71]
      %169 = vst [vmem:[%s79 + $0xb0] sm:%s71] %v168
      %v170 = vld [vmem:[%s78 + $0xb8] sm:%s71]
      %171 = vst [vmem:[%s79 + $0xb4] sm:%s71] %v170
      %v172 = vld [vmem:[%s78 + $0xb4] sm:%s71]
      %173 = vst [vmem:[%s79 + $0xb8] sm:%s71] %v172
      %v174 = vld [vmem:[%s78 + $0xbc] sm:%s71]
      %175 = vst [vmem:[%s79 + $0xbc] sm:%s71] %v174
      %v176 = vld [vmem:[%s78 + $0xc0] sm:%s71]
      %177 = vst [vmem:[%s79 + $0xc0] sm:%s71] %v176
      %v178 = vld [vmem:[%s78 + $0xc8] sm:%s71]
      %179 = vst [vmem:[%s79 + $0xc4] sm:%s71] %v178
      %v180 = vld [vmem:[%s78 + $0xc4] sm:%s71]
      %181 = vst [vmem:[%s79 + $0xc8] sm:%s71] %v180
      %v182 = vld [vmem:[%s78 + $0xcc] sm:%s71]
      %183 = vst [vmem:[%s79 + $0xcc] sm:%s71] %v182
      %v184 = vld [vmem:[%s78 + $0xd0] sm:%s71]
      %185 = vst [vmem:[%s79 + $0xd0] sm:%s71] %v184
      %v186 = vld [vmem:[%s78 + $0xd8] sm:%s71]
      %187 = vst [vmem:[%s79 + $0xd4] sm:%s71] %v186
      %v188 = vld [vmem:[%s78 + $0xd4] sm:%s71]
      %189 = vst [vmem:[%s79 + $0xd8] sm:%s71] %v188
      %v190 = vld [vmem:[%s78 + $0xdc] sm:%s71]
      %191 = vst [vmem:[%s79 + $0xdc] sm:%s71] %v190
      %v192 = vld [vmem:[%s78 + $0xe0] sm:%s71]
      %193 = vst [vmem:[%s79 + $0xe0] sm:%s71] %v192
      %v194 = vld [vmem:[%s78 + $0xe8] sm:%s71]
      %195 = vst [vmem:[%s79 + $0xe4] sm:%s71] %v194
      %v196 = vld [vmem:[%s78 + $0xe4] sm:%s71]
      %197 = vst [vmem:[%s79 + $0xe8] sm:%s71] %v196
      %v198 = vld [vmem:[%s78 + $0xec] sm:%s71]
      %199 = vst [vmem:[%s79 + $0xec] sm:%s71] %v198
      %v200 = vld [vmem:[%s78 + $0xf0] sm:%s71]
      %201 = vst [vmem:[%s79 + $0xf0] sm:%s71] %v200
      %v202 = vld [vmem:[%s78 + $0xf8] sm:%s71]
      %203 = vst [vmem:[%s79 + $0xf4] sm:%s71] %v202
      %v204 = vld [vmem:[%s78 + $0xf4] sm:%s71]
      %205 = vst [vmem:[%s79 + $0xf8] sm:%s71] %v204
      %v206 = vld [vmem:[%s78 + $0xfc] sm:%s71]
      %207 = vst [vmem:[%s79 + $0xfc] sm:%s71] %v206
      %v208 = vld [vmem:[%s78 + $0x100] sm:%s71]
      %209 = vst [vmem:[%s79 + $0x100] sm:%s71] %v208
      %v210 = vld [vmem:[%s78 + $0x108] sm:%s71]
      %211 = vst [vmem:[%s79 + $0x104] sm:%s71] %v210
      %v212 = vld [vmem:[%s78 + $0x104] sm:%s71]
      %213 = vst [vmem:[%s79 + $0x108] sm:%s71] %v212
      %v214 = vld [vmem:[%s78 + $0x10c] sm:%s71]
      %215 = vst [vmem:[%s79 + $0x10c] sm:%s71] %v214
      %v216 = vld [vmem:[%s78 + $0x110] sm:%s71]
      %217 = vst [vmem:[%s79 + $0x110] sm:%s71] %v216
      %v218 = vld [vmem:[%s78 + $0x118] sm:%s71]
      %219 = vst [vmem:[%s79 + $0x114] sm:%s71] %v218
      %v220 = vld [vmem:[%s78 + $0x114] sm:%s71]
      %221 = vst [vmem:[%s79 + $0x118] sm:%s71] %v220
      %v222 = vld [vmem:[%s78 + $0x11c] sm:%s71]
      %223 = vst [vmem:[%s79 + $0x11c] sm:%s71] %v222
      %v224 = vld [vmem:[%s78 + $0x120] sm:%s71]
      %225 = vst [vmem:[%s79 + $0x120] sm:%s71] %v224
      %v226 = vld [vmem:[%s78 + $0x128] sm:%s71]
      %227 = vst [vmem:[%s79 + $0x124] sm:%s71] %v226
      %v228 = vld [vmem:[%s78 + $0x124] sm:%s71]
      %229 = vst [vmem:[%s79 + $0x128] sm:%s71] %v228
      %v230 = vld [vmem:[%s78 + $0x12c] sm:%s71]
      %231 = vst [vmem:[%s79 + $0x12c] sm:%s71] %v230
      %v232 = vld [vmem:[%s78 + $0x130] sm:%s71]
      %233 = vst [vmem:[%s79 + $0x130] sm:%s71] %v232
      %v234 = vld [vmem:[%s78 + $0x138] sm:%s71]
      %235 = vst [vmem:[%s79 + $0x134] sm:%s71] %v234
      %v236 = vld [vmem:[%s78 + $0x134] sm:%s71]
      %237 = vst [vmem:[%s79 + $0x138] sm:%s71] %v236
      %v238 = vld [vmem:[%s78 + $0x13c] sm:%s71]
      %239 = vst [vmem:[%s79 + $0x13c] sm:%s71] %v238
      %v240 = vld [vmem:[%s78 + $0x140] sm:%s71]
      %241 = vst [vmem:[%s79 + $0x140] sm:%s71] %v240
      %v242 = vld [vmem:[%s78 + $0x148] sm:%s71]
      %243 = vst [vmem:[%s79 + $0x144] sm:%s71] %v242
      %v244 = vld [vmem:[%s78 + $0x144] sm:%s71]
      %245 = vst [vmem:[%s79 + $0x148] sm:%s71] %v244
      %v246 = vld [vmem:[%s78 + $0x14c] sm:%s71]
      %247 = vst [vmem:[%s79 + $0x14c] sm:%s71] %v246
      %v248 = vld [vmem:[%s78 + $0x150] sm:%s71]
      %249 = vst [vmem:[%s79 + $0x150] sm:%s71] %v248
      %v250 = vld [vmem:[%s78 + $0x158] sm:%s71]
      %251 = vst [vmem:[%s79 + $0x154] sm:%s71] %v250
      %v252 = vld [vmem:[%s78 + $0x154] sm:%s71]
      %253 = vst [vmem:[%s79 + $0x158] sm:%s71] %v252
      %v254 = vld [vmem:[%s78 + $0x15c] sm:%s71]
      %255 = vst [vmem:[%s79 + $0x15c] sm:%s71] %v254
      %v256 = vld [vmem:[%s78 + $0x160] sm:%s71]
      %257 = vst [vmem:[%s79 + $0x160] sm:%s71] %v256
      %v258 = vld [vmem:[%s78 + $0x168] sm:%s71]
      %259 = vst [vmem:[%s79 + $0x164] sm:%s71] %v258
      %v260 = vld [vmem:[%s78 + $0x164] sm:%s71]
      %261 = vst [vmem:[%s79 + $0x168] sm:%s71] %v260
      %v262 = vld [vmem:[%s78 + $0x16c] sm:%s71]
      %263 = vst [vmem:[%s79 + $0x16c] sm:%s71] %v262
      %v264 = vld [vmem:[%s78 + $0x170] sm:%s71]
      %265 = vst [vmem:[%s79 + $0x170] sm:%s71] %v264
      %v266 = vld [vmem:[%s78 + $0x178] sm:%s71]
      %267 = vst [vmem:[%s79 + $0x174] sm:%s71] %v266
      %v268 = vld [vmem:[%s78 + $0x174] sm:%s71]
      %269 = vst [vmem:[%s79 + $0x178] sm:%s71] %v268
      %v270 = vld [vmem:[%s78 + $0x17c] sm:%s71]
      %271 = vst [vmem:[%s79 + $0x17c] sm:%s71] %v270
      %v272 = vld [vmem:[%s78 + $0x180] sm:%s71]
      %273 = vst [vmem:[%s79 + $0x180] sm:%s71] %v272
      %v274 = vld [vmem:[%s78 + $0x188] sm:%s71]
      %275 = vst [vmem:[%s79 + $0x184] sm:%s71] %v274
      %v276 = vld [vmem:[%s78 + $0x184] sm:%s71]
      %277 = vst [vmem:[%s79 + $0x188] sm:%s71] %v276
      %v278 = vld [vmem:[%s78 + $0x18c] sm:%s71]
      %279 = vst [vmem:[%s79 + $0x18c] sm:%s71] %v278
      %v280 = vld [vmem:[%s78 + $0x190] sm:%s71]
      %281 = vst [vmem:[%s79 + $0x190] sm:%s71] %v280
      %v282 = vld [vmem:[%s78 + $0x198] sm:%s71]
      %283 = vst [vmem:[%s79 + $0x194] sm:%s71] %v282
      %v284 = vld [vmem:[%s78 + $0x194] sm:%s71]
      %285 = vst [vmem:[%s79 + $0x198] sm:%s71] %v284
      %v286 = vld [vmem:[%s78 + $0x19c] sm:%s71]
      %287 = vst [vmem:[%s79 + $0x19c] sm:%s71] %v286
      %v288 = vld [vmem:[%s78 + $0x1a0] sm:%s71]
      %289 = vst [vmem:[%s79 + $0x1a0] sm:%s71] %v288
      %v290 = vld [vmem:[%s78 + $0x1a8] sm:%s71]
      %291 = vst [vmem:[%s79 + $0x1a4] sm:%s71] %v290
      %v292 = vld [vmem:[%s78 + $0x1a4] sm:%s71]
      %293 = vst [vmem:[%s79 + $0x1a8] sm:%s71] %v292
      %v294 = vld [vmem:[%s78 + $0x1ac] sm:%s71]
      %295 = vst [vmem:[%s79 + $0x1ac] sm:%s71] %v294
      %v296 = vld [vmem:[%s78 + $0x1b0] sm:%s71]
      %297 = vst [vmem:[%s79 + $0x1b0] sm:%s71] %v296
      %v298 = vld [vmem:[%s78 + $0x1b8] sm:%s71]
      %299 = vst [vmem:[%s79 + $0x1b4] sm:%s71] %v298
      %v300 = vld [vmem:[%s78 + $0x1b4] sm:%s71]
      %301 = vst [vmem:[%s79 + $0x1b8] sm:%s71] %v300
      %v302 = vld [vmem:[%s78 + $0x1bc] sm:%s71]
      %303 = vst [vmem:[%s79 + $0x1bc] sm:%s71] %v302
      %v304 = vld [vmem:[%s78 + $0x1c0] sm:%s71]
      %305 = vst [vmem:[%s79 + $0x1c0] sm:%s71] %v304
      %v306 = vld [vmem:[%s78 + $0x1c8] sm:%s71]
      %307 = vst [vmem:[%s79 + $0x1c4] sm:%s71] %v306
      %v308 = vld [vmem:[%s78 + $0x1c4] sm:%s71]
      %309 = vst [vmem:[%s79 + $0x1c8] sm:%s71] %v308
      %v310 = vld [vmem:[%s78 + $0x1cc] sm:%s71]
      %311 = vst [vmem:[%s79 + $0x1cc] sm:%s71] %v310
      %v312 = vld [vmem:[%s78 + $0x1d0] sm:%s71]
      %313 = vst [vmem:[%s79 + $0x1d0] sm:%s71] %v312
      %v314 = vld [vmem:[%s78 + $0x1d8] sm:%s71]
      %315 = vst [vmem:[%s79 + $0x1d4] sm:%s71] %v314
      %v316 = vld [vmem:[%s78 + $0x1d4] sm:%s71]
      %317 = vst [vmem:[%s79 + $0x1d8] sm:%s71] %v316
      %v318 = vld [vmem:[%s78 + $0x1dc] sm:%s71]
      %319 = vst [vmem:[%s79 + $0x1dc] sm:%s71] %v318
      %v320 = vld [vmem:[%s78 + $0x1e0] sm:%s71]
      %321 = vst [vmem:[%s79 + $0x1e0] sm:%s71] %v320
      %v322 = vld [vmem:[%s78 + $0x1e8] sm:%s71]
      %323 = vst [vmem:[%s79 + $0x1e4] sm:%s71] %v322
      %v324 = vld [vmem:[%s78 + $0x1e4] sm:%s71]
      %325 = vst [vmem:[%s79 + $0x1e8] sm:%s71] %v324
      %v326 = vld [vmem:[%s78 + $0x1ec] sm:%s71]
      %327 = vst [vmem:[%s79 + $0x1ec] sm:%s71] %v326
      %v328 = vld [vmem:[%s78 + $0x1f0] sm:%s71]
      %329 = vst [vmem:[%s79 + $0x1f0] sm:%s71] %v328
      %v330 = vld [vmem:[%s78 + $0x1f8] sm:%s71]
      %331 = vst [vmem:[%s79 + $0x1f4] sm:%s71] %v330
      %v332 = vld [vmem:[%s78 + $0x1f4] sm:%s71]
      %333 = vst [vmem:[%s79 + $0x1f8] sm:%s71] %v332
      %v334 = vld [vmem:[%s78 + $0x1fc] sm:%s71]
      %335 = vst [vmem:[%s79 + $0x1fc] sm:%s71] %v334
      %v336 = vld [vmem:[%s78 + $0x200] sm:%s71]
      %337 = vst [vmem:[%s79 + $0x200] sm:%s71] %v336
      %v338 = vld [vmem:[%s78 + $0x208] sm:%s71]
      %339 = vst [vmem:[%s79 + $0x204] sm:%s71] %v338
      %v340 = vld [vmem:[%s78 + $0x204] sm:%s71]
      %341 = vst [vmem:[%s79 + $0x208] sm:%s71] %v340
      %v342 = vld [vmem:[%s78 + $0x20c] sm:%s71]
      %343 = vst [vmem:[%s79 + $0x20c] sm:%s71] %v342
      %v344 = vld [vmem:[%s78 + $0x210] sm:%s71]
      %345 = vst [vmem:[%s79 + $0x210] sm:%s71] %v344
      %v346 = vld [vmem:[%s78 + $0x218] sm:%s71]
      %347 = vst [vmem:[%s79 + $0x214] sm:%s71] %v346
      %v348 = vld [vmem:[%s78 + $0x214] sm:%s71]
      %349 = vst [vmem:[%s79 + $0x218] sm:%s71] %v348
      %v350 = vld [vmem:[%s78 + $0x21c] sm:%s71]
      %351 = vst [vmem:[%s79 + $0x21c] sm:%s71] %v350
      %v352 = vld [vmem:[%s78 + $0x220] sm:%s71]
      %353 = vst [vmem:[%s79 + $0x220] sm:%s71] %v352
      %v354 = vld [vmem:[%s78 + $0x228] sm:%s71]
      %355 = vst [vmem:[%s79 + $0x224] sm:%s71] %v354
      %v356 = vld [vmem:[%s78 + $0x224] sm:%s71]
      %357 = vst [vmem:[%s79 + $0x228] sm:%s71] %v356
      %v358 = vld [vmem:[%s78 + $0x22c] sm:%s71]
      %359 = vst [vmem:[%s79 + $0x22c] sm:%s71] %v358
      %v360 = vld [vmem:[%s78 + $0x230] sm:%s71]
      %361 = vst [vmem:[%s79 + $0x230] sm:%s71] %v360
      %v362 = vld [vmem:[%s78 + $0x238] sm:%s71]
      %363 = vst [vmem:[%s79 + $0x234] sm:%s71] %v362
      %v364 = vld [vmem:[%s78 + $0x234] sm:%s71]
      %365 = vst [vmem:[%s79 + $0x238] sm:%s71] %v364
      %v366 = vld [vmem:[%s78 + $0x23c] sm:%s71]
      %367 = vst [vmem:[%s79 + $0x23c] sm:%s71] %v366
      %v368 = vld [vmem:[%s78 + $0x240] sm:%s71]
      %369 = vst [vmem:[%s79 + $0x240] sm:%s71] %v368
      %v370 = vld [vmem:[%s78 + $0x248] sm:%s71]
      %371 = vst [vmem:[%s79 + $0x244] sm:%s71] %v370
      %v372 = vld [vmem:[%s78 + $0x244] sm:%s71]
      %373 = vst [vmem:[%s79 + $0x248] sm:%s71] %v372
      %v374 = vld [vmem:[%s78 + $0x24c] sm:%s71]
      %375 = vst [vmem:[%s79 + $0x24c] sm:%s71] %v374
      %v376 = vld [vmem:[%s78 + $0x250] sm:%s71]
      %377 = vst [vmem:[%s79 + $0x250] sm:%s71] %v376
      %v378 = vld [vmem:[%s78 + $0x258] sm:%s71]
      %379 = vst [vmem:[%s79 + $0x254] sm:%s71] %v378
      %v380 = vld [vmem:[%s78 + $0x254] sm:%s71]
      %381 = vst [vmem:[%s79 + $0x258] sm:%s71] %v380
      %v382 = vld [vmem:[%s78 + $0x25c] sm:%s71]
      %383 = vst [vmem:[%s79 + $0x25c] sm:%s71] %v382
      %v384 = vld [vmem:[%s78 + $0x260] sm:%s71]
      %385 = vst [vmem:[%s79 + $0x260] sm:%s71] %v384
      %v386 = vld [vmem:[%s78 + $0x268] sm:%s71]
      %387 = vst [vmem:[%s79 + $0x264] sm:%s71] %v386
      %v388 = vld [vmem:[%s78 + $0x264] sm:%s71]
      %389 = vst [vmem:[%s79 + $0x268] sm:%s71] %v388
      %v390 = vld [vmem:[%s78 + $0x26c] sm:%s71]
      %391 = vst [vmem:[%s79 + $0x26c] sm:%s71] %v390
      %v392 = vld [vmem:[%s78 + $0x270] sm:%s71]
      %393 = vst [vmem:[%s79 + $0x270] sm:%s71] %v392
      %v394 = vld [vmem:[%s78 + $0x278] sm:%s71]
      %395 = vst [vmem:[%s79 + $0x274] sm:%s71] %v394
      %v396 = vld [vmem:[%s78 + $0x274] sm:%s71]
      %397 = vst [vmem:[%s79 + $0x278] sm:%s71] %v396
      %v398 = vld [vmem:[%s78 + $0x27c] sm:%s71]
      %399 = vst [vmem:[%s79 + $0x27c] sm:%s71] %v398
      %v400 = vld [vmem:[%s78 + $0x280] sm:%s71]
      %401 = vst [vmem:[%s79 + $0x280] sm:%s71] %v400
      %v402 = vld [vmem:[%s78 + $0x288] sm:%s71]
      %403 = vst [vmem:[%s79 + $0x284] sm:%s71] %v402
      %v404 = vld [vmem:[%s78 + $0x284] sm:%s71]
      %405 = vst [vmem:[%s79 + $0x288] sm:%s71] %v404
      %v406 = vld [vmem:[%s78 + $0x28c] sm:%s71]
      %407 = vst [vmem:[%s79 + $0x28c] sm:%s71] %v406
      %v408 = vld [vmem:[%s78 + $0x290] sm:%s71]
      %409 = vst [vmem:[%s79 + $0x290] sm:%s71] %v408
      %v410 = vld [vmem:[%s78 + $0x298] sm:%s71]
      %411 = vst [vmem:[%s79 + $0x294] sm:%s71] %v410
      %v412 = vld [vmem:[%s78 + $0x294] sm:%s71]
      %413 = vst [vmem:[%s79 + $0x298] sm:%s71] %v412
      %v414 = vld [vmem:[%s78 + $0x29c] sm:%s71]
      %415 = vst [vmem:[%s79 + $0x29c] sm:%s71] %v414
      %v416 = vld [vmem:[%s78 + $0x2a0] sm:%s71]
      %417 = vst [vmem:[%s79 + $0x2a0] sm:%s71] %v416
      %v418 = vld [vmem:[%s78 + $0x2a8] sm:%s71]
      %419 = vst [vmem:[%s79 + $0x2a4] sm:%s71] %v418
      %v420 = vld [vmem:[%s78 + $0x2a4] sm:%s71]
      %421 = vst [vmem:[%s79 + $0x2a8] sm:%s71] %v420
      %v422 = vld [vmem:[%s78 + $0x2ac] sm:%s71]
      %423 = vst [vmem:[%s79 + $0x2ac] sm:%s71] %v422
      %v424 = vld [vmem:[%s78 + $0x2b0] sm:%s71]
      %425 = vst [vmem:[%s79 + $0x2b0] sm:%s71] %v424
      %v426 = vld [vmem:[%s78 + $0x2b8] sm:%s71]
      %427 = vst [vmem:[%s79 + $0x2b4] sm:%s71] %v426
      %v428 = vld [vmem:[%s78 + $0x2b4] sm:%s71]
      %429 = vst [vmem:[%s79 + $0x2b8] sm:%s71] %v428
      %v430 = vld [vmem:[%s78 + $0x2bc] sm:%s71]
      %431 = vst [vmem:[%s79 + $0x2bc] sm:%s71] %v430
      %v432 = vld [vmem:[%s78 + $0x2c0] sm:%s71]
      %433 = vst [vmem:[%s79 + $0x2c0] sm:%s71] %v432
      %v434 = vld [vmem:[%s78 + $0x2c8] sm:%s71]
      %435 = vst [vmem:[%s79 + $0x2c4] sm:%s71] %v434
      %v436 = vld [vmem:[%s78 + $0x2c4] sm:%s71]
      %437 = vst [vmem:[%s79 + $0x2c8] sm:%s71] %v436
      %v438 = vld [vmem:[%s78 + $0x2cc] sm:%s71]
      %439 = vst [vmem:[%s79 + $0x2cc] sm:%s71] %v438
      %v440 = vld [vmem:[%s78 + $0x2d0] sm:%s71]
      %441 = vst [vmem:[%s79 + $0x2d0] sm:%s71] %v440
      %v442 = vld [vmem:[%s78 + $0x2d8] sm:%s71]
      %443 = vst [vmem:[%s79 + $0x2d4] sm:%s71] %v442
      %v444 = vld [vmem:[%s78 + $0x2d4] sm:%s71]
      %445 = vst [vmem:[%s79 + $0x2d8] sm:%s71] %v444
      %v446 = vld [vmem:[%s78 + $0x2dc] sm:%s71]
      %447 = vst [vmem:[%s79 + $0x2dc] sm:%s71] %v446
      %v448 = vld [vmem:[%s78 + $0x2e0] sm:%s71]
      %449 = vst [vmem:[%s79 + $0x2e0] sm:%s71] %v448
      %v450 = vld [vmem:[%s78 + $0x2e8] sm:%s71]
      %451 = vst [vmem:[%s79 + $0x2e4] sm:%s71] %v450
      %v452 = vld [vmem:[%s78 + $0x2e4] sm:%s71]
      %453 = vst [vmem:[%s79 + $0x2e8] sm:%s71] %v452
      %v454 = vld [vmem:[%s78 + $0x2ec] sm:%s71]
      %455 = vst [vmem:[%s79 + $0x2ec] sm:%s71] %v454
      %v456 = vld [vmem:[%s78 + $0x2f0] sm:%s71]
      %457 = vst [vmem:[%s79 + $0x2f0] sm:%s71] %v456
      %v458 = vld [vmem:[%s78 + $0x2f8] sm:%s71]
      %459 = vst [vmem:[%s79 + $0x2f4] sm:%s71] %v458
      %v460 = vld [vmem:[%s78 + $0x2f4] sm:%s71]
      %461 = vst [vmem:[%s79 + $0x2f8] sm:%s71] %v460
      %v462 = vld [vmem:[%s78 + $0x2fc] sm:%s71]
      %463 = vst [vmem:[%s79 + $0x2fc] sm:%s71] %v462
      %v464 = vld [vmem:[%s78 + $0x300] sm:%s71]
      %465 = vst [vmem:[%s79 + $0x300] sm:%s71] %v464
      %v466 = vld [vmem:[%s78 + $0x308] sm:%s71]
      %467 = vst [vmem:[%s79 + $0x304] sm:%s71] %v466
      %v468 = vld [vmem:[%s78 + $0x304] sm:%s71]
      %469 = vst [vmem:[%s79 + $0x308] sm:%s71] %v468
      %v470 = vld [vmem:[%s78 + $0x30c] sm:%s71]
      %471 = vst [vmem:[%s79 + $0x30c] sm:%s71] %v470
      %v472 = vld [vmem:[%s78 + $0x310] sm:%s71]
      %473 = vst [vmem:[%s79 + $0x310] sm:%s71] %v472
      %v474 = vld [vmem:[%s78 + $0x318] sm:%s71]
      %475 = vst [vmem:[%s79 + $0x314] sm:%s71] %v474
      %v476 = vld [vmem:[%s78 + $0x314] sm:%s71]
      %477 = vst [vmem:[%s79 + $0x318] sm:%s71] %v476
      %v478 = vld [vmem:[%s78 + $0x31c] sm:%s71]
      %479 = vst [vmem:[%s79 + $0x31c] sm:%s71] %v478
      %v480 = vld [vmem:[%s78 + $0x320] sm:%s71]
      %481 = vst [vmem:[%s79 + $0x320] sm:%s71] %v480
      %v482 = vld [vmem:[%s78 + $0x328] sm:%s71]
      %483 = vst [vmem:[%s79 + $0x324] sm:%s71] %v482
      %v484 = vld [vmem:[%s78 + $0x324] sm:%s71]
      %485 = vst [vmem:[%s79 + $0x328] sm:%s71] %v484
      %v486 = vld [vmem:[%s78 + $0x32c] sm:%s71]
      %487 = vst [vmem:[%s79 + $0x32c] sm:%s71] %v486
      %v488 = vld [vmem:[%s78 + $0x330] sm:%s71]
      %489 = vst [vmem:[%s79 + $0x330] sm:%s71] %v488
      %v490 = vld [vmem:[%s78 + $0x338] sm:%s71]
      %491 = vst [vmem:[%s79 + $0x334] sm:%s71] %v490
      %v492 = vld [vmem:[%s78 + $0x334] sm:%s71]
      %493 = vst [vmem:[%s79 + $0x338] sm:%s71] %v492
      %v494 = vld [vmem:[%s78 + $0x33c] sm:%s71]
      %495 = vst [vmem:[%s79 + $0x33c] sm:%s71] %v494
      %v496 = vld [vmem:[%s78 + $0x340] sm:%s71]
      %497 = vst [vmem:[%s79 + $0x340] sm:%s71] %v496
      %v498 = vld [vmem:[%s78 + $0x348] sm:%s71]
      %499 = vst [vmem:[%s79 + $0x344] sm:%s71] %v498
      %v500 = vld [vmem:[%s78 + $0x344] sm:%s71]
      %501 = vst [vmem:[%s79 + $0x348] sm:%s71] %v500
      %v502 = vld [vmem:[%s78 + $0x34c] sm:%s71]
      %503 = vst [vmem:[%s79 + $0x34c] sm:%s71] %v502
      %v504 = vld [vmem:[%s78 + $0x350] sm:%s71]
      %505 = vst [vmem:[%s79 + $0x350] sm:%s71] %v504
      %v506 = vld [vmem:[%s78 + $0x358] sm:%s71]
      %507 = vst [vmem:[%s79 + $0x354] sm:%s71] %v506
      %v508 = vld [vmem:[%s78 + $0x354] sm:%s71]
      %509 = vst [vmem:[%s79 + $0x358] sm:%s71] %v508
      %v510 = vld [vmem:[%s78 + $0x35c] sm:%s71]
      %511 = vst [vmem:[%s79 + $0x35c] sm:%s71] %v510
      %v512 = vld [vmem:[%s78 + $0x360] sm:%s71]
      %513 = vst [vmem:[%s79 + $0x360] sm:%s71] %v512
      %v514 = vld [vmem:[%s78 + $0x368] sm:%s71]
      %515 = vst [vmem:[%s79 + $0x364] sm:%s71] %v514
      %v516 = vld [vmem:[%s78 + $0x364] sm:%s71]
      %517 = vst [vmem:[%s79 + $0x368] sm:%s71] %v516
      %v518 = vld [vmem:[%s78 + $0x36c] sm:%s71]
      %519 = vst [vmem:[%s79 + $0x36c] sm:%s71] %v518
      %v520 = vld [vmem:[%s78 + $0x370] sm:%s71]
      %521 = vst [vmem:[%s79 + $0x370] sm:%s71] %v520
      %v522 = vld [vmem:[%s78 + $0x378] sm:%s71]
      %523 = vst [vmem:[%s79 + $0x374] sm:%s71] %v522
      %v524 = vld [vmem:[%s78 + $0x374] sm:%s71]
      %525 = vst [vmem:[%s79 + $0x378] sm:%s71] %v524
      %v526 = vld [vmem:[%s78 + $0x37c] sm:%s71]
      %527 = vst [vmem:[%s79 + $0x37c] sm:%s71] %v526
      %v528 = vld [vmem:[%s78 + $0x380] sm:%s71]
      %529 = vst [vmem:[%s79 + $0x380] sm:%s71] %v528
      %v530 = vld [vmem:[%s78 + $0x388] sm:%s71]
      %531 = vst [vmem:[%s79 + $0x384] sm:%s71] %v530
      %v532 = vld [vmem:[%s78 + $0x384] sm:%s71]
      %533 = vst [vmem:[%s79 + $0x388] sm:%s71] %v532
      %v534 = vld [vmem:[%s78 + $0x38c] sm:%s71]
      %535 = vst [vmem:[%s79 + $0x38c] sm:%s71] %v534
      %v536 = vld [vmem:[%s78 + $0x390] sm:%s71]
      %537 = vst [vmem:[%s79 + $0x390] sm:%s71] %v536
      %v538 = vld [vmem:[%s78 + $0x398] sm:%s71]
      %539 = vst [vmem:[%s79 + $0x394] sm:%s71] %v538
      %v540 = vld [vmem:[%s78 + $0x394] sm:%s71]
      %541 = vst [vmem:[%s79 + $0x398] sm:%s71] %v540
      %v542 = vld [vmem:[%s78 + $0x39c] sm:%s71]
      %543 = vst [vmem:[%s79 + $0x39c] sm:%s71] %v542
      %v544 = vld [vmem:[%s78 + $0x3a0] sm:%s71]
      %545 = vst [vmem:[%s79 + $0x3a0] sm:%s71] %v544
      %v546 = vld [vmem:[%s78 + $0x3a8] sm:%s71]
      %547 = vst [vmem:[%s79 + $0x3a4] sm:%s71] %v546
      %v548 = vld [vmem:[%s78 + $0x3a4] sm:%s71]
      %549 = vst [vmem:[%s79 + $0x3a8] sm:%s71] %v548
      %v550 = vld [vmem:[%s78 + $0x3ac] sm:%s71]
      %551 = vst [vmem:[%s79 + $0x3ac] sm:%s71] %v550
      %v552 = vld [vmem:[%s78 + $0x3b0] sm:%s71]
      %553 = vst [vmem:[%s79 + $0x3b0] sm:%s71] %v552
      %v554 = vld [vmem:[%s78 + $0x3b8] sm:%s71]
      %555 = vst [vmem:[%s79 + $0x3b4] sm:%s71] %v554
      %v556 = vld [vmem:[%s78 + $0x3b4] sm:%s71]
      %557 = vst [vmem:[%s79 + $0x3b8] sm:%s71] %v556
      %v558 = vld [vmem:[%s78 + $0x3bc] sm:%s71]
      %559 = vst [vmem:[%s79 + $0x3bc] sm:%s71] %v558
      %v560 = vld [vmem:[%s78 + $0x3c0] sm:%s71]
      %561 = vst [vmem:[%s79 + $0x3c0] sm:%s71] %v560
      %v562 = vld [vmem:[%s78 + $0x3c8] sm:%s71]
      %563 = vst [vmem:[%s79 + $0x3c4] sm:%s71] %v562
      %v564 = vld [vmem:[%s78 + $0x3c4] sm:%s71]
      %565 = vst [vmem:[%s79 + $0x3c8] sm:%s71] %v564
      %v566 = vld [vmem:[%s78 + $0x3cc] sm:%s71]
      %567 = vst [vmem:[%s79 + $0x3cc] sm:%s71] %v566
      %v568 = vld [vmem:[%s78 + $0x3d0] sm:%s71]
      %569 = vst [vmem:[%s79 + $0x3d0] sm:%s71] %v568
      %v570 = vld [vmem:[%s78 + $0x3d8] sm:%s71]
      %571 = vst [vmem:[%s79 + $0x3d4] sm:%s71] %v570
      %v572 = vld [vmem:[%s78 + $0x3d4] sm:%s71]
      %573 = vst [vmem:[%s79 + $0x3d8] sm:%s71] %v572
      %v574 = vld [vmem:[%s78 + $0x3dc] sm:%s71]
      %575 = vst [vmem:[%s79 + $0x3dc] sm:%s71] %v574
      %v576 = vld [vmem:[%s78 + $0x3e0] sm:%s71]
      %577 = vst [vmem:[%s79 + $0x3e0] sm:%s71] %v576
      %v578 = vld [vmem:[%s78 + $0x3e8] sm:%s71]
      %579 = vst [vmem:[%s79 + $0x3e4] sm:%s71] %v578
      %v580 = vld [vmem:[%s78 + $0x3e4] sm:%s71]
      %581 = vst [vmem:[%s79 + $0x3e8] sm:%s71] %v580
      %v582 = vld [vmem:[%s78 + $0x3ec] sm:%s71]
      %583 = vst [vmem:[%s79 + $0x3ec] sm:%s71] %v582
      %v584 = vld [vmem:[%s78 + $0x3f0] sm:%s71]
      %585 = vst [vmem:[%s79 + $0x3f0] sm:%s71] %v584
      %v586 = vld [vmem:[%s78 + $0x3f8] sm:%s71]
      %587 = vst [vmem:[%s79 + $0x3f4] sm:%s71] %v586
      %v588 = vld [vmem:[%s78 + $0x3f4] sm:%s71]
      %589 = vst [vmem:[%s79 + $0x3f8] sm:%s71] %v588
      %v590 = vld [vmem:[%s78 + $0x3fc] sm:%s71]
      %591 = vst [vmem:[%s79 + $0x3fc] sm:%s71] %v590
      %v592 = vld [vmem:[%s78 + $0x400] sm:%s71]
      %593 = vst [vmem:[%s79 + $0x400] sm:%s71] %v592
      %v594 = vld [vmem:[%s78 + $0x408] sm:%s71]
      %595 = vst [vmem:[%s79 + $0x404] sm:%s71] %v594
      %v596 = vld [vmem:[%s78 + $0x404] sm:%s71]
      %597 = vst [vmem:[%s79 + $0x408] sm:%s71] %v596
      %v598 = vld [vmem:[%s78 + $0x40c] sm:%s71]
      %599 = vst [vmem:[%s79 + $0x40c] sm:%s71] %v598
      %v600 = vld [vmem:[%s78 + $0x410] sm:%s71]
      %601 = vst [vmem:[%s79 + $0x410] sm:%s71] %v600
      %v602 = vld [vmem:[%s78 + $0x418] sm:%s71]
      %603 = vst [vmem:[%s79 + $0x414] sm:%s71] %v602
      %v604 = vld [vmem:[%s78 + $0x414] sm:%s71]
      %605 = vst [vmem:[%s79 + $0x418] sm:%s71] %v604
      %v606 = vld [vmem:[%s78 + $0x41c] sm:%s71]
      %607 = vst [vmem:[%s79 + $0x41c] sm:%s71] %v606
      %v608 = vld [vmem:[%s78 + $0x420] sm:%s71]
      %609 = vst [vmem:[%s79 + $0x420] sm:%s71] %v608
      %v610 = vld [vmem:[%s78 + $0x428] sm:%s71]
      %611 = vst [vmem:[%s79 + $0x424] sm:%s71] %v610
      %v612 = vld [vmem:[%s78 + $0x424] sm:%s71]
      %613 = vst [vmem:[%s79 + $0x428] sm:%s71] %v612
      %v614 = vld [vmem:[%s78 + $0x42c] sm:%s71]
      %615 = vst [vmem:[%s79 + $0x42c] sm:%s71] %v614
      %v616 = vld [vmem:[%s78 + $0x430] sm:%s71]
      %617 = vst [vmem:[%s79 + $0x430] sm:%s71] %v616
      %v618 = vld [vmem:[%s78 + $0x438] sm:%s71]
      %619 = vst [vmem:[%s79 + $0x434] sm:%s71] %v618
      %v620 = vld [vmem:[%s78 + $0x434] sm:%s71]
      %621 = vst [vmem:[%s79 + $0x438] sm:%s71] %v620
      %v622 = vld [vmem:[%s78 + $0x43c] sm:%s71]
      %623 = vst [vmem:[%s79 + $0x43c] sm:%s71] %v622
      %v624 = vld [vmem:[%s78 + $0x440] sm:%s71]
      %625 = vst [vmem:[%s79 + $0x440] sm:%s71] %v624
      %v626 = vld [vmem:[%s78 + $0x448] sm:%s71]
      %627 = vst [vmem:[%s79 + $0x444] sm:%s71] %v626
      %v628 = vld [vmem:[%s78 + $0x444] sm:%s71]
      %629 = vst [vmem:[%s79 + $0x448] sm:%s71] %v628
      %v630 = vld [vmem:[%s78 + $0x44c] sm:%s71]
      %631 = vst [vmem:[%s79 + $0x44c] sm:%s71] %v630
      %v632 = vld [vmem:[%s78 + $0x450] sm:%s71]
      %633 = vst [vmem:[%s79 + $0x450] sm:%s71] %v632
      %v634 = vld [vmem:[%s78 + $0x458] sm:%s71]
      %635 = vst [vmem:[%s79 + $0x454] sm:%s71] %v634
      %v636 = vld [vmem:[%s78 + $0x454] sm:%s71]
      %637 = vst [vmem:[%s79 + $0x458] sm:%s71] %v636
      %v638 = vld [vmem:[%s78 + $0x45c] sm:%s71]
      %639 = vst [vmem:[%s79 + $0x45c] sm:%s71] %v638
      %v640 = vld [vmem:[%s78 + $0x460] sm:%s71]
      %641 = vst [vmem:[%s79 + $0x460] sm:%s71] %v640
      %v642 = vld [vmem:[%s78 + $0x468] sm:%s71]
      %643 = vst [vmem:[%s79 + $0x464] sm:%s71] %v642
      %v644 = vld [vmem:[%s78 + $0x464] sm:%s71]
      %645 = vst [vmem:[%s79 + $0x468] sm:%s71] %v644
      %v646 = vld [vmem:[%s78 + $0x46c] sm:%s71]
      %647 = vst [vmem:[%s79 + $0x46c] sm:%s71] %v646
      %v648 = vld [vmem:[%s78 + $0x470] sm:%s71]
      %649 = vst [vmem:[%s79 + $0x470] sm:%s71] %v648
      %v650 = vld [vmem:[%s78 + $0x478] sm:%s71]
      %651 = vst [vmem:[%s79 + $0x474] sm:%s71] %v650
      %v652 = vld [vmem:[%s78 + $0x474] sm:%s71]
      %653 = vst [vmem:[%s79 + $0x478] sm:%s71] %v652
      %v654 = vld [vmem:[%s78 + $0x47c] sm:%s71]
      %655 = vst [vmem:[%s79 + $0x47c] sm:%s71] %v654
    $region86: #{conv_input_model.1} parent=80 // loop_footer
      %s77 = sadd.s32 1, %s73
    $region87: #{conv_input_model.1} parent=80 // loop_footer_branch
      %72 = sbr.rel target = $region83
    $region88: #{conv_input_model.1} parent=80 // loop_exit
      _
  $region81: #{conv_input_model.1} parent=0 // pred_fallthru
    _
  // Predicated region
  $region107: #{conv_input_model.1} parent=0 // pred_check
    _
  $region108: #{conv_input_model.1} parent=0 // pred_check_branch
    %1261 = sbr.rel (0) target = $region110
  $region109: #{conv_input_model.1} parent=0 // pred_region
    %1262 = vsyncadd [#allocation5], 18432
  $region110: #{conv_input_model.1} parent=0 // pred_fallthru
    _
  %s1263 = scalar_lea.sflag [#allocation5], 1
  %p1265 = scmp.lt.u32.totalorder 288, 8
  %p1266 = pneg %p1265
  // Predicated region
  $region111: #{conv_input_model.1} parent=0 // pred_check
    _
  $region112: #{conv_input_model.1} parent=0 // pred_check_branch
    %1268 = sbr.rel (%p1265) target = $region114
  $region113: #{conv_input_model.1} parent=0 // pred_region
    %s1283 = sand.u32 288, 7
    %p1284 = scmp.eq.s32.totalorder %s1283, 0
    // Predicated region
    $region126: #{conv_input_model.1} parent=113 // pred_check
      %p1285 = pneg %p1284
    $region127: #{conv_input_model.1} parent=113 // pred_check_branch
      %1287 = sbr.rel (%p1285) target = $region129
    $region128: #{conv_input_model.1} parent=113 // pred_region
      loop: start=0, step=1, limit=1
      $region130: #{conv_input_model.1} parent=128 // loop_pre_header
        _
      $region131: #{conv_input_model.1} parent=128 // loop_header
        %s1289 = sphi 0, %s1293
        %p1290 = scmp.ge.s32.totalorder %s1289, 1
        %s1294 = sphi %s3, %s3
        %s1295 = sphi [#allocation3], [#allocation3]
      $region132: #{conv_input_model.1} parent=128 // loop_header_branch
        %1292 = sbr.rel (%p1290) target = $region136
      $region133: #{conv_input_model.1} parent=128 // loop_body
        %v1296 = vld [vmem:[%s1294] sm:$0xff]
        %1297 = vst [vmem:[%s1295] sm:$0xff] %v1296
        %v1298 = vld [vmem:[%s1294 + $0x8] sm:$0xff]
        %1299 = vst [vmem:[%s1295 + $0x8] sm:$0xff] %v1298
        %v1300 = vld [vmem:[%s1294 + $0x10] sm:$0xff]
        %1301 = vst [vmem:[%s1295 + $0x10] sm:$0xff] %v1300
        %v1302 = vld [vmem:[%s1294 + $0x18] sm:$0xff]
        %1303 = vst [vmem:[%s1295 + $0x18] sm:$0xff] %v1302
        %v1304 = vld [vmem:[%s1294 + $0x20] sm:$0xff]
        %1305 = vst [vmem:[%s1295 + $0x20] sm:$0xff] %v1304
        %v1306 = vld [vmem:[%s1294 + $0x28] sm:$0xff]
        %1307 = vst [vmem:[%s1295 + $0x28] sm:$0xff] %v1306
        %v1308 = vld [vmem:[%s1294 + $0x30] sm:$0xff]
        %1309 = vst [vmem:[%s1295 + $0x30] sm:$0xff] %v1308
        %v1310 = vld [vmem:[%s1294 + $0x38] sm:$0xff]
        %1311 = vst [vmem:[%s1295 + $0x38] sm:$0xff] %v1310
        %v1312 = vld [vmem:[%s1294 + $0x40] sm:$0xff]
        %1313 = vst [vmem:[%s1295 + $0x40] sm:$0xff] %v1312
        %v1314 = vld [vmem:[%s1294 + $0x48] sm:$0xff]
        %1315 = vst [vmem:[%s1295 + $0x48] sm:$0xff] %v1314
        %v1316 = vld [vmem:[%s1294 + $0x50] sm:$0xff]
        %1317 = vst [vmem:[%s1295 + $0x50] sm:$0xff] %v1316
        %v1318 = vld [vmem:[%s1294 + $0x58] sm:$0xff]
        %1319 = vst [vmem:[%s1295 + $0x58] sm:$0xff] %v1318
        %v1320 = vld [vmem:[%s1294 + $0x60] sm:$0xff]
        %1321 = vst [vmem:[%s1295 + $0x60] sm:$0xff] %v1320
        %v1322 = vld [vmem:[%s1294 + $0x68] sm:$0xff]
        %1323 = vst [vmem:[%s1295 + $0x68] sm:$0xff] %v1322
        %v1324 = vld [vmem:[%s1294 + $0x70] sm:$0xff]
        %1325 = vst [vmem:[%s1295 + $0x70] sm:$0xff] %v1324
        %v1326 = vld [vmem:[%s1294 + $0x78] sm:$0xff]
        %1327 = vst [vmem:[%s1295 + $0x78] sm:$0xff] %v1326
        %v1328 = vld [vmem:[%s1294 + $0x80] sm:$0xff]
        %1329 = vst [vmem:[%s1295 + $0x80] sm:$0xff] %v1328
        %v1330 = vld [vmem:[%s1294 + $0x88] sm:$0xff]
        %1331 = vst [vmem:[%s1295 + $0x88] sm:$0xff] %v1330
        %v1332 = vld [vmem:[%s1294 + $0x90] sm:$0xff]
        %1333 = vst [vmem:[%s1295 + $0x90] sm:$0xff] %v1332
        %v1334 = vld [vmem:[%s1294 + $0x98] sm:$0xff]
        %1335 = vst [vmem:[%s1295 + $0x98] sm:$0xff] %v1334
        %v1336 = vld [vmem:[%s1294 + $0xa0] sm:$0xff]
        %1337 = vst [vmem:[%s1295 + $0xa0] sm:$0xff] %v1336
        %v1338 = vld [vmem:[%s1294 + $0xa8] sm:$0xff]
        %1339 = vst [vmem:[%s1295 + $0xa8] sm:$0xff] %v1338
        %v1340 = vld [vmem:[%s1294 + $0xb0] sm:$0xff]
        %1341 = vst [vmem:[%s1295 + $0xb0] sm:$0xff] %v1340
        %v1342 = vld [vmem:[%s1294 + $0xb8] sm:$0xff]
        %1343 = vst [vmem:[%s1295 + $0xb8] sm:$0xff] %v1342
        %v1344 = vld [vmem:[%s1294 + $0xc0] sm:$0xff]
        %1345 = vst [vmem:[%s1295 + $0xc0] sm:$0xff] %v1344
        %v1346 = vld [vmem:[%s1294 + $0xc8] sm:$0xff]
        %1347 = vst [vmem:[%s1295 + $0xc8] sm:$0xff] %v1346
        %v1348 = vld [vmem:[%s1294 + $0xd0] sm:$0xff]
        %1349 = vst [vmem:[%s1295 + $0xd0] sm:$0xff] %v1348
        %v1350 = vld [vmem:[%s1294 + $0xd8] sm:$0xff]
        %1351 = vst [vmem:[%s1295 + $0xd8] sm:$0xff] %v1350
        %v1352 = vld [vmem:[%s1294 + $0xe0] sm:$0xff]
        %1353 = vst [vmem:[%s1295 + $0xe0] sm:$0xff] %v1352
        %v1354 = vld [vmem:[%s1294 + $0xe8] sm:$0xff]
        %1355 = vst [vmem:[%s1295 + $0xe8] sm:$0xff] %v1354
        %v1356 = vld [vmem:[%s1294 + $0xf0] sm:$0xff]
        %1357 = vst [vmem:[%s1295 + $0xf0] sm:$0xff] %v1356
        %v1358 = vld [vmem:[%s1294 + $0xf8] sm:$0xff]
        %1359 = vst [vmem:[%s1295 + $0xf8] sm:$0xff] %v1358
        %v1360 = vld [vmem:[%s1294 + $0x100] sm:$0xff]
        %1361 = vst [vmem:[%s1295 + $0x100] sm:$0xff] %v1360
        %v1362 = vld [vmem:[%s1294 + $0x108] sm:$0xff]
        %1363 = vst [vmem:[%s1295 + $0x108] sm:$0xff] %v1362
        %v1364 = vld [vmem:[%s1294 + $0x110] sm:$0xff]
        %1365 = vst [vmem:[%s1295 + $0x110] sm:$0xff] %v1364
        %v1366 = vld [vmem:[%s1294 + $0x118] sm:$0xff]
        %1367 = vst [vmem:[%s1295 + $0x118] sm:$0xff] %v1366
      $region134: #{conv_input_model.1} parent=128 // loop_footer
        %s1293 = sadd.s32 1, %s1289
      $region135: #{conv_input_model.1} parent=128 // loop_footer_branch
        %1288 = sbr.rel target = $region131
      $region136: #{conv_input_model.1} parent=128 // loop_exit
        _
    $region129: #{conv_input_model.1} parent=113 // pred_fallthru
      _
    %p1368 = pneg %p1284
    // Predicated region
    $region137: #{conv_input_model.1} parent=113 // pred_check
      _
    $region138: #{conv_input_model.1} parent=113 // pred_check_branch
      %1370 = sbr.rel (%p1284) target = $region140
    $region139: #{conv_input_model.1} parent=113 // pred_region
      %s1371 = sand.u32 288, 7
    $region140: #{conv_input_model.1} parent=113 // pred_fallthru
      _
  $region114: #{conv_input_model.1} parent=0 // pred_fallthru
    _
  // Predicated region
  $region115: #{conv_input_model.1} parent=0 // pred_check
    %p1269 = pneg %p1265
  $region116: #{conv_input_model.1} parent=0 // pred_check_branch
    %1271 = sbr.rel (%p1269) target = $region118
  $region117: #{conv_input_model.1} parent=0 // pred_region
    %s1272 = sshllo.u32 0, 288
    loop: start=0, step=1, limit=1
    $region119: #{conv_input_model.1} parent=117 // loop_pre_header
      _
    $region120: #{conv_input_model.1} parent=117 // loop_header
      %s1274 = sphi 0, %s1278
      %p1275 = scmp.ge.s32.totalorder %s1274, 1
      %s1279 = sphi %s3, %s3
      %s1280 = sphi [#allocation3], [#allocation3]
    $region121: #{conv_input_model.1} parent=117 // loop_header_branch
      %1277 = sbr.rel (%p1275) target = $region125
    $region122: #{conv_input_model.1} parent=117 // loop_body
      %v1281 = vld [vmem:[%s1279] sm:%s1272]
      %1282 = vst [vmem:[%s1280] sm:%s1272] %v1281
    $region123: #{conv_input_model.1} parent=117 // loop_footer
      %s1278 = sadd.s32 1, %s1274
    $region124: #{conv_input_model.1} parent=117 // loop_footer_branch
      %1273 = sbr.rel target = $region120
    $region125: #{conv_input_model.1} parent=117 // loop_exit
      _
  $region118: #{conv_input_model.1} parent=0 // pred_fallthru
    _
  // Predicated region
  $region141: #{conv_input_model.1} parent=0 // pred_check
    _
  $region142: #{conv_input_model.1} parent=0 // pred_check_branch
    %1374 = sbr.rel (0) target = $region144
  $region143: #{conv_input_model.1} parent=0 // pred_region
    %1375 = vsyncadd %s1263, 4608
  $region144: #{conv_input_model.1} parent=0 // pred_fallthru
    _
  %s1376 = scalar_lea.sflag [#allocation5], 2
  %p1378 = scmp.lt.u32.totalorder 144, 8
  %p1379 = pneg %p1378
  // Predicated region
  $region145: #{conv_input_model.1} parent=0 // pred_check
    _
  $region146: #{conv_input_model.1} parent=0 // pred_check_branch
    %1381 = sbr.rel (%p1378) target = $region148
  $region147: #{conv_input_model.1} parent=0 // pred_region
    %s1396 = sand.u32 144, 7
    %p1397 = scmp.eq.s32.totalorder %s1396, 0
    // Predicated region
    $region160: #{conv_input_model.1} parent=147 // pred_check
      %p1398 = pneg %p1397
    $region161: #{conv_input_model.1} parent=147 // pred_check_branch
      %1400 = sbr.rel (%p1398) target = $region163
    $region162: #{conv_input_model.1} parent=147 // pred_region
      loop: start=0, step=1, limit=1
      $region164: #{conv_input_model.1} parent=162 // loop_pre_header
        _
      $region165: #{conv_input_model.1} parent=162 // loop_header
        %s1402 = sphi 0, %s1406
        %p1403 = scmp.ge.s32.totalorder %s1402, 1
        %s1407 = sphi %s4, %s4
        %s1408 = sphi [#allocation4], [#allocation4]
      $region166: #{conv_input_model.1} parent=162 // loop_header_branch
        %1405 = sbr.rel (%p1403) target = $region170
      $region167: #{conv_input_model.1} parent=162 // loop_body
        %v1409 = vld [vmem:[%s1407] sm:$0xff]
        %1410 = vst [vmem:[%s1408] sm:$0xff] %v1409
        %v1411 = vld [vmem:[%s1407 + $0x8] sm:$0xff]
        %1412 = vst [vmem:[%s1408 + $0x8] sm:$0xff] %v1411
        %v1413 = vld [vmem:[%s1407 + $0x10] sm:$0xff]
        %1414 = vst [vmem:[%s1408 + $0x10] sm:$0xff] %v1413
        %v1415 = vld [vmem:[%s1407 + $0x18] sm:$0xff]
        %1416 = vst [vmem:[%s1408 + $0x18] sm:$0xff] %v1415
        %v1417 = vld [vmem:[%s1407 + $0x20] sm:$0xff]
        %1418 = vst [vmem:[%s1408 + $0x20] sm:$0xff] %v1417
        %v1419 = vld [vmem:[%s1407 + $0x28] sm:$0xff]
        %1420 = vst [vmem:[%s1408 + $0x28] sm:$0xff] %v1419
        %v1421 = vld [vmem:[%s1407 + $0x30] sm:$0xff]
        %1422 = vst [vmem:[%s1408 + $0x30] sm:$0xff] %v1421
        %v1423 = vld [vmem:[%s1407 + $0x38] sm:$0xff]
        %1424 = vst [vmem:[%s1408 + $0x38] sm:$0xff] %v1423
        %v1425 = vld [vmem:[%s1407 + $0x40] sm:$0xff]
        %1426 = vst [vmem:[%s1408 + $0x40] sm:$0xff] %v1425
        %v1427 = vld [vmem:[%s1407 + $0x48] sm:$0xff]
        %1428 = vst [vmem:[%s1408 + $0x48] sm:$0xff] %v1427
        %v1429 = vld [vmem:[%s1407 + $0x50] sm:$0xff]
        %1430 = vst [vmem:[%s1408 + $0x50] sm:$0xff] %v1429
        %v1431 = vld [vmem:[%s1407 + $0x58] sm:$0xff]
        %1432 = vst [vmem:[%s1408 + $0x58] sm:$0xff] %v1431
        %v1433 = vld [vmem:[%s1407 + $0x60] sm:$0xff]
        %1434 = vst [vmem:[%s1408 + $0x60] sm:$0xff] %v1433
        %v1435 = vld [vmem:[%s1407 + $0x68] sm:$0xff]
        %1436 = vst [vmem:[%s1408 + $0x68] sm:$0xff] %v1435
        %v1437 = vld [vmem:[%s1407 + $0x70] sm:$0xff]
        %1438 = vst [vmem:[%s1408 + $0x70] sm:$0xff] %v1437
        %v1439 = vld [vmem:[%s1407 + $0x78] sm:$0xff]
        %1440 = vst [vmem:[%s1408 + $0x78] sm:$0xff] %v1439
        %v1441 = vld [vmem:[%s1407 + $0x80] sm:$0xff]
        %1442 = vst [vmem:[%s1408 + $0x80] sm:$0xff] %v1441
        %v1443 = vld [vmem:[%s1407 + $0x88] sm:$0xff]
        %1444 = vst [vmem:[%s1408 + $0x88] sm:$0xff] %v1443
      $region168: #{conv_input_model.1} parent=162 // loop_footer
        %s1406 = sadd.s32 1, %s1402
      $region169: #{conv_input_model.1} parent=162 // loop_footer_branch
        %1401 = sbr.rel target = $region165
      $region170: #{conv_input_model.1} parent=162 // loop_exit
        _
    $region163: #{conv_input_model.1} parent=147 // pred_fallthru
      _
    %p1445 = pneg %p1397
    // Predicated region
    $region171: #{conv_input_model.1} parent=147 // pred_check
      _
    $region172: #{conv_input_model.1} parent=147 // pred_check_branch
      %1447 = sbr.rel (%p1397) target = $region174
    $region173: #{conv_input_model.1} parent=147 // pred_region
      %s1448 = sand.u32 144, 7
    $region174: #{conv_input_model.1} parent=147 // pred_fallthru
      _
  $region148: #{conv_input_model.1} parent=0 // pred_fallthru
    _
  // Predicated region
  $region149: #{conv_input_model.1} parent=0 // pred_check
    %p1382 = pneg %p1378
  $region150: #{conv_input_model.1} parent=0 // pred_check_branch
    %1384 = sbr.rel (%p1382) target = $region152
  $region151: #{conv_input_model.1} parent=0 // pred_region
    %s1385 = sshllo.u32 0, 144
    loop: start=0, step=1, limit=1
    $region153: #{conv_input_model.1} parent=151 // loop_pre_header
      _
    $region154: #{conv_input_model.1} parent=151 // loop_header
      %s1387 = sphi 0, %s1391
      %p1388 = scmp.ge.s32.totalorder %s1387, 1
      %s1392 = sphi %s4, %s4
      %s1393 = sphi [#allocation4], [#allocation4]
    $region155: #{conv_input_model.1} parent=151 // loop_header_branch
      %1390 = sbr.rel (%p1388) target = $region159
    $region156: #{conv_input_model.1} parent=151 // loop_body
      %v1394 = vld [vmem:[%s1392] sm:%s1385]
      %1395 = vst [vmem:[%s1393] sm:%s1385] %v1394
    $region157: #{conv_input_model.1} parent=151 // loop_footer
      %s1391 = sadd.s32 1, %s1387
    $region158: #{conv_input_model.1} parent=151 // loop_footer_branch
      %1386 = sbr.rel target = $region154
    $region159: #{conv_input_model.1} parent=151 // loop_exit
      _
  $region152: #{conv_input_model.1} parent=0 // pred_fallthru
    _
  // Predicated region
  $region175: #{conv_input_model.1} parent=0 // pred_check
    _
  $region176: #{conv_input_model.1} parent=0 // pred_check_branch
    %1451 = sbr.rel (0) target = $region178
  $region177: #{conv_input_model.1} parent=0 // pred_region
    %1452 = vsyncadd %s1376, 2304
  $region178: #{conv_input_model.1} parent=0 // pred_fallthru
    _
  %v1453 = vld [vmem:[%s0] sm:$0xff]
  %v1454 = vld [vmem:[%s0 + $0x8] sm:$0xff]
  %v1455 = vld [vmem:[%s0 + $0x10] sm:$0xff]
  %v1456 = vld [vmem:[%s0 + $0x18] sm:$0xff]
  %v1457 = vld [vmem:[%s0 + $0x20] sm:$0xff]
  %v1458 = vld [vmem:[%s0 + $0x28] sm:$0xff]
  %v1459 = vld [vmem:[%s0 + $0x30] sm:$0xff]
  %v1460 = vld [vmem:[%s0 + $0x38] sm:$0xff]
  %v1461 = vld [vmem:[%s0 + $0x40] sm:$0xff]
  %v1462 = vld [vmem:[%s0 + $0x48] sm:$0xff]
  %v1463 = vld [vmem:[%s0 + $0x50] sm:$0xff]
  %v1464 = vld [vmem:[%s0 + $0x58] sm:$0xff]
  %v1465 = vld [vmem:[%s0 + $0x60] sm:$0xff]
  %v1466 = vld [vmem:[%s0 + $0x68] sm:$0xff]
  %v1467 = vld [vmem:[%s0 + $0x70] sm:$0xff]
  %v1468 = vld [vmem:[%s0 + $0x78] sm:$0xff]
  %v1469 = vld [vmem:[%s0 + $0x80] sm:$0xff]
  %v1470 = vld [vmem:[%s0 + $0x88] sm:$0xff]
  %v1471 = vld [vmem:[%s0 + $0x90] sm:$0xff]
  %v1472 = vld [vmem:[%s0 + $0x98] sm:$0xff]
  %v1473 = vld [vmem:[%s0 + $0xa0] sm:$0xff]
  %v1474 = vld [vmem:[%s0 + $0xa8] sm:$0xff]
  %v1475 = vld [vmem:[%s0 + $0xb0] sm:$0xff]
  %v1476 = vld [vmem:[%s0 + $0xb8] sm:$0xff]
  %v1477 = vld [vmem:[%s0 + $0xc0] sm:$0xff]
  %v1478 = vld [vmem:[%s0 + $0xc8] sm:$0xff]
  %v1479 = vld [vmem:[%s0 + $0xd0] sm:$0xff]
  %v1480 = vld [vmem:[%s0 + $0xd8] sm:$0xff]
  %v1481 = vld [vmem:[%s0 + $0xe0] sm:$0xff]
  %v1482 = vld [vmem:[%s0 + $0xe8] sm:$0xff]
  %v1483 = vld [vmem:[%s0 + $0xf0] sm:$0xff]
  %v1484 = vld [vmem:[%s0 + $0xf8] sm:$0xff]
  %v1485 = vpack.c.bf16 %v1454, %v1453
  %v1486 = vpack.c.bf16 %v1456, %v1455
  %v1487 = vpack.c.bf16 %v1458, %v1457
  %v1488 = vpack.c.bf16 %v1460, %v1459
  %v1489 = vpack.c.bf16 %v1462, %v1461
  %v1490 = vpack.c.bf16 %v1464, %v1463
  %v1491 = vpack.c.bf16 %v1466, %v1465
  %v1492 = vpack.c.bf16 %v1468, %v1467
  %v1493 = vpack.c.bf16 %v1470, %v1469
  %v1494 = vpack.c.bf16 %v1472, %v1471
  %v1495 = vpack.c.bf16 %v1474, %v1473
  %v1496 = vpack.c.bf16 %v1476, %v1475
  %v1497 = vpack.c.bf16 %v1478, %v1477
  %v1498 = vpack.c.bf16 %v1480, %v1479
  %v1499 = vpack.c.bf16 %v1482, %v1481
  %v1500 = vpack.c.bf16 %v1484, %v1483
  %v1501 = vld [vmem:[%s5] sm:$0xff]
  %v1502 = vld [vmem:[%s5 + $0x8] sm:$0xff]
  %v1503 = vld [vmem:[%s5 + $0x10] sm:$0xff]
  %v1504 = vld [vmem:[%s5 + $0x18] sm:$0xff]
  %v1505 = vld [vmem:[%s5 + $0x20] sm:$0xff]
  %v1506 = vld [vmem:[%s5 + $0x28] sm:$0xff]
  %v1507 = vld [vmem:[%s5 + $0x30] sm:$0xff]
  %v1508 = vld [vmem:[%s5 + $0x38] sm:$0xff]
  %v1509 = vld [vmem:[%s5 + $0x40] sm:$0xff]
  %v1510 = vld [vmem:[%s5 + $0x48] sm:$0xff]
  %v1511 = vld [vmem:[%s5 + $0x50] sm:$0xff]
  %v1512 = vld [vmem:[%s5 + $0x58] sm:$0xff]
  %v1513 = vld [vmem:[%s5 + $0x60] sm:$0xff]
  %v1514 = vld [vmem:[%s5 + $0x68] sm:$0xff]
  %v1515 = vld [vmem:[%s5 + $0x70] sm:$0xff]
  %v1516 = vld [vmem:[%s5 + $0x78] sm:$0xff]
  %v1517 = vld [vmem:[%s5 + $0x80] sm:$0xff]
  %v1518 = vld [vmem:[%s5 + $0x88] sm:$0xff]
  %v1519 = vld [vmem:[%s5 + $0x90] sm:$0xff]
  %v1520 = vld [vmem:[%s5 + $0x98] sm:$0xff]
  %v1521 = vld [vmem:[%s5 + $0xa0] sm:$0xff]
  %v1522 = vld [vmem:[%s5 + $0xa8] sm:$0xff]
  %v1523 = vld [vmem:[%s5 + $0xb0] sm:$0xff]
  %v1524 = vld [vmem:[%s5 + $0xb8] sm:$0xff]
  %v1525 = vld [vmem:[%s5 + $0xc0] sm:$0xff]
  %v1526 = vld [vmem:[%s5 + $0xc8] sm:$0xff]
  %v1527 = vld [vmem:[%s5 + $0xd0] sm:$0xff]
  %v1528 = vld [vmem:[%s5 + $0xd8] sm:$0xff]
  %v1529 = vld [vmem:[%s5 + $0xe0] sm:$0xff]
  %v1530 = vld [vmem:[%s5 + $0xe8] sm:$0xff]
  %v1531 = vld [vmem:[%s5 + $0xf0] sm:$0xff]
  %v1532 = vld [vmem:[%s5 + $0xf8] sm:$0xff]
  %v1533 = vld [vmem:[%s5 + $0x100] sm:$0xff]
  %v1534 = vld [vmem:[%s5 + $0x108] sm:$0xff]
  %v1535 = vld [vmem:[%s5 + $0x110] sm:$0xff]
  %v1536 = vld [vmem:[%s5 + $0x118] sm:$0xff]
  %v1537 = vld [vmem:[%s5 + $0x120] sm:$0xff]
  %v1538 = vld [vmem:[%s5 + $0x128] sm:$0xff]
  %v1539 = vld [vmem:[%s5 + $0x130] sm:$0xff]
  %v1540 = vld [vmem:[%s5 + $0x138] sm:$0xff]
  %v1541 = vld [vmem:[%s5 + $0x140] sm:$0xff]
  %v1542 = vld [vmem:[%s5 + $0x148] sm:$0xff]
  %v1543 = vld [vmem:[%s5 + $0x150] sm:$0xff]
  %v1544 = vld [vmem:[%s5 + $0x158] sm:$0xff]
  %v1545 = vld [vmem:[%s5 + $0x160] sm:$0xff]
  %v1546 = vld [vmem:[%s5 + $0x168] sm:$0xff]
  %v1547 = vld [vmem:[%s5 + $0x170] sm:$0xff]
  %v1548 = vld [vmem:[%s5 + $0x178] sm:$0xff]
  %v1597 = vunpack.c.l.b16 %v1501
  %v1598 = vunpack.c.h.b16 %v1501
  %v1599 = vunpack.c.l.b16 %v1502
  %v1600 = vunpack.c.h.b16 %v1502
  %v1601 = vunpack.c.l.b16 %v1503
  %v1602 = vunpack.c.h.b16 %v1503
  %v1603 = vunpack.c.l.b16 %v1504
  %v1604 = vunpack.c.h.b16 %v1504
  %v1605 = vunpack.c.l.b16 %v1505
  %v1606 = vunpack.c.h.b16 %v1505
  %v1607 = vunpack.c.l.b16 %v1506
  %v1608 = vunpack.c.h.b16 %v1506
  %v1609 = vunpack.c.l.b16 %v1507
  %v1610 = vunpack.c.h.b16 %v1507
  %v1611 = vunpack.c.l.b16 %v1508
  %v1612 = vunpack.c.h.b16 %v1508
  %v1613 = vunpack.c.l.b16 %v1509
  %v1614 = vunpack.c.h.b16 %v1509
  %v1615 = vunpack.c.l.b16 %v1510
  %v1616 = vunpack.c.h.b16 %v1510
  %v1617 = vunpack.c.l.b16 %v1511
  %v1618 = vunpack.c.h.b16 %v1511
  %v1619 = vunpack.c.l.b16 %v1512
  %v1620 = vunpack.c.h.b16 %v1512
  %v1621 = vunpack.c.l.b16 %v1513
  %v1622 = vunpack.c.h.b16 %v1513
  %v1623 = vunpack.c.l.b16 %v1514
  %v1624 = vunpack.c.h.b16 %v1514
  %v1625 = vunpack.c.l.b16 %v1515
  %v1626 = vunpack.c.h.b16 %v1515
  %v1627 = vunpack.c.l.b16 %v1516
  %v1628 = vunpack.c.h.b16 %v1516
  %v1629 = vunpack.c.l.b16 %v1517
  %v1630 = vunpack.c.h.b16 %v1517
  %v1631 = vunpack.c.l.b16 %v1518
  %v1632 = vunpack.c.h.b16 %v1518
  %v1633 = vunpack.c.l.b16 %v1519
  %v1634 = vunpack.c.h.b16 %v1519
  %v1635 = vunpack.c.l.b16 %v1520
  %v1636 = vunpack.c.h.b16 %v1520
  %v1637 = vunpack.c.l.b16 %v1521
  %v1638 = vunpack.c.h.b16 %v1521
  %v1639 = vunpack.c.l.b16 %v1522
  %v1640 = vunpack.c.h.b16 %v1522
  %v1641 = vunpack.c.l.b16 %v1523
  %v1642 = vunpack.c.h.b16 %v1523
  %v1643 = vunpack.c.l.b16 %v1524
  %v1644 = vunpack.c.h.b16 %v1524
  %v1645 = vunpack.c.l.b16 %v1525
  %v1646 = vunpack.c.h.b16 %v1525
  %v1647 = vunpack.c.l.b16 %v1526
  %v1648 = vunpack.c.h.b16 %v1526
  %v1649 = vunpack.c.l.b16 %v1527
  %v1650 = vunpack.c.h.b16 %v1527
  %v1651 = vunpack.c.l.b16 %v1528
  %v1652 = vunpack.c.h.b16 %v1528
  %v1653 = vunpack.c.l.b16 %v1529
  %v1654 = vunpack.c.h.b16 %v1529
  %v1655 = vunpack.c.l.b16 %v1530
  %v1656 = vunpack.c.h.b16 %v1530
  %v1657 = vunpack.c.l.b16 %v1531
  %v1658 = vunpack.c.h.b16 %v1531
  %v1659 = vunpack.c.l.b16 %v1532
  %v1660 = vunpack.c.h.b16 %v1532
  %v1661 = vunpack.c.l.b16 %v1533
  %v1662 = vunpack.c.h.b16 %v1533
  %v1663 = vunpack.c.l.b16 %v1534
  %v1664 = vunpack.c.h.b16 %v1534
  %v1665 = vunpack.c.l.b16 %v1535
  %v1666 = vunpack.c.h.b16 %v1535
  %v1667 = vunpack.c.l.b16 %v1536
  %v1668 = vunpack.c.h.b16 %v1536
  %v1669 = vunpack.c.l.b16 %v1537
  %v1670 = vunpack.c.h.b16 %v1537
  %v1671 = vunpack.c.l.b16 %v1538
  %v1672 = vunpack.c.h.b16 %v1538
  %v1673 = vunpack.c.l.b16 %v1539
  %v1674 = vunpack.c.h.b16 %v1539
  %v1675 = vunpack.c.l.b16 %v1540
  %v1676 = vunpack.c.h.b16 %v1540
  %v1677 = vunpack.c.l.b16 %v1541
  %v1678 = vunpack.c.h.b16 %v1541
  %v1679 = vunpack.c.l.b16 %v1542
  %v1680 = vunpack.c.h.b16 %v1542
  %v1681 = vunpack.c.l.b16 %v1543
  %v1682 = vunpack.c.h.b16 %v1543
  %v1683 = vunpack.c.l.b16 %v1544
  %v1684 = vunpack.c.h.b16 %v1544
  %v1685 = vunpack.c.l.b16 %v1545
  %v1686 = vunpack.c.h.b16 %v1545
  %v1687 = vunpack.c.l.b16 %v1546
  %v1688 = vunpack.c.h.b16 %v1546
  %v1689 = vunpack.c.l.b16 %v1547
  %v1690 = vunpack.c.h.b16 %v1547
  %v1691 = vunpack.c.l.b16 %v1548
  %v1692 = vunpack.c.h.b16 %v1548
  %v1693 = vpack.c.b16 %v1599, %v1597
  %v1694 = vpack.c.b16 %v1600, %v1598
  %v1695 = vpack.c.b16 %v1603, %v1601
  %v1696 = vpack.c.b16 %v1604, %v1602
  %v1697 = vpack.c.b16 %v1607, %v1605
  %v1698 = vpack.c.b16 %v1608, %v1606
  %v1699 = vpack.c.b16 %v1611, %v1609
  %v1700 = vpack.c.b16 %v1612, %v1610
  %v1701 = vpack.c.b16 %v1615, %v1613
  %v1702 = vpack.c.b16 %v1616, %v1614
  %v1703 = vpack.c.b16 %v1619, %v1617
  %v1704 = vpack.c.b16 %v1620, %v1618
  %v1705 = vpack.c.b16 %v1623, %v1621
  %v1706 = vpack.c.b16 %v1624, %v1622
  %v1707 = vpack.c.b16 %v1627, %v1625
  %v1708 = vpack.c.b16 %v1628, %v1626
  %v1709 = vpack.c.b16 %v1631, %v1629
  %v1710 = vpack.c.b16 %v1632, %v1630
  %v1711 = vpack.c.b16 %v1635, %v1633
  %v1712 = vpack.c.b16 %v1636, %v1634
  %v1713 = vpack.c.b16 %v1639, %v1637
  %v1714 = vpack.c.b16 %v1640, %v1638
  %v1715 = vpack.c.b16 %v1643, %v1641
  %v1716 = vpack.c.b16 %v1644, %v1642
  %v1717 = vpack.c.b16 %v1647, %v1645
  %v1718 = vpack.c.b16 %v1648, %v1646
  %v1719 = vpack.c.b16 %v1651, %v1649
  %v1720 = vpack.c.b16 %v1652, %v1650
  %v1721 = vpack.c.b16 %v1655, %v1653
  %v1722 = vpack.c.b16 %v1656, %v1654
  %v1723 = vpack.c.b16 %v1659, %v1657
  %v1724 = vpack.c.b16 %v1660, %v1658
  %v1725 = vpack.c.b16 %v1663, %v1661
  %v1726 = vpack.c.b16 %v1664, %v1662
  %v1727 = vpack.c.b16 %v1667, %v1665
  %v1728 = vpack.c.b16 %v1668, %v1666
  %v1729 = vpack.c.b16 %v1671, %v1669
  %v1730 = vpack.c.b16 %v1672, %v1670
  %v1731 = vpack.c.b16 %v1675, %v1673
  %v1732 = vpack.c.b16 %v1676, %v1674
  %v1733 = vpack.c.b16 %v1679, %v1677
  %v1734 = vpack.c.b16 %v1680, %v1678
  %v1735 = vpack.c.b16 %v1683, %v1681
  %v1736 = vpack.c.b16 %v1684, %v1682
  %v1737 = vpack.c.b16 %v1687, %v1685
  %v1738 = vpack.c.b16 %v1688, %v1686
  %v1739 = vpack.c.b16 %v1691, %v1689
  %v1740 = vpack.c.b16 %v1692, %v1690
  %1789 = vmatprep.subr.bf16.mxu0 0
  %1790 = vmatpush1.bf16.msra.mxu0 %v1485
  %1791 = vmatprep.subr.bf16.mxu0 0
  %1792 = vmatpush1.bf16.msra.mxu0 %v1486
  %1793 = vmatprep.subr.bf16.mxu0 0
  %1794 = vmatpush1.bf16.msra.mxu0 %v1487
  %1795 = vmatprep.subr.bf16.mxu0 0
  %1796 = vmatpush1.bf16.msra.mxu0 %v1488
  %1797 = vmatprep.subr.bf16.mxu0 0
  %1798 = vmatpush1.bf16.msra.mxu0 %v1489
  %1799 = vmatprep.subr.bf16.mxu0 0
  %1800 = vmatpush1.bf16.msra.mxu0 %v1490
  %1801 = vmatprep.subr.bf16.mxu0 0
  %1802 = vmatpush1.bf16.msra.mxu0 %v1491
  %1803 = vmatprep.subr.bf16.mxu0 0
  %1804 = vmatpush1.bf16.msra.mxu0 %v1492
  %1805 = vmatprep.subr.bf16.mxu0 0
  %1806 = vmatpush1.bf16.msra.mxu0 %v1493
  %1807 = vmatprep.subr.bf16.mxu0 0
  %1808 = vmatpush1.bf16.msra.mxu0 %v1494
  %1809 = vmatprep.subr.bf16.mxu0 0
  %1810 = vmatpush1.bf16.msra.mxu0 %v1495
  %1811 = vmatprep.subr.bf16.mxu0 0
  %1812 = vmatpush1.bf16.msra.mxu0 %v1496
  %1813 = vmatprep.subr.bf16.mxu0 0
  %1814 = vmatpush1.bf16.msra.mxu0 %v1497
  %1815 = vmatprep.subr.bf16.mxu0 0
  %1816 = vmatpush1.bf16.msra.mxu0 %v1498
  %1817 = vmatprep.subr.bf16.mxu0 0
  %1818 = vmatpush1.bf16.msra.mxu0 %v1499
  %1819 = vmatprep.subr.bf16.mxu0 0
  %1820 = vmatpush1.bf16.msra.mxu0 %v1500
  %1821 = vmatprep.mubr.bf16.mxu0 %v1694
  %1822 = vmatmul.mubr.bf16.gmra.mrb[0].mxu0 %v1693
  %v1823 = vpop.f32.mrb[0].mxu0
  %v1824 = vadd.f32 0.0, %v1823
  %v1825 = vpop.f32.mrb[0].mxu0
  %v1826 = vpop.f32.mrb[0].mxu0
  %v1827 = vadd.f32 0.0, %v1826
  %v1828 = vpop.f32.mrb[0].mxu0
  %1829 = vmatprep.mubr.bf16.mxu0 %v1696
  %1830 = vmatmul.mubr.bf16.gmra.mrb[0].mxu0 %v1695
  %v1831 = vpop.f32.mrb[0].mxu0
  %v1832 = vadd.f32 0.0, %v1831
  %v1833 = vpop.f32.mrb[0].mxu0
  %v1834 = vpop.f32.mrb[0].mxu0
  %v1835 = vadd.f32 0.0, %v1834
  %v1836 = vpop.f32.mrb[0].mxu0
  %1837 = vmatprep.mubr.bf16.mxu0 %v1698
  %1838 = vmatmul.mubr.bf16.gmra.mrb[0].mxu0 %v1697
  %v1839 = vpop.f32.mrb[0].mxu0
  %v1840 = vadd.f32 0.0, %v1839
  %v1841 = vpop.f32.mrb[0].mxu0
  %v1842 = vpop.f32.mrb[0].mxu0
  %v1843 = vadd.f32 0.0, %v1842
  %v1844 = vpop.f32.mrb[0].mxu0
  %1845 = vmatprep.mubr.bf16.mxu0 %v1700
  %1846 = vmatmul.mubr.bf16.gmra.mrb[0].mxu0 %v1699
  %v1847 = vpop.f32.mrb[0].mxu0
  %v1848 = vadd.f32 0.0, %v1847
  %v1849 = vpop.f32.mrb[0].mxu0
  %v1850 = vpop.f32.mrb[0].mxu0
  %v1851 = vadd.f32 0.0, %v1850
  %v1852 = vpop.f32.mrb[0].mxu0
  %1853 = vmatprep.mubr.bf16.mxu0 %v1702
  %1854 = vmatmul.mubr.bf16.gmra.mrb[0].mxu0 %v1701
  %v1855 = vpop.f32.mrb[0].mxu0
  %v1856 = vadd.f32 0.0, %v1855
  %v1857 = vpop.f32.mrb[0].mxu0
  %v1858 = vpop.f32.mrb[0].mxu0
  %v1859 = vadd.f32 0.0, %v1858
  %v1860 = vpop.f32.mrb[0].mxu0
  %1861 = vmatprep.mubr.bf16.mxu0 %v1704
  %1862 = vmatmul.mubr.bf16.gmra.mrb[0].mxu0 %v1703
  %v1863 = vpop.f32.mrb[0].mxu0
  %v1864 = vadd.f32 0.0, %v1863
  %v1865 = vpop.f32.mrb[0].mxu0
  %v1866 = vpop.f32.mrb[0].mxu0
  %v1867 = vadd.f32 0.0, %v1866
  %v1868 = vpop.f32.mrb[0].mxu0
  %1869 = vmatprep.mubr.bf16.mxu0 %v1706
  %1870 = vmatmul.mubr.bf16.gmra.mrb[0].mxu0 %v1705
  %v1871 = vpop.f32.mrb[0].mxu0
  %v1872 = vadd.f32 0.0, %v1871
  %v1873 = vpop.f32.mrb[0].mxu0
  %v1874 = vpop.f32.mrb[0].mxu0
  %v1875 = vadd.f32 0.0, %v1874
  %v1876 = vpop.f32.mrb[0].mxu0
  %1877 = vmatprep.mubr.bf16.mxu0 %v1708
  %1878 = vmatmul.mubr.bf16.gmra.mrb[0].mxu0 %v1707
  %v1879 = vpop.f32.mrb[0].mxu0
  %v1880 = vadd.f32 0.0, %v1879
  %v1881 = vpop.f32.mrb[0].mxu0
  %v1882 = vpop.f32.mrb[0].mxu0
  %v1883 = vadd.f32 0.0, %v1882
  %v1884 = vpop.f32.mrb[0].mxu0
  %1885 = vmatprep.mubr.bf16.mxu0 %v1710
  %1886 = vmatmul.mubr.bf16.gmra.mrb[0].mxu0 %v1709
  %v1887 = vpop.f32.mrb[0].mxu0
  %v1888 = vadd.f32 0.0, %v1887
  %v1889 = vpop.f32.mrb[0].mxu0
  %v1890 = vpop.f32.mrb[0].mxu0
  %v1891 = vadd.f32 0.0, %v1890
  %v1892 = vpop.f32.mrb[0].mxu0
  %1893 = vmatprep.mubr.bf16.mxu0 %v1712
  %1894 = vmatmul.mubr.bf16.gmra.mrb[0].mxu0 %v1711
  %v1895 = vpop.f32.mrb[0].mxu0
  %v1896 = vadd.f32 0.0, %v1895
  %v1897 = vpop.f32.mrb[0].mxu0
  %v1898 = vpop.f32.mrb[0].mxu0
  %v1899 = vadd.f32 0.0, %v1898
  %v1900 = vpop.f32.mrb[0].mxu0
  %1901 = vmatprep.mubr.bf16.mxu0 %v1714
  %1902 = vmatmul.mubr.bf16.gmra.mrb[0].mxu0 %v1713
  %v1903 = vpop.f32.mrb[0].mxu0
  %v1904 = vadd.f32 0.0, %v1903
  %v1905 = vpop.f32.mrb[0].mxu0
  %v1906 = vpop.f32.mrb[0].mxu0
  %v1907 = vadd.f32 0.0, %v1906
  %v1908 = vpop.f32.mrb[0].mxu0
  %1909 = vmatprep.mubr.bf16.mxu0 %v1716
  %1910 = vmatmul.mubr.bf16.gmra.mrb[0].mxu0 %v1715
  %v1911 = vpop.f32.mrb[0].mxu0
  %v1912 = vadd.f32 0.0, %v1911
  %v1913 = vpop.f32.mrb[0].mxu0
  %v1914 = vpop.f32.mrb[0].mxu0
  %v1915 = vadd.f32 0.0, %v1914
  %v1916 = vpop.f32.mrb[0].mxu0
  %1917 = vmatprep.mubr.bf16.mxu0 %v1718
  %1918 = vmatmul.mubr.bf16.gmra.mrb[0].mxu0 %v1717
  %v1919 = vpop.f32.mrb[0].mxu0
  %v1920 = vadd.f32 0.0, %v1919
  %v1921 = vpop.f32.mrb[0].mxu0
  %v1922 = vpop.f32.mrb[0].mxu0
  %v1923 = vadd.f32 0.0, %v1922
  %v1924 = vpop.f32.mrb[0].mxu0
  %1925 = vmatprep.mubr.bf16.mxu0 %v1720
  %1926 = vmatmul.mubr.bf16.gmra.mrb[0].mxu0 %v1719
  %v1927 = vpop.f32.mrb[0].mxu0
  %v1928 = vadd.f32 0.0, %v1927
  %v1929 = vpop.f32.mrb[0].mxu0
  %v1930 = vpop.f32.mrb[0].mxu0
  %v1931 = vadd.f32 0.0, %v1930
  %v1932 = vpop.f32.mrb[0].mxu0
  %1933 = vmatprep.mubr.bf16.mxu0 %v1722
  %1934 = vmatmul.mubr.bf16.gmra.mrb[0].mxu0 %v1721
  %v1935 = vpop.f32.mrb[0].mxu0
  %v1936 = vadd.f32 0.0, %v1935
  %v1937 = vpop.f32.mrb[0].mxu0
  %v1938 = vpop.f32.mrb[0].mxu0
  %v1939 = vadd.f32 0.0, %v1938
  %v1940 = vpop.f32.mrb[0].mxu0
  %1941 = vmatprep.mubr.bf16.mxu0 %v1724
  %1942 = vmatmul.mubr.bf16.gmra.mrb[0].mxu0 %v1723
  %v1943 = vpop.f32.mrb[0].mxu0
  %v1944 = vadd.f32 0.0, %v1943
  %v1945 = vpop.f32.mrb[0].mxu0
  %v1946 = vpop.f32.mrb[0].mxu0
  %v1947 = vadd.f32 0.0, %v1946
  %v1948 = vpop.f32.mrb[0].mxu0
  %1949 = vmatprep.mubr.bf16.mxu0 %v1726
  %1950 = vmatmul.mubr.bf16.gmra.mrb[0].mxu0 %v1725
  %v1951 = vpop.f32.mrb[0].mxu0
  %v1952 = vadd.f32 0.0, %v1951
  %v1953 = vpop.f32.mrb[0].mxu0
  %v1954 = vpop.f32.mrb[0].mxu0
  %v1955 = vadd.f32 0.0, %v1954
  %v1956 = vpop.f32.mrb[0].mxu0
  %1957 = vmatprep.mubr.bf16.mxu0 %v1728
  %1958 = vmatmul.mubr.bf16.gmra.mrb[0].mxu0 %v1727
  %v1959 = vpop.f32.mrb[0].mxu0
  %v1960 = vadd.f32 0.0, %v1959
  %v1961 = vpop.f32.mrb[0].mxu0
  %v1962 = vpop.f32.mrb[0].mxu0
  %v1963 = vadd.f32 0.0, %v1962
  %v1964 = vpop.f32.mrb[0].mxu0
  %1965 = vmatprep.mubr.bf16.mxu0 %v1730
  %1966 = vmatmul.mubr.bf16.gmra.mrb[0].mxu0 %v1729
  %v1967 = vpop.f32.mrb[0].mxu0
  %v1968 = vadd.f32 0.0, %v1967
  %v1969 = vpop.f32.mrb[0].mxu0
  %v1970 = vpop.f32.mrb[0].mxu0
  %v1971 = vadd.f32 0.0, %v1970
  %v1972 = vpop.f32.mrb[0].mxu0
  %1973 = vmatprep.mubr.bf16.mxu0 %v1732
  %1974 = vmatmul.mubr.bf16.gmra.mrb[0].mxu0 %v1731
  %v1975 = vpop.f32.mrb[0].mxu0
  %v1976 = vadd.f32 0.0, %v1975
  %v1977 = vpop.f32.mrb[0].mxu0
  %v1978 = vpop.f32.mrb[0].mxu0
  %v1979 = vadd.f32 0.0, %v1978
  %v1980 = vpop.f32.mrb[0].mxu0
  %1981 = vmatprep.mubr.bf16.mxu0 %v1734
  %1982 = vmatmul.mubr.bf16.gmra.mrb[0].mxu0 %v1733
  %v1983 = vpop.f32.mrb[0].mxu0
  %v1984 = vadd.f32 0.0, %v1983
  %v1985 = vpop.f32.mrb[0].mxu0
  %v1986 = vpop.f32.mrb[0].mxu0
  %v1987 = vadd.f32 0.0, %v1986
  %v1988 = vpop.f32.mrb[0].mxu0
  %1989 = vmatprep.mubr.bf16.mxu0 %v1736
  %1990 = vmatmul.mubr.bf16.gmra.mrb[0].mxu0 %v1735
  %v1991 = vpop.f32.mrb[0].mxu0
  %v1992 = vadd.f32 0.0, %v1991
  %v1993 = vpop.f32.mrb[0].mxu0
  %v1994 = vpop.f32.mrb[0].mxu0
  %v1995 = vadd.f32 0.0, %v1994
  %v1996 = vpop.f32.mrb[0].mxu0
  %1997 = vmatprep.mubr.bf16.mxu0 %v1738
  %1998 = vmatmul.mubr.bf16.gmra.mrb[0].mxu0 %v1737
  %v1999 = vpop.f32.mrb[0].mxu0
  %v2000 = vadd.f32 0.0, %v1999
  %v2001 = vpop.f32.mrb[0].mxu0
  %v2002 = vpop.f32.mrb[0].mxu0
  %v2003 = vadd.f32 0.0, %v2002
  %v2004 = vpop.f32.mrb[0].mxu0
  %2005 = vmatprep.mubr.bf16.mxu0 %v1740
  %2006 = vmatmul.mubr.bf16.gmra.mrb[0].mxu0 %v1739
  %v2007 = vpop.f32.mrb[0].mxu0
  %v2008 = vadd.f32 0.0, %v2007
  %v2009 = vpop.f32.mrb[0].mxu0
  %v2010 = vpop.f32.mrb[0].mxu0
  %v2011 = vadd.f32 0.0, %v2010
  %v2012 = vpop.f32.mrb[0].mxu0
  %2013 = vdwg.mxu0
  %v2014 = vpack.c.bf16 %v1827, %v1824
  %v2015 = vpack.c.bf16 %v1835, %v1832
  %v2016 = vpack.c.bf16 %v1843, %v1840
  %v2017 = vpack.c.bf16 %v1851, %v1848
  %v2018 = vpack.c.bf16 %v1859, %v1856
  %v2019 = vpack.c.bf16 %v1867, %v1864
  %v2020 = vpack.c.bf16 %v1875, %v1872
  %v2021 = vpack.c.bf16 %v1883, %v1880
  %v2022 = vld [vmem:[%s1] sm:$0xff]
  %v2023 = vld [vmem:[%s1 + $0x8] sm:$0xf]
  %v2024 = vld [vmem:[%s1 + $0xc] sm:$0xff]
  %v2025 = vld [vmem:[%s1 + $0x14] sm:$0xf]
  %v2026 = vld [vmem:[%s1 + $0x18] sm:$0xff]
  %v2027 = vld [vmem:[%s1 + $0x20] sm:$0xf]
  %v2028 = vld [vmem:[%s1 + $0x24] sm:$0xff]
  %v2029 = vld [vmem:[%s1 + $0x2c] sm:$0xf]
  %v2030 = vld [vmem:[%s1 + $0x30] sm:$0xff]
  %v2031 = vld [vmem:[%s1 + $0x38] sm:$0xf]
  %v2032 = vld [vmem:[%s1 + $0x3c] sm:$0xff]
  %v2033 = vld [vmem:[%s1 + $0x44] sm:$0xf]
  %v2034 = vld [vmem:[%s1 + $0x48] sm:$0xff]
  %v2035 = vld [vmem:[%s1 + $0x50] sm:$0xf]
  %v2036 = vld [vmem:[%s1 + $0x54] sm:$0xff]
  %v2037 = vld [vmem:[%s1 + $0x5c] sm:$0xf]
  %v2038 = vld [vmem:[%s1 + $0x60] sm:$0xff]
  %v2039 = vld [vmem:[%s1 + $0x68] sm:$0xf]
  %v2040 = vld [vmem:[%s1 + $0x6c] sm:$0xff]
  %v2041 = vld [vmem:[%s1 + $0x74] sm:$0xf]
  %v2042 = vld [vmem:[%s1 + $0x78] sm:$0xff]
  %v2043 = vld [vmem:[%s1 + $0x80] sm:$0xf]
  %v2044 = vld [vmem:[%s1 + $0x84] sm:$0xff]
  %v2045 = vld [vmem:[%s1 + $0x8c] sm:$0xf]
  %v2046 = vpack.c.bf16 %v1891, %v1888
  %v2047 = vpack.c.bf16 %v1899, %v1896
  %v2048 = vpack.c.bf16 %v1907, %v1904
  %v2049 = vpack.c.bf16 %v1915, %v1912
  %v2050 = vpack.c.bf16 %v1923, %v1920
  %v2051 = vpack.c.bf16 %v1931, %v1928
  %v2052 = vpack.c.bf16 %v1939, %v1936
  %v2053 = vpack.c.bf16 %v1947, %v1944
  %s2054 = scalar_lea.vmem %s1, 144
  %v2055 = vld [vmem:[%s2054] sm:$0xff]
  %v2056 = vld [vmem:[%s2054 + $0x8] sm:$0xf]
  %v2057 = vld [vmem:[%s2054 + $0xc] sm:$0xff]
  %v2058 = vld [vmem:[%s2054 + $0x14] sm:$0xf]
  %v2059 = vld [vmem:[%s2054 + $0x18] sm:$0xff]
  %v2060 = vld [vmem:[%s2054 + $0x20] sm:$0xf]
  %v2061 = vld [vmem:[%s2054 + $0x24] sm:$0xff]
  %v2062 = vld [vmem:[%s2054 + $0x2c] sm:$0xf]
  %v2063 = vld [vmem:[%s2054 + $0x30] sm:$0xff]
  %v2064 = vld [vmem:[%s2054 + $0x38] sm:$0xf]
  %v2065 = vld [vmem:[%s2054 + $0x3c] sm:$0xff]
  %v2066 = vld [vmem:[%s2054 + $0x44] sm:$0xf]
  %v2067 = vld [vmem:[%s2054 + $0x48] sm:$0xff]
  %v2068 = vld [vmem:[%s2054 + $0x50] sm:$0xf]
  %v2069 = vld [vmem:[%s2054 + $0x54] sm:$0xff]
  %v2070 = vld [vmem:[%s2054 + $0x5c] sm:$0xf]
  %v2071 = vld [vmem:[%s2054 + $0x60] sm:$0xff]
  %v2072 = vld [vmem:[%s2054 + $0x68] sm:$0xf]
  %v2073 = vld [vmem:[%s2054 + $0x6c] sm:$0xff]
  %v2074 = vld [vmem:[%s2054 + $0x74] sm:$0xf]
  %v2075 = vld [vmem:[%s2054 + $0x78] sm:$0xff]
  %v2076 = vld [vmem:[%s2054 + $0x80] sm:$0xf]
  %v2077 = vld [vmem:[%s2054 + $0x84] sm:$0xff]
  %v2078 = vld [vmem:[%s2054 + $0x8c] sm:$0xf]
  %v2103 = vunpack.c.l.b16 %v2055
  %v2104 = vunpack.c.h.b16 %v2055
  %v2105 = vunpack.c.l.b16 %v2056
  %v2106 = vunpack.c.l.b16 %v2057
  %v2107 = vunpack.c.h.b16 %v2057
  %v2108 = vunpack.c.l.b16 %v2058
  %v2109 = vunpack.c.l.b16 %v2059
  %v2110 = vunpack.c.h.b16 %v2059
  %v2111 = vunpack.c.l.b16 %v2060
  %v2112 = vunpack.c.l.b16 %v2061
  %v2113 = vunpack.c.h.b16 %v2061
  %v2114 = vunpack.c.l.b16 %v2062
  %v2115 = vunpack.c.l.b16 %v2063
  %v2116 = vunpack.c.h.b16 %v2063
  %v2117 = vunpack.c.l.b16 %v2064
  %v2118 = vunpack.c.l.b16 %v2065
  %v2119 = vunpack.c.h.b16 %v2065
  %v2120 = vunpack.c.l.b16 %v2066
  %v2121 = vunpack.c.l.b16 %v2067
  %v2122 = vunpack.c.h.b16 %v2067
  %v2123 = vunpack.c.l.b16 %v2068
  %v2124 = vunpack.c.l.b16 %v2069
  %v2125 = vunpack.c.h.b16 %v2069
  %v2126 = vunpack.c.l.b16 %v2070
  %v2127 = vunpack.c.l.b16 %v2071
  %v2128 = vunpack.c.h.b16 %v2071
  %v2129 = vunpack.c.l.b16 %v2072
  %v2130 = vunpack.c.l.b16 %v2073
  %v2131 = vunpack.c.h.b16 %v2073
  %v2132 = vunpack.c.l.b16 %v2074
  %v2133 = vunpack.c.l.b16 %v2075
  %v2134 = vunpack.c.h.b16 %v2075
  %v2135 = vunpack.c.l.b16 %v2076
  %v2136 = vunpack.c.l.b16 %v2077
  %v2137 = vunpack.c.h.b16 %v2077
  %v2138 = vunpack.c.l.b16 %v2078
  %v2139 = vpack.c.b16 %v2106, %v2103
  %v2140 = vpack.c.b16 %v2107, %v2104
  %v2141 = vpack.c.b16 %v2108, %v2105
  %v2142 = vpack.c.b16 %v2112, %v2109
  %v2143 = vpack.c.b16 %v2113, %v2110
  %v2144 = vpack.c.b16 %v2114, %v2111
  %v2145 = vpack.c.b16 %v2118, %v2115
  %v2146 = vpack.c.b16 %v2119, %v2116
  %v2147 = vpack.c.b16 %v2120, %v2117
  %v2148 = vpack.c.b16 %v2124, %v2121
  %v2149 = vpack.c.b16 %v2125, %v2122
  %v2150 = vpack.c.b16 %v2126, %v2123
  %v2151 = vpack.c.b16 %v2130, %v2127
  %v2152 = vpack.c.b16 %v2131, %v2128
  %v2153 = vpack.c.b16 %v2132, %v2129
  %v2154 = vpack.c.b16 %v2136, %v2133
  %v2155 = vpack.c.b16 %v2137, %v2134
  %v2156 = vpack.c.b16 %v2138, %v2135
  %vm2175 = vcmask 785408
  %v2177 = vsel %vm2175, %v2046, 0
  %v2180 = vsel %vm2175, %v2047, 0
  %v2183 = vsel %vm2175, %v2048, 0
  %v2186 = vsel %vm2175, %v2049, 0
  %v2189 = vsel %vm2175, %v2050, 0
  %v2192 = vsel %vm2175, %v2051, 0
  %v2195 = vsel %vm2175, %v2052, 0
  %v2198 = vsel %vm2175, %v2053, 0
  %2200 = vmatprep.subr.bf16.mxu0 %v2140
  %2201 = vmatpush1.bf16.msra.mxu0 %v2139
  %2202 = vmatprep.subr.bf16.mxu0 %v2143
  %2203 = vmatpush1.bf16.msra.mxu0 %v2142
  %2204 = vmatprep.subr.bf16.mxu0 %v2146
  %2205 = vmatpush1.bf16.msra.mxu0 %v2145
  %2206 = vmatprep.subr.bf16.mxu0 %v2149
  %2207 = vmatpush1.bf16.msra.mxu0 %v2148
  %2208 = vmatprep.subr.bf16.mxu0 %v2152
  %2209 = vmatpush1.bf16.msra.mxu0 %v2151
  %2210 = vmatprep.subr.bf16.mxu0 %v2155
  %2211 = vmatpush1.bf16.msra.mxu0 %v2154
  %2212 = vmatprep.subr.bf16.mxu0 0
  %2213 = vmatpush1.bf16.msra.mxu0 0
  %2214 = vmatprep.subr.bf16.mxu0 0
  %2215 = vmatpush1.bf16.msra.mxu0 0
  %2216 = vmatprep.subr.bf16.mxu0 0
  %2217 = vmatpush1.bf16.msra.mxu0 0
  %2218 = vmatprep.subr.bf16.mxu0 0
  %2219 = vmatpush1.bf16.msra.mxu0 0
  %2220 = vmatprep.subr.bf16.mxu0 0
  %2221 = vmatpush1.bf16.msra.mxu0 0
  %2222 = vmatprep.subr.bf16.mxu0 0
  %2223 = vmatpush1.bf16.msra.mxu0 0
  %2224 = vmatprep.subr.bf16.mxu0 0
  %2225 = vmatpush1.bf16.msra.mxu0 0
  %2226 = vmatprep.subr.bf16.mxu0 0
  %2227 = vmatpush1.bf16.msra.mxu0 0
  %2228 = vmatprep.subr.bf16.mxu0 0
  %2229 = vmatpush1.bf16.msra.mxu0 0
  %2230 = vmatprep.subr.bf16.mxu0 0
  %2231 = vmatpush1.bf16.msra.mxu0 0
  %2232 = vmatprep.mubr.bf16.mxu0 0
  %2233 = vmatmul.mubr.bf16.gmra.mrb[0].mxu0 %v2177
  %v2234 = vpop.f32.mrb[0].mxu0
  %v2235 = vadd.f32 0.0, %v2234
  %v2236 = vpop.f32.mrb[0].mxu0
  %v2237 = vadd.f32 0.0, %v2236
  %v2238 = vpop.f32.mrb[0].mxu0
  %v2239 = vadd.f32 0.0, %v2238
  %v2240 = vpop.f32.mrb[0].mxu0
  %v2241 = vadd.f32 0.0, %v2240
  %2242 = vmatprep.mubr.bf16.mxu0 0
  %2243 = vmatmul.mubr.bf16.gmra.mrb[0].mxu0 %v2180
  %v2244 = vpop.f32.mrb[0].mxu0
  %v2245 = vadd.f32 0.0, %v2244
  %v2246 = vpop.f32.mrb[0].mxu0
  %v2247 = vadd.f32 0.0, %v2246
  %v2248 = vpop.f32.mrb[0].mxu0
  %v2249 = vadd.f32 0.0, %v2248
  %v2250 = vpop.f32.mrb[0].mxu0
  %v2251 = vadd.f32 0.0, %v2250
  %2252 = vmatprep.mubr.bf16.mxu0 0
  %2253 = vmatmul.mubr.bf16.gmra.mrb[0].mxu0 %v2183
  %v2254 = vpop.f32.mrb[0].mxu0
  %v2255 = vadd.f32 0.0, %v2254
  %v2256 = vpop.f32.mrb[0].mxu0
  %v2257 = vadd.f32 0.0, %v2256
  %v2258 = vpop.f32.mrb[0].mxu0
  %v2259 = vadd.f32 0.0, %v2258
  %v2260 = vpop.f32.mrb[0].mxu0
  %v2261 = vadd.f32 0.0, %v2260
  %2262 = vmatprep.mubr.bf16.mxu0 0
  %2263 = vmatmul.mubr.bf16.gmra.mrb[0].mxu0 %v2186
  %v2264 = vpop.f32.mrb[0].mxu0
  %v2265 = vadd.f32 0.0, %v2264
  %v2266 = vpop.f32.mrb[0].mxu0
  %v2267 = vadd.f32 0.0, %v2266
  %v2268 = vpop.f32.mrb[0].mxu0
  %v2269 = vadd.f32 0.0, %v2268
  %v2270 = vpop.f32.mrb[0].mxu0
  %v2271 = vadd.f32 0.0, %v2270
  %2272 = vmatprep.mubr.bf16.mxu0 0
  %2273 = vmatmul.mubr.bf16.gmra.mrb[0].mxu0 %v2189
  %v2274 = vpop.f32.mrb[0].mxu0
  %v2275 = vadd.f32 0.0, %v2274
  %v2276 = vpop.f32.mrb[0].mxu0
  %v2277 = vadd.f32 0.0, %v2276
  %v2278 = vpop.f32.mrb[0].mxu0
  %v2279 = vadd.f32 0.0, %v2278
  %v2280 = vpop.f32.mrb[0].mxu0
  %v2281 = vadd.f32 0.0, %v2280
  %2282 = vmatprep.mubr.bf16.mxu0 0
  %2283 = vmatmul.mubr.bf16.gmra.mrb[0].mxu0 %v2192
  %v2284 = vpop.f32.mrb[0].mxu0
  %v2285 = vadd.f32 0.0, %v2284
  %v2286 = vpop.f32.mrb[0].mxu0
  %v2287 = vadd.f32 0.0, %v2286
  %v2288 = vpop.f32.mrb[0].mxu0
  %v2289 = vadd.f32 0.0, %v2288
  %v2290 = vpop.f32.mrb[0].mxu0
  %v2291 = vadd.f32 0.0, %v2290
  %2292 = vmatprep.mubr.bf16.mxu0 0
  %2293 = vmatmul.mubr.bf16.gmra.mrb[0].mxu0 %v2195
  %v2294 = vpop.f32.mrb[0].mxu0
  %v2295 = vadd.f32 0.0, %v2294
  %v2296 = vpop.f32.mrb[0].mxu0
  %v2297 = vadd.f32 0.0, %v2296
  %v2298 = vpop.f32.mrb[0].mxu0
  %v2299 = vadd.f32 0.0, %v2298
  %v2300 = vpop.f32.mrb[0].mxu0
  %v2301 = vadd.f32 0.0, %v2300
  %2302 = vmatprep.mubr.bf16.mxu0 0
  %2303 = vmatmul.mubr.bf16.gmra.mrb[0].mxu0 %v2198
  %v2304 = vpop.f32.mrb[0].mxu0
  %v2305 = vadd.f32 0.0, %v2304
  %v2306 = vpop.f32.mrb[0].mxu0
  %v2307 = vadd.f32 0.0, %v2306
  %v2308 = vpop.f32.mrb[0].mxu0
  %v2309 = vadd.f32 0.0, %v2308
  %v2310 = vpop.f32.mrb[0].mxu0
  %v2311 = vadd.f32 0.0, %v2310
  %2312 = vdwg.mxu0
  %2313 = vmatprep.subr.bf16.mxu0 0
  %2314 = vmatpush1.bf16.msra.mxu0 %v2141
  %2315 = vmatprep.subr.bf16.mxu0 0
  %2316 = vmatpush1.bf16.msra.mxu0 %v2144
  %2317 = vmatprep.subr.bf16.mxu0 0
  %2318 = vmatpush1.bf16.msra.mxu0 %v2147
  %2319 = vmatprep.subr.bf16.mxu0 0
  %2320 = vmatpush1.bf16.msra.mxu0 %v2150
  %2321 = vmatprep.subr.bf16.mxu0 0
  %2322 = vmatpush1.bf16.msra.mxu0 %v2153
  %2323 = vmatprep.subr.bf16.mxu0 0
  %2324 = vmatpush1.bf16.msra.mxu0 %v2156
  %2325 = vmatprep.subr.bf16.mxu0 0
  %2326 = vmatpush1.bf16.msra.mxu0 0
  %2327 = vmatprep.subr.bf16.mxu0 0
  %2328 = vmatpush1.bf16.msra.mxu0 0
  %2329 = vmatprep.subr.bf16.mxu0 0
  %2330 = vmatpush1.bf16.msra.mxu0 0
  %2331 = vmatprep.subr.bf16.mxu0 0
  %2332 = vmatpush1.bf16.msra.mxu0 0
  %2333 = vmatprep.subr.bf16.mxu0 0
  %2334 = vmatpush1.bf16.msra.mxu0 0
  %2335 = vmatprep.subr.bf16.mxu0 0
  %2336 = vmatpush1.bf16.msra.mxu0 0
  %2337 = vmatprep.subr.bf16.mxu0 0
  %2338 = vmatpush1.bf16.msra.mxu0 0
  %2339 = vmatprep.subr.bf16.mxu0 0
  %2340 = vmatpush1.bf16.msra.mxu0 0
  %2341 = vmatprep.subr.bf16.mxu0 0
  %2342 = vmatpush1.bf16.msra.mxu0 0
  %2343 = vmatprep.subr.bf16.mxu0 0
  %2344 = vmatpush1.bf16.msra.mxu0 0
  %2345 = vmatprep.mubr.bf16.mxu0 0
  %2346 = vmatmul.mubr.bf16.gmra.mrb[0].mxu0 %v2177
  %v2347 = vpop.f32.mrb[0].mxu0
  %v2348 = vadd.f32 0.0, %v2347
  %v2349 = vpop.f32.mrb[0].mxu0
  %v2350 = vpop.f32.mrb[0].mxu0
  %v2351 = vadd.f32 0.0, %v2350
  %v2352 = vpop.f32.mrb[0].mxu0
  %2353 = vmatprep.mubr.bf16.mxu0 0
  %2354 = vmatmul.mubr.bf16.gmra.mrb[0].mxu0 %v2180
  %v2355 = vpop.f32.mrb[0].mxu0
  %v2356 = vadd.f32 0.0, %v2355
  %v2357 = vpop.f32.mrb[0].mxu0
  %v2358 = vpop.f32.mrb[0].mxu0
  %v2359 = vadd.f32 0.0, %v2358
  %v2360 = vpop.f32.mrb[0].mxu0
  %2361 = vmatprep.mubr.bf16.mxu0 0
  %2362 = vmatmul.mubr.bf16.gmra.mrb[0].mxu0 %v2183
  %v2363 = vpop.f32.mrb[0].mxu0
  %v2364 = vadd.f32 0.0, %v2363
  %v2365 = vpop.f32.mrb[0].mxu0
  %v2366 = vpop.f32.mrb[0].mxu0
  %v2367 = vadd.f32 0.0, %v2366
  %v2368 = vpop.f32.mrb[0].mxu0
  %2369 = vmatprep.mubr.bf16.mxu0 0
  %2370 = vmatmul.mubr.bf16.gmra.mrb[0].mxu0 %v2186
  %v2371 = vpop.f32.mrb[0].mxu0
  %v2372 = vadd.f32 0.0, %v2371
  %v2373 = vpop.f32.mrb[0].mxu0
  %v2374 = vpop.f32.mrb[0].mxu0
  %v2375 = vadd.f32 0.0, %v2374
  %v2376 = vpop.f32.mrb[0].mxu0
  %2377 = vmatprep.mubr.bf16.mxu0 0
  %2378 = vmatmul.mubr.bf16.gmra.mrb[0].mxu0 %v2189
  %v2379 = vpop.f32.mrb[0].mxu0
  %v2380 = vadd.f32 0.0, %v2379
  %v2381 = vpop.f32.mrb[0].mxu0
  %v2382 = vpop.f32.mrb[0].mxu0
  %v2383 = vadd.f32 0.0, %v2382
  %v2384 = vpop.f32.mrb[0].mxu0
  %2385 = vmatprep.mubr.bf16.mxu0 0
  %2386 = vmatmul.mubr.bf16.gmra.mrb[0].mxu0 %v2192
  %v2387 = vpop.f32.mrb[0].mxu0
  %v2388 = vadd.f32 0.0, %v2387
  %v2389 = vpop.f32.mrb[0].mxu0
  %v2390 = vpop.f32.mrb[0].mxu0
  %v2391 = vadd.f32 0.0, %v2390
  %v2392 = vpop.f32.mrb[0].mxu0
  %2393 = vmatprep.mubr.bf16.mxu0 0
  %2394 = vmatmul.mubr.bf16.gmra.mrb[0].mxu0 %v2195
  %v2395 = vpop.f32.mrb[0].mxu0
  %v2396 = vadd.f32 0.0, %v2395
  %v2397 = vpop.f32.mrb[0].mxu0
  %v2398 = vpop.f32.mrb[0].mxu0
  %v2399 = vadd.f32 0.0, %v2398
  %v2400 = vpop.f32.mrb[0].mxu0
  %2401 = vmatprep.mubr.bf16.mxu0 0
  %2402 = vmatmul.mubr.bf16.gmra.mrb[0].mxu0 %v2198
  %v2403 = vpop.f32.mrb[0].mxu0
  %v2404 = vadd.f32 0.0, %v2403
  %v2405 = vpop.f32.mrb[0].mxu0
  %v2406 = vpop.f32.mrb[0].mxu0
  %v2407 = vadd.f32 0.0, %v2406
  %v2408 = vpop.f32.mrb[0].mxu0
  %2409 = vdwg.mxu0
  %v2434 = vunpack.c.l.b16 %v2022
  %v2435 = vunpack.c.h.b16 %v2022
  %v2436 = vunpack.c.l.b16 %v2023
  %v2437 = vunpack.c.l.b16 %v2024
  %v2438 = vunpack.c.h.b16 %v2024
  %v2439 = vunpack.c.l.b16 %v2025
  %v2440 = vunpack.c.l.b16 %v2026
  %v2441 = vunpack.c.h.b16 %v2026
  %v2442 = vunpack.c.l.b16 %v2027
  %v2443 = vunpack.c.l.b16 %v2028
  %v2444 = vunpack.c.h.b16 %v2028
  %v2445 = vunpack.c.l.b16 %v2029
  %v2446 = vunpack.c.l.b16 %v2030
  %v2447 = vunpack.c.h.b16 %v2030
  %v2448 = vunpack.c.l.b16 %v2031
  %v2449 = vunpack.c.l.b16 %v2032
  %v2450 = vunpack.c.h.b16 %v2032
  %v2451 = vunpack.c.l.b16 %v2033
  %v2452 = vunpack.c.l.b16 %v2034
  %v2453 = vunpack.c.h.b16 %v2034
  %v2454 = vunpack.c.l.b16 %v2035
  %v2455 = vunpack.c.l.b16 %v2036
  %v2456 = vunpack.c.h.b16 %v2036
  %v2457 = vunpack.c.l.b16 %v2037
  %v2458 = vunpack.c.l.b16 %v2038
  %v2459 = vunpack.c.h.b16 %v2038
  %v2460 = vunpack.c.l.b16 %v2039
  %v2461 = vunpack.c.l.b16 %v2040
  %v2462 = vunpack.c.h.b16 %v2040
  %v2463 = vunpack.c.l.b16 %v2041
  %v2464 = vunpack.c.l.b16 %v2042
  %v2465 = vunpack.c.h.b16 %v2042
  %v2466 = vunpack.c.l.b16 %v2043
  %v2467 = vunpack.c.l.b16 %v2044
  %v2468 = vunpack.c.h.b16 %v2044
  %v2469 = vunpack.c.l.b16 %v2045
  %v2470 = vpack.c.b16 %v2437, %v2434
  %v2471 = vpack.c.b16 %v2438, %v2435
  %v2472 = vpack.c.b16 %v2439, %v2436
  %v2473 = vpack.c.b16 %v2443, %v2440
  %v2474 = vpack.c.b16 %v2444, %v2441
  %v2475 = vpack.c.b16 %v2445, %v2442
  %v2476 = vpack.c.b16 %v2449, %v2446
  %v2477 = vpack.c.b16 %v2450, %v2447
  %v2478 = vpack.c.b16 %v2451, %v2448
  %v2479 = vpack.c.b16 %v2455, %v2452
  %v2480 = vpack.c.b16 %v2456, %v2453
  %v2481 = vpack.c.b16 %v2457, %v2454
  %v2482 = vpack.c.b16 %v2461, %v2458
  %v2483 = vpack.c.b16 %v2462, %v2459
  %v2484 = vpack.c.b16 %v2463, %v2460
  %v2485 = vpack.c.b16 %v2467, %v2464
  %v2486 = vpack.c.b16 %v2468, %v2465
  %v2487 = vpack.c.b16 %v2469, %v2466
  %v2507 = vsel %vm2175, %v2014, 0
  %v2510 = vsel %vm2175, %v2015, 0
  %v2513 = vsel %vm2175, %v2016, 0
  %v2516 = vsel %vm2175, %v2017, 0
  %v2519 = vsel %vm2175, %v2018, 0
  %v2522 = vsel %vm2175, %v2019, 0
  %v2525 = vsel %vm2175, %v2020, 0
  %v2528 = vsel %vm2175, %v2021, 0
  %2530 = vmatprep.subr.bf16.mxu0 %v2471
  %2531 = vmatpush1.bf16.msra.mxu0 %v2470
  %2532 = vmatprep.subr.bf16.mxu0 %v2474
  %2533 = vmatpush1.bf16.msra.mxu0 %v2473
  %2534 = vmatprep.subr.bf16.mxu0 %v2477
  %2535 = vmatpush1.bf16.msra.mxu0 %v2476
  %2536 = vmatprep.subr.bf16.mxu0 %v2480
  %2537 = vmatpush1.bf16.msra.mxu0 %v2479
  %2538 = vmatprep.subr.bf16.mxu0 %v2483
  %2539 = vmatpush1.bf16.msra.mxu0 %v2482
  %2540 = vmatprep.subr.bf16.mxu0 %v2486
  %2541 = vmatpush1.bf16.msra.mxu0 %v2485
  %2542 = vmatprep.subr.bf16.mxu0 0
  %2543 = vmatpush1.bf16.msra.mxu0 0
  %2544 = vmatprep.subr.bf16.mxu0 0
  %2545 = vmatpush1.bf16.msra.mxu0 0
  %2546 = vmatprep.subr.bf16.mxu0 0
  %2547 = vmatpush1.bf16.msra.mxu0 0
  %2548 = vmatprep.subr.bf16.mxu0 0
  %2549 = vmatpush1.bf16.msra.mxu0 0
  %2550 = vmatprep.subr.bf16.mxu0 0
  %2551 = vmatpush1.bf16.msra.mxu0 0
  %2552 = vmatprep.subr.bf16.mxu0 0
  %2553 = vmatpush1.bf16.msra.mxu0 0
  %2554 = vmatprep.subr.bf16.mxu0 0
  %2555 = vmatpush1.bf16.msra.mxu0 0
  %2556 = vmatprep.subr.bf16.mxu0 0
  %2557 = vmatpush1.bf16.msra.mxu0 0
  %2558 = vmatprep.subr.bf16.mxu0 0
  %2559 = vmatpush1.bf16.msra.mxu0 0
  %2560 = vmatprep.subr.bf16.mxu0 0
  %2561 = vmatpush1.bf16.msra.mxu0 0
  %2562 = vmatprep.mubr.bf16.mxu0 0
  %2563 = vmatmul.mubr.bf16.gmra.mrb[0].mxu0 %v2507
  %v2564 = vpop.f32.mrb[0].mxu0
  %v2565 = vadd.f32 %v2235, %v2564
  %v2566 = vpop.f32.mrb[0].mxu0
  %v2567 = vadd.f32 %v2237, %v2566
  %v2568 = vpop.f32.mrb[0].mxu0
  %v2569 = vadd.f32 %v2239, %v2568
  %v2570 = vpop.f32.mrb[0].mxu0
  %v2571 = vadd.f32 %v2241, %v2570
  %2572 = vmatprep.mubr.bf16.mxu0 0
  %2573 = vmatmul.mubr.bf16.gmra.mrb[0].mxu0 %v2510
  %v2574 = vpop.f32.mrb[0].mxu0
  %v2575 = vadd.f32 %v2245, %v2574
  %v2576 = vpop.f32.mrb[0].mxu0
  %v2577 = vadd.f32 %v2247, %v2576
  %v2578 = vpop.f32.mrb[0].mxu0
  %v2579 = vadd.f32 %v2249, %v2578
  %v2580 = vpop.f32.mrb[0].mxu0
  %v2581 = vadd.f32 %v2251, %v2580
  %2582 = vmatprep.mubr.bf16.mxu0 0
  %2583 = vmatmul.mubr.bf16.gmra.mrb[0].mxu0 %v2513
  %v2584 = vpop.f32.mrb[0].mxu0
  %v2585 = vadd.f32 %v2255, %v2584
  %v2586 = vpop.f32.mrb[0].mxu0
  %v2587 = vadd.f32 %v2257, %v2586
  %v2588 = vpop.f32.mrb[0].mxu0
  %v2589 = vadd.f32 %v2259, %v2588
  %v2590 = vpop.f32.mrb[0].mxu0
  %v2591 = vadd.f32 %v2261, %v2590
  %2592 = vmatprep.mubr.bf16.mxu0 0
  %2593 = vmatmul.mubr.bf16.gmra.mrb[0].mxu0 %v2516
  %v2594 = vpop.f32.mrb[0].mxu0
  %v2595 = vadd.f32 %v2265, %v2594
  %v2596 = vpop.f32.mrb[0].mxu0
  %v2597 = vadd.f32 %v2267, %v2596
  %v2598 = vpop.f32.mrb[0].mxu0
  %v2599 = vadd.f32 %v2269, %v2598
  %v2600 = vpop.f32.mrb[0].mxu0
  %v2601 = vadd.f32 %v2271, %v2600
  %2602 = vmatprep.mubr.bf16.mxu0 0
  %2603 = vmatmul.mubr.bf16.gmra.mrb[0].mxu0 %v2519
  %v2604 = vpop.f32.mrb[0].mxu0
  %v2605 = vadd.f32 %v2275, %v2604
  %v2606 = vpop.f32.mrb[0].mxu0
  %v2607 = vadd.f32 %v2277, %v2606
  %v2608 = vpop.f32.mrb[0].mxu0
  %v2609 = vadd.f32 %v2279, %v2608
  %v2610 = vpop.f32.mrb[0].mxu0
  %v2611 = vadd.f32 %v2281, %v2610
  %2612 = vmatprep.mubr.bf16.mxu0 0
  %2613 = vmatmul.mubr.bf16.gmra.mrb[0].mxu0 %v2522
  %v2614 = vpop.f32.mrb[0].mxu0
  %v2615 = vadd.f32 %v2285, %v2614
  %v2616 = vpop.f32.mrb[0].mxu0
  %v2617 = vadd.f32 %v2287, %v2616
  %v2618 = vpop.f32.mrb[0].mxu0
  %v2619 = vadd.f32 %v2289, %v2618
  %v2620 = vpop.f32.mrb[0].mxu0
  %v2621 = vadd.f32 %v2291, %v2620
  %2622 = vmatprep.mubr.bf16.mxu0 0
  %2623 = vmatmul.mubr.bf16.gmra.mrb[0].mxu0 %v2525
  %v2624 = vpop.f32.mrb[0].mxu0
  %v2625 = vadd.f32 %v2295, %v2624
  %v2626 = vpop.f32.mrb[0].mxu0
  %v2627 = vadd.f32 %v2297, %v2626
  %v2628 = vpop.f32.mrb[0].mxu0
  %v2629 = vadd.f32 %v2299, %v2628
  %v2630 = vpop.f32.mrb[0].mxu0
  %v2631 = vadd.f32 %v2301, %v2630
  %2632 = vmatprep.mubr.bf16.mxu0 0
  %2633 = vmatmul.mubr.bf16.gmra.mrb[0].mxu0 %v2528
  %v2634 = vpop.f32.mrb[0].mxu0
  %v2635 = vadd.f32 %v2305, %v2634
  %v2636 = vpop.f32.mrb[0].mxu0
  %v2637 = vadd.f32 %v2307, %v2636
  %v2638 = vpop.f32.mrb[0].mxu0
  %v2639 = vadd.f32 %v2309, %v2638
  %v2640 = vpop.f32.mrb[0].mxu0
  %v2641 = vadd.f32 %v2311, %v2640
  %2642 = vdwg.mxu0
  %2643 = vmatprep.subr.bf16.mxu0 0
  %2644 = vmatpush1.bf16.msra.mxu0 %v2472
  %2645 = vmatprep.subr.bf16.mxu0 0
  %2646 = vmatpush1.bf16.msra.mxu0 %v2475
  %2647 = vmatprep.subr.bf16.mxu0 0
  %2648 = vmatpush1.bf16.msra.mxu0 %v2478
  %2649 = vmatprep.subr.bf16.mxu0 0
  %2650 = vmatpush1.bf16.msra.mxu0 %v2481
  %2651 = vmatprep.subr.bf16.mxu0 0
  %2652 = vmatpush1.bf16.msra.mxu0 %v2484
  %2653 = vmatprep.subr.bf16.mxu0 0
  %2654 = vmatpush1.bf16.msra.mxu0 %v2487
  %2655 = vmatprep.subr.bf16.mxu0 0
  %2656 = vmatpush1.bf16.msra.mxu0 0
  %2657 = vmatprep.subr.bf16.mxu0 0
  %2658 = vmatpush1.bf16.msra.mxu0 0
  %2659 = vmatprep.subr.bf16.mxu0 0
  %2660 = vmatpush1.bf16.msra.mxu0 0
  %2661 = vmatprep.subr.bf16.mxu0 0
  %2662 = vmatpush1.bf16.msra.mxu0 0
  %2663 = vmatprep.subr.bf16.mxu0 0
  %2664 = vmatpush1.bf16.msra.mxu0 0
  %2665 = vmatprep.subr.bf16.mxu0 0
  %2666 = vmatpush1.bf16.msra.mxu0 0
  %2667 = vmatprep.subr.bf16.mxu0 0
  %2668 = vmatpush1.bf16.msra.mxu0 0
  %2669 = vmatprep.subr.bf16.mxu0 0
  %2670 = vmatpush1.bf16.msra.mxu0 0
  %2671 = vmatprep.subr.bf16.mxu0 0
  %2672 = vmatpush1.bf16.msra.mxu0 0
  %2673 = vmatprep.subr.bf16.mxu0 0
  %2674 = vmatpush1.bf16.msra.mxu0 0
  %2675 = vmatprep.mubr.bf16.mxu0 0
  %2676 = vmatmul.mubr.bf16.gmra.mrb[0].mxu0 %v2507
  %v2677 = vpop.f32.mrb[0].mxu0
  %v2678 = vadd.f32 %v2348, %v2677
  %v2679 = vpop.f32.mrb[0].mxu0
  %v2680 = vpop.f32.mrb[0].mxu0
  %v2681 = vadd.f32 %v2351, %v2680
  %v2682 = vpop.f32.mrb[0].mxu0
  %2683 = vmatprep.mubr.bf16.mxu0 0
  %2684 = vmatmul.mubr.bf16.gmra.mrb[0].mxu0 %v2510
  %v2685 = vpop.f32.mrb[0].mxu0
  %v2686 = vadd.f32 %v2356, %v2685
  %v2687 = vpop.f32.mrb[0].mxu0
  %v2688 = vpop.f32.mrb[0].mxu0
  %v2689 = vadd.f32 %v2359, %v2688
  %v2690 = vpop.f32.mrb[0].mxu0
  %2691 = vmatprep.mubr.bf16.mxu0 0
  %2692 = vmatmul.mubr.bf16.gmra.mrb[0].mxu0 %v2513
  %v2693 = vpop.f32.mrb[0].mxu0
  %v2694 = vadd.f32 %v2364, %v2693
  %v2695 = vpop.f32.mrb[0].mxu0
  %v2696 = vpop.f32.mrb[0].mxu0
  %v2697 = vadd.f32 %v2367, %v2696
  %v2698 = vpop.f32.mrb[0].mxu0
  %2699 = vmatprep.mubr.bf16.mxu0 0
  %2700 = vmatmul.mubr.bf16.gmra.mrb[0].mxu0 %v2516
  %v2701 = vpop.f32.mrb[0].mxu0
  %v2702 = vadd.f32 %v2372, %v2701
  %v2703 = vpop.f32.mrb[0].mxu0
  %v2704 = vpop.f32.mrb[0].mxu0
  %v2705 = vadd.f32 %v2375, %v2704
  %v2706 = vpop.f32.mrb[0].mxu0
  %2707 = vmatprep.mubr.bf16.mxu0 0
  %2708 = vmatmul.mubr.bf16.gmra.mrb[0].mxu0 %v2519
  %v2709 = vpop.f32.mrb[0].mxu0
  %v2710 = vadd.f32 %v2380, %v2709
  %v2711 = vpop.f32.mrb[0].mxu0
  %v2712 = vpop.f32.mrb[0].mxu0
  %v2713 = vadd.f32 %v2383, %v2712
  %v2714 = vpop.f32.mrb[0].mxu0
  %2715 = vmatprep.mubr.bf16.mxu0 0
  %2716 = vmatmul.mubr.bf16.gmra.mrb[0].mxu0 %v2522
  %v2717 = vpop.f32.mrb[0].mxu0
  %v2718 = vadd.f32 %v2388, %v2717
  %v2719 = vpop.f32.mrb[0].mxu0
  %v2720 = vpop.f32.mrb[0].mxu0
  %v2721 = vadd.f32 %v2391, %v2720
  %v2722 = vpop.f32.mrb[0].mxu0
  %2723 = vmatprep.mubr.bf16.mxu0 0
  %2724 = vmatmul.mubr.bf16.gmra.mrb[0].mxu0 %v2525
  %v2725 = vpop.f32.mrb[0].mxu0
  %v2726 = vadd.f32 %v2396, %v2725
  %v2727 = vpop.f32.mrb[0].mxu0
  %v2728 = vpop.f32.mrb[0].mxu0
  %v2729 = vadd.f32 %v2399, %v2728
  %v2730 = vpop.f32.mrb[0].mxu0
  %2731 = vmatprep.mubr.bf16.mxu0 0
  %2732 = vmatmul.mubr.bf16.gmra.mrb[0].mxu0 %v2528
  %v2733 = vpop.f32.mrb[0].mxu0
  %v2734 = vadd.f32 %v2404, %v2733
  %v2735 = vpop.f32.mrb[0].mxu0
  %v2736 = vpop.f32.mrb[0].mxu0
  %v2737 = vadd.f32 %v2407, %v2736
  %v2738 = vpop.f32.mrb[0].mxu0
  %2739 = vdwg.mxu0
  %v2740 = vpack.c.bf16 %v1955, %v1952
  %v2741 = vpack.c.bf16 %v1963, %v1960
  %v2742 = vpack.c.bf16 %v1971, %v1968
  %v2743 = vpack.c.bf16 %v1979, %v1976
  %v2744 = vpack.c.bf16 %v1987, %v1984
  %v2745 = vpack.c.bf16 %v1995, %v1992
  %v2746 = vpack.c.bf16 %v2003, %v2000
  %v2747 = vpack.c.bf16 %v2011, %v2008
  %s2748 = scalar_lea.vmem %s1, 288
  %v2749 = vld [vmem:[%s2748] sm:$0xff]
  %v2750 = vld [vmem:[%s2748 + $0x8] sm:$0xf]
  %v2751 = vld [vmem:[%s2748 + $0xc] sm:$0xff]
  %v2752 = vld [vmem:[%s2748 + $0x14] sm:$0xf]
  %v2753 = vld [vmem:[%s2748 + $0x18] sm:$0xff]
  %v2754 = vld [vmem:[%s2748 + $0x20] sm:$0xf]
  %v2755 = vld [vmem:[%s2748 + $0x24] sm:$0xff]
  %v2756 = vld [vmem:[%s2748 + $0x2c] sm:$0xf]
  %v2757 = vld [vmem:[%s2748 + $0x30] sm:$0xff]
  %v2758 = vld [vmem:[%s2748 + $0x38] sm:$0xf]
  %v2759 = vld [vmem:[%s2748 + $0x3c] sm:$0xff]
  %v2760 = vld [vmem:[%s2748 + $0x44] sm:$0xf]
  %v2761 = vld [vmem:[%s2748 + $0x48] sm:$0xff]
  %v2762 = vld [vmem:[%s2748 + $0x50] sm:$0xf]
  %v2763 = vld [vmem:[%s2748 + $0x54] sm:$0xff]
  %v2764 = vld [vmem:[%s2748 + $0x5c] sm:$0xf]
  %v2765 = vld [vmem:[%s2748 + $0x60] sm:$0xff]
  %v2766 = vld [vmem:[%s2748 + $0x68] sm:$0xf]
  %v2767 = vld [vmem:[%s2748 + $0x6c] sm:$0xff]
  %v2768 = vld [vmem:[%s2748 + $0x74] sm:$0xf]
  %v2769 = vld [vmem:[%s2748 + $0x78] sm:$0xff]
  %v2770 = vld [vmem:[%s2748 + $0x80] sm:$0xf]
  %v2771 = vld [vmem:[%s2748 + $0x84] sm:$0xff]
  %v2772 = vld [vmem:[%s2748 + $0x8c] sm:$0xf]
  %v2797 = vunpack.c.l.b16 %v2749
  %v2798 = vunpack.c.h.b16 %v2749
  %v2799 = vunpack.c.l.b16 %v2750
  %v2800 = vunpack.c.l.b16 %v2751
  %v2801 = vunpack.c.h.b16 %v2751
  %v2802 = vunpack.c.l.b16 %v2752
  %v2803 = vunpack.c.l.b16 %v2753
  %v2804 = vunpack.c.h.b16 %v2753
  %v2805 = vunpack.c.l.b16 %v2754
  %v2806 = vunpack.c.l.b16 %v2755
  %v2807 = vunpack.c.h.b16 %v2755
  %v2808 = vunpack.c.l.b16 %v2756
  %v2809 = vunpack.c.l.b16 %v2757
  %v2810 = vunpack.c.h.b16 %v2757
  %v2811 = vunpack.c.l.b16 %v2758
  %v2812 = vunpack.c.l.b16 %v2759
  %v2813 = vunpack.c.h.b16 %v2759
  %v2814 = vunpack.c.l.b16 %v2760
  %v2815 = vunpack.c.l.b16 %v2761
  %v2816 = vunpack.c.h.b16 %v2761
  %v2817 = vunpack.c.l.b16 %v2762
  %v2818 = vunpack.c.l.b16 %v2763
  %v2819 = vunpack.c.h.b16 %v2763
  %v2820 = vunpack.c.l.b16 %v2764
  %v2821 = vunpack.c.l.b16 %v2765
  %v2822 = vunpack.c.h.b16 %v2765
  %v2823 = vunpack.c.l.b16 %v2766
  %v2824 = vunpack.c.l.b16 %v2767
  %v2825 = vunpack.c.h.b16 %v2767
  %v2826 = vunpack.c.l.b16 %v2768
  %v2827 = vunpack.c.l.b16 %v2769
  %v2828 = vunpack.c.h.b16 %v2769
  %v2829 = vunpack.c.l.b16 %v2770
  %v2830 = vunpack.c.l.b16 %v2771
  %v2831 = vunpack.c.h.b16 %v2771
  %v2832 = vunpack.c.l.b16 %v2772
  %v2833 = vpack.c.b16 %v2800, %v2797
  %v2834 = vpack.c.b16 %v2801, %v2798
  %v2835 = vpack.c.b16 %v2802, %v2799
  %v2836 = vpack.c.b16 %v2806, %v2803
  %v2837 = vpack.c.b16 %v2807, %v2804
  %v2838 = vpack.c.b16 %v2808, %v2805
  %v2839 = vpack.c.b16 %v2812, %v2809
  %v2840 = vpack.c.b16 %v2813, %v2810
  %v2841 = vpack.c.b16 %v2814, %v2811
  %v2842 = vpack.c.b16 %v2818, %v2815
  %v2843 = vpack.c.b16 %v2819, %v2816
  %v2844 = vpack.c.b16 %v2820, %v2817
  %v2845 = vpack.c.b16 %v2824, %v2821
  %v2846 = vpack.c.b16 %v2825, %v2822
  %v2847 = vpack.c.b16 %v2826, %v2823
  %v2848 = vpack.c.b16 %v2830, %v2827
  %v2849 = vpack.c.b16 %v2831, %v2828
  %v2850 = vpack.c.b16 %v2832, %v2829
  %v2870 = vsel %vm2175, %v2740, 0
  %v2873 = vsel %vm2175, %v2741, 0
  %v2876 = vsel %vm2175, %v2742, 0
  %v2879 = vsel %vm2175, %v2743, 0
  %v2882 = vsel %vm2175, %v2744, 0
  %v2885 = vsel %vm2175, %v2745, 0
  %v2888 = vsel %vm2175, %v2746, 0
  %v2891 = vsel %vm2175, %v2747, 0
  %2893 = vmatprep.subr.bf16.mxu0 %v2834
  %2894 = vmatpush1.bf16.msra.mxu0 %v2833
  %2895 = vmatprep.subr.bf16.mxu0 %v2837
  %2896 = vmatpush1.bf16.msra.mxu0 %v2836
  %2897 = vmatprep.subr.bf16.mxu0 %v2840
  %2898 = vmatpush1.bf16.msra.mxu0 %v2839
  %2899 = vmatprep.subr.bf16.mxu0 %v2843
  %2900 = vmatpush1.bf16.msra.mxu0 %v2842
  %2901 = vmatprep.subr.bf16.mxu0 %v2846
  %2902 = vmatpush1.bf16.msra.mxu0 %v2845
  %2903 = vmatprep.subr.bf16.mxu0 %v2849
  %2904 = vmatpush1.bf16.msra.mxu0 %v2848
  %2905 = vmatprep.subr.bf16.mxu0 0
  %2906 = vmatpush1.bf16.msra.mxu0 0
  %2907 = vmatprep.subr.bf16.mxu0 0
  %2908 = vmatpush1.bf16.msra.mxu0 0
  %2909 = vmatprep.subr.bf16.mxu0 0
  %2910 = vmatpush1.bf16.msra.mxu0 0
  %2911 = vmatprep.subr.bf16.mxu0 0
  %2912 = vmatpush1.bf16.msra.mxu0 0
  %2913 = vmatprep.subr.bf16.mxu0 0
  %2914 = vmatpush1.bf16.msra.mxu0 0
  %2915 = vmatprep.subr.bf16.mxu0 0
  %2916 = vmatpush1.bf16.msra.mxu0 0
  %2917 = vmatprep.subr.bf16.mxu0 0
  %2918 = vmatpush1.bf16.msra.mxu0 0
  %2919 = vmatprep.subr.bf16.mxu0 0
  %2920 = vmatpush1.bf16.msra.mxu0 0
  %2921 = vmatprep.subr.bf16.mxu0 0
  %2922 = vmatpush1.bf16.msra.mxu0 0
  %2923 = vmatprep.subr.bf16.mxu0 0
  %2924 = vmatpush1.bf16.msra.mxu0 0
  %2925 = vmatprep.mubr.bf16.mxu0 0
  %2926 = vmatmul.mubr.bf16.gmra.mrb[0].mxu0 %v2870
  %v2927 = vpop.f32.mrb[0].mxu0
  %v2928 = vadd.f32 0.0, %v2927
  %v2929 = vpop.f32.mrb[0].mxu0
  %v2930 = vadd.f32 0.0, %v2929
  %v2931 = vpop.f32.mrb[0].mxu0
  %v2932 = vadd.f32 0.0, %v2931
  %v2933 = vpop.f32.mrb[0].mxu0
  %v2934 = vadd.f32 0.0, %v2933
  %2935 = vmatprep.mubr.bf16.mxu0 0
  %2936 = vmatmul.mubr.bf16.gmra.mrb[0].mxu0 %v2873
  %v2937 = vpop.f32.mrb[0].mxu0
  %v2938 = vadd.f32 0.0, %v2937
  %v2939 = vpop.f32.mrb[0].mxu0
  %v2940 = vadd.f32 0.0, %v2939
  %v2941 = vpop.f32.mrb[0].mxu0
  %v2942 = vadd.f32 0.0, %v2941
  %v2943 = vpop.f32.mrb[0].mxu0
  %v2944 = vadd.f32 0.0, %v2943
  %2945 = vmatprep.mubr.bf16.mxu0 0
  %2946 = vmatmul.mubr.bf16.gmra.mrb[0].mxu0 %v2876
  %v2947 = vpop.f32.mrb[0].mxu0
  %v2948 = vadd.f32 0.0, %v2947
  %v2949 = vpop.f32.mrb[0].mxu0
  %v2950 = vadd.f32 0.0, %v2949
  %v2951 = vpop.f32.mrb[0].mxu0
  %v2952 = vadd.f32 0.0, %v2951
  %v2953 = vpop.f32.mrb[0].mxu0
  %v2954 = vadd.f32 0.0, %v2953
  %2955 = vmatprep.mubr.bf16.mxu0 0
  %2956 = vmatmul.mubr.bf16.gmra.mrb[0].mxu0 %v2879
  %v2957 = vpop.f32.mrb[0].mxu0
  %v2958 = vadd.f32 0.0, %v2957
  %v2959 = vpop.f32.mrb[0].mxu0
  %v2960 = vadd.f32 0.0, %v2959
  %v2961 = vpop.f32.mrb[0].mxu0
  %v2962 = vadd.f32 0.0, %v2961
  %v2963 = vpop.f32.mrb[0].mxu0
  %v2964 = vadd.f32 0.0, %v2963
  %2965 = vmatprep.mubr.bf16.mxu0 0
  %2966 = vmatmul.mubr.bf16.gmra.mrb[0].mxu0 %v2882
  %v2967 = vpop.f32.mrb[0].mxu0
  %v2968 = vadd.f32 0.0, %v2967
  %v2969 = vpop.f32.mrb[0].mxu0
  %v2970 = vadd.f32 0.0, %v2969
  %v2971 = vpop.f32.mrb[0].mxu0
  %v2972 = vadd.f32 0.0, %v2971
  %v2973 = vpop.f32.mrb[0].mxu0
  %v2974 = vadd.f32 0.0, %v2973
  %2975 = vmatprep.mubr.bf16.mxu0 0
  %2976 = vmatmul.mubr.bf16.gmra.mrb[0].mxu0 %v2885
  %v2977 = vpop.f32.mrb[0].mxu0
  %v2978 = vadd.f32 0.0, %v2977
  %v2979 = vpop.f32.mrb[0].mxu0
  %v2980 = vadd.f32 0.0, %v2979
  %v2981 = vpop.f32.mrb[0].mxu0
  %v2982 = vadd.f32 0.0, %v2981
  %v2983 = vpop.f32.mrb[0].mxu0
  %v2984 = vadd.f32 0.0, %v2983
  %2985 = vmatprep.mubr.bf16.mxu0 0
  %2986 = vmatmul.mubr.bf16.gmra.mrb[0].mxu0 %v2888
  %v2987 = vpop.f32.mrb[0].mxu0
  %v2988 = vadd.f32 0.0, %v2987
  %v2989 = vpop.f32.mrb[0].mxu0
  %v2990 = vadd.f32 0.0, %v2989
  %v2991 = vpop.f32.mrb[0].mxu0
  %v2992 = vadd.f32 0.0, %v2991
  %v2993 = vpop.f32.mrb[0].mxu0
  %v2994 = vadd.f32 0.0, %v2993
  %2995 = vmatprep.mubr.bf16.mxu0 0
  %2996 = vmatmul.mubr.bf16.gmra.mrb[0].mxu0 %v2891
  %v2997 = vpop.f32.mrb[0].mxu0
  %v2998 = vadd.f32 0.0, %v2997
  %v2999 = vpop.f32.mrb[0].mxu0
  %v3000 = vadd.f32 0.0, %v2999
  %v3001 = vpop.f32.mrb[0].mxu0
  %v3002 = vadd.f32 0.0, %v3001
  %v3003 = vpop.f32.mrb[0].mxu0
  %v3004 = vadd.f32 0.0, %v3003
  %3005 = vdwg.mxu0
  %3006 = vmatprep.subr.bf16.mxu0 0
  %3007 = vmatpush1.bf16.msra.mxu0 %v2835
  %3008 = vmatprep.subr.bf16.mxu0 0
  %3009 = vmatpush1.bf16.msra.mxu0 %v2838
  %3010 = vmatprep.subr.bf16.mxu0 0
  %3011 = vmatpush1.bf16.msra.mxu0 %v2841
  %3012 = vmatprep.subr.bf16.mxu0 0
  %3013 = vmatpush1.bf16.msra.mxu0 %v2844
  %3014 = vmatprep.subr.bf16.mxu0 0
  %3015 = vmatpush1.bf16.msra.mxu0 %v2847
  %3016 = vmatprep.subr.bf16.mxu0 0
  %3017 = vmatpush1.bf16.msra.mxu0 %v2850
  %3018 = vmatprep.subr.bf16.mxu0 0
  %3019 = vmatpush1.bf16.msra.mxu0 0
  %3020 = vmatprep.subr.bf16.mxu0 0
  %3021 = vmatpush1.bf16.msra.mxu0 0
  %3022 = vmatprep.subr.bf16.mxu0 0
  %3023 = vmatpush1.bf16.msra.mxu0 0
  %3024 = vmatprep.subr.bf16.mxu0 0
  %3025 = vmatpush1.bf16.msra.mxu0 0
  %3026 = vmatprep.subr.bf16.mxu0 0
  %3027 = vmatpush1.bf16.msra.mxu0 0
  %3028 = vmatprep.subr.bf16.mxu0 0
  %3029 = vmatpush1.bf16.msra.mxu0 0
  %3030 = vmatprep.subr.bf16.mxu0 0
  %3031 = vmatpush1.bf16.msra.mxu0 0
  %3032 = vmatprep.subr.bf16.mxu0 0
  %3033 = vmatpush1.bf16.msra.mxu0 0
  %3034 = vmatprep.subr.bf16.mxu0 0
  %3035 = vmatpush1.bf16.msra.mxu0 0
  %3036 = vmatprep.subr.bf16.mxu0 0
  %3037 = vmatpush1.bf16.msra.mxu0 0
  %3038 = vmatprep.mubr.bf16.mxu0 0
  %3039 = vmatmul.mubr.bf16.gmra.mrb[0].mxu0 %v2870
  %v3040 = vpop.f32.mrb[0].mxu0
  %v3041 = vadd.f32 0.0, %v3040
  %v3042 = vpop.f32.mrb[0].mxu0
  %v3043 = vpop.f32.mrb[0].mxu0
  %v3044 = vadd.f32 0.0, %v3043
  %v3045 = vpop.f32.mrb[0].mxu0
  %3046 = vmatprep.mubr.bf16.mxu0 0
  %3047 = vmatmul.mubr.bf16.gmra.mrb[0].mxu0 %v2873
  %v3048 = vpop.f32.mrb[0].mxu0
  %v3049 = vadd.f32 0.0, %v3048
  %v3050 = vpop.f32.mrb[0].mxu0
  %v3051 = vpop.f32.mrb[0].mxu0
  %v3052 = vadd.f32 0.0, %v3051
  %v3053 = vpop.f32.mrb[0].mxu0
  %3054 = vmatprep.mubr.bf16.mxu0 0
  %3055 = vmatmul.mubr.bf16.gmra.mrb[0].mxu0 %v2876
  %v3056 = vpop.f32.mrb[0].mxu0
  %v3057 = vadd.f32 0.0, %v3056
  %v3058 = vpop.f32.mrb[0].mxu0
  %v3059 = vpop.f32.mrb[0].mxu0
  %v3060 = vadd.f32 0.0, %v3059
  %v3061 = vpop.f32.mrb[0].mxu0
  %3062 = vmatprep.mubr.bf16.mxu0 0
  %3063 = vmatmul.mubr.bf16.gmra.mrb[0].mxu0 %v2879
  %v3064 = vpop.f32.mrb[0].mxu0
  %v3065 = vadd.f32 0.0, %v3064
  %v3066 = vpop.f32.mrb[0].mxu0
  %v3067 = vpop.f32.mrb[0].mxu0
  %v3068 = vadd.f32 0.0, %v3067
  %v3069 = vpop.f32.mrb[0].mxu0
  %3070 = vmatprep.mubr.bf16.mxu0 0
  %3071 = vmatmul.mubr.bf16.gmra.mrb[0].mxu0 %v2882
  %v3072 = vpop.f32.mrb[0].mxu0
  %v3073 = vadd.f32 0.0, %v3072
  %v3074 = vpop.f32.mrb[0].mxu0
  %v3075 = vpop.f32.mrb[0].mxu0
  %v3076 = vadd.f32 0.0, %v3075
  %v3077 = vpop.f32.mrb[0].mxu0
  %3078 = vmatprep.mubr.bf16.mxu0 0
  %3079 = vmatmul.mubr.bf16.gmra.mrb[0].mxu0 %v2885
  %v3080 = vpop.f32.mrb[0].mxu0
  %v3081 = vadd.f32 0.0, %v3080
  %v3082 = vpop.f32.mrb[0].mxu0
  %v3083 = vpop.f32.mrb[0].mxu0
  %v3084 = vadd.f32 0.0, %v3083
  %v3085 = vpop.f32.mrb[0].mxu0
  %3086 = vmatprep.mubr.bf16.mxu0 0
  %3087 = vmatmul.mubr.bf16.gmra.mrb[0].mxu0 %v2888
  %v3088 = vpop.f32.mrb[0].mxu0
  %v3089 = vadd.f32 0.0, %v3088
  %v3090 = vpop.f32.mrb[0].mxu0
  %v3091 = vpop.f32.mrb[0].mxu0
  %v3092 = vadd.f32 0.0, %v3091
  %v3093 = vpop.f32.mrb[0].mxu0
  %3094 = vmatprep.mubr.bf16.mxu0 0
  %3095 = vmatmul.mubr.bf16.gmra.mrb[0].mxu0 %v2891
  %v3096 = vpop.f32.mrb[0].mxu0
  %v3097 = vadd.f32 0.0, %v3096
  %v3098 = vpop.f32.mrb[0].mxu0
  %v3099 = vpop.f32.mrb[0].mxu0
  %v3100 = vadd.f32 0.0, %v3099
  %v3101 = vpop.f32.mrb[0].mxu0
  %3102 = vdwg.mxu0
  %v3103 = vadd.f32 %v2565, %v2928
  %v3104 = vadd.f32 %v2567, %v2930
  %v3105 = vadd.f32 %v2678, %v3041
  %v3106 = vadd.f32 %v2569, %v2932
  %v3107 = vadd.f32 %v2571, %v2934
  %v3108 = vadd.f32 %v2681, %v3044
  %v3109 = vadd.f32 %v2575, %v2938
  %v3110 = vadd.f32 %v2577, %v2940
  %v3111 = vadd.f32 %v2686, %v3049
  %v3112 = vadd.f32 %v2579, %v2942
  %v3113 = vadd.f32 %v2581, %v2944
  %v3114 = vadd.f32 %v2689, %v3052
  %v3115 = vadd.f32 %v2585, %v2948
  %v3116 = vadd.f32 %v2587, %v2950
  %v3117 = vadd.f32 %v2694, %v3057
  %v3118 = vadd.f32 %v2589, %v2952
  %v3119 = vadd.f32 %v2591, %v2954
  %v3120 = vadd.f32 %v2697, %v3060
  %v3121 = vadd.f32 %v2595, %v2958
  %v3122 = vadd.f32 %v2597, %v2960
  %v3123 = vadd.f32 %v2702, %v3065
  %v3124 = vadd.f32 %v2599, %v2962
  %v3125 = vadd.f32 %v2601, %v2964
  %v3126 = vadd.f32 %v2705, %v3068
  %v3127 = vadd.f32 %v2605, %v2968
  %v3128 = vadd.f32 %v2607, %v2970
  %v3129 = vadd.f32 %v2710, %v3073
  %v3130 = vadd.f32 %v2609, %v2972
  %v3131 = vadd.f32 %v2611, %v2974
  %v3132 = vadd.f32 %v2713, %v3076
  %v3133 = vadd.f32 %v2615, %v2978
  %v3134 = vadd.f32 %v2617, %v2980
  %v3135 = vadd.f32 %v2718, %v3081
  %v3136 = vadd.f32 %v2619, %v2982
  %v3137 = vadd.f32 %v2621, %v2984
  %v3138 = vadd.f32 %v2721, %v3084
  %v3139 = vadd.f32 %v2625, %v2988
  %v3140 = vadd.f32 %v2627, %v2990
  %v3141 = vadd.f32 %v2726, %v3089
  %v3142 = vadd.f32 %v2629, %v2992
  %v3143 = vadd.f32 %v2631, %v2994
  %v3144 = vadd.f32 %v2729, %v3092
  %v3145 = vadd.f32 %v2635, %v2998
  %v3146 = vadd.f32 %v2637, %v3000
  %v3147 = vadd.f32 %v2734, %v3097
  %v3148 = vadd.f32 %v2639, %v3002
  %v3149 = vadd.f32 %v2641, %v3004
  %v3150 = vadd.f32 %v2737, %v3100
  %v3151 = vld [vmem:[%s6] sm:$0x77]
  %v3152 = vld [vmem:[%s6 + $0x8] sm:$0x7]
  %v3155 = vlaneseq
  %v3156 = vshrl.u32 %v3155, 7
  %v3157 = vsub.s32 0, %v3156
  %v3158 = vrot.slane %v3151, %v3157
  %v3159 = vlaneseq
  %v3160 = vshrl.u32 %v3159, 7
  %v3161 = vsub.s32 4, %v3160
  %v3162 = vrot.slane %v3151, %v3161
  %v3163 = vlaneseq
  %v3164 = vshrl.u32 %v3163, 7
  %v3165 = vsub.s32 0, %v3164
  %v3166 = vrot.slane %v3152, %v3165
  %v3170 = vlaneseq
  %v3171 = vshrl.u32 %v3170, 7
  %v3172 = vsub.s32 0, %v3171
  %v3173 = vrot.slane %v3158, %v3172
  %v3174 = vlaneseq
  %v3175 = vshrl.u32 %v3174, 7
  %v3176 = vsub.s32 0, %v3175
  %v3177 = vrot.slane %v3162, %v3176
  %v3178 = vlaneseq
  %v3179 = vshrl.u32 %v3178, 7
  %v3180 = vsub.s32 0, %v3179
  %v3181 = vrot.slane %v3166, %v3180
  %v3182 = vadd.f32 %v3103, %v3173
  %v3183 = vadd.f32 %v3104, %v3177
  %v3184 = vadd.f32 %v3105, %v3181
  %v3185 = vadd.f32 %v3106, %v3173
  %v3186 = vadd.f32 %v3107, %v3177
  %v3187 = vadd.f32 %v3108, %v3181
  %v3188 = vadd.f32 %v3109, %v3173
  %v3189 = vadd.f32 %v3110, %v3177
  %v3190 = vadd.f32 %v3111, %v3181
  %v3191 = vadd.f32 %v3112, %v3173
  %v3192 = vadd.f32 %v3113, %v3177
  %v3193 = vadd.f32 %v3114, %v3181
  %v3194 = vadd.f32 %v3115, %v3173
  %v3195 = vadd.f32 %v3116, %v3177
  %v3196 = vadd.f32 %v3117, %v3181
  %v3197 = vadd.f32 %v3118, %v3173
  %v3198 = vadd.f32 %v3119, %v3177
  %v3199 = vadd.f32 %v3120, %v3181
  %v3200 = vadd.f32 %v3121, %v3173
  %v3201 = vadd.f32 %v3122, %v3177
  %v3202 = vadd.f32 %v3123, %v3181
  %v3203 = vadd.f32 %v3124, %v3173
  %v3204 = vadd.f32 %v3125, %v3177
  %v3205 = vadd.f32 %v3126, %v3181
  %v3206 = vadd.f32 %v3127, %v3173
  %v3207 = vadd.f32 %v3128, %v3177
  %v3208 = vadd.f32 %v3129, %v3181
  %v3209 = vadd.f32 %v3130, %v3173
  %v3210 = vadd.f32 %v3131, %v3177
  %v3211 = vadd.f32 %v3132, %v3181
  %v3212 = vadd.f32 %v3133, %v3173
  %v3213 = vadd.f32 %v3134, %v3177
  %v3214 = vadd.f32 %v3135, %v3181
  %v3215 = vadd.f32 %v3136, %v3173
  %v3216 = vadd.f32 %v3137, %v3177
  %v3217 = vadd.f32 %v3138, %v3181
  %v3218 = vadd.f32 %v3139, %v3173
  %v3219 = vadd.f32 %v3140, %v3177
  %v3220 = vadd.f32 %v3141, %v3181
  %v3221 = vadd.f32 %v3142, %v3173
  %v3222 = vadd.f32 %v3143, %v3177
  %v3223 = vadd.f32 %v3144, %v3181
  %v3224 = vadd.f32 %v3145, %v3173
  %v3225 = vadd.f32 %v3146, %v3177
  %v3226 = vadd.f32 %v3147, %v3181
  %v3227 = vadd.f32 %v3148, %v3173
  %v3228 = vadd.f32 %v3149, %v3177
  %v3229 = vadd.f32 %v3150, %v3181
  %v3230 = vmax.f32 %v3182, 0.0
  %v3231 = vmax.f32 %v3183, 0.0
  %v3232 = vmax.f32 %v3184, 0.0
  %v3233 = vmax.f32 %v3185, 0.0
  %v3234 = vmax.f32 %v3186, 0.0
  %v3235 = vmax.f32 %v3187, 0.0
  %v3236 = vmax.f32 %v3188, 0.0
  %v3237 = vmax.f32 %v3189, 0.0
  %v3238 = vmax.f32 %v3190, 0.0
  %v3239 = vmax.f32 %v3191, 0.0
  %v3240 = vmax.f32 %v3192, 0.0
  %v3241 = vmax.f32 %v3193, 0.0
  %v3242 = vmax.f32 %v3194, 0.0
  %v3243 = vmax.f32 %v3195, 0.0
  %v3244 = vmax.f32 %v3196, 0.0
  %v3245 = vmax.f32 %v3197, 0.0
  %v3246 = vmax.f32 %v3198, 0.0
  %v3247 = vmax.f32 %v3199, 0.0
  %v3248 = vmax.f32 %v3200, 0.0
  %v3249 = vmax.f32 %v3201, 0.0
  %v3250 = vmax.f32 %v3202, 0.0
  %v3251 = vmax.f32 %v3203, 0.0
  %v3252 = vmax.f32 %v3204, 0.0
  %v3253 = vmax.f32 %v3205, 0.0
  %v3254 = vmax.f32 %v3206, 0.0
  %v3255 = vmax.f32 %v3207, 0.0
  %v3256 = vmax.f32 %v3208, 0.0
  %v3257 = vmax.f32 %v3209, 0.0
  %v3258 = vmax.f32 %v3210, 0.0
  %v3259 = vmax.f32 %v3211, 0.0
  %v3260 = vmax.f32 %v3212, 0.0
  %v3261 = vmax.f32 %v3213, 0.0
  %v3262 = vmax.f32 %v3214, 0.0
  %v3263 = vmax.f32 %v3215, 0.0
  %v3264 = vmax.f32 %v3216, 0.0
  %v3265 = vmax.f32 %v3217, 0.0
  %v3266 = vmax.f32 %v3218, 0.0
  %v3267 = vmax.f32 %v3219, 0.0
  %v3268 = vmax.f32 %v3220, 0.0
  %v3269 = vmax.f32 %v3221, 0.0
  %v3270 = vmax.f32 %v3222, 0.0
  %v3271 = vmax.f32 %v3223, 0.0
  %v3272 = vmax.f32 %v3224, 0.0
  %v3273 = vmax.f32 %v3225, 0.0
  %v3274 = vmax.f32 %v3226, 0.0
  %v3275 = vmax.f32 %v3227, 0.0
  %v3276 = vmax.f32 %v3228, 0.0
  %v3277 = vmax.f32 %v3229, 0.0
  %v3278 = vadd.f32 %v3230, %v3233
  %v3279 = vadd.f32 %v3278, %v3236
  %v3280 = vadd.f32 %v3279, %v3239
  %v3281 = vadd.f32 %v3280, %v3242
  %v3282 = vadd.f32 %v3281, %v3245
  %v3283 = vadd.f32 %v3282, %v3248
  %v3284 = vadd.f32 %v3283, %v3251
  %v3285 = vadd.f32 %v3284, %v3254
  %v3286 = vadd.f32 %v3285, %v3257
  %v3287 = vadd.f32 %v3286, %v3260
  %v3288 = vadd.f32 %v3287, %v3263
  %v3289 = vadd.f32 %v3288, %v3266
  %v3290 = vadd.f32 %v3289, %v3269
  %v3291 = vadd.f32 %v3290, %v3272
  %v3292 = vadd.f32 %v3291, %v3275
  %v3293 = vrot.slane %v3292, 4
  %v3294 = vadd.f32 %v3292, %v3293
  %v3295 = vrot.slane %v3294, 2
  %v3296 = vadd.f32 %v3294, %v3295
  %v3297 = vrot.slane %v3296, 1
  %v3298 = vadd.f32 %v3296, %v3297
  %v3299 = vadd.f32 %v3231, %v3234
  %v3300 = vadd.f32 %v3299, %v3237
  %v3301 = vadd.f32 %v3300, %v3240
  %v3302 = vadd.f32 %v3301, %v3243
  %v3303 = vadd.f32 %v3302, %v3246
  %v3304 = vadd.f32 %v3303, %v3249
  %v3305 = vadd.f32 %v3304, %v3252
  %v3306 = vadd.f32 %v3305, %v3255
  %v3307 = vadd.f32 %v3306, %v3258
  %v3308 = vadd.f32 %v3307, %v3261
  %v3309 = vadd.f32 %v3308, %v3264
  %v3310 = vadd.f32 %v3309, %v3267
  %v3311 = vadd.f32 %v3310, %v3270
  %v3312 = vadd.f32 %v3311, %v3273
  %v3313 = vadd.f32 %v3312, %v3276
  %v3314 = vrot.slane %v3313, 4
  %v3315 = vadd.f32 %v3313, %v3314
  %v3316 = vrot.slane %v3315, 2
  %v3317 = vadd.f32 %v3315, %v3316
  %v3318 = vrot.slane %v3317, 1
  %v3319 = vadd.f32 %v3317, %v3318
  %v3320 = vadd.f32 %v3232, %v3235
  %v3321 = vadd.f32 %v3320, %v3238
  %v3322 = vadd.f32 %v3321, %v3241
  %v3323 = vadd.f32 %v3322, %v3244
  %v3324 = vadd.f32 %v3323, %v3247
  %v3325 = vadd.f32 %v3324, %v3250
  %v3326 = vadd.f32 %v3325, %v3253
  %v3327 = vadd.f32 %v3326, %v3256
  %v3328 = vadd.f32 %v3327, %v3259
  %v3329 = vadd.f32 %v3328, %v3262
  %v3330 = vadd.f32 %v3329, %v3265
  %v3331 = vadd.f32 %v3330, %v3268
  %v3332 = vadd.f32 %v3331, %v3271
  %v3333 = vadd.f32 %v3332, %v3274
  %v3334 = vadd.f32 %v3333, %v3277
  %v3335 = vrot.slane %v3334, 4
  %v3336 = vadd.f32 %v3334, %v3335
  %v3337 = vrot.slane %v3336, 2
  %v3338 = vadd.f32 %v3336, %v3337
  %v3339 = vrot.slane %v3338, 1
  %v3340 = vadd.f32 %v3338, %v3339
  %v3341 = vld [vmem:[%s7] sm:$0xff]
  %v3342 = vld [vmem:[%s7 + $0x8] sm:$0xff]
  %v3343 = vld [vmem:[%s7 + $0x10] sm:$0xff]
  %v3344 = vld [vmem:[%s7 + $0x18] sm:$0xff]
  %v3345 = vld [vmem:[%s7 + $0x20] sm:$0xff]
  %v3346 = vld [vmem:[%s7 + $0x28] sm:$0xff]
  %v3347 = vld [vmem:[%s7 + $0x30] sm:$0xff]
  %v3348 = vld [vmem:[%s7 + $0x38] sm:$0xff]
  %v3349 = vld [vmem:[%s7 + $0x40] sm:$0xff]
  %v3350 = vld [vmem:[%s7 + $0x48] sm:$0xff]
  %v3351 = vld [vmem:[%s7 + $0x50] sm:$0xff]
  %v3352 = vld [vmem:[%s7 + $0x58] sm:$0xff]
  %v3353 = vld [vmem:[%s7 + $0x60] sm:$0xff]
  %v3354 = vld [vmem:[%s7 + $0x68] sm:$0xff]
  %v3355 = vld [vmem:[%s7 + $0x70] sm:$0xff]
  %v3356 = vld [vmem:[%s7 + $0x78] sm:$0xff]
  %v3357 = vld [vmem:[%s7 + $0x80] sm:$0xff]
  %v3358 = vld [vmem:[%s7 + $0x88] sm:$0xff]
  %v3359 = vld [vmem:[%s7 + $0x90] sm:$0xff]
  %v3360 = vld [vmem:[%s7 + $0x98] sm:$0xff]
  %v3361 = vld [vmem:[%s7 + $0xa0] sm:$0xff]
  %v3362 = vld [vmem:[%s7 + $0xa8] sm:$0xff]
  %v3363 = vld [vmem:[%s7 + $0xb0] sm:$0xff]
  %v3364 = vld [vmem:[%s7 + $0xb8] sm:$0xff]
  %v3365 = vld [vmem:[%s7 + $0xc0] sm:$0xff]
  %v3366 = vld [vmem:[%s7 + $0xc8] sm:$0xff]
  %v3367 = vld [vmem:[%s7 + $0xd0] sm:$0xff]
  %v3368 = vld [vmem:[%s7 + $0xd8] sm:$0xff]
  %v3369 = vld [vmem:[%s7 + $0xe0] sm:$0xff]
  %v3370 = vld [vmem:[%s7 + $0xe8] sm:$0xff]
  %v3371 = vld [vmem:[%s7 + $0xf0] sm:$0xff]
  %v3372 = vld [vmem:[%s7 + $0xf8] sm:$0xff]
  %v3373 = vld [vmem:[%s7 + $0x100] sm:$0xff]
  %v3374 = vld [vmem:[%s7 + $0x108] sm:$0xff]
  %v3375 = vld [vmem:[%s7 + $0x110] sm:$0xff]
  %v3376 = vld [vmem:[%s7 + $0x118] sm:$0xff]
  %v3377 = vld [vmem:[%s7 + $0x120] sm:$0xff]
  %v3378 = vld [vmem:[%s7 + $0x128] sm:$0xff]
  %v3379 = vld [vmem:[%s7 + $0x130] sm:$0xff]
  %v3380 = vld [vmem:[%s7 + $0x138] sm:$0xff]
  %v3381 = vld [vmem:[%s7 + $0x140] sm:$0xff]
  %v3382 = vld [vmem:[%s7 + $0x148] sm:$0xff]
  %v3383 = vld [vmem:[%s7 + $0x150] sm:$0xff]
  %v3384 = vld [vmem:[%s7 + $0x158] sm:$0xff]
  %v3385 = vld [vmem:[%s7 + $0x160] sm:$0xff]
  %v3386 = vld [vmem:[%s7 + $0x168] sm:$0xff]
  %v3387 = vld [vmem:[%s7 + $0x170] sm:$0xff]
  %v3388 = vld [vmem:[%s7 + $0x178] sm:$0xff]
  %3389 = vmatprep.subr.mxu0 0.0
  %3390 = vmatpush1.msra.mxu0 %v3341
  %3391 = vmatprep.subr.mxu0 0.0
  %3392 = vmatpush1.msra.mxu0 %v3342
  %3393 = vmatprep.subr.mxu0 0.0
  %3394 = vmatpush1.msra.mxu0 %v3343
  %3395 = vmatprep.subr.mxu0 0.0
  %3396 = vmatpush1.msra.mxu0 %v3344
  %3397 = vmatprep.subr.mxu0 0.0
  %3398 = vmatpush1.msra.mxu0 %v3345
  %3399 = vmatprep.subr.mxu0 0.0
  %3400 = vmatpush1.msra.mxu0 %v3346
  %3401 = vmatprep.subr.mxu0 0.0
  %3402 = vmatpush1.msra.mxu0 %v3347
  %3403 = vmatprep.subr.mxu0 0.0
  %3404 = vmatpush1.msra.mxu0 %v3348
  %3405 = vmatprep.subr.mxu0 0.0
  %3406 = vmatpush1.msra.mxu0 %v3349
  %3407 = vmatprep.subr.mxu0 0.0
  %3408 = vmatpush1.msra.mxu0 %v3350
  %3409 = vmatprep.subr.mxu0 0.0
  %3410 = vmatpush1.msra.mxu0 %v3351
  %3411 = vmatprep.subr.mxu0 0.0
  %3412 = vmatpush1.msra.mxu0 %v3352
  %3413 = vmatprep.subr.mxu0 0.0
  %3414 = vmatpush1.msra.mxu0 %v3353
  %3415 = vmatprep.subr.mxu0 0.0
  %3416 = vmatpush1.msra.mxu0 %v3354
  %3417 = vmatprep.subr.mxu0 0.0
  %3418 = vmatpush1.msra.mxu0 %v3355
  %3419 = vmatprep.subr.mxu0 0.0
  %3420 = vmatpush1.msra.mxu0 %v3356
  %3421 = vmatprep.subr.mxu0 0.0
  %3422 = vmatpush1.msra.mxu0 %v3357
  %3423 = vmatprep.subr.mxu0 0.0
  %3424 = vmatpush1.msra.mxu0 %v3358
  %3425 = vmatprep.subr.mxu0 0.0
  %3426 = vmatpush1.msra.mxu0 %v3359
  %3427 = vmatprep.subr.mxu0 0.0
  %3428 = vmatpush1.msra.mxu0 %v3360
  %3429 = vmatprep.subr.mxu0 0.0
  %3430 = vmatpush1.msra.mxu0 %v3361
  %3431 = vmatprep.subr.mxu0 0.0
  %3432 = vmatpush1.msra.mxu0 %v3362
  %3433 = vmatprep.subr.mxu0 0.0
  %3434 = vmatpush1.msra.mxu0 %v3363
  %3435 = vmatprep.subr.mxu0 0.0
  %3436 = vmatpush1.msra.mxu0 %v3364
  %3437 = vmatprep.subr.mxu0 0.0
  %3438 = vmatpush1.msra.mxu0 %v3365
  %3439 = vmatprep.subr.mxu0 0.0
  %3440 = vmatpush1.msra.mxu0 %v3366
  %3441 = vmatprep.subr.mxu0 0.0
  %3442 = vmatpush1.msra.mxu0 %v3367
  %3443 = vmatprep.subr.mxu0 0.0
  %3444 = vmatpush1.msra.mxu0 %v3368
  %3445 = vmatprep.subr.mxu0 0.0
  %3446 = vmatpush1.msra.mxu0 %v3369
  %3447 = vmatprep.subr.mxu0 0.0
  %3448 = vmatpush1.msra.mxu0 %v3370
  %3449 = vmatprep.subr.mxu0 0.0
  %3450 = vmatpush1.msra.mxu0 %v3371
  %3451 = vmatprep.subr.mxu0 0.0
  %3452 = vmatpush1.msra.mxu0 %v3372
  %3453 = vmatprep.mubr.f32.mxu0 %v3319
  %3454 = vmatmul.mubr.f32.gmra.mrb[0].mxu0 %v3298
  %v3455 = vpop.f32.mrb[0].mxu0
  %v3456 = vadd.f32 0.0, %v3455
  %v3457 = vpop.f32.mrb[0].mxu0
  %3458 = vdwg.mxu0
  %3459 = vmatprep.subr.mxu0 0.0
  %3460 = vmatpush1.msra.mxu0 %v3373
  %3461 = vmatprep.subr.mxu0 0.0
  %3462 = vmatpush1.msra.mxu0 %v3374
  %3463 = vmatprep.subr.mxu0 0.0
  %3464 = vmatpush1.msra.mxu0 %v3375
  %3465 = vmatprep.subr.mxu0 0.0
  %3466 = vmatpush1.msra.mxu0 %v3376
  %3467 = vmatprep.subr.mxu0 0.0
  %3468 = vmatpush1.msra.mxu0 %v3377
  %3469 = vmatprep.subr.mxu0 0.0
  %3470 = vmatpush1.msra.mxu0 %v3378
  %3471 = vmatprep.subr.mxu0 0.0
  %3472 = vmatpush1.msra.mxu0 %v3379
  %3473 = vmatprep.subr.mxu0 0.0
  %3474 = vmatpush1.msra.mxu0 %v3380
  %3475 = vmatprep.subr.mxu0 0.0
  %3476 = vmatpush1.msra.mxu0 %v3381
  %3477 = vmatprep.subr.mxu0 0.0
  %3478 = vmatpush1.msra.mxu0 %v3382
  %3479 = vmatprep.subr.mxu0 0.0
  %3480 = vmatpush1.msra.mxu0 %v3383
  %3481 = vmatprep.subr.mxu0 0.0
  %3482 = vmatpush1.msra.mxu0 %v3384
  %3483 = vmatprep.subr.mxu0 0.0
  %3484 = vmatpush1.msra.mxu0 %v3385
  %3485 = vmatprep.subr.mxu0 0.0
  %3486 = vmatpush1.msra.mxu0 %v3386
  %3487 = vmatprep.subr.mxu0 0.0
  %3488 = vmatpush1.msra.mxu0 %v3387
  %3489 = vmatprep.subr.mxu0 0.0
  %3490 = vmatpush1.msra.mxu0 %v3388
  %3491 = vmatprep.subr.mxu0 0.0
  %3492 = vmatpush1.msra.mxu0 0.0
  %3493 = vmatprep.subr.mxu0 0.0
  %3494 = vmatpush1.msra.mxu0 0.0
  %3495 = vmatprep.subr.mxu0 0.0
  %3496 = vmatpush1.msra.mxu0 0.0
  %3497 = vmatprep.subr.mxu0 0.0
  %3498 = vmatpush1.msra.mxu0 0.0
  %3499 = vmatprep.subr.mxu0 0.0
  %3500 = vmatpush1.msra.mxu0 0.0
  %3501 = vmatprep.subr.mxu0 0.0
  %3502 = vmatpush1.msra.mxu0 0.0
  %3503 = vmatprep.subr.mxu0 0.0
  %3504 = vmatpush1.msra.mxu0 0.0
  %3505 = vmatprep.subr.mxu0 0.0
  %3506 = vmatpush1.msra.mxu0 0.0
  %3507 = vmatprep.subr.mxu0 0.0
  %3508 = vmatpush1.msra.mxu0 0.0
  %3509 = vmatprep.subr.mxu0 0.0
  %3510 = vmatpush1.msra.mxu0 0.0
  %3511 = vmatprep.subr.mxu0 0.0
  %3512 = vmatpush1.msra.mxu0 0.0
  %3513 = vmatprep.subr.mxu0 0.0
  %3514 = vmatpush1.msra.mxu0 0.0
  %3515 = vmatprep.subr.mxu0 0.0
  %3516 = vmatpush1.msra.mxu0 0.0
  %3517 = vmatprep.subr.mxu0 0.0
  %3518 = vmatpush1.msra.mxu0 0.0
  %3519 = vmatprep.subr.mxu0 0.0
  %3520 = vmatpush1.msra.mxu0 0.0
  %3521 = vmatprep.subr.mxu0 0.0
  %3522 = vmatpush1.msra.mxu0 0.0
  %3523 = vmatprep.mubr.f32.mxu0 0.0
  %3524 = vmatmul.mubr.f32.gmra.mrb[0].mxu0 %v3340
  %v3525 = vpop.f32.mrb[0].mxu0
  %v3526 = vadd.f32 %v3456, %v3525
  %v3527 = vpop.f32.mrb[0].mxu0
  %3528 = vdwg.mxu0
  %v3529 = vld [vmem:[%s8] sm:$0xff]
  %v3530 = vld [vmem:[%s8 + $0x8] sm:$0xff]
  %v3531 = vld [vmem:[%s8 + $0x10] sm:$0xff]
  %v3532 = vld [vmem:[%s8 + $0x18] sm:$0xff]
  %v3533 = vld [vmem:[%s8 + $0x20] sm:$0xff]
  %v3534 = vld [vmem:[%s8 + $0x28] sm:$0xff]
  %v3535 = vld [vmem:[%s8 + $0x30] sm:$0xff]
  %v3536 = vld [vmem:[%s8 + $0x38] sm:$0xff]
  %v3537 = vld [vmem:[%s8 + $0x40] sm:$0xff]
  %vm3538 = vcmask 195584
  %v3540 = vsel %vm3538, %v3526, 0
  %3542 = vmatprep.subr.mxu0 %v3530
  %3543 = vmatpush1.msra.mxu0 %v3529
  %3544 = vmatprep.subr.mxu0 %v3533
  %3545 = vmatpush1.msra.mxu0 %v3532
  %3546 = vmatprep.subr.mxu0 %v3536
  %3547 = vmatpush1.msra.mxu0 %v3535
  %3548 = vmatprep.subr.mxu0 0.0
  %3549 = vmatpush1.msra.mxu0 0.0
  %3550 = vmatprep.subr.mxu0 0.0
  %3551 = vmatpush1.msra.mxu0 0.0
  %3552 = vmatprep.subr.mxu0 0.0
  %3553 = vmatpush1.msra.mxu0 0.0
  %3554 = vmatprep.subr.mxu0 0.0
  %3555 = vmatpush1.msra.mxu0 0.0
  %3556 = vmatprep.subr.mxu0 0.0
  %3557 = vmatpush1.msra.mxu0 0.0
  %3558 = vmatprep.subr.mxu0 0.0
  %3559 = vmatpush1.msra.mxu0 0.0
  %3560 = vmatprep.subr.mxu0 0.0
  %3561 = vmatpush1.msra.mxu0 0.0
  %3562 = vmatprep.subr.mxu0 0.0
  %3563 = vmatpush1.msra.mxu0 0.0
  %3564 = vmatprep.subr.mxu0 0.0
  %3565 = vmatpush1.msra.mxu0 0.0
  %3566 = vmatprep.subr.mxu0 0.0
  %3567 = vmatpush1.msra.mxu0 0.0
  %3568 = vmatprep.subr.mxu0 0.0
  %3569 = vmatpush1.msra.mxu0 0.0
  %3570 = vmatprep.subr.mxu0 0.0
  %3571 = vmatpush1.msra.mxu0 0.0
  %3572 = vmatprep.subr.mxu0 0.0
  %3573 = vmatpush1.msra.mxu0 0.0
  %3574 = vmatprep.subr.mxu0 0.0
  %3575 = vmatpush1.msra.mxu0 0.0
  %3576 = vmatprep.subr.mxu0 0.0
  %3577 = vmatpush1.msra.mxu0 0.0
  %3578 = vmatprep.subr.mxu0 0.0
  %3579 = vmatpush1.msra.mxu0 0.0
  %3580 = vmatprep.subr.mxu0 0.0
  %3581 = vmatpush1.msra.mxu0 0.0
  %3582 = vmatprep.subr.mxu0 0.0
  %3583 = vmatpush1.msra.mxu0 0.0
  %3584 = vmatprep.subr.mxu0 0.0
  %3585 = vmatpush1.msra.mxu0 0.0
  %3586 = vmatprep.subr.mxu0 0.0
  %3587 = vmatpush1.msra.mxu0 0.0
  %3588 = vmatprep.subr.mxu0 0.0
  %3589 = vmatpush1.msra.mxu0 0.0
  %3590 = vmatprep.subr.mxu0 0.0
  %3591 = vmatpush1.msra.mxu0 0.0
  %3592 = vmatprep.subr.mxu0 0.0
  %3593 = vmatpush1.msra.mxu0 0.0
  %3594 = vmatprep.subr.mxu0 0.0
  %3595 = vmatpush1.msra.mxu0 0.0
  %3596 = vmatprep.subr.mxu0 0.0
  %3597 = vmatpush1.msra.mxu0 0.0
  %3598 = vmatprep.subr.mxu0 0.0
  %3599 = vmatpush1.msra.mxu0 0.0
  %3600 = vmatprep.subr.mxu0 0.0
  %3601 = vmatpush1.msra.mxu0 0.0
  %3602 = vmatprep.subr.mxu0 0.0
  %3603 = vmatpush1.msra.mxu0 0.0
  %3604 = vmatprep.subr.mxu0 0.0
  %3605 = vmatpush1.msra.mxu0 0.0
  %3606 = vmatprep.mubr.f32.mxu0 0.0
  %3607 = vmatmul.mubr.f32.gmra.mrb[0].mxu0 %v3540
  %v3608 = vpop.f32.mrb[0].mxu0
  %v3609 = vadd.f32 0.0, %v3608
  %v3610 = vpop.f32.mrb[0].mxu0
  %v3611 = vadd.f32 0.0, %v3610
  %3612 = vdwg.mxu0
  %3613 = vmatprep.subr.mxu0 0.0
  %3614 = vmatpush1.msra.mxu0 %v3531
  %3615 = vmatprep.subr.mxu0 0.0
  %3616 = vmatpush1.msra.mxu0 %v3534
  %3617 = vmatprep.subr.mxu0 0.0
  %3618 = vmatpush1.msra.mxu0 %v3537
  %3619 = vmatprep.subr.mxu0 0.0
  %3620 = vmatpush1.msra.mxu0 0.0
  %3621 = vmatprep.subr.mxu0 0.0
  %3622 = vmatpush1.msra.mxu0 0.0
  %3623 = vmatprep.subr.mxu0 0.0
  %3624 = vmatpush1.msra.mxu0 0.0
  %3625 = vmatprep.subr.mxu0 0.0
  %3626 = vmatpush1.msra.mxu0 0.0
  %3627 = vmatprep.subr.mxu0 0.0
  %3628 = vmatpush1.msra.mxu0 0.0
  %3629 = vmatprep.subr.mxu0 0.0
  %3630 = vmatpush1.msra.mxu0 0.0
  %3631 = vmatprep.subr.mxu0 0.0
  %3632 = vmatpush1.msra.mxu0 0.0
  %3633 = vmatprep.subr.mxu0 0.0
  %3634 = vmatpush1.msra.mxu0 0.0
  %3635 = vmatprep.subr.mxu0 0.0
  %3636 = vmatpush1.msra.mxu0 0.0
  %3637 = vmatprep.subr.mxu0 0.0
  %3638 = vmatpush1.msra.mxu0 0.0
  %3639 = vmatprep.subr.mxu0 0.0
  %3640 = vmatpush1.msra.mxu0 0.0
  %3641 = vmatprep.subr.mxu0 0.0
  %3642 = vmatpush1.msra.mxu0 0.0
  %3643 = vmatprep.subr.mxu0 0.0
  %3644 = vmatpush1.msra.mxu0 0.0
  %3645 = vmatprep.subr.mxu0 0.0
  %3646 = vmatpush1.msra.mxu0 0.0
  %3647 = vmatprep.subr.mxu0 0.0
  %3648 = vmatpush1.msra.mxu0 0.0
  %3649 = vmatprep.subr.mxu0 0.0
  %3650 = vmatpush1.msra.mxu0 0.0
  %3651 = vmatprep.subr.mxu0 0.0
  %3652 = vmatpush1.msra.mxu0 0.0
  %3653 = vmatprep.subr.mxu0 0.0
  %3654 = vmatpush1.msra.mxu0 0.0
  %3655 = vmatprep.subr.mxu0 0.0
  %3656 = vmatpush1.msra.mxu0 0.0
  %3657 = vmatprep.subr.mxu0 0.0
  %3658 = vmatpush1.msra.mxu0 0.0
  %3659 = vmatprep.subr.mxu0 0.0
  %3660 = vmatpush1.msra.mxu0 0.0
  %3661 = vmatprep.subr.mxu0 0.0
  %3662 = vmatpush1.msra.mxu0 0.0
  %3663 = vmatprep.subr.mxu0 0.0
  %3664 = vmatpush1.msra.mxu0 0.0
  %3665 = vmatprep.subr.mxu0 0.0
  %3666 = vmatpush1.msra.mxu0 0.0
  %3667 = vmatprep.subr.mxu0 0.0
  %3668 = vmatpush1.msra.mxu0 0.0
  %3669 = vmatprep.subr.mxu0 0.0
  %3670 = vmatpush1.msra.mxu0 0.0
  %3671 = vmatprep.subr.mxu0 0.0
  %3672 = vmatpush1.msra.mxu0 0.0
  %3673 = vmatprep.subr.mxu0 0.0
  %3674 = vmatpush1.msra.mxu0 0.0
  %3675 = vmatprep.subr.mxu0 0.0
  %3676 = vmatpush1.msra.mxu0 0.0
  %3677 = vmatprep.mubr.f32.mxu0 0.0
  %3678 = vmatmul.mubr.f32.gmra.mrb[0].mxu0 %v3540
  %v3679 = vpop.f32.mrb[0].mxu0
  %v3680 = vadd.f32 0.0, %v3679
  %v3681 = vpop.f32.mrb[0].mxu0
  %3682 = vdwg.mxu0
  %v3683 = vlaneseq
  %v3684 = vshrl.u32 %v3683, 7
  %v3685 = vsub.s32 0, %v3684
  %v3686 = vrot.slane %v3609, %v3685
  %v3687 = vlaneseq
  %v3688 = vshrl.u32 %v3687, 7
  %v3689 = vsub.s32 0, %v3688
  %v3690 = vrot.slane %v3611, %v3689
  %v3691 = vlaneseq
  %v3692 = vshrl.u32 %v3691, 7
  %v3693 = vsub.s32 0, %v3692
  %v3694 = vrot.slane %v3680, %v3693
  %v3695 = vsub.f32 %v3230, %v3686
  %v3696 = vsub.f32 %v3231, %v3690
  %v3697 = vsub.f32 %v3232, %v3694
  %v3698 = vsub.f32 %v3233, %v3686
  %v3699 = vsub.f32 %v3234, %v3690
  %v3700 = vsub.f32 %v3235, %v3694
  %v3701 = vsub.f32 %v3236, %v3686
  %v3702 = vsub.f32 %v3237, %v3690
  %v3703 = vsub.f32 %v3238, %v3694
  %v3704 = vsub.f32 %v3239, %v3686
  %v3705 = vsub.f32 %v3240, %v3690
  %v3706 = vsub.f32 %v3241, %v3694
  %v3707 = vsub.f32 %v3242, %v3686
  %v3708 = vsub.f32 %v3243, %v3690
  %v3709 = vsub.f32 %v3244, %v3694
  %v3710 = vsub.f32 %v3245, %v3686
  %v3711 = vsub.f32 %v3246, %v3690
  %v3712 = vsub.f32 %v3247, %v3694
  %v3713 = vsub.f32 %v3248, %v3686
  %v3714 = vsub.f32 %v3249, %v3690
  %v3715 = vsub.f32 %v3250, %v3694
  %v3716 = vsub.f32 %v3251, %v3686
  %v3717 = vsub.f32 %v3252, %v3690
  %v3718 = vsub.f32 %v3253, %v3694
  %v3719 = vsub.f32 %v3254, %v3686
  %v3720 = vsub.f32 %v3255, %v3690
  %v3721 = vsub.f32 %v3256, %v3694
  %v3722 = vsub.f32 %v3257, %v3686
  %v3723 = vsub.f32 %v3258, %v3690
  %v3724 = vsub.f32 %v3259, %v3694
  %v3725 = vsub.f32 %v3260, %v3686
  %v3726 = vsub.f32 %v3261, %v3690
  %v3727 = vsub.f32 %v3262, %v3694
  %v3728 = vsub.f32 %v3263, %v3686
  %v3729 = vsub.f32 %v3264, %v3690
  %v3730 = vsub.f32 %v3265, %v3694
  %v3731 = vsub.f32 %v3266, %v3686
  %v3732 = vsub.f32 %v3267, %v3690
  %v3733 = vsub.f32 %v3268, %v3694
  %v3734 = vsub.f32 %v3269, %v3686
  %v3735 = vsub.f32 %v3270, %v3690
  %v3736 = vsub.f32 %v3271, %v3694
  %v3737 = vsub.f32 %v3272, %v3686
  %v3738 = vsub.f32 %v3273, %v3690
  %v3739 = vsub.f32 %v3274, %v3694
  %v3740 = vsub.f32 %v3275, %v3686
  %v3741 = vsub.f32 %v3276, %v3690
  %v3742 = vsub.f32 %v3277, %v3694
  %v3743 = vmul.f32 %v3695, %v3695
  %v3744 = vmul.f32 %v3696, %v3696
  %v3745 = vmul.f32 %v3697, %v3697
  %v3746 = vmul.f32 %v3698, %v3698
  %v3747 = vmul.f32 %v3699, %v3699
  %v3748 = vmul.f32 %v3700, %v3700
  %v3749 = vmul.f32 %v3701, %v3701
  %v3750 = vmul.f32 %v3702, %v3702
  %v3751 = vmul.f32 %v3703, %v3703
  %v3752 = vmul.f32 %v3704, %v3704
  %v3753 = vmul.f32 %v3705, %v3705
  %v3754 = vmul.f32 %v3706, %v3706
  %v3755 = vmul.f32 %v3707, %v3707
  %v3756 = vmul.f32 %v3708, %v3708
  %v3757 = vmul.f32 %v3709, %v3709
  %v3758 = vmul.f32 %v3710, %v3710
  %v3759 = vmul.f32 %v3711, %v3711
  %v3760 = vmul.f32 %v3712, %v3712
  %v3761 = vmul.f32 %v3713, %v3713
  %v3762 = vmul.f32 %v3714, %v3714
  %v3763 = vmul.f32 %v3715, %v3715
  %v3764 = vmul.f32 %v3716, %v3716
  %v3765 = vmul.f32 %v3717, %v3717
  %v3766 = vmul.f32 %v3718, %v3718
  %v3767 = vmul.f32 %v3719, %v3719
  %v3768 = vmul.f32 %v3720, %v3720
  %v3769 = vmul.f32 %v3721, %v3721
  %v3770 = vmul.f32 %v3722, %v3722
  %v3771 = vmul.f32 %v3723, %v3723
  %v3772 = vmul.f32 %v3724, %v3724
  %v3773 = vmul.f32 %v3725, %v3725
  %v3774 = vmul.f32 %v3726, %v3726
  %v3775 = vmul.f32 %v3727, %v3727
  %v3776 = vmul.f32 %v3728, %v3728
  %v3777 = vmul.f32 %v3729, %v3729
  %v3778 = vmul.f32 %v3730, %v3730
  %v3779 = vmul.f32 %v3731, %v3731
  %v3780 = vmul.f32 %v3732, %v3732
  %v3781 = vmul.f32 %v3733, %v3733
  %v3782 = vmul.f32 %v3734, %v3734
  %v3783 = vmul.f32 %v3735, %v3735
  %v3784 = vmul.f32 %v3736, %v3736
  %v3785 = vmul.f32 %v3737, %v3737
  %v3786 = vmul.f32 %v3738, %v3738
  %v3787 = vmul.f32 %v3739, %v3739
  %v3788 = vmul.f32 %v3740, %v3740
  %v3789 = vmul.f32 %v3741, %v3741
  %v3790 = vmul.f32 %v3742, %v3742
  %v3791 = vadd.f32 %v3743, %v3746
  %v3792 = vadd.f32 %v3791, %v3749
  %v3793 = vadd.f32 %v3792, %v3752
  %v3794 = vadd.f32 %v3793, %v3755
  %v3795 = vadd.f32 %v3794, %v3758
  %v3796 = vadd.f32 %v3795, %v3761
  %v3797 = vadd.f32 %v3796, %v3764
  %v3798 = vadd.f32 %v3797, %v3767
  %v3799 = vadd.f32 %v3798, %v3770
  %v3800 = vadd.f32 %v3799, %v3773
  %v3801 = vadd.f32 %v3800, %v3776
  %v3802 = vadd.f32 %v3801, %v3779
  %v3803 = vadd.f32 %v3802, %v3782
  %v3804 = vadd.f32 %v3803, %v3785
  %v3805 = vadd.f32 %v3804, %v3788
  %v3806 = vrot.slane %v3805, 4
  %v3807 = vadd.f32 %v3805, %v3806
  %v3808 = vrot.slane %v3807, 2
  %v3809 = vadd.f32 %v3807, %v3808
  %v3810 = vrot.slane %v3809, 1
  %v3811 = vadd.f32 %v3809, %v3810
  %v3812 = vadd.f32 %v3744, %v3747
  %v3813 = vadd.f32 %v3812, %v3750
  %v3814 = vadd.f32 %v3813, %v3753
  %v3815 = vadd.f32 %v3814, %v3756
  %v3816 = vadd.f32 %v3815, %v3759
  %v3817 = vadd.f32 %v3816, %v3762
  %v3818 = vadd.f32 %v3817, %v3765
  %v3819 = vadd.f32 %v3818, %v3768
  %v3820 = vadd.f32 %v3819, %v3771
  %v3821 = vadd.f32 %v3820, %v3774
  %v3822 = vadd.f32 %v3821, %v3777
  %v3823 = vadd.f32 %v3822, %v3780
  %v3824 = vadd.f32 %v3823, %v3783
  %v3825 = vadd.f32 %v3824, %v3786
  %v3826 = vadd.f32 %v3825, %v3789
  %v3827 = vrot.slane %v3826, 4
  %v3828 = vadd.f32 %v3826, %v3827
  %v3829 = vrot.slane %v3828, 2
  %v3830 = vadd.f32 %v3828, %v3829
  %v3831 = vrot.slane %v3830, 1
  %v3832 = vadd.f32 %v3830, %v3831
  %v3833 = vadd.f32 %v3745, %v3748
  %v3834 = vadd.f32 %v3833, %v3751
  %v3835 = vadd.f32 %v3834, %v3754
  %v3836 = vadd.f32 %v3835, %v3757
  %v3837 = vadd.f32 %v3836, %v3760
  %v3838 = vadd.f32 %v3837, %v3763
  %v3839 = vadd.f32 %v3838, %v3766
  %v3840 = vadd.f32 %v3839, %v3769
  %v3841 = vadd.f32 %v3840, %v3772
  %v3842 = vadd.f32 %v3841, %v3775
  %v3843 = vadd.f32 %v3842, %v3778
  %v3844 = vadd.f32 %v3843, %v3781
  %v3845 = vadd.f32 %v3844, %v3784
  %v3846 = vadd.f32 %v3845, %v3787
  %v3847 = vadd.f32 %v3846, %v3790
  %v3848 = vrot.slane %v3847, 4
  %v3849 = vadd.f32 %v3847, %v3848
  %v3850 = vrot.slane %v3849, 2
  %v3851 = vadd.f32 %v3849, %v3850
  %v3852 = vrot.slane %v3851, 1
  %v3853 = vadd.f32 %v3851, %v3852
  %3854 = vmatprep.subr.mxu0 0.0
  %3855 = vmatpush1.msra.mxu0 %v3341
  %3856 = vmatprep.subr.mxu0 0.0
  %3857 = vmatpush1.msra.mxu0 %v3342
  %3858 = vmatprep.subr.mxu0 0.0
  %3859 = vmatpush1.msra.mxu0 %v3343
  %3860 = vmatprep.subr.mxu0 0.0
  %3861 = vmatpush1.msra.mxu0 %v3344
  %3862 = vmatprep.subr.mxu0 0.0
  %3863 = vmatpush1.msra.mxu0 %v3345
  %3864 = vmatprep.subr.mxu0 0.0
  %3865 = vmatpush1.msra.mxu0 %v3346
  %3866 = vmatprep.subr.mxu0 0.0
  %3867 = vmatpush1.msra.mxu0 %v3347
  %3868 = vmatprep.subr.mxu0 0.0
  %3869 = vmatpush1.msra.mxu0 %v3348
  %3870 = vmatprep.subr.mxu0 0.0
  %3871 = vmatpush1.msra.mxu0 %v3349
  %3872 = vmatprep.subr.mxu0 0.0
  %3873 = vmatpush1.msra.mxu0 %v3350
  %3874 = vmatprep.subr.mxu0 0.0
  %3875 = vmatpush1.msra.mxu0 %v3351
  %3876 = vmatprep.subr.mxu0 0.0
  %3877 = vmatpush1.msra.mxu0 %v3352
  %3878 = vmatprep.subr.mxu0 0.0
  %3879 = vmatpush1.msra.mxu0 %v3353
  %3880 = vmatprep.subr.mxu0 0.0
  %3881 = vmatpush1.msra.mxu0 %v3354
  %3882 = vmatprep.subr.mxu0 0.0
  %3883 = vmatpush1.msra.mxu0 %v3355
  %3884 = vmatprep.subr.mxu0 0.0
  %3885 = vmatpush1.msra.mxu0 %v3356
  %3886 = vmatprep.subr.mxu0 0.0
  %3887 = vmatpush1.msra.mxu0 %v3357
  %3888 = vmatprep.subr.mxu0 0.0
  %3889 = vmatpush1.msra.mxu0 %v3358
  %3890 = vmatprep.subr.mxu0 0.0
  %3891 = vmatpush1.msra.mxu0 %v3359
  %3892 = vmatprep.subr.mxu0 0.0
  %3893 = vmatpush1.msra.mxu0 %v3360
  %3894 = vmatprep.subr.mxu0 0.0
  %3895 = vmatpush1.msra.mxu0 %v3361
  %3896 = vmatprep.subr.mxu0 0.0
  %3897 = vmatpush1.msra.mxu0 %v3362
  %3898 = vmatprep.subr.mxu0 0.0
  %3899 = vmatpush1.msra.mxu0 %v3363
  %3900 = vmatprep.subr.mxu0 0.0
  %3901 = vmatpush1.msra.mxu0 %v3364
  %3902 = vmatprep.subr.mxu0 0.0
  %3903 = vmatpush1.msra.mxu0 %v3365
  %3904 = vmatprep.subr.mxu0 0.0
  %3905 = vmatpush1.msra.mxu0 %v3366
  %3906 = vmatprep.subr.mxu0 0.0
  %3907 = vmatpush1.msra.mxu0 %v3367
  %3908 = vmatprep.subr.mxu0 0.0
  %3909 = vmatpush1.msra.mxu0 %v3368
  %3910 = vmatprep.subr.mxu0 0.0
  %3911 = vmatpush1.msra.mxu0 %v3369
  %3912 = vmatprep.subr.mxu0 0.0
  %3913 = vmatpush1.msra.mxu0 %v3370
  %3914 = vmatprep.subr.mxu0 0.0
  %3915 = vmatpush1.msra.mxu0 %v3371
  %3916 = vmatprep.subr.mxu0 0.0
  %3917 = vmatpush1.msra.mxu0 %v3372
  %3918 = vmatprep.mubr.f32.mxu0 %v3832
  %3919 = vmatmul.mubr.f32.gmra.mrb[0].mxu0 %v3811
  %v3920 = vpop.f32.mrb[0].mxu0
  %v3921 = vadd.f32 0.0, %v3920
  %v3922 = vpop.f32.mrb[0].mxu0
  %3923 = vdwg.mxu0
  %3924 = vmatprep.subr.mxu0 0.0
  %3925 = vmatpush1.msra.mxu0 %v3373
  %3926 = vmatprep.subr.mxu0 0.0
  %3927 = vmatpush1.msra.mxu0 %v3374
  %3928 = vmatprep.subr.mxu0 0.0
  %3929 = vmatpush1.msra.mxu0 %v3375
  %3930 = vmatprep.subr.mxu0 0.0
  %3931 = vmatpush1.msra.mxu0 %v3376
  %3932 = vmatprep.subr.mxu0 0.0
  %3933 = vmatpush1.msra.mxu0 %v3377
  %3934 = vmatprep.subr.mxu0 0.0
  %3935 = vmatpush1.msra.mxu0 %v3378
  %3936 = vmatprep.subr.mxu0 0.0
  %3937 = vmatpush1.msra.mxu0 %v3379
  %3938 = vmatprep.subr.mxu0 0.0
  %3939 = vmatpush1.msra.mxu0 %v3380
  %3940 = vmatprep.subr.mxu0 0.0
  %3941 = vmatpush1.msra.mxu0 %v3381
  %3942 = vmatprep.subr.mxu0 0.0
  %3943 = vmatpush1.msra.mxu0 %v3382
  %3944 = vmatprep.subr.mxu0 0.0
  %3945 = vmatpush1.msra.mxu0 %v3383
  %3946 = vmatprep.subr.mxu0 0.0
  %3947 = vmatpush1.msra.mxu0 %v3384
  %3948 = vmatprep.subr.mxu0 0.0
  %3949 = vmatpush1.msra.mxu0 %v3385
  %3950 = vmatprep.subr.mxu0 0.0
  %3951 = vmatpush1.msra.mxu0 %v3386
  %3952 = vmatprep.subr.mxu0 0.0
  %3953 = vmatpush1.msra.mxu0 %v3387
  %3954 = vmatprep.subr.mxu0 0.0
  %3955 = vmatpush1.msra.mxu0 %v3388
  %3956 = vmatprep.subr.mxu0 0.0
  %3957 = vmatpush1.msra.mxu0 0.0
  %3958 = vmatprep.subr.mxu0 0.0
  %3959 = vmatpush1.msra.mxu0 0.0
  %3960 = vmatprep.subr.mxu0 0.0
  %3961 = vmatpush1.msra.mxu0 0.0
  %3962 = vmatprep.subr.mxu0 0.0
  %3963 = vmatpush1.msra.mxu0 0.0
  %3964 = vmatprep.subr.mxu0 0.0
  %3965 = vmatpush1.msra.mxu0 0.0
  %3966 = vmatprep.subr.mxu0 0.0
  %3967 = vmatpush1.msra.mxu0 0.0
  %3968 = vmatprep.subr.mxu0 0.0
  %3969 = vmatpush1.msra.mxu0 0.0
  %3970 = vmatprep.subr.mxu0 0.0
  %3971 = vmatpush1.msra.mxu0 0.0
  %3972 = vmatprep.subr.mxu0 0.0
  %3973 = vmatpush1.msra.mxu0 0.0
  %3974 = vmatprep.subr.mxu0 0.0
  %3975 = vmatpush1.msra.mxu0 0.0
  %3976 = vmatprep.subr.mxu0 0.0
  %3977 = vmatpush1.msra.mxu0 0.0
  %3978 = vmatprep.subr.mxu0 0.0
  %3979 = vmatpush1.msra.mxu0 0.0
  %3980 = vmatprep.subr.mxu0 0.0
  %3981 = vmatpush1.msra.mxu0 0.0
  %3982 = vmatprep.subr.mxu0 0.0
  %3983 = vmatpush1.msra.mxu0 0.0
  %3984 = vmatprep.subr.mxu0 0.0
  %3985 = vmatpush1.msra.mxu0 0.0
  %3986 = vmatprep.subr.mxu0 0.0
  %3987 = vmatpush1.msra.mxu0 0.0
  %3988 = vmatprep.mubr.f32.mxu0 0.0
  %3989 = vmatmul.mubr.f32.gmra.mrb[0].mxu0 %v3853
  %v3990 = vpop.f32.mrb[0].mxu0
  %v3991 = vadd.f32 %v3921, %v3990
  %v3992 = vpop.f32.mrb[0].mxu0
  %3993 = vdwg.mxu0
  %v3995 = vsel %vm3538, %v3991, 0
  %3997 = vmatprep.subr.mxu0 %v3530
  %3998 = vmatpush1.msra.mxu0 %v3529
  %3999 = vmatprep.subr.mxu0 %v3533
  %4000 = vmatpush1.msra.mxu0 %v3532
  %4001 = vmatprep.subr.mxu0 %v3536
  %4002 = vmatpush1.msra.mxu0 %v3535
  %4003 = vmatprep.subr.mxu0 0.0
  %4004 = vmatpush1.msra.mxu0 0.0
  %4005 = vmatprep.subr.mxu0 0.0
  %4006 = vmatpush1.msra.mxu0 0.0
  %4007 = vmatprep.subr.mxu0 0.0
  %4008 = vmatpush1.msra.mxu0 0.0
  %4009 = vmatprep.subr.mxu0 0.0
  %4010 = vmatpush1.msra.mxu0 0.0
  %4011 = vmatprep.subr.mxu0 0.0
  %4012 = vmatpush1.msra.mxu0 0.0
  %4013 = vmatprep.subr.mxu0 0.0
  %4014 = vmatpush1.msra.mxu0 0.0
  %4015 = vmatprep.subr.mxu0 0.0
  %4016 = vmatpush1.msra.mxu0 0.0
  %4017 = vmatprep.subr.mxu0 0.0
  %4018 = vmatpush1.msra.mxu0 0.0
  %4019 = vmatprep.subr.mxu0 0.0
  %4020 = vmatpush1.msra.mxu0 0.0
  %4021 = vmatprep.subr.mxu0 0.0
  %4022 = vmatpush1.msra.mxu0 0.0
  %4023 = vmatprep.subr.mxu0 0.0
  %4024 = vmatpush1.msra.mxu0 0.0
  %4025 = vmatprep.subr.mxu0 0.0
  %4026 = vmatpush1.msra.mxu0 0.0
  %4027 = vmatprep.subr.mxu0 0.0
  %4028 = vmatpush1.msra.mxu0 0.0
  %4029 = vmatprep.subr.mxu0 0.0
  %4030 = vmatpush1.msra.mxu0 0.0
  %4031 = vmatprep.subr.mxu0 0.0
  %4032 = vmatpush1.msra.mxu0 0.0
  %4033 = vmatprep.subr.mxu0 0.0
  %4034 = vmatpush1.msra.mxu0 0.0
  %4035 = vmatprep.subr.mxu0 0.0
  %4036 = vmatpush1.msra.mxu0 0.0
  %4037 = vmatprep.subr.mxu0 0.0
  %4038 = vmatpush1.msra.mxu0 0.0
  %4039 = vmatprep.subr.mxu0 0.0
  %4040 = vmatpush1.msra.mxu0 0.0
  %4041 = vmatprep.subr.mxu0 0.0
  %4042 = vmatpush1.msra.mxu0 0.0
  %4043 = vmatprep.subr.mxu0 0.0
  %4044 = vmatpush1.msra.mxu0 0.0
  %4045 = vmatprep.subr.mxu0 0.0
  %4046 = vmatpush1.msra.mxu0 0.0
  %4047 = vmatprep.subr.mxu0 0.0
  %4048 = vmatpush1.msra.mxu0 0.0
  %4049 = vmatprep.subr.mxu0 0.0
  %4050 = vmatpush1.msra.mxu0 0.0
  %4051 = vmatprep.subr.mxu0 0.0
  %4052 = vmatpush1.msra.mxu0 0.0
  %4053 = vmatprep.subr.mxu0 0.0
  %4054 = vmatpush1.msra.mxu0 0.0
  %4055 = vmatprep.subr.mxu0 0.0
  %4056 = vmatpush1.msra.mxu0 0.0
  %4057 = vmatprep.subr.mxu0 0.0
  %4058 = vmatpush1.msra.mxu0 0.0
  %4059 = vmatprep.subr.mxu0 0.0
  %4060 = vmatpush1.msra.mxu0 0.0
  %4061 = vmatprep.mubr.f32.mxu0 0.0
  %4062 = vmatmul.mubr.f32.gmra.mrb[0].mxu0 %v3995
  %v4063 = vpop.f32.mrb[0].mxu0
  %v4064 = vadd.f32 1e-05, %v4063
  %v4065 = vpop.f32.mrb[0].mxu0
  %v4066 = vadd.f32 1e-05, %v4065
  %4067 = vdwg.mxu0
  %4068 = vmatprep.subr.mxu0 0.0
  %4069 = vmatpush1.msra.mxu0 %v3531
  %4070 = vmatprep.subr.mxu0 0.0
  %4071 = vmatpush1.msra.mxu0 %v3534
  %4072 = vmatprep.subr.mxu0 0.0
  %4073 = vmatpush1.msra.mxu0 %v3537
  %4074 = vmatprep.subr.mxu0 0.0
  %4075 = vmatpush1.msra.mxu0 0.0
  %4076 = vmatprep.subr.mxu0 0.0
  %4077 = vmatpush1.msra.mxu0 0.0
  %4078 = vmatprep.subr.mxu0 0.0
  %4079 = vmatpush1.msra.mxu0 0.0
  %4080 = vmatprep.subr.mxu0 0.0
  %4081 = vmatpush1.msra.mxu0 0.0
  %4082 = vmatprep.subr.mxu0 0.0
  %4083 = vmatpush1.msra.mxu0 0.0
  %4084 = vmatprep.subr.mxu0 0.0
  %4085 = vmatpush1.msra.mxu0 0.0
  %4086 = vmatprep.subr.mxu0 0.0
  %4087 = vmatpush1.msra.mxu0 0.0
  %4088 = vmatprep.subr.mxu0 0.0
  %4089 = vmatpush1.msra.mxu0 0.0
  %4090 = vmatprep.subr.mxu0 0.0
  %4091 = vmatpush1.msra.mxu0 0.0
  %4092 = vmatprep.subr.mxu0 0.0
  %4093 = vmatpush1.msra.mxu0 0.0
  %4094 = vmatprep.subr.mxu0 0.0
  %4095 = vmatpush1.msra.mxu0 0.0
  %4096 = vmatprep.subr.mxu0 0.0
  %4097 = vmatpush1.msra.mxu0 0.0
  %4098 = vmatprep.subr.mxu0 0.0
  %4099 = vmatpush1.msra.mxu0 0.0
  %4100 = vmatprep.subr.mxu0 0.0
  %4101 = vmatpush1.msra.mxu0 0.0
  %4102 = vmatprep.subr.mxu0 0.0
  %4103 = vmatpush1.msra.mxu0 0.0
  %4104 = vmatprep.subr.mxu0 0.0
  %4105 = vmatpush1.msra.mxu0 0.0
  %4106 = vmatprep.subr.mxu0 0.0
  %4107 = vmatpush1.msra.mxu0 0.0
  %4108 = vmatprep.subr.mxu0 0.0
  %4109 = vmatpush1.msra.mxu0 0.0
  %4110 = vmatprep.subr.mxu0 0.0
  %4111 = vmatpush1.msra.mxu0 0.0
  %4112 = vmatprep.subr.mxu0 0.0
  %4113 = vmatpush1.msra.mxu0 0.0
  %4114 = vmatprep.subr.mxu0 0.0
  %4115 = vmatpush1.msra.mxu0 0.0
  %4116 = vmatprep.subr.mxu0 0.0
  %4117 = vmatpush1.msra.mxu0 0.0
  %4118 = vmatprep.subr.mxu0 0.0
  %4119 = vmatpush1.msra.mxu0 0.0
  %4120 = vmatprep.subr.mxu0 0.0
  %4121 = vmatpush1.msra.mxu0 0.0
  %4122 = vmatprep.subr.mxu0 0.0
  %4123 = vmatpush1.msra.mxu0 0.0
  %4124 = vmatprep.subr.mxu0 0.0
  %4125 = vmatpush1.msra.mxu0 0.0
  %4126 = vmatprep.subr.mxu0 0.0
  %4127 = vmatpush1.msra.mxu0 0.0
  %4128 = vmatprep.subr.mxu0 0.0
  %4129 = vmatpush1.msra.mxu0 0.0
  %4130 = vmatprep.subr.mxu0 0.0
  %4131 = vmatpush1.msra.mxu0 0.0
  %4132 = vmatprep.mubr.f32.mxu0 0.0
  %4133 = vmatmul.mubr.f32.gmra.mrb[0].mxu0 %v3995
  %v4134 = vpop.f32.mrb[0].mxu0
  %v4135 = vadd.f32 1e-05, %v4134
  %v4136 = vpop.f32.mrb[0].mxu0
  %4137 = vdwg.mxu0
  %v4138 = vrsqrt.pop %v4064
  %v4139 = vrsqrt.pop %v4066
  %v4140 = vrsqrt.pop %v4135
  %v4141 = vlaneseq
  %v4142 = vshrl.u32 %v4141, 7
  %v4143 = vsub.s32 1, %v4142
  %v4144 = vrot.slane %v3151, %v4143
  %v4145 = vlaneseq
  %v4146 = vshrl.u32 %v4145, 7
  %v4147 = vsub.s32 5, %v4146
  %v4148 = vrot.slane %v3151, %v4147
  %v4149 = vlaneseq
  %v4150 = vshrl.u32 %v4149, 7
  %v4151 = vsub.s32 1, %v4150
  %v4152 = vrot.slane %v3152, %v4151
  %v4156 = vmul.f32 %v4138, %v4144
  %v4157 = vmul.f32 %v4139, %v4148
  %v4158 = vmul.f32 %v4140, %v4152
  %v4159 = vlaneseq
  %v4160 = vshrl.u32 %v4159, 7
  %v4161 = vsub.s32 0, %v4160
  %v4162 = vrot.slane %v4156, %v4161
  %v4163 = vlaneseq
  %v4164 = vshrl.u32 %v4163, 7
  %v4165 = vsub.s32 0, %v4164
  %v4166 = vrot.slane %v4157, %v4165
  %v4167 = vlaneseq
  %v4168 = vshrl.u32 %v4167, 7
  %v4169 = vsub.s32 0, %v4168
  %v4170 = vrot.slane %v4158, %v4169
  %v4171 = vmul.f32 %v3695, %v4162
  %v4172 = vmul.f32 %v3696, %v4166
  %v4173 = vmul.f32 %v3697, %v4170
  %v4174 = vmul.f32 %v3698, %v4162
  %v4175 = vmul.f32 %v3699, %v4166
  %v4176 = vmul.f32 %v3700, %v4170
  %v4177 = vmul.f32 %v3701, %v4162
  %v4178 = vmul.f32 %v3702, %v4166
  %v4179 = vmul.f32 %v3703, %v4170
  %v4180 = vmul.f32 %v3704, %v4162
  %v4181 = vmul.f32 %v3705, %v4166
  %v4182 = vmul.f32 %v3706, %v4170
  %v4183 = vmul.f32 %v3707, %v4162
  %v4184 = vmul.f32 %v3708, %v4166
  %v4185 = vmul.f32 %v3709, %v4170
  %v4186 = vmul.f32 %v3710, %v4162
  %v4187 = vmul.f32 %v3711, %v4166
  %v4188 = vmul.f32 %v3712, %v4170
  %v4189 = vmul.f32 %v3713, %v4162
  %v4190 = vmul.f32 %v3714, %v4166
  %v4191 = vmul.f32 %v3715, %v4170
  %v4192 = vmul.f32 %v3716, %v4162
  %v4193 = vmul.f32 %v3717, %v4166
  %v4194 = vmul.f32 %v3718, %v4170
  %v4195 = vmul.f32 %v3719, %v4162
  %v4196 = vmul.f32 %v3720, %v4166
  %v4197 = vmul.f32 %v3721, %v4170
  %v4198 = vmul.f32 %v3722, %v4162
  %v4199 = vmul.f32 %v3723, %v4166
  %v4200 = vmul.f32 %v3724, %v4170
  %v4201 = vmul.f32 %v3725, %v4162
  %v4202 = vmul.f32 %v3726, %v4166
  %v4203 = vmul.f32 %v3727, %v4170
  %v4204 = vmul.f32 %v3728, %v4162
  %v4205 = vmul.f32 %v3729, %v4166
  %v4206 = vmul.f32 %v3730, %v4170
  %v4207 = vmul.f32 %v3731, %v4162
  %v4208 = vmul.f32 %v3732, %v4166
  %v4209 = vmul.f32 %v3733, %v4170
  %v4210 = vmul.f32 %v3734, %v4162
  %v4211 = vmul.f32 %v3735, %v4166
  %v4212 = vmul.f32 %v3736, %v4170
  %v4213 = vmul.f32 %v3737, %v4162
  %v4214 = vmul.f32 %v3738, %v4166
  %v4215 = vmul.f32 %v3739, %v4170
  %v4216 = vmul.f32 %v3740, %v4162
  %v4217 = vmul.f32 %v3741, %v4166
  %v4218 = vmul.f32 %v3742, %v4170
  %v4219 = vlaneseq
  %v4220 = vshrl.u32 %v4219, 7
  %v4221 = vsub.s32 2, %v4220
  %v4222 = vrot.slane %v3151, %v4221
  %v4223 = vlaneseq
  %v4224 = vshrl.u32 %v4223, 7
  %v4225 = vsub.s32 6, %v4224
  %v4226 = vrot.slane %v3151, %v4225
  %v4227 = vlaneseq
  %v4228 = vshrl.u32 %v4227, 7
  %v4229 = vsub.s32 2, %v4228
  %v4230 = vrot.slane %v3152, %v4229
  %v4234 = vlaneseq
  %v4235 = vshrl.u32 %v4234, 7
  %v4236 = vsub.s32 2, %v4235
  %v4237 = vrot.slane %v4222, %v4236
  %v4238 = vlaneseq
  %v4239 = vshrl.u32 %v4238, 7
  %v4240 = vsub.s32 2, %v4239
  %v4241 = vrot.slane %v4226, %v4240
  %v4242 = vlaneseq
  %v4243 = vshrl.u32 %v4242, 7
  %v4244 = vsub.s32 2, %v4243
  %v4245 = vrot.slane %v4230, %v4244
  %v4246 = vadd.f32 %v4171, %v4237
  %v4247 = vadd.f32 %v4172, %v4241
  %v4248 = vadd.f32 %v4173, %v4245
  %v4249 = vadd.f32 %v4174, %v4237
  %v4250 = vadd.f32 %v4175, %v4241
  %v4251 = vadd.f32 %v4176, %v4245
  %v4252 = vadd.f32 %v4177, %v4237
  %v4253 = vadd.f32 %v4178, %v4241
  %v4254 = vadd.f32 %v4179, %v4245
  %v4255 = vadd.f32 %v4180, %v4237
  %v4256 = vadd.f32 %v4181, %v4241
  %v4257 = vadd.f32 %v4182, %v4245
  %v4258 = vadd.f32 %v4183, %v4237
  %v4259 = vadd.f32 %v4184, %v4241
  %v4260 = vadd.f32 %v4185, %v4245
  %v4261 = vadd.f32 %v4186, %v4237
  %v4262 = vadd.f32 %v4187, %v4241
  %v4263 = vadd.f32 %v4188, %v4245
  %v4264 = vadd.f32 %v4189, %v4237
  %v4265 = vadd.f32 %v4190, %v4241
  %v4266 = vadd.f32 %v4191, %v4245
  %v4267 = vadd.f32 %v4192, %v4237
  %v4268 = vadd.f32 %v4193, %v4241
  %v4269 = vadd.f32 %v4194, %v4245
  %v4270 = vadd.f32 %v4195, %v4237
  %v4271 = vadd.f32 %v4196, %v4241
  %v4272 = vadd.f32 %v4197, %v4245
  %v4273 = vadd.f32 %v4198, %v4237
  %v4274 = vadd.f32 %v4199, %v4241
  %v4275 = vadd.f32 %v4200, %v4245
  %v4276 = vadd.f32 %v4201, %v4237
  %v4277 = vadd.f32 %v4202, %v4241
  %v4278 = vadd.f32 %v4203, %v4245
  %v4279 = vadd.f32 %v4204, %v4237
  %v4280 = vadd.f32 %v4205, %v4241
  %v4281 = vadd.f32 %v4206, %v4245
  %v4282 = vadd.f32 %v4207, %v4237
  %v4283 = vadd.f32 %v4208, %v4241
  %v4284 = vadd.f32 %v4209, %v4245
  %v4285 = vadd.f32 %v4210, %v4237
  %v4286 = vadd.f32 %v4211, %v4241
  %v4287 = vadd.f32 %v4212, %v4245
  %v4288 = vadd.f32 %v4213, %v4237
  %v4289 = vadd.f32 %v4214, %v4241
  %v4290 = vadd.f32 %v4215, %v4245
  %v4291 = vadd.f32 %v4216, %v4237
  %v4292 = vadd.f32 %v4217, %v4241
  %v4293 = vadd.f32 %v4218, %v4245
  %s4294 = smul.u32 4, 3
  %s4295 = smul.u32 %s4294, 48
  %s4296 = smul.u32 %s4295, 2
  %s4297 = sshll.u32 %s4296, 4
  %4298 = dma.done [#allocation5], %s4297
  %v4299 = vpack.c.bf16 %v4249, %v4246
  %v4300 = vpack.c.bf16 %v4250, %v4247
  %v4301 = vpack.c.bf16 %v4251, %v4248
  %v4302 = vpack.c.bf16 %v4255, %v4252
  %v4303 = vpack.c.bf16 %v4256, %v4253
  %v4304 = vpack.c.bf16 %v4257, %v4254
  %v4305 = vpack.c.bf16 %v4261, %v4258
  %v4306 = vpack.c.bf16 %v4262, %v4259
  %v4307 = vpack.c.bf16 %v4263, %v4260
  %v4308 = vpack.c.bf16 %v4267, %v4264
  %v4309 = vpack.c.bf16 %v4268, %v4265
  %v4310 = vpack.c.bf16 %v4269, %v4266
  %v4311 = vpack.c.bf16 %v4273, %v4270
  %v4312 = vpack.c.bf16 %v4274, %v4271
  %v4313 = vpack.c.bf16 %v4275, %v4272
  %v4314 = vpack.c.bf16 %v4279, %v4276
  %v4315 = vpack.c.bf16 %v4280, %v4277
  %v4316 = vpack.c.bf16 %v4281, %v4278
  %v4317 = vpack.c.bf16 %v4285, %v4282
  %v4318 = vpack.c.bf16 %v4286, %v4283
  %v4319 = vpack.c.bf16 %v4287, %v4284
  %v4320 = vpack.c.bf16 %v4291, %v4288
  %v4321 = vpack.c.bf16 %v4292, %v4289
  %v4322 = vpack.c.bf16 %v4293, %v4290
  %v4323 = vld [vmem:[%s9] sm:$0xf]
  %v4324 = vld [vmem:[%s9 + $0x4] sm:$0xf]
  %v4325 = vld [vmem:[%s9 + $0x8] sm:$0xf]
  %v4326 = vld [vmem:[%s9 + $0xc] sm:$0xf]
  %v4327 = vld [vmem:[%s9 + $0x10] sm:$0xf]
  %v4328 = vld [vmem:[%s9 + $0x14] sm:$0xf]
  %v4329 = vld [vmem:[%s9 + $0x18] sm:$0xf]
  %v4330 = vld [vmem:[%s9 + $0x1c] sm:$0xf]
  %v4331 = vld [vmem:[%s9 + $0x20] sm:$0xf]
  %v4332 = vld [vmem:[%s9 + $0x24] sm:$0xf]
  %v4333 = vld [vmem:[%s9 + $0x28] sm:$0xf]
  %v4334 = vld [vmem:[%s9 + $0x2c] sm:$0xf]
  %v4335 = vld [vmem:[%s9 + $0x30] sm:$0xf]
  %v4336 = vld [vmem:[%s9 + $0x34] sm:$0xf]
  %v4337 = vld [vmem:[%s9 + $0x38] sm:$0xf]
  %v4338 = vld [vmem:[%s9 + $0x3c] sm:$0xf]
  %v4339 = vld [vmem:[%s9 + $0x40] sm:$0xf]
  %v4340 = vld [vmem:[%s9 + $0x44] sm:$0xf]
  %v4341 = vld [vmem:[%s9 + $0x48] sm:$0xf]
  %v4342 = vld [vmem:[%s9 + $0x4c] sm:$0xf]
  %v4343 = vld [vmem:[%s9 + $0x50] sm:$0xf]
  %v4344 = vld [vmem:[%s9 + $0x54] sm:$0xf]
  %v4345 = vld [vmem:[%s9 + $0x58] sm:$0xf]
  %v4346 = vld [vmem:[%s9 + $0x5c] sm:$0xf]
  %v4371 = vunpack.c.l.b16 %v4323
  %v4372 = vunpack.c.l.b16 %v4324
  %v4373 = vunpack.c.l.b16 %v4325
  %v4374 = vunpack.c.l.b16 %v4326
  %v4375 = vunpack.c.l.b16 %v4327
  %v4376 = vunpack.c.l.b16 %v4328
  %v4377 = vunpack.c.l.b16 %v4329
  %v4378 = vunpack.c.l.b16 %v4330
  %v4379 = vunpack.c.l.b16 %v4331
  %v4380 = vunpack.c.l.b16 %v4332
  %v4381 = vunpack.c.l.b16 %v4333
  %v4382 = vunpack.c.l.b16 %v4334
  %v4383 = vunpack.c.l.b16 %v4335
  %v4384 = vunpack.c.l.b16 %v4336
  %v4385 = vunpack.c.l.b16 %v4337
  %v4386 = vunpack.c.l.b16 %v4338
  %v4387 = vunpack.c.l.b16 %v4339
  %v4388 = vunpack.c.l.b16 %v4340
  %v4389 = vunpack.c.l.b16 %v4341
  %v4390 = vunpack.c.l.b16 %v4342
  %v4391 = vunpack.c.l.b16 %v4343
  %v4392 = vunpack.c.l.b16 %v4344
  %v4393 = vunpack.c.l.b16 %v4345
  %v4394 = vunpack.c.l.b16 %v4346
  %v4395 = vpack.c.b16 %v4372, %v4371
  %v4396 = vpack.c.b16 %v4374, %v4373
  %v4397 = vpack.c.b16 %v4376, %v4375
  %v4398 = vpack.c.b16 %v4378, %v4377
  %v4399 = vpack.c.b16 %v4380, %v4379
  %v4400 = vpack.c.b16 %v4382, %v4381
  %v4401 = vpack.c.b16 %v4384, %v4383
  %v4402 = vpack.c.b16 %v4386, %v4385
  %v4403 = vpack.c.b16 %v4388, %v4387
  %v4404 = vpack.c.b16 %v4390, %v4389
  %v4405 = vpack.c.b16 %v4392, %v4391
  %v4406 = vpack.c.b16 %v4394, %v4393
  %4419 = vmatprep.subr.bf16.mxu0 %v4300
  %4420 = vmatpush1.bf16.msra.mxu0 %v4299
  %4421 = vmatprep.subr.bf16.mxu0 %v4303
  %4422 = vmatpush1.bf16.msra.mxu0 %v4302
  %4423 = vmatprep.subr.bf16.mxu0 %v4306
  %4424 = vmatpush1.bf16.msra.mxu0 %v4305
  %4425 = vmatprep.subr.bf16.mxu0 %v4309
  %4426 = vmatpush1.bf16.msra.mxu0 %v4308
  %4427 = vmatprep.subr.bf16.mxu0 %v4312
  %4428 = vmatpush1.bf16.msra.mxu0 %v4311
  %4429 = vmatprep.subr.bf16.mxu0 %v4315
  %4430 = vmatpush1.bf16.msra.mxu0 %v4314
  %4431 = vmatprep.subr.bf16.mxu0 %v4318
  %4432 = vmatpush1.bf16.msra.mxu0 %v4317
  %4433 = vmatprep.subr.bf16.mxu0 %v4321
  %4434 = vmatpush1.bf16.msra.mxu0 %v4320
  %4435 = vmatprep.subr.bf16.mxu0 0
  %4436 = vmatpush1.bf16.msra.mxu0 0
  %4437 = vmatprep.subr.bf16.mxu0 0
  %4438 = vmatpush1.bf16.msra.mxu0 0
  %4439 = vmatprep.subr.bf16.mxu0 0
  %4440 = vmatpush1.bf16.msra.mxu0 0
  %4441 = vmatprep.subr.bf16.mxu0 0
  %4442 = vmatpush1.bf16.msra.mxu0 0
  %4443 = vmatprep.subr.bf16.mxu0 0
  %4444 = vmatpush1.bf16.msra.mxu0 0
  %4445 = vmatprep.subr.bf16.mxu0 0
  %4446 = vmatpush1.bf16.msra.mxu0 0
  %4447 = vmatprep.subr.bf16.mxu0 0
  %4448 = vmatpush1.bf16.msra.mxu0 0
  %4449 = vmatprep.subr.bf16.mxu0 0
  %4450 = vmatpush1.bf16.msra.mxu0 0
  %4451 = vmatprep.mubr.bf16.mxu0 0
  %4452 = vmatmul.mubr.bf16.gmra.mrb[0].mxu0 %v4395
  %v4453 = vpop.f32.mrb[0].mxu0
  %v4454 = vadd.f32 0.0, %v4453
  %v4455 = vpop.f32.mrb[0].mxu0
  %v4456 = vadd.f32 0.0, %v4455
  %v4457 = vpop.f32.mrb[0].mxu0
  %v4458 = vadd.f32 0.0, %v4457
  %v4459 = vpop.f32.mrb[0].mxu0
  %v4460 = vadd.f32 0.0, %v4459
  %4461 = vmatprep.mubr.bf16.mxu0 0
  %4462 = vmatmul.mubr.bf16.gmra.mrb[0].mxu0 %v4396
  %v4463 = vpop.f32.mrb[0].mxu0
  %v4464 = vadd.f32 0.0, %v4463
  %v4465 = vpop.f32.mrb[0].mxu0
  %v4466 = vadd.f32 0.0, %v4465
  %v4467 = vpop.f32.mrb[0].mxu0
  %v4468 = vadd.f32 0.0, %v4467
  %v4469 = vpop.f32.mrb[0].mxu0
  %v4470 = vadd.f32 0.0, %v4469
  %4471 = vmatprep.mubr.bf16.mxu0 0
  %4472 = vmatmul.mubr.bf16.gmra.mrb[0].mxu0 %v4397
  %v4473 = vpop.f32.mrb[0].mxu0
  %v4474 = vadd.f32 0.0, %v4473
  %v4475 = vpop.f32.mrb[0].mxu0
  %v4476 = vadd.f32 0.0, %v4475
  %v4477 = vpop.f32.mrb[0].mxu0
  %v4478 = vadd.f32 0.0, %v4477
  %v4479 = vpop.f32.mrb[0].mxu0
  %v4480 = vadd.f32 0.0, %v4479
  %4481 = vmatprep.mubr.bf16.mxu0 0
  %4482 = vmatmul.mubr.bf16.gmra.mrb[0].mxu0 %v4398
  %v4483 = vpop.f32.mrb[0].mxu0
  %v4484 = vadd.f32 0.0, %v4483
  %v4485 = vpop.f32.mrb[0].mxu0
  %v4486 = vadd.f32 0.0, %v4485
  %v4487 = vpop.f32.mrb[0].mxu0
  %v4488 = vadd.f32 0.0, %v4487
  %v4489 = vpop.f32.mrb[0].mxu0
  %v4490 = vadd.f32 0.0, %v4489
  %4491 = vmatprep.mubr.bf16.mxu0 0
  %4492 = vmatmul.mubr.bf16.gmra.mrb[0].mxu0 %v4399
  %v4493 = vpop.f32.mrb[0].mxu0
  %v4494 = vadd.f32 0.0, %v4493
  %v4495 = vpop.f32.mrb[0].mxu0
  %v4496 = vadd.f32 0.0, %v4495
  %v4497 = vpop.f32.mrb[0].mxu0
  %v4498 = vadd.f32 0.0, %v4497
  %v4499 = vpop.f32.mrb[0].mxu0
  %v4500 = vadd.f32 0.0, %v4499
  %4501 = vmatprep.mubr.bf16.mxu0 0
  %4502 = vmatmul.mubr.bf16.gmra.mrb[0].mxu0 %v4400
  %v4503 = vpop.f32.mrb[0].mxu0
  %v4504 = vadd.f32 0.0, %v4503
  %v4505 = vpop.f32.mrb[0].mxu0
  %v4506 = vadd.f32 0.0, %v4505
  %v4507 = vpop.f32.mrb[0].mxu0
  %v4508 = vadd.f32 0.0, %v4507
  %v4509 = vpop.f32.mrb[0].mxu0
  %v4510 = vadd.f32 0.0, %v4509
  %4511 = vmatprep.mubr.bf16.mxu0 0
  %4512 = vmatmul.mubr.bf16.gmra.mrb[0].mxu0 %v4401
  %v4513 = vpop.f32.mrb[0].mxu0
  %v4514 = vadd.f32 0.0, %v4513
  %v4515 = vpop.f32.mrb[0].mxu0
  %v4516 = vadd.f32 0.0, %v4515
  %v4517 = vpop.f32.mrb[0].mxu0
  %v4518 = vadd.f32 0.0, %v4517
  %v4519 = vpop.f32.mrb[0].mxu0
  %v4520 = vadd.f32 0.0, %v4519
  %4521 = vmatprep.mubr.bf16.mxu0 0
  %4522 = vmatmul.mubr.bf16.gmra.mrb[0].mxu0 %v4402
  %v4523 = vpop.f32.mrb[0].mxu0
  %v4524 = vadd.f32 0.0, %v4523
  %v4525 = vpop.f32.mrb[0].mxu0
  %v4526 = vadd.f32 0.0, %v4525
  %v4527 = vpop.f32.mrb[0].mxu0
  %v4528 = vadd.f32 0.0, %v4527
  %v4529 = vpop.f32.mrb[0].mxu0
  %v4530 = vadd.f32 0.0, %v4529
  %4531 = vmatprep.mubr.bf16.mxu0 0
  %4532 = vmatmul.mubr.bf16.gmra.mrb[0].mxu0 %v4403
  %v4533 = vpop.f32.mrb[0].mxu0
  %v4534 = vadd.f32 0.0, %v4533
  %v4535 = vpop.f32.mrb[0].mxu0
  %v4536 = vadd.f32 0.0, %v4535
  %v4537 = vpop.f32.mrb[0].mxu0
  %v4538 = vadd.f32 0.0, %v4537
  %v4539 = vpop.f32.mrb[0].mxu0
  %v4540 = vadd.f32 0.0, %v4539
  %4541 = vmatprep.mubr.bf16.mxu0 0
  %4542 = vmatmul.mubr.bf16.gmra.mrb[0].mxu0 %v4404
  %v4543 = vpop.f32.mrb[0].mxu0
  %v4544 = vadd.f32 0.0, %v4543
  %v4545 = vpop.f32.mrb[0].mxu0
  %v4546 = vadd.f32 0.0, %v4545
  %v4547 = vpop.f32.mrb[0].mxu0
  %v4548 = vadd.f32 0.0, %v4547
  %v4549 = vpop.f32.mrb[0].mxu0
  %v4550 = vadd.f32 0.0, %v4549
  %4551 = vmatprep.mubr.bf16.mxu0 0
  %4552 = vmatmul.mubr.bf16.gmra.mrb[0].mxu0 %v4405
  %v4553 = vpop.f32.mrb[0].mxu0
  %v4554 = vadd.f32 0.0, %v4553
  %v4555 = vpop.f32.mrb[0].mxu0
  %v4556 = vadd.f32 0.0, %v4555
  %v4557 = vpop.f32.mrb[0].mxu0
  %v4558 = vadd.f32 0.0, %v4557
  %v4559 = vpop.f32.mrb[0].mxu0
  %v4560 = vadd.f32 0.0, %v4559
  %4561 = vmatprep.mubr.bf16.mxu0 0
  %4562 = vmatmul.mubr.bf16.gmra.mrb[0].mxu0 %v4406
  %v4563 = vpop.f32.mrb[0].mxu0
  %v4564 = vadd.f32 0.0, %v4563
  %v4565 = vpop.f32.mrb[0].mxu0
  %v4566 = vadd.f32 0.0, %v4565
  %v4567 = vpop.f32.mrb[0].mxu0
  %v4568 = vadd.f32 0.0, %v4567
  %v4569 = vpop.f32.mrb[0].mxu0
  %v4570 = vadd.f32 0.0, %v4569
  %4571 = vdwg.mxu0
  %4572 = vmatprep.subr.bf16.mxu0 0
  %4573 = vmatpush1.bf16.msra.mxu0 %v4301
  %4574 = vmatprep.subr.bf16.mxu0 0
  %4575 = vmatpush1.bf16.msra.mxu0 %v4304
  %4576 = vmatprep.subr.bf16.mxu0 0
  %4577 = vmatpush1.bf16.msra.mxu0 %v4307
  %4578 = vmatprep.subr.bf16.mxu0 0
  %4579 = vmatpush1.bf16.msra.mxu0 %v4310
  %4580 = vmatprep.subr.bf16.mxu0 0
  %4581 = vmatpush1.bf16.msra.mxu0 %v4313
  %4582 = vmatprep.subr.bf16.mxu0 0
  %4583 = vmatpush1.bf16.msra.mxu0 %v4316
  %4584 = vmatprep.subr.bf16.mxu0 0
  %4585 = vmatpush1.bf16.msra.mxu0 %v4319
  %4586 = vmatprep.subr.bf16.mxu0 0
  %4587 = vmatpush1.bf16.msra.mxu0 %v4322
  %4588 = vmatprep.subr.bf16.mxu0 0
  %4589 = vmatpush1.bf16.msra.mxu0 0
  %4590 = vmatprep.subr.bf16.mxu0 0
  %4591 = vmatpush1.bf16.msra.mxu0 0
  %4592 = vmatprep.subr.bf16.mxu0 0
  %4593 = vmatpush1.bf16.msra.mxu0 0
  %4594 = vmatprep.subr.bf16.mxu0 0
  %4595 = vmatpush1.bf16.msra.mxu0 0
  %4596 = vmatprep.subr.bf16.mxu0 0
  %4597 = vmatpush1.bf16.msra.mxu0 0
  %4598 = vmatprep.subr.bf16.mxu0 0
  %4599 = vmatpush1.bf16.msra.mxu0 0
  %4600 = vmatprep.subr.bf16.mxu0 0
  %4601 = vmatpush1.bf16.msra.mxu0 0
  %4602 = vmatprep.subr.bf16.mxu0 0
  %4603 = vmatpush1.bf16.msra.mxu0 0
  %4604 = vmatprep.mubr.bf16.mxu0 0
  %4605 = vmatmul.mubr.bf16.gmra.mrb[0].mxu0 %v4395
  %v4606 = vpop.f32.mrb[0].mxu0
  %v4607 = vadd.f32 0.0, %v4606
  %v4608 = vpop.f32.mrb[0].mxu0
  %v4609 = vpop.f32.mrb[0].mxu0
  %v4610 = vadd.f32 0.0, %v4609
  %v4611 = vpop.f32.mrb[0].mxu0
  %4612 = vmatprep.mubr.bf16.mxu0 0
  %4613 = vmatmul.mubr.bf16.gmra.mrb[0].mxu0 %v4396
  %v4614 = vpop.f32.mrb[0].mxu0
  %v4615 = vadd.f32 0.0, %v4614
  %v4616 = vpop.f32.mrb[0].mxu0
  %v4617 = vpop.f32.mrb[0].mxu0
  %v4618 = vadd.f32 0.0, %v4617
  %v4619 = vpop.f32.mrb[0].mxu0
  %4620 = vmatprep.mubr.bf16.mxu0 0
  %4621 = vmatmul.mubr.bf16.gmra.mrb[0].mxu0 %v4397
  %v4622 = vpop.f32.mrb[0].mxu0
  %v4623 = vadd.f32 0.0, %v4622
  %v4624 = vpop.f32.mrb[0].mxu0
  %v4625 = vpop.f32.mrb[0].mxu0
  %v4626 = vadd.f32 0.0, %v4625
  %v4627 = vpop.f32.mrb[0].mxu0
  %4628 = vmatprep.mubr.bf16.mxu0 0
  %4629 = vmatmul.mubr.bf16.gmra.mrb[0].mxu0 %v4398
  %v4630 = vpop.f32.mrb[0].mxu0
  %v4631 = vadd.f32 0.0, %v4630
  %v4632 = vpop.f32.mrb[0].mxu0
  %v4633 = vpop.f32.mrb[0].mxu0
  %v4634 = vadd.f32 0.0, %v4633
  %v4635 = vpop.f32.mrb[0].mxu0
  %4636 = vmatprep.mubr.bf16.mxu0 0
  %4637 = vmatmul.mubr.bf16.gmra.mrb[0].mxu0 %v4399
  %v4638 = vpop.f32.mrb[0].mxu0
  %v4639 = vadd.f32 0.0, %v4638
  %v4640 = vpop.f32.mrb[0].mxu0
  %v4641 = vpop.f32.mrb[0].mxu0
  %v4642 = vadd.f32 0.0, %v4641
  %v4643 = vpop.f32.mrb[0].mxu0
  %4644 = vmatprep.mubr.bf16.mxu0 0
  %4645 = vmatmul.mubr.bf16.gmra.mrb[0].mxu0 %v4400
  %v4646 = vpop.f32.mrb[0].mxu0
  %v4647 = vadd.f32 0.0, %v4646
  %v4648 = vpop.f32.mrb[0].mxu0
  %v4649 = vpop.f32.mrb[0].mxu0
  %v4650 = vadd.f32 0.0, %v4649
  %v4651 = vpop.f32.mrb[0].mxu0
  %4652 = vmatprep.mubr.bf16.mxu0 0
  %4653 = vmatmul.mubr.bf16.gmra.mrb[0].mxu0 %v4401
  %v4654 = vpop.f32.mrb[0].mxu0
  %v4655 = vadd.f32 0.0, %v4654
  %v4656 = vpop.f32.mrb[0].mxu0
  %v4657 = vpop.f32.mrb[0].mxu0
  %v4658 = vadd.f32 0.0, %v4657
  %v4659 = vpop.f32.mrb[0].mxu0
  %4660 = vmatprep.mubr.bf16.mxu0 0
  %4661 = vmatmul.mubr.bf16.gmra.mrb[0].mxu0 %v4402
  %v4662 = vpop.f32.mrb[0].mxu0
  %v4663 = vadd.f32 0.0, %v4662
  %v4664 = vpop.f32.mrb[0].mxu0
  %v4665 = vpop.f32.mrb[0].mxu0
  %v4666 = vadd.f32 0.0, %v4665
  %v4667 = vpop.f32.mrb[0].mxu0
  %4668 = vmatprep.mubr.bf16.mxu0 0
  %4669 = vmatmul.mubr.bf16.gmra.mrb[0].mxu0 %v4403
  %v4670 = vpop.f32.mrb[0].mxu0
  %v4671 = vadd.f32 0.0, %v4670
  %v4672 = vpop.f32.mrb[0].mxu0
  %v4673 = vpop.f32.mrb[0].mxu0
  %v4674 = vadd.f32 0.0, %v4673
  %v4675 = vpop.f32.mrb[0].mxu0
  %4676 = vmatprep.mubr.bf16.mxu0 0
  %4677 = vmatmul.mubr.bf16.gmra.mrb[0].mxu0 %v4404
  %v4678 = vpop.f32.mrb[0].mxu0
  %v4679 = vadd.f32 0.0, %v4678
  %v4680 = vpop.f32.mrb[0].mxu0
  %v4681 = vpop.f32.mrb[0].mxu0
  %v4682 = vadd.f32 0.0, %v4681
  %v4683 = vpop.f32.mrb[0].mxu0
  %4684 = vmatprep.mubr.bf16.mxu0 0
  %4685 = vmatmul.mubr.bf16.gmra.mrb[0].mxu0 %v4405
  %v4686 = vpop.f32.mrb[0].mxu0
  %v4687 = vadd.f32 0.0, %v4686
  %v4688 = vpop.f32.mrb[0].mxu0
  %v4689 = vpop.f32.mrb[0].mxu0
  %v4690 = vadd.f32 0.0, %v4689
  %v4691 = vpop.f32.mrb[0].mxu0
  %4692 = vmatprep.mubr.bf16.mxu0 0
  %4693 = vmatmul.mubr.bf16.gmra.mrb[0].mxu0 %v4406
  %v4694 = vpop.f32.mrb[0].mxu0
  %v4695 = vadd.f32 0.0, %v4694
  %v4696 = vpop.f32.mrb[0].mxu0
  %v4697 = vpop.f32.mrb[0].mxu0
  %v4698 = vadd.f32 0.0, %v4697
  %v4699 = vpop.f32.mrb[0].mxu0
  %4700 = vdwg.mxu0
  %v4701 = vpack.c.bf16 %v4458, %v4454
  %v4702 = vpack.c.bf16 %v4460, %v4456
  %v4703 = vpack.c.bf16 %v4610, %v4607
  %v4704 = vpack.c.bf16 %v4468, %v4464
  %v4705 = vpack.c.bf16 %v4470, %v4466
  %v4706 = vpack.c.bf16 %v4618, %v4615
  %v4707 = vpack.c.bf16 %v4478, %v4474
  %v4708 = vpack.c.bf16 %v4480, %v4476
  %v4709 = vpack.c.bf16 %v4626, %v4623
  %v4710 = vpack.c.bf16 %v4488, %v4484
  %v4711 = vpack.c.bf16 %v4490, %v4486
  %v4712 = vpack.c.bf16 %v4634, %v4631
  %v4713 = vld [vmem:[#allocation2] sm:$0xff]
  %v4714 = vld [vmem:[#allocation2 + $0x8] sm:$0xff]
  %v4715 = vld [vmem:[#allocation2 + $0x10] sm:$0xff]
  %v4716 = vld [vmem:[#allocation2 + $0x18] sm:$0xff]
  %v4717 = vld [vmem:[#allocation2 + $0x20] sm:$0xff]
  %v4718 = vld [vmem:[#allocation2 + $0x28] sm:$0xff]
  %v4719 = vld [vmem:[#allocation2 + $0x30] sm:$0xff]
  %v4720 = vld [vmem:[#allocation2 + $0x38] sm:$0xff]
  %v4721 = vld [vmem:[#allocation2 + $0x40] sm:$0xff]
  %v4722 = vld [vmem:[#allocation2 + $0x48] sm:$0xff]
  %v4723 = vld [vmem:[#allocation2 + $0x50] sm:$0xff]
  %v4724 = vld [vmem:[#allocation2 + $0x58] sm:$0xff]
  %v4725 = vld [vmem:[#allocation2 + $0x60] sm:$0xff]
  %v4726 = vld [vmem:[#allocation2 + $0x68] sm:$0xff]
  %v4727 = vld [vmem:[#allocation2 + $0x70] sm:$0xff]
  %v4728 = vld [vmem:[#allocation2 + $0x78] sm:$0xff]
  %v4729 = vld [vmem:[#allocation2 + $0x80] sm:$0xff]
  %v4730 = vld [vmem:[#allocation2 + $0x88] sm:$0xff]
  %v4731 = vld [vmem:[#allocation2 + $0x90] sm:$0xff]
  %v4732 = vld [vmem:[#allocation2 + $0x98] sm:$0xff]
  %v4733 = vld [vmem:[#allocation2 + $0xa0] sm:$0xff]
  %v4734 = vld [vmem:[#allocation2 + $0xa8] sm:$0xff]
  %v4735 = vld [vmem:[#allocation2 + $0xb0] sm:$0xff]
  %v4736 = vld [vmem:[#allocation2 + $0xb8] sm:$0xff]
  %v4737 = vld [vmem:[#allocation2 + $0xc0] sm:$0xff]
  %v4738 = vld [vmem:[#allocation2 + $0xc8] sm:$0xff]
  %v4739 = vld [vmem:[#allocation2 + $0xd0] sm:$0xff]
  %v4740 = vld [vmem:[#allocation2 + $0xd8] sm:$0xff]
  %v4741 = vld [vmem:[#allocation2 + $0xe0] sm:$0xff]
  %v4742 = vld [vmem:[#allocation2 + $0xe8] sm:$0xff]
  %v4743 = vld [vmem:[#allocation2 + $0xf0] sm:$0xff]
  %v4744 = vld [vmem:[#allocation2 + $0xf8] sm:$0xff]
  %v4745 = vld [vmem:[#allocation2 + $0x100] sm:$0xff]
  %v4746 = vld [vmem:[#allocation2 + $0x108] sm:$0xff]
  %v4747 = vld [vmem:[#allocation2 + $0x110] sm:$0xff]
  %v4748 = vld [vmem:[#allocation2 + $0x118] sm:$0xff]
  %v4749 = vld [vmem:[#allocation2 + $0x120] sm:$0xff]
  %v4750 = vld [vmem:[#allocation2 + $0x128] sm:$0xff]
  %v4751 = vld [vmem:[#allocation2 + $0x130] sm:$0xff]
  %v4752 = vld [vmem:[#allocation2 + $0x138] sm:$0xff]
  %v4753 = vld [vmem:[#allocation2 + $0x140] sm:$0xff]
  %v4754 = vld [vmem:[#allocation2 + $0x148] sm:$0xff]
  %v4755 = vld [vmem:[#allocation2 + $0x150] sm:$0xff]
  %v4756 = vld [vmem:[#allocation2 + $0x158] sm:$0xff]
  %v4757 = vld [vmem:[#allocation2 + $0x160] sm:$0xff]
  %v4758 = vld [vmem:[#allocation2 + $0x168] sm:$0xff]
  %v4759 = vld [vmem:[#allocation2 + $0x170] sm:$0xff]
  %v4760 = vld [vmem:[#allocation2 + $0x178] sm:$0xff]
  %v4761 = vpack.c.bf16 %v4498, %v4494
  %v4762 = vpack.c.bf16 %v4500, %v4496
  %v4763 = vpack.c.bf16 %v4642, %v4639
  %v4764 = vpack.c.bf16 %v4508, %v4504
  %v4765 = vpack.c.bf16 %v4510, %v4506
  %v4766 = vpack.c.bf16 %v4650, %v4647
  %v4767 = vpack.c.bf16 %v4518, %v4514
  %v4768 = vpack.c.bf16 %v4520, %v4516
  %v4769 = vpack.c.bf16 %v4658, %v4655
  %v4770 = vpack.c.bf16 %v4528, %v4524
  %v4771 = vpack.c.bf16 %v4530, %v4526
  %v4772 = vpack.c.bf16 %v4666, %v4663
  %s4773 = scalar_lea.vmem [#allocation2], 384
  %v4774 = vld [vmem:[%s4773] sm:$0xff]
  %v4775 = vld [vmem:[%s4773 + $0x8] sm:$0xff]
  %v4776 = vld [vmem:[%s4773 + $0x10] sm:$0xff]
  %v4777 = vld [vmem:[%s4773 + $0x18] sm:$0xff]
  %v4778 = vld [vmem:[%s4773 + $0x20] sm:$0xff]
  %v4779 = vld [vmem:[%s4773 + $0x28] sm:$0xff]
  %v4780 = vld [vmem:[%s4773 + $0x30] sm:$0xff]
  %v4781 = vld [vmem:[%s4773 + $0x38] sm:$0xff]
  %v4782 = vld [vmem:[%s4773 + $0x40] sm:$0xff]
  %v4783 = vld [vmem:[%s4773 + $0x48] sm:$0xff]
  %v4784 = vld [vmem:[%s4773 + $0x50] sm:$0xff]
  %v4785 = vld [vmem:[%s4773 + $0x58] sm:$0xff]
  %v4786 = vld [vmem:[%s4773 + $0x60] sm:$0xff]
  %v4787 = vld [vmem:[%s4773 + $0x68] sm:$0xff]
  %v4788 = vld [vmem:[%s4773 + $0x70] sm:$0xff]
  %v4789 = vld [vmem:[%s4773 + $0x78] sm:$0xff]
  %v4790 = vld [vmem:[%s4773 + $0x80] sm:$0xff]
  %v4791 = vld [vmem:[%s4773 + $0x88] sm:$0xff]
  %v4792 = vld [vmem:[%s4773 + $0x90] sm:$0xff]
  %v4793 = vld [vmem:[%s4773 + $0x98] sm:$0xff]
  %v4794 = vld [vmem:[%s4773 + $0xa0] sm:$0xff]
  %v4795 = vld [vmem:[%s4773 + $0xa8] sm:$0xff]
  %v4796 = vld [vmem:[%s4773 + $0xb0] sm:$0xff]
  %v4797 = vld [vmem:[%s4773 + $0xb8] sm:$0xff]
  %v4798 = vld [vmem:[%s4773 + $0xc0] sm:$0xff]
  %v4799 = vld [vmem:[%s4773 + $0xc8] sm:$0xff]
  %v4800 = vld [vmem:[%s4773 + $0xd0] sm:$0xff]
  %v4801 = vld [vmem:[%s4773 + $0xd8] sm:$0xff]
  %v4802 = vld [vmem:[%s4773 + $0xe0] sm:$0xff]
  %v4803 = vld [vmem:[%s4773 + $0xe8] sm:$0xff]
  %v4804 = vld [vmem:[%s4773 + $0xf0] sm:$0xff]
  %v4805 = vld [vmem:[%s4773 + $0xf8] sm:$0xff]
  %v4806 = vld [vmem:[%s4773 + $0x100] sm:$0xff]
  %v4807 = vld [vmem:[%s4773 + $0x108] sm:$0xff]
  %v4808 = vld [vmem:[%s4773 + $0x110] sm:$0xff]
  %v4809 = vld [vmem:[%s4773 + $0x118] sm:$0xff]
  %v4810 = vld [vmem:[%s4773 + $0x120] sm:$0xff]
  %v4811 = vld [vmem:[%s4773 + $0x128] sm:$0xff]
  %v4812 = vld [vmem:[%s4773 + $0x130] sm:$0xff]
  %v4813 = vld [vmem:[%s4773 + $0x138] sm:$0xff]
  %v4814 = vld [vmem:[%s4773 + $0x140] sm:$0xff]
  %v4815 = vld [vmem:[%s4773 + $0x148] sm:$0xff]
  %v4816 = vld [vmem:[%s4773 + $0x150] sm:$0xff]
  %v4817 = vld [vmem:[%s4773 + $0x158] sm:$0xff]
  %v4818 = vld [vmem:[%s4773 + $0x160] sm:$0xff]
  %v4819 = vld [vmem:[%s4773 + $0x168] sm:$0xff]
  %v4820 = vld [vmem:[%s4773 + $0x170] sm:$0xff]
  %v4821 = vld [vmem:[%s4773 + $0x178] sm:$0xff]
  %4822 = vmatprep.subr.bf16.mxu0 %v4775
  %4823 = vmatpush1.bf16.msra.mxu0 %v4774
  %4824 = vmatprep.subr.bf16.mxu0 %v4777
  %4825 = vmatpush1.bf16.msra.mxu0 %v4776
  %4826 = vmatprep.subr.bf16.mxu0 %v4779
  %4827 = vmatpush1.bf16.msra.mxu0 %v4778
  %4828 = vmatprep.subr.bf16.mxu0 %v4781
  %4829 = vmatpush1.bf16.msra.mxu0 %v4780
  %4830 = vmatprep.subr.bf16.mxu0 %v4783
  %4831 = vmatpush1.bf16.msra.mxu0 %v4782
  %4832 = vmatprep.subr.bf16.mxu0 %v4785
  %4833 = vmatpush1.bf16.msra.mxu0 %v4784
  %4834 = vmatprep.subr.bf16.mxu0 %v4787
  %4835 = vmatpush1.bf16.msra.mxu0 %v4786
  %4836 = vmatprep.subr.bf16.mxu0 %v4789
  %4837 = vmatpush1.bf16.msra.mxu0 %v4788
  %4838 = vmatprep.subr.bf16.mxu0 %v4791
  %4839 = vmatpush1.bf16.msra.mxu0 %v4790
  %4840 = vmatprep.subr.bf16.mxu0 %v4793
  %4841 = vmatpush1.bf16.msra.mxu0 %v4792
  %4842 = vmatprep.subr.bf16.mxu0 %v4795
  %4843 = vmatpush1.bf16.msra.mxu0 %v4794
  %4844 = vmatprep.subr.bf16.mxu0 %v4797
  %4845 = vmatpush1.bf16.msra.mxu0 %v4796
  %4846 = vmatprep.subr.bf16.mxu0 %v4799
  %4847 = vmatpush1.bf16.msra.mxu0 %v4798
  %4848 = vmatprep.subr.bf16.mxu0 %v4801
  %4849 = vmatpush1.bf16.msra.mxu0 %v4800
  %4850 = vmatprep.subr.bf16.mxu0 %v4803
  %4851 = vmatpush1.bf16.msra.mxu0 %v4802
  %4852 = vmatprep.subr.bf16.mxu0 %v4805
  %4853 = vmatpush1.bf16.msra.mxu0 %v4804
  %4854 = vmatprep.mubr.bf16.mxu0 %v4762
  %4855 = vmatmul.mubr.bf16.gmra.mrb[0].mxu0 %v4761
  %v4856 = vpop.f32.mrb[0].mxu0
  %v4857 = vadd.f32 0.0, %v4856
  %v4858 = vpop.f32.mrb[0].mxu0
  %v4859 = vadd.f32 0.0, %v4858
  %v4860 = vpop.f32.mrb[0].mxu0
  %v4861 = vadd.f32 0.0, %v4860
  %v4862 = vpop.f32.mrb[0].mxu0
  %v4863 = vadd.f32 0.0, %v4862
  %4864 = vmatprep.mubr.bf16.mxu0 %v4765
  %4865 = vmatmul.mubr.bf16.gmra.mrb[0].mxu0 %v4764
  %v4866 = vpop.f32.mrb[0].mxu0
  %v4867 = vadd.f32 0.0, %v4866
  %v4868 = vpop.f32.mrb[0].mxu0
  %v4869 = vadd.f32 0.0, %v4868
  %v4870 = vpop.f32.mrb[0].mxu0
  %v4871 = vadd.f32 0.0, %v4870
  %v4872 = vpop.f32.mrb[0].mxu0
  %v4873 = vadd.f32 0.0, %v4872
  %4874 = vmatprep.mubr.bf16.mxu0 %v4768
  %4875 = vmatmul.mubr.bf16.gmra.mrb[0].mxu0 %v4767
  %v4876 = vpop.f32.mrb[0].mxu0
  %v4877 = vadd.f32 0.0, %v4876
  %v4878 = vpop.f32.mrb[0].mxu0
  %v4879 = vadd.f32 0.0, %v4878
  %v4880 = vpop.f32.mrb[0].mxu0
  %v4881 = vadd.f32 0.0, %v4880
  %v4882 = vpop.f32.mrb[0].mxu0
  %v4883 = vadd.f32 0.0, %v4882
  %4884 = vmatprep.mubr.bf16.mxu0 %v4771
  %4885 = vmatmul.mubr.bf16.gmra.mrb[0].mxu0 %v4770
  %v4886 = vpop.f32.mrb[0].mxu0
  %v4887 = vadd.f32 0.0, %v4886
  %v4888 = vpop.f32.mrb[0].mxu0
  %v4889 = vadd.f32 0.0, %v4888
  %v4890 = vpop.f32.mrb[0].mxu0
  %v4891 = vadd.f32 0.0, %v4890
  %v4892 = vpop.f32.mrb[0].mxu0
  %v4893 = vadd.f32 0.0, %v4892
  %4894 = vdwg.mxu0
  %4895 = vmatprep.subr.bf16.mxu0 %v4807
  %4896 = vmatpush1.bf16.msra.mxu0 %v4806
  %4897 = vmatprep.subr.bf16.mxu0 %v4809
  %4898 = vmatpush1.bf16.msra.mxu0 %v4808
  %4899 = vmatprep.subr.bf16.mxu0 %v4811
  %4900 = vmatpush1.bf16.msra.mxu0 %v4810
  %4901 = vmatprep.subr.bf16.mxu0 %v4813
  %4902 = vmatpush1.bf16.msra.mxu0 %v4812
  %4903 = vmatprep.subr.bf16.mxu0 %v4815
  %4904 = vmatpush1.bf16.msra.mxu0 %v4814
  %4905 = vmatprep.subr.bf16.mxu0 %v4817
  %4906 = vmatpush1.bf16.msra.mxu0 %v4816
  %4907 = vmatprep.subr.bf16.mxu0 %v4819
  %4908 = vmatpush1.bf16.msra.mxu0 %v4818
  %4909 = vmatprep.subr.bf16.mxu0 %v4821
  %4910 = vmatpush1.bf16.msra.mxu0 %v4820
  %4911 = vmatprep.subr.bf16.mxu0 0
  %4912 = vmatpush1.bf16.msra.mxu0 0
  %4913 = vmatprep.subr.bf16.mxu0 0
  %4914 = vmatpush1.bf16.msra.mxu0 0
  %4915 = vmatprep.subr.bf16.mxu0 0
  %4916 = vmatpush1.bf16.msra.mxu0 0
  %4917 = vmatprep.subr.bf16.mxu0 0
  %4918 = vmatpush1.bf16.msra.mxu0 0
  %4919 = vmatprep.subr.bf16.mxu0 0
  %4920 = vmatpush1.bf16.msra.mxu0 0
  %4921 = vmatprep.subr.bf16.mxu0 0
  %4922 = vmatpush1.bf16.msra.mxu0 0
  %4923 = vmatprep.subr.bf16.mxu0 0
  %4924 = vmatpush1.bf16.msra.mxu0 0
  %4925 = vmatprep.subr.bf16.mxu0 0
  %4926 = vmatpush1.bf16.msra.mxu0 0
  %4927 = vmatprep.mubr.bf16.mxu0 0
  %4928 = vmatmul.mubr.bf16.gmra.mrb[0].mxu0 %v4763
  %v4929 = vpop.f32.mrb[0].mxu0
  %v4930 = vadd.f32 %v4857, %v4929
  %v4931 = vpop.f32.mrb[0].mxu0
  %v4932 = vadd.f32 %v4859, %v4931
  %v4933 = vpop.f32.mrb[0].mxu0
  %v4934 = vadd.f32 %v4861, %v4933
  %v4935 = vpop.f32.mrb[0].mxu0
  %v4936 = vadd.f32 %v4863, %v4935
  %4937 = vmatprep.mubr.bf16.mxu0 0
  %4938 = vmatmul.mubr.bf16.gmra.mrb[0].mxu0 %v4766
  %v4939 = vpop.f32.mrb[0].mxu0
  %v4940 = vadd.f32 %v4867, %v4939
  %v4941 = vpop.f32.mrb[0].mxu0
  %v4942 = vadd.f32 %v4869, %v4941
  %v4943 = vpop.f32.mrb[0].mxu0
  %v4944 = vadd.f32 %v4871, %v4943
  %v4945 = vpop.f32.mrb[0].mxu0
  %v4946 = vadd.f32 %v4873, %v4945
  %4947 = vmatprep.mubr.bf16.mxu0 0
  %4948 = vmatmul.mubr.bf16.gmra.mrb[0].mxu0 %v4769
  %v4949 = vpop.f32.mrb[0].mxu0
  %v4950 = vadd.f32 %v4877, %v4949
  %v4951 = vpop.f32.mrb[0].mxu0
  %v4952 = vadd.f32 %v4879, %v4951
  %v4953 = vpop.f32.mrb[0].mxu0
  %v4954 = vadd.f32 %v4881, %v4953
  %v4955 = vpop.f32.mrb[0].mxu0
  %v4956 = vadd.f32 %v4883, %v4955
  %4957 = vmatprep.mubr.bf16.mxu0 0
  %4958 = vmatmul.mubr.bf16.gmra.mrb[0].mxu0 %v4772
  %v4959 = vpop.f32.mrb[0].mxu0
  %v4960 = vadd.f32 %v4887, %v4959
  %v4961 = vpop.f32.mrb[0].mxu0
  %v4962 = vadd.f32 %v4889, %v4961
  %v4963 = vpop.f32.mrb[0].mxu0
  %v4964 = vadd.f32 %v4891, %v4963
  %v4965 = vpop.f32.mrb[0].mxu0
  %v4966 = vadd.f32 %v4893, %v4965
  %4967 = vdwg.mxu0
  %4968 = vmatprep.subr.bf16.mxu0 %v4714
  %4969 = vmatpush1.bf16.msra.mxu0 %v4713
  %4970 = vmatprep.subr.bf16.mxu0 %v4716
  %4971 = vmatpush1.bf16.msra.mxu0 %v4715
  %4972 = vmatprep.subr.bf16.mxu0 %v4718
  %4973 = vmatpush1.bf16.msra.mxu0 %v4717
  %4974 = vmatprep.subr.bf16.mxu0 %v4720
  %4975 = vmatpush1.bf16.msra.mxu0 %v4719
  %4976 = vmatprep.subr.bf16.mxu0 %v4722
  %4977 = vmatpush1.bf16.msra.mxu0 %v4721
  %4978 = vmatprep.subr.bf16.mxu0 %v4724
  %4979 = vmatpush1.bf16.msra.mxu0 %v4723
  %4980 = vmatprep.subr.bf16.mxu0 %v4726
  %4981 = vmatpush1.bf16.msra.mxu0 %v4725
  %4982 = vmatprep.subr.bf16.mxu0 %v4728
  %4983 = vmatpush1.bf16.msra.mxu0 %v4727
  %4984 = vmatprep.subr.bf16.mxu0 %v4730
  %4985 = vmatpush1.bf16.msra.mxu0 %v4729
  %4986 = vmatprep.subr.bf16.mxu0 %v4732
  %4987 = vmatpush1.bf16.msra.mxu0 %v4731
  %4988 = vmatprep.subr.bf16.mxu0 %v4734
  %4989 = vmatpush1.bf16.msra.mxu0 %v4733
  %4990 = vmatprep.subr.bf16.mxu0 %v4736
  %4991 = vmatpush1.bf16.msra.mxu0 %v4735
  %4992 = vmatprep.subr.bf16.mxu0 %v4738
  %4993 = vmatpush1.bf16.msra.mxu0 %v4737
  %4994 = vmatprep.subr.bf16.mxu0 %v4740
  %4995 = vmatpush1.bf16.msra.mxu0 %v4739
  %4996 = vmatprep.subr.bf16.mxu0 %v4742
  %4997 = vmatpush1.bf16.msra.mxu0 %v4741
  %4998 = vmatprep.subr.bf16.mxu0 %v4744
  %4999 = vmatpush1.bf16.msra.mxu0 %v4743
  %5000 = vmatprep.mubr.bf16.mxu0 %v4702
  %5001 = vmatmul.mubr.bf16.gmra.mrb[0].mxu0 %v4701
  %v5002 = vpop.f32.mrb[0].mxu0
  %v5003 = vadd.f32 %v4930, %v5002
  %v5004 = vpop.f32.mrb[0].mxu0
  %v5005 = vadd.f32 %v4932, %v5004
  %v5006 = vpop.f32.mrb[0].mxu0
  %v5007 = vadd.f32 %v4934, %v5006
  %v5008 = vpop.f32.mrb[0].mxu0
  %v5009 = vadd.f32 %v4936, %v5008
  %5010 = vmatprep.mubr.bf16.mxu0 %v4705
  %5011 = vmatmul.mubr.bf16.gmra.mrb[0].mxu0 %v4704
  %v5012 = vpop.f32.mrb[0].mxu0
  %v5013 = vadd.f32 %v4940, %v5012
  %v5014 = vpop.f32.mrb[0].mxu0
  %v5015 = vadd.f32 %v4942, %v5014
  %v5016 = vpop.f32.mrb[0].mxu0
  %v5017 = vadd.f32 %v4944, %v5016
  %v5018 = vpop.f32.mrb[0].mxu0
  %v5019 = vadd.f32 %v4946, %v5018
  %5020 = vmatprep.mubr.bf16.mxu0 %v4708
  %5021 = vmatmul.mubr.bf16.gmra.mrb[0].mxu0 %v4707
  %v5022 = vpop.f32.mrb[0].mxu0
  %v5023 = vadd.f32 %v4950, %v5022
  %v5024 = vpop.f32.mrb[0].mxu0
  %v5025 = vadd.f32 %v4952, %v5024
  %v5026 = vpop.f32.mrb[0].mxu0
  %v5027 = vadd.f32 %v4954, %v5026
  %v5028 = vpop.f32.mrb[0].mxu0
  %v5029 = vadd.f32 %v4956, %v5028
  %5030 = vmatprep.mubr.bf16.mxu0 %v4711
  %5031 = vmatmul.mubr.bf16.gmra.mrb[0].mxu0 %v4710
  %v5032 = vpop.f32.mrb[0].mxu0
  %v5033 = vadd.f32 %v4960, %v5032
  %v5034 = vpop.f32.mrb[0].mxu0
  %v5035 = vadd.f32 %v4962, %v5034
  %v5036 = vpop.f32.mrb[0].mxu0
  %v5037 = vadd.f32 %v4964, %v5036
  %v5038 = vpop.f32.mrb[0].mxu0
  %v5039 = vadd.f32 %v4966, %v5038
  %5040 = vdwg.mxu0
  %5041 = vmatprep.subr.bf16.mxu0 %v4746
  %5042 = vmatpush1.bf16.msra.mxu0 %v4745
  %5043 = vmatprep.subr.bf16.mxu0 %v4748
  %5044 = vmatpush1.bf16.msra.mxu0 %v4747
  %5045 = vmatprep.subr.bf16.mxu0 %v4750
  %5046 = vmatpush1.bf16.msra.mxu0 %v4749
  %5047 = vmatprep.subr.bf16.mxu0 %v4752
  %5048 = vmatpush1.bf16.msra.mxu0 %v4751
  %5049 = vmatprep.subr.bf16.mxu0 %v4754
  %5050 = vmatpush1.bf16.msra.mxu0 %v4753
  %5051 = vmatprep.subr.bf16.mxu0 %v4756
  %5052 = vmatpush1.bf16.msra.mxu0 %v4755
  %5053 = vmatprep.subr.bf16.mxu0 %v4758
  %5054 = vmatpush1.bf16.msra.mxu0 %v4757
  %5055 = vmatprep.subr.bf16.mxu0 %v4760
  %5056 = vmatpush1.bf16.msra.mxu0 %v4759
  %5057 = vmatprep.subr.bf16.mxu0 0
  %5058 = vmatpush1.bf16.msra.mxu0 0
  %5059 = vmatprep.subr.bf16.mxu0 0
  %5060 = vmatpush1.bf16.msra.mxu0 0
  %5061 = vmatprep.subr.bf16.mxu0 0
  %5062 = vmatpush1.bf16.msra.mxu0 0
  %5063 = vmatprep.subr.bf16.mxu0 0
  %5064 = vmatpush1.bf16.msra.mxu0 0
  %5065 = vmatprep.subr.bf16.mxu0 0
  %5066 = vmatpush1.bf16.msra.mxu0 0
  %5067 = vmatprep.subr.bf16.mxu0 0
  %5068 = vmatpush1.bf16.msra.mxu0 0
  %5069 = vmatprep.subr.bf16.mxu0 0
  %5070 = vmatpush1.bf16.msra.mxu0 0
  %5071 = vmatprep.subr.bf16.mxu0 0
  %5072 = vmatpush1.bf16.msra.mxu0 0
  %5073 = vmatprep.mubr.bf16.mxu0 0
  %5074 = vmatmul.mubr.bf16.gmra.mrb[0].mxu0 %v4703
  %v5075 = vpop.f32.mrb[0].mxu0
  %v5076 = vadd.f32 %v5003, %v5075
  %v5077 = vpop.f32.mrb[0].mxu0
  %v5078 = vadd.f32 %v5005, %v5077
  %v5079 = vpop.f32.mrb[0].mxu0
  %v5080 = vadd.f32 %v5007, %v5079
  %v5081 = vpop.f32.mrb[0].mxu0
  %v5082 = vadd.f32 %v5009, %v5081
  %5083 = vmatprep.mubr.bf16.mxu0 0
  %5084 = vmatmul.mubr.bf16.gmra.mrb[0].mxu0 %v4706
  %v5085 = vpop.f32.mrb[0].mxu0
  %v5086 = vadd.f32 %v5013, %v5085
  %v5087 = vpop.f32.mrb[0].mxu0
  %v5088 = vadd.f32 %v5015, %v5087
  %v5089 = vpop.f32.mrb[0].mxu0
  %v5090 = vadd.f32 %v5017, %v5089
  %v5091 = vpop.f32.mrb[0].mxu0
  %v5092 = vadd.f32 %v5019, %v5091
  %5093 = vmatprep.mubr.bf16.mxu0 0
  %5094 = vmatmul.mubr.bf16.gmra.mrb[0].mxu0 %v4709
  %v5095 = vpop.f32.mrb[0].mxu0
  %v5096 = vadd.f32 %v5023, %v5095
  %v5097 = vpop.f32.mrb[0].mxu0
  %v5098 = vadd.f32 %v5025, %v5097
  %v5099 = vpop.f32.mrb[0].mxu0
  %v5100 = vadd.f32 %v5027, %v5099
  %v5101 = vpop.f32.mrb[0].mxu0
  %v5102 = vadd.f32 %v5029, %v5101
  %5103 = vmatprep.mubr.bf16.mxu0 0
  %5104 = vmatmul.mubr.bf16.gmra.mrb[0].mxu0 %v4712
  %v5105 = vpop.f32.mrb[0].mxu0
  %v5106 = vadd.f32 %v5033, %v5105
  %v5107 = vpop.f32.mrb[0].mxu0
  %v5108 = vadd.f32 %v5035, %v5107
  %v5109 = vpop.f32.mrb[0].mxu0
  %v5110 = vadd.f32 %v5037, %v5109
  %v5111 = vpop.f32.mrb[0].mxu0
  %v5112 = vadd.f32 %v5039, %v5111
  %5113 = vdwg.mxu0
  %v5114 = vpack.c.bf16 %v4538, %v4534
  %v5115 = vpack.c.bf16 %v4540, %v4536
  %v5116 = vpack.c.bf16 %v4674, %v4671
  %v5117 = vpack.c.bf16 %v4548, %v4544
  %v5118 = vpack.c.bf16 %v4550, %v4546
  %v5119 = vpack.c.bf16 %v4682, %v4679
  %v5120 = vpack.c.bf16 %v4558, %v4554
  %v5121 = vpack.c.bf16 %v4560, %v4556
  %v5122 = vpack.c.bf16 %v4690, %v4687
  %v5123 = vpack.c.bf16 %v4568, %v4564
  %v5124 = vpack.c.bf16 %v4570, %v4566
  %v5125 = vpack.c.bf16 %v4698, %v4695
  %s5126 = scalar_lea.vmem [#allocation2], 768
  %v5127 = vld [vmem:[%s5126] sm:$0xff]
  %v5128 = vld [vmem:[%s5126 + $0x8] sm:$0xff]
  %v5129 = vld [vmem:[%s5126 + $0x10] sm:$0xff]
  %v5130 = vld [vmem:[%s5126 + $0x18] sm:$0xff]
  %v5131 = vld [vmem:[%s5126 + $0x20] sm:$0xff]
  %v5132 = vld [vmem:[%s5126 + $0x28] sm:$0xff]
  %v5133 = vld [vmem:[%s5126 + $0x30] sm:$0xff]
  %v5134 = vld [vmem:[%s5126 + $0x38] sm:$0xff]
  %v5135 = vld [vmem:[%s5126 + $0x40] sm:$0xff]
  %v5136 = vld [vmem:[%s5126 + $0x48] sm:$0xff]
  %v5137 = vld [vmem:[%s5126 + $0x50] sm:$0xff]
  %v5138 = vld [vmem:[%s5126 + $0x58] sm:$0xff]
  %v5139 = vld [vmem:[%s5126 + $0x60] sm:$0xff]
  %v5140 = vld [vmem:[%s5126 + $0x68] sm:$0xff]
  %v5141 = vld [vmem:[%s5126 + $0x70] sm:$0xff]
  %v5142 = vld [vmem:[%s5126 + $0x78] sm:$0xff]
  %v5143 = vld [vmem:[%s5126 + $0x80] sm:$0xff]
  %v5144 = vld [vmem:[%s5126 + $0x88] sm:$0xff]
  %v5145 = vld [vmem:[%s5126 + $0x90] sm:$0xff]
  %v5146 = vld [vmem:[%s5126 + $0x98] sm:$0xff]
  %v5147 = vld [vmem:[%s5126 + $0xa0] sm:$0xff]
  %v5148 = vld [vmem:[%s5126 + $0xa8] sm:$0xff]
  %v5149 = vld [vmem:[%s5126 + $0xb0] sm:$0xff]
  %v5150 = vld [vmem:[%s5126 + $0xb8] sm:$0xff]
  %v5151 = vld [vmem:[%s5126 + $0xc0] sm:$0xff]
  %v5152 = vld [vmem:[%s5126 + $0xc8] sm:$0xff]
  %v5153 = vld [vmem:[%s5126 + $0xd0] sm:$0xff]
  %v5154 = vld [vmem:[%s5126 + $0xd8] sm:$0xff]
  %v5155 = vld [vmem:[%s5126 + $0xe0] sm:$0xff]
  %v5156 = vld [vmem:[%s5126 + $0xe8] sm:$0xff]
  %v5157 = vld [vmem:[%s5126 + $0xf0] sm:$0xff]
  %v5158 = vld [vmem:[%s5126 + $0xf8] sm:$0xff]
  %v5159 = vld [vmem:[%s5126 + $0x100] sm:$0xff]
  %v5160 = vld [vmem:[%s5126 + $0x108] sm:$0xff]
  %v5161 = vld [vmem:[%s5126 + $0x110] sm:$0xff]
  %v5162 = vld [vmem:[%s5126 + $0x118] sm:$0xff]
  %v5163 = vld [vmem:[%s5126 + $0x120] sm:$0xff]
  %v5164 = vld [vmem:[%s5126 + $0x128] sm:$0xff]
  %v5165 = vld [vmem:[%s5126 + $0x130] sm:$0xff]
  %v5166 = vld [vmem:[%s5126 + $0x138] sm:$0xff]
  %v5167 = vld [vmem:[%s5126 + $0x140] sm:$0xff]
  %v5168 = vld [vmem:[%s5126 + $0x148] sm:$0xff]
  %v5169 = vld [vmem:[%s5126 + $0x150] sm:$0xff]
  %v5170 = vld [vmem:[%s5126 + $0x158] sm:$0xff]
  %v5171 = vld [vmem:[%s5126 + $0x160] sm:$0xff]
  %v5172 = vld [vmem:[%s5126 + $0x168] sm:$0xff]
  %v5173 = vld [vmem:[%s5126 + $0x170] sm:$0xff]
  %v5174 = vld [vmem:[%s5126 + $0x178] sm:$0xff]
  %5175 = vmatprep.subr.bf16.mxu0 %v5128
  %5176 = vmatpush1.bf16.msra.mxu0 %v5127
  %5177 = vmatprep.subr.bf16.mxu0 %v5130
  %5178 = vmatpush1.bf16.msra.mxu0 %v5129
  %5179 = vmatprep.subr.bf16.mxu0 %v5132
  %5180 = vmatpush1.bf16.msra.mxu0 %v5131
  %5181 = vmatprep.subr.bf16.mxu0 %v5134
  %5182 = vmatpush1.bf16.msra.mxu0 %v5133
  %5183 = vmatprep.subr.bf16.mxu0 %v5136
  %5184 = vmatpush1.bf16.msra.mxu0 %v5135
  %5185 = vmatprep.subr.bf16.mxu0 %v5138
  %5186 = vmatpush1.bf16.msra.mxu0 %v5137
  %5187 = vmatprep.subr.bf16.mxu0 %v5140
  %5188 = vmatpush1.bf16.msra.mxu0 %v5139
  %5189 = vmatprep.subr.bf16.mxu0 %v5142
  %5190 = vmatpush1.bf16.msra.mxu0 %v5141
  %5191 = vmatprep.subr.bf16.mxu0 %v5144
  %5192 = vmatpush1.bf16.msra.mxu0 %v5143
  %5193 = vmatprep.subr.bf16.mxu0 %v5146
  %5194 = vmatpush1.bf16.msra.mxu0 %v5145
  %5195 = vmatprep.subr.bf16.mxu0 %v5148
  %5196 = vmatpush1.bf16.msra.mxu0 %v5147
  %5197 = vmatprep.subr.bf16.mxu0 %v5150
  %5198 = vmatpush1.bf16.msra.mxu0 %v5149
  %5199 = vmatprep.subr.bf16.mxu0 %v5152
  %5200 = vmatpush1.bf16.msra.mxu0 %v5151
  %5201 = vmatprep.subr.bf16.mxu0 %v5154
  %5202 = vmatpush1.bf16.msra.mxu0 %v5153
  %5203 = vmatprep.subr.bf16.mxu0 %v5156
  %5204 = vmatpush1.bf16.msra.mxu0 %v5155
  %5205 = vmatprep.subr.bf16.mxu0 %v5158
  %5206 = vmatpush1.bf16.msra.mxu0 %v5157
  %5207 = vmatprep.mubr.bf16.mxu0 %v5115
  %5208 = vmatmul.mubr.bf16.gmra.mrb[0].mxu0 %v5114
  %v5209 = vpop.f32.mrb[0].mxu0
  %v5210 = vadd.f32 0.0, %v5209
  %v5211 = vpop.f32.mrb[0].mxu0
  %v5212 = vadd.f32 0.0, %v5211
  %v5213 = vpop.f32.mrb[0].mxu0
  %v5214 = vadd.f32 0.0, %v5213
  %v5215 = vpop.f32.mrb[0].mxu0
  %v5216 = vadd.f32 0.0, %v5215
  %5217 = vmatprep.mubr.bf16.mxu0 %v5118
  %5218 = vmatmul.mubr.bf16.gmra.mrb[0].mxu0 %v5117
  %v5219 = vpop.f32.mrb[0].mxu0
  %v5220 = vadd.f32 0.0, %v5219
  %v5221 = vpop.f32.mrb[0].mxu0
  %v5222 = vadd.f32 0.0, %v5221
  %v5223 = vpop.f32.mrb[0].mxu0
  %v5224 = vadd.f32 0.0, %v5223
  %v5225 = vpop.f32.mrb[0].mxu0
  %v5226 = vadd.f32 0.0, %v5225
  %5227 = vmatprep.mubr.bf16.mxu0 %v5121
  %5228 = vmatmul.mubr.bf16.gmra.mrb[0].mxu0 %v5120
  %v5229 = vpop.f32.mrb[0].mxu0
  %v5230 = vadd.f32 0.0, %v5229
  %v5231 = vpop.f32.mrb[0].mxu0
  %v5232 = vadd.f32 0.0, %v5231
  %v5233 = vpop.f32.mrb[0].mxu0
  %v5234 = vadd.f32 0.0, %v5233
  %v5235 = vpop.f32.mrb[0].mxu0
  %v5236 = vadd.f32 0.0, %v5235
  %5237 = vmatprep.mubr.bf16.mxu0 %v5124
  %5238 = vmatmul.mubr.bf16.gmra.mrb[0].mxu0 %v5123
  %v5239 = vpop.f32.mrb[0].mxu0
  %v5240 = vadd.f32 0.0, %v5239
  %v5241 = vpop.f32.mrb[0].mxu0
  %v5242 = vadd.f32 0.0, %v5241
  %v5243 = vpop.f32.mrb[0].mxu0
  %v5244 = vadd.f32 0.0, %v5243
  %v5245 = vpop.f32.mrb[0].mxu0
  %v5246 = vadd.f32 0.0, %v5245
  %5247 = vdwg.mxu0
  %5248 = vmatprep.subr.bf16.mxu0 %v5160
  %5249 = vmatpush1.bf16.msra.mxu0 %v5159
  %5250 = vmatprep.subr.bf16.mxu0 %v5162
  %5251 = vmatpush1.bf16.msra.mxu0 %v5161
  %5252 = vmatprep.subr.bf16.mxu0 %v5164
  %5253 = vmatpush1.bf16.msra.mxu0 %v5163
  %5254 = vmatprep.subr.bf16.mxu0 %v5166
  %5255 = vmatpush1.bf16.msra.mxu0 %v5165
  %5256 = vmatprep.subr.bf16.mxu0 %v5168
  %5257 = vmatpush1.bf16.msra.mxu0 %v5167
  %5258 = vmatprep.subr.bf16.mxu0 %v5170
  %5259 = vmatpush1.bf16.msra.mxu0 %v5169
  %5260 = vmatprep.subr.bf16.mxu0 %v5172
  %5261 = vmatpush1.bf16.msra.mxu0 %v5171
  %5262 = vmatprep.subr.bf16.mxu0 %v5174
  %5263 = vmatpush1.bf16.msra.mxu0 %v5173
  %5264 = vmatprep.subr.bf16.mxu0 0
  %5265 = vmatpush1.bf16.msra.mxu0 0
  %5266 = vmatprep.subr.bf16.mxu0 0
  %5267 = vmatpush1.bf16.msra.mxu0 0
  %5268 = vmatprep.subr.bf16.mxu0 0
  %5269 = vmatpush1.bf16.msra.mxu0 0
  %5270 = vmatprep.subr.bf16.mxu0 0
  %5271 = vmatpush1.bf16.msra.mxu0 0
  %5272 = vmatprep.subr.bf16.mxu0 0
  %5273 = vmatpush1.bf16.msra.mxu0 0
  %5274 = vmatprep.subr.bf16.mxu0 0
  %5275 = vmatpush1.bf16.msra.mxu0 0
  %5276 = vmatprep.subr.bf16.mxu0 0
  %5277 = vmatpush1.bf16.msra.mxu0 0
  %5278 = vmatprep.subr.bf16.mxu0 0
  %5279 = vmatpush1.bf16.msra.mxu0 0
  %5280 = vmatprep.mubr.bf16.mxu0 0
  %5281 = vmatmul.mubr.bf16.gmra.mrb[0].mxu0 %v5116
  %v5282 = vpop.f32.mrb[0].mxu0
  %v5283 = vadd.f32 %v5210, %v5282
  %v5284 = vpop.f32.mrb[0].mxu0
  %v5285 = vadd.f32 %v5212, %v5284
  %v5286 = vpop.f32.mrb[0].mxu0
  %v5287 = vadd.f32 %v5214, %v5286
  %v5288 = vpop.f32.mrb[0].mxu0
  %v5289 = vadd.f32 %v5216, %v5288
  %5290 = vmatprep.mubr.bf16.mxu0 0
  %5291 = vmatmul.mubr.bf16.gmra.mrb[0].mxu0 %v5119
  %v5292 = vpop.f32.mrb[0].mxu0
  %v5293 = vadd.f32 %v5220, %v5292
  %v5294 = vpop.f32.mrb[0].mxu0
  %v5295 = vadd.f32 %v5222, %v5294
  %v5296 = vpop.f32.mrb[0].mxu0
  %v5297 = vadd.f32 %v5224, %v5296
  %v5298 = vpop.f32.mrb[0].mxu0
  %v5299 = vadd.f32 %v5226, %v5298
  %5300 = vmatprep.mubr.bf16.mxu0 0
  %5301 = vmatmul.mubr.bf16.gmra.mrb[0].mxu0 %v5122
  %v5302 = vpop.f32.mrb[0].mxu0
  %v5303 = vadd.f32 %v5230, %v5302
  %v5304 = vpop.f32.mrb[0].mxu0
  %v5305 = vadd.f32 %v5232, %v5304
  %v5306 = vpop.f32.mrb[0].mxu0
  %v5307 = vadd.f32 %v5234, %v5306
  %v5308 = vpop.f32.mrb[0].mxu0
  %v5309 = vadd.f32 %v5236, %v5308
  %5310 = vmatprep.mubr.bf16.mxu0 0
  %5311 = vmatmul.mubr.bf16.gmra.mrb[0].mxu0 %v5125
  %v5312 = vpop.f32.mrb[0].mxu0
  %v5313 = vadd.f32 %v5240, %v5312
  %v5314 = vpop.f32.mrb[0].mxu0
  %v5315 = vadd.f32 %v5242, %v5314
  %v5316 = vpop.f32.mrb[0].mxu0
  %v5317 = vadd.f32 %v5244, %v5316
  %v5318 = vpop.f32.mrb[0].mxu0
  %v5319 = vadd.f32 %v5246, %v5318
  %5320 = vdwg.mxu0
  %v5321 = vadd.f32 %v5076, %v5283
  %v5322 = vadd.f32 %v5078, %v5285
  %v5323 = vadd.f32 %v5080, %v5287
  %v5324 = vadd.f32 %v5082, %v5289
  %v5325 = vadd.f32 %v5086, %v5293
  %v5326 = vadd.f32 %v5088, %v5295
  %v5327 = vadd.f32 %v5090, %v5297
  %v5328 = vadd.f32 %v5092, %v5299
  %v5329 = vadd.f32 %v5096, %v5303
  %v5330 = vadd.f32 %v5098, %v5305
  %v5331 = vadd.f32 %v5100, %v5307
  %v5332 = vadd.f32 %v5102, %v5309
  %v5333 = vadd.f32 %v5106, %v5313
  %v5334 = vadd.f32 %v5108, %v5315
  %v5335 = vadd.f32 %v5110, %v5317
  %v5336 = vadd.f32 %v5112, %v5319
  %v5337 = vld [vmem:[%s10] sm:$0x77]
  %v5339 = vlaneseq
  %v5340 = vshrl.u32 %v5339, 7
  %v5341 = vsub.s32 0, %v5340
  %v5342 = vrot.slane %v5337, %v5341
  %v5343 = vlaneseq
  %v5344 = vshrl.u32 %v5343, 7
  %v5345 = vsub.s32 4, %v5344
  %v5346 = vrot.slane %v5337, %v5345
  %v5349 = vlaneseq
  %v5350 = vshrl.u32 %v5349, 7
  %v5351 = vsub.s32 0, %v5350
  %v5352 = vrot.slane %v5342, %v5351
  %v5353 = vlaneseq
  %v5354 = vshrl.u32 %v5353, 7
  %v5355 = vsub.s32 0, %v5354
  %v5356 = vrot.slane %v5346, %v5355
  %v5357 = vadd.f32 %v5321, %v5352
  %v5358 = vadd.f32 %v5322, %v5356
  %v5359 = vadd.f32 %v5323, %v5352
  %v5360 = vadd.f32 %v5324, %v5356
  %v5361 = vadd.f32 %v5325, %v5352
  %v5362 = vadd.f32 %v5326, %v5356
  %v5363 = vadd.f32 %v5327, %v5352
  %v5364 = vadd.f32 %v5328, %v5356
  %v5365 = vadd.f32 %v5329, %v5352
  %v5366 = vadd.f32 %v5330, %v5356
  %v5367 = vadd.f32 %v5331, %v5352
  %v5368 = vadd.f32 %v5332, %v5356
  %v5369 = vadd.f32 %v5333, %v5352
  %v5370 = vadd.f32 %v5334, %v5356
  %v5371 = vadd.f32 %v5335, %v5352
  %v5372 = vadd.f32 %v5336, %v5356
  %v5373 = vmax.f32 %v5357, 0.0
  %v5374 = vmax.f32 %v5358, 0.0
  %v5375 = vmax.f32 %v5359, 0.0
  %v5376 = vmax.f32 %v5360, 0.0
  %v5377 = vmax.f32 %v5361, 0.0
  %v5378 = vmax.f32 %v5362, 0.0
  %v5379 = vmax.f32 %v5363, 0.0
  %v5380 = vmax.f32 %v5364, 0.0
  %v5381 = vmax.f32 %v5365, 0.0
  %v5382 = vmax.f32 %v5366, 0.0
  %v5383 = vmax.f32 %v5367, 0.0
  %v5384 = vmax.f32 %v5368, 0.0
  %v5385 = vmax.f32 %v5369, 0.0
  %v5386 = vmax.f32 %v5370, 0.0
  %v5387 = vmax.f32 %v5371, 0.0
  %v5388 = vmax.f32 %v5372, 0.0
  %v5389 = vadd.f32 %v5373, %v5375
  %v5390 = vadd.f32 %v5389, %v5377
  %v5391 = vadd.f32 %v5390, %v5379
  %v5392 = vadd.f32 %v5391, %v5381
  %v5393 = vadd.f32 %v5392, %v5383
  %v5394 = vadd.f32 %v5393, %v5385
  %v5395 = vadd.f32 %v5394, %v5387
  %v5396 = vrot.slane %v5395, 4
  %v5397 = vadd.f32 %v5395, %v5396
  %v5398 = vrot.slane %v5397, 2
  %v5399 = vadd.f32 %v5397, %v5398
  %v5400 = vrot.slane %v5399, 1
  %v5401 = vadd.f32 %v5399, %v5400
  %vm5402 = vcmask 523264
  %v5403 = vsel %vm5402, %v5374, 0.0
  %v5404 = vsel %vm5402, %v5376, 0.0
  %v5405 = vadd.f32 %v5403, %v5404
  %v5406 = vsel %vm5402, %v5378, 0.0
  %v5407 = vadd.f32 %v5405, %v5406
  %v5408 = vsel %vm5402, %v5380, 0.0
  %v5409 = vadd.f32 %v5407, %v5408
  %v5410 = vsel %vm5402, %v5382, 0.0
  %v5411 = vadd.f32 %v5409, %v5410
  %v5412 = vsel %vm5402, %v5384, 0.0
  %v5413 = vadd.f32 %v5411, %v5412
  %v5414 = vsel %vm5402, %v5386, 0.0
  %v5415 = vadd.f32 %v5413, %v5414
  %v5416 = vsel %vm5402, %v5388, 0.0
  %v5417 = vadd.f32 %v5415, %v5416
  %v5418 = vrot.slane %v5417, 4
  %v5419 = vadd.f32 %v5417, %v5418
  %v5420 = vrot.slane %v5419, 2
  %v5421 = vadd.f32 %v5419, %v5420
  %v5422 = vrot.slane %v5421, 1
  %v5423 = vadd.f32 %v5421, %v5422
  %v5424 = vld [vmem:[%s11] sm:$0xff]
  %v5425 = vld [vmem:[%s11 + $0x8] sm:$0xff]
  %v5426 = vld [vmem:[%s11 + $0x10] sm:$0xff]
  %v5427 = vld [vmem:[%s11 + $0x18] sm:$0xff]
  %v5428 = vld [vmem:[%s11 + $0x20] sm:$0xff]
  %v5429 = vld [vmem:[%s11 + $0x28] sm:$0xff]
  %v5430 = vld [vmem:[%s11 + $0x30] sm:$0xff]
  %v5431 = vld [vmem:[%s11 + $0x38] sm:$0xff]
  %v5432 = vld [vmem:[%s11 + $0x40] sm:$0xff]
  %v5433 = vld [vmem:[%s11 + $0x48] sm:$0xff]
  %v5434 = vld [vmem:[%s11 + $0x50] sm:$0xff]
  %v5435 = vld [vmem:[%s11 + $0x58] sm:$0xff]
  %v5436 = vld [vmem:[%s11 + $0x60] sm:$0xff]
  %v5437 = vld [vmem:[%s11 + $0x68] sm:$0xff]
  %v5438 = vld [vmem:[%s11 + $0x70] sm:$0xff]
  %v5439 = vld [vmem:[%s11 + $0x78] sm:$0xff]
  %v5440 = vld [vmem:[%s11 + $0x80] sm:$0xff]
  %v5441 = vld [vmem:[%s11 + $0x88] sm:$0xff]
  %v5442 = vld [vmem:[%s11 + $0x90] sm:$0xff]
  %v5443 = vld [vmem:[%s11 + $0x98] sm:$0xff]
  %v5444 = vld [vmem:[%s11 + $0xa0] sm:$0xff]
  %v5445 = vld [vmem:[%s11 + $0xa8] sm:$0xff]
  %v5446 = vld [vmem:[%s11 + $0xb0] sm:$0xff]
  %v5447 = vld [vmem:[%s11 + $0xb8] sm:$0xff]
  %v5449 = vsel %vm5402, %v5423, 0
  %5451 = vmatprep.subr.mxu0 0.0
  %5452 = vmatpush1.msra.mxu0 %v5424
  %5453 = vmatprep.subr.mxu0 0.0
  %5454 = vmatpush1.msra.mxu0 %v5425
  %5455 = vmatprep.subr.mxu0 0.0
  %5456 = vmatpush1.msra.mxu0 %v5426
  %5457 = vmatprep.subr.mxu0 0.0
  %5458 = vmatpush1.msra.mxu0 %v5427
  %5459 = vmatprep.subr.mxu0 0.0
  %5460 = vmatpush1.msra.mxu0 %v5428
  %5461 = vmatprep.subr.mxu0 0.0
  %5462 = vmatpush1.msra.mxu0 %v5429
  %5463 = vmatprep.subr.mxu0 0.0
  %5464 = vmatpush1.msra.mxu0 %v5430
  %5465 = vmatprep.subr.mxu0 0.0
  %5466 = vmatpush1.msra.mxu0 %v5431
  %5467 = vmatprep.subr.mxu0 0.0
  %5468 = vmatpush1.msra.mxu0 %v5432
  %5469 = vmatprep.subr.mxu0 0.0
  %5470 = vmatpush1.msra.mxu0 %v5433
  %5471 = vmatprep.subr.mxu0 0.0
  %5472 = vmatpush1.msra.mxu0 %v5434
  %5473 = vmatprep.subr.mxu0 0.0
  %5474 = vmatpush1.msra.mxu0 %v5435
  %5475 = vmatprep.subr.mxu0 0.0
  %5476 = vmatpush1.msra.mxu0 %v5436
  %5477 = vmatprep.subr.mxu0 0.0
  %5478 = vmatpush1.msra.mxu0 %v5437
  %5479 = vmatprep.subr.mxu0 0.0
  %5480 = vmatpush1.msra.mxu0 %v5438
  %5481 = vmatprep.subr.mxu0 0.0
  %5482 = vmatpush1.msra.mxu0 %v5439
  %5483 = vmatprep.subr.mxu0 0.0
  %5484 = vmatpush1.msra.mxu0 %v5440
  %5485 = vmatprep.subr.mxu0 0.0
  %5486 = vmatpush1.msra.mxu0 %v5441
  %5487 = vmatprep.subr.mxu0 0.0
  %5488 = vmatpush1.msra.mxu0 %v5442
  %5489 = vmatprep.subr.mxu0 0.0
  %5490 = vmatpush1.msra.mxu0 %v5443
  %5491 = vmatprep.subr.mxu0 0.0
  %5492 = vmatpush1.msra.mxu0 %v5444
  %5493 = vmatprep.subr.mxu0 0.0
  %5494 = vmatpush1.msra.mxu0 %v5445
  %5495 = vmatprep.subr.mxu0 0.0
  %5496 = vmatpush1.msra.mxu0 %v5446
  %5497 = vmatprep.subr.mxu0 0.0
  %5498 = vmatpush1.msra.mxu0 %v5447
  %5499 = vmatprep.subr.mxu0 0.0
  %5500 = vmatpush1.msra.mxu0 0.0
  %5501 = vmatprep.subr.mxu0 0.0
  %5502 = vmatpush1.msra.mxu0 0.0
  %5503 = vmatprep.subr.mxu0 0.0
  %5504 = vmatpush1.msra.mxu0 0.0
  %5505 = vmatprep.subr.mxu0 0.0
  %5506 = vmatpush1.msra.mxu0 0.0
  %5507 = vmatprep.subr.mxu0 0.0
  %5508 = vmatpush1.msra.mxu0 0.0
  %5509 = vmatprep.subr.mxu0 0.0
  %5510 = vmatpush1.msra.mxu0 0.0
  %5511 = vmatprep.subr.mxu0 0.0
  %5512 = vmatpush1.msra.mxu0 0.0
  %5513 = vmatprep.subr.mxu0 0.0
  %5514 = vmatpush1.msra.mxu0 0.0
  %5515 = vmatprep.mubr.f32.mxu0 %v5449
  %5516 = vmatmul.mubr.f32.gmra.mrb[0].mxu0 %v5401
  %v5517 = vpop.f32.mrb[0].mxu0
  %v5518 = vadd.f32 0.0, %v5517
  %v5519 = vpop.f32.mrb[0].mxu0
  %5520 = vdwg.mxu0
  %v5521 = vld [vmem:[%s12] sm:$0xff]
  %v5522 = vld [vmem:[%s12 + $0x8] sm:$0xff]
  %v5523 = vld [vmem:[%s12 + $0x10] sm:$0xff]
  %v5524 = vld [vmem:[%s12 + $0x18] sm:$0xff]
  %v5525 = vld [vmem:[%s12 + $0x20] sm:$0xff]
  %v5526 = vld [vmem:[%s12 + $0x28] sm:$0xff]
  %v5528 = vsel %vm3538, %v5518, 0
  %5530 = vmatprep.subr.mxu0 %v5522
  %5531 = vmatpush1.msra.mxu0 %v5521
  %5532 = vmatprep.subr.mxu0 %v5524
  %5533 = vmatpush1.msra.mxu0 %v5523
  %5534 = vmatprep.subr.mxu0 %v5526
  %5535 = vmatpush1.msra.mxu0 %v5525
  %5536 = vmatprep.subr.mxu0 0.0
  %5537 = vmatpush1.msra.mxu0 0.0
  %5538 = vmatprep.subr.mxu0 0.0
  %5539 = vmatpush1.msra.mxu0 0.0
  %5540 = vmatprep.subr.mxu0 0.0
  %5541 = vmatpush1.msra.mxu0 0.0
  %5542 = vmatprep.subr.mxu0 0.0
  %5543 = vmatpush1.msra.mxu0 0.0
  %5544 = vmatprep.subr.mxu0 0.0
  %5545 = vmatpush1.msra.mxu0 0.0
  %5546 = vmatprep.subr.mxu0 0.0
  %5547 = vmatpush1.msra.mxu0 0.0
  %5548 = vmatprep.subr.mxu0 0.0
  %5549 = vmatpush1.msra.mxu0 0.0
  %5550 = vmatprep.subr.mxu0 0.0
  %5551 = vmatpush1.msra.mxu0 0.0
  %5552 = vmatprep.subr.mxu0 0.0
  %5553 = vmatpush1.msra.mxu0 0.0
  %5554 = vmatprep.subr.mxu0 0.0
  %5555 = vmatpush1.msra.mxu0 0.0
  %5556 = vmatprep.subr.mxu0 0.0
  %5557 = vmatpush1.msra.mxu0 0.0
  %5558 = vmatprep.subr.mxu0 0.0
  %5559 = vmatpush1.msra.mxu0 0.0
  %5560 = vmatprep.subr.mxu0 0.0
  %5561 = vmatpush1.msra.mxu0 0.0
  %5562 = vmatprep.subr.mxu0 0.0
  %5563 = vmatpush1.msra.mxu0 0.0
  %5564 = vmatprep.subr.mxu0 0.0
  %5565 = vmatpush1.msra.mxu0 0.0
  %5566 = vmatprep.subr.mxu0 0.0
  %5567 = vmatpush1.msra.mxu0 0.0
  %5568 = vmatprep.subr.mxu0 0.0
  %5569 = vmatpush1.msra.mxu0 0.0
  %5570 = vmatprep.subr.mxu0 0.0
  %5571 = vmatpush1.msra.mxu0 0.0
  %5572 = vmatprep.subr.mxu0 0.0
  %5573 = vmatpush1.msra.mxu0 0.0
  %5574 = vmatprep.subr.mxu0 0.0
  %5575 = vmatpush1.msra.mxu0 0.0
  %5576 = vmatprep.subr.mxu0 0.0
  %5577 = vmatpush1.msra.mxu0 0.0
  %5578 = vmatprep.subr.mxu0 0.0
  %5579 = vmatpush1.msra.mxu0 0.0
  %5580 = vmatprep.subr.mxu0 0.0
  %5581 = vmatpush1.msra.mxu0 0.0
  %5582 = vmatprep.subr.mxu0 0.0
  %5583 = vmatpush1.msra.mxu0 0.0
  %5584 = vmatprep.subr.mxu0 0.0
  %5585 = vmatpush1.msra.mxu0 0.0
  %5586 = vmatprep.subr.mxu0 0.0
  %5587 = vmatpush1.msra.mxu0 0.0
  %5588 = vmatprep.subr.mxu0 0.0
  %5589 = vmatpush1.msra.mxu0 0.0
  %5590 = vmatprep.subr.mxu0 0.0
  %5591 = vmatpush1.msra.mxu0 0.0
  %5592 = vmatprep.subr.mxu0 0.0
  %5593 = vmatpush1.msra.mxu0 0.0
  %5594 = vmatprep.mubr.f32.mxu0 0.0
  %5595 = vmatmul.mubr.f32.gmra.mrb[0].mxu0 %v5528
  %v5596 = vpop.f32.mrb[0].mxu0
  %v5597 = vadd.f32 0.0, %v5596
  %v5598 = vpop.f32.mrb[0].mxu0
  %v5599 = vadd.f32 0.0, %v5598
  %5600 = vdwg.mxu0
  %v5601 = vlaneseq
  %v5602 = vshrl.u32 %v5601, 7
  %v5603 = vsub.s32 0, %v5602
  %v5604 = vrot.slane %v5597, %v5603
  %v5605 = vlaneseq
  %v5606 = vshrl.u32 %v5605, 7
  %v5607 = vsub.s32 0, %v5606
  %v5608 = vrot.slane %v5599, %v5607
  %v5609 = vsub.f32 %v5373, %v5604
  %v5610 = vsub.f32 %v5374, %v5608
  %v5611 = vsub.f32 %v5375, %v5604
  %v5612 = vsub.f32 %v5376, %v5608
  %v5613 = vsub.f32 %v5377, %v5604
  %v5614 = vsub.f32 %v5378, %v5608
  %v5615 = vsub.f32 %v5379, %v5604
  %v5616 = vsub.f32 %v5380, %v5608
  %v5617 = vsub.f32 %v5381, %v5604
  %v5618 = vsub.f32 %v5382, %v5608
  %v5619 = vsub.f32 %v5383, %v5604
  %v5620 = vsub.f32 %v5384, %v5608
  %v5621 = vsub.f32 %v5385, %v5604
  %v5622 = vsub.f32 %v5386, %v5608
  %v5623 = vsub.f32 %v5387, %v5604
  %v5624 = vsub.f32 %v5388, %v5608
  %v5625 = vmul.f32 %v5609, %v5609
  %v5626 = vmul.f32 %v5610, %v5610
  %v5627 = vmul.f32 %v5611, %v5611
  %v5628 = vmul.f32 %v5612, %v5612
  %v5629 = vmul.f32 %v5613, %v5613
  %v5630 = vmul.f32 %v5614, %v5614
  %v5631 = vmul.f32 %v5615, %v5615
  %v5632 = vmul.f32 %v5616, %v5616
  %v5633 = vmul.f32 %v5617, %v5617
  %v5634 = vmul.f32 %v5618, %v5618
  %v5635 = vmul.f32 %v5619, %v5619
  %v5636 = vmul.f32 %v5620, %v5620
  %v5637 = vmul.f32 %v5621, %v5621
  %v5638 = vmul.f32 %v5622, %v5622
  %v5639 = vmul.f32 %v5623, %v5623
  %v5640 = vmul.f32 %v5624, %v5624
  %v5641 = vadd.f32 %v5625, %v5627
  %v5642 = vadd.f32 %v5641, %v5629
  %v5643 = vadd.f32 %v5642, %v5631
  %v5644 = vadd.f32 %v5643, %v5633
  %v5645 = vadd.f32 %v5644, %v5635
  %v5646 = vadd.f32 %v5645, %v5637
  %v5647 = vadd.f32 %v5646, %v5639
  %v5648 = vrot.slane %v5647, 4
  %v5649 = vadd.f32 %v5647, %v5648
  %v5650 = vrot.slane %v5649, 2
  %v5651 = vadd.f32 %v5649, %v5650
  %v5652 = vrot.slane %v5651, 1
  %v5653 = vadd.f32 %v5651, %v5652
  %v5654 = vsel %vm5402, %v5626, 0.0
  %v5655 = vsel %vm5402, %v5628, 0.0
  %v5656 = vadd.f32 %v5654, %v5655
  %v5657 = vsel %vm5402, %v5630, 0.0
  %v5658 = vadd.f32 %v5656, %v5657
  %v5659 = vsel %vm5402, %v5632, 0.0
  %v5660 = vadd.f32 %v5658, %v5659
  %v5661 = vsel %vm5402, %v5634, 0.0
  %v5662 = vadd.f32 %v5660, %v5661
  %v5663 = vsel %vm5402, %v5636, 0.0
  %v5664 = vadd.f32 %v5662, %v5663
  %v5665 = vsel %vm5402, %v5638, 0.0
  %v5666 = vadd.f32 %v5664, %v5665
  %v5667 = vsel %vm5402, %v5640, 0.0
  %v5668 = vadd.f32 %v5666, %v5667
  %v5669 = vrot.slane %v5668, 4
  %v5670 = vadd.f32 %v5668, %v5669
  %v5671 = vrot.slane %v5670, 2
  %v5672 = vadd.f32 %v5670, %v5671
  %v5673 = vrot.slane %v5672, 1
  %v5674 = vadd.f32 %v5672, %v5673
  %v5676 = vsel %vm5402, %v5674, 0
  %5678 = vmatprep.subr.mxu0 0.0
  %5679 = vmatpush1.msra.mxu0 %v5424
  %5680 = vmatprep.subr.mxu0 0.0
  %5681 = vmatpush1.msra.mxu0 %v5425
  %5682 = vmatprep.subr.mxu0 0.0
  %5683 = vmatpush1.msra.mxu0 %v5426
  %5684 = vmatprep.subr.mxu0 0.0
  %5685 = vmatpush1.msra.mxu0 %v5427
  %5686 = vmatprep.subr.mxu0 0.0
  %5687 = vmatpush1.msra.mxu0 %v5428
  %5688 = vmatprep.subr.mxu0 0.0
  %5689 = vmatpush1.msra.mxu0 %v5429
  %5690 = vmatprep.subr.mxu0 0.0
  %5691 = vmatpush1.msra.mxu0 %v5430
  %5692 = vmatprep.subr.mxu0 0.0
  %5693 = vmatpush1.msra.mxu0 %v5431
  %5694 = vmatprep.subr.mxu0 0.0
  %5695 = vmatpush1.msra.mxu0 %v5432
  %5696 = vmatprep.subr.mxu0 0.0
  %5697 = vmatpush1.msra.mxu0 %v5433
  %5698 = vmatprep.subr.mxu0 0.0
  %5699 = vmatpush1.msra.mxu0 %v5434
  %5700 = vmatprep.subr.mxu0 0.0
  %5701 = vmatpush1.msra.mxu0 %v5435
  %5702 = vmatprep.subr.mxu0 0.0
  %5703 = vmatpush1.msra.mxu0 %v5436
  %5704 = vmatprep.subr.mxu0 0.0
  %5705 = vmatpush1.msra.mxu0 %v5437
  %5706 = vmatprep.subr.mxu0 0.0
  %5707 = vmatpush1.msra.mxu0 %v5438
  %5708 = vmatprep.subr.mxu0 0.0
  %5709 = vmatpush1.msra.mxu0 %v5439
  %5710 = vmatprep.subr.mxu0 0.0
  %5711 = vmatpush1.msra.mxu0 %v5440
  %5712 = vmatprep.subr.mxu0 0.0
  %5713 = vmatpush1.msra.mxu0 %v5441
  %5714 = vmatprep.subr.mxu0 0.0
  %5715 = vmatpush1.msra.mxu0 %v5442
  %5716 = vmatprep.subr.mxu0 0.0
  %5717 = vmatpush1.msra.mxu0 %v5443
  %5718 = vmatprep.subr.mxu0 0.0
  %5719 = vmatpush1.msra.mxu0 %v5444
  %5720 = vmatprep.subr.mxu0 0.0
  %5721 = vmatpush1.msra.mxu0 %v5445
  %5722 = vmatprep.subr.mxu0 0.0
  %5723 = vmatpush1.msra.mxu0 %v5446
  %5724 = vmatprep.subr.mxu0 0.0
  %5725 = vmatpush1.msra.mxu0 %v5447
  %5726 = vmatprep.subr.mxu0 0.0
  %5727 = vmatpush1.msra.mxu0 0.0
  %5728 = vmatprep.subr.mxu0 0.0
  %5729 = vmatpush1.msra.mxu0 0.0
  %5730 = vmatprep.subr.mxu0 0.0
  %5731 = vmatpush1.msra.mxu0 0.0
  %5732 = vmatprep.subr.mxu0 0.0
  %5733 = vmatpush1.msra.mxu0 0.0
  %5734 = vmatprep.subr.mxu0 0.0
  %5735 = vmatpush1.msra.mxu0 0.0
  %5736 = vmatprep.subr.mxu0 0.0
  %5737 = vmatpush1.msra.mxu0 0.0
  %5738 = vmatprep.subr.mxu0 0.0
  %5739 = vmatpush1.msra.mxu0 0.0
  %5740 = vmatprep.subr.mxu0 0.0
  %5741 = vmatpush1.msra.mxu0 0.0
  %5742 = vmatprep.mubr.f32.mxu0 %v5676
  %5743 = vmatmul.mubr.f32.gmra.mrb[0].mxu0 %v5653
  %v5744 = vpop.f32.mrb[0].mxu0
  %v5745 = vadd.f32 0.0, %v5744
  %v5746 = vpop.f32.mrb[0].mxu0
  %5747 = vdwg.mxu0
  %v5749 = vsel %vm3538, %v5745, 0
  %5751 = vmatprep.subr.mxu0 %v5522
  %5752 = vmatpush1.msra.mxu0 %v5521
  %5753 = vmatprep.subr.mxu0 %v5524
  %5754 = vmatpush1.msra.mxu0 %v5523
  %5755 = vmatprep.subr.mxu0 %v5526
  %5756 = vmatpush1.msra.mxu0 %v5525
  %5757 = vmatprep.subr.mxu0 0.0
  %5758 = vmatpush1.msra.mxu0 0.0
  %5759 = vmatprep.subr.mxu0 0.0
  %5760 = vmatpush1.msra.mxu0 0.0
  %5761 = vmatprep.subr.mxu0 0.0
  %5762 = vmatpush1.msra.mxu0 0.0
  %5763 = vmatprep.subr.mxu0 0.0
  %5764 = vmatpush1.msra.mxu0 0.0
  %5765 = vmatprep.subr.mxu0 0.0
  %5766 = vmatpush1.msra.mxu0 0.0
  %5767 = vmatprep.subr.mxu0 0.0
  %5768 = vmatpush1.msra.mxu0 0.0
  %5769 = vmatprep.subr.mxu0 0.0
  %5770 = vmatpush1.msra.mxu0 0.0
  %5771 = vmatprep.subr.mxu0 0.0
  %5772 = vmatpush1.msra.mxu0 0.0
  %5773 = vmatprep.subr.mxu0 0.0
  %5774 = vmatpush1.msra.mxu0 0.0
  %5775 = vmatprep.subr.mxu0 0.0
  %5776 = vmatpush1.msra.mxu0 0.0
  %5777 = vmatprep.subr.mxu0 0.0
  %5778 = vmatpush1.msra.mxu0 0.0
  %5779 = vmatprep.subr.mxu0 0.0
  %5780 = vmatpush1.msra.mxu0 0.0
  %5781 = vmatprep.subr.mxu0 0.0
  %5782 = vmatpush1.msra.mxu0 0.0
  %5783 = vmatprep.subr.mxu0 0.0
  %5784 = vmatpush1.msra.mxu0 0.0
  %5785 = vmatprep.subr.mxu0 0.0
  %5786 = vmatpush1.msra.mxu0 0.0
  %5787 = vmatprep.subr.mxu0 0.0
  %5788 = vmatpush1.msra.mxu0 0.0
  %5789 = vmatprep.subr.mxu0 0.0
  %5790 = vmatpush1.msra.mxu0 0.0
  %5791 = vmatprep.subr.mxu0 0.0
  %5792 = vmatpush1.msra.mxu0 0.0
  %5793 = vmatprep.subr.mxu0 0.0
  %5794 = vmatpush1.msra.mxu0 0.0
  %5795 = vmatprep.subr.mxu0 0.0
  %5796 = vmatpush1.msra.mxu0 0.0
  %5797 = vmatprep.subr.mxu0 0.0
  %5798 = vmatpush1.msra.mxu0 0.0
  %5799 = vmatprep.subr.mxu0 0.0
  %5800 = vmatpush1.msra.mxu0 0.0
  %5801 = vmatprep.subr.mxu0 0.0
  %5802 = vmatpush1.msra.mxu0 0.0
  %5803 = vmatprep.subr.mxu0 0.0
  %5804 = vmatpush1.msra.mxu0 0.0
  %5805 = vmatprep.subr.mxu0 0.0
  %5806 = vmatpush1.msra.mxu0 0.0
  %5807 = vmatprep.subr.mxu0 0.0
  %5808 = vmatpush1.msra.mxu0 0.0
  %5809 = vmatprep.subr.mxu0 0.0
  %5810 = vmatpush1.msra.mxu0 0.0
  %5811 = vmatprep.subr.mxu0 0.0
  %5812 = vmatpush1.msra.mxu0 0.0
  %5813 = vmatprep.subr.mxu0 0.0
  %5814 = vmatpush1.msra.mxu0 0.0
  %5815 = vmatprep.mubr.f32.mxu0 0.0
  %5816 = vmatmul.mubr.f32.gmra.mrb[0].mxu0 %v5749
  %v5817 = vpop.f32.mrb[0].mxu0
  %v5818 = vadd.f32 1e-05, %v5817
  %v5819 = vpop.f32.mrb[0].mxu0
  %v5820 = vadd.f32 1e-05, %v5819
  %5821 = vdwg.mxu0
  %v5822 = vrsqrt.pop %v5818
  %v5823 = vrsqrt.pop %v5820
  %v5824 = vlaneseq
  %v5825 = vshrl.u32 %v5824, 7
  %v5826 = vsub.s32 1, %v5825
  %v5827 = vrot.slane %v5337, %v5826
  %v5828 = vlaneseq
  %v5829 = vshrl.u32 %v5828, 7
  %v5830 = vsub.s32 5, %v5829
  %v5831 = vrot.slane %v5337, %v5830
  %v5834 = vmul.f32 %v5822, %v5827
  %v5835 = vmul.f32 %v5823, %v5831
  %v5836 = vlaneseq
  %v5837 = vshrl.u32 %v5836, 7
  %v5838 = vsub.s32 0, %v5837
  %v5839 = vrot.slane %v5834, %v5838
  %v5840 = vlaneseq
  %v5841 = vshrl.u32 %v5840, 7
  %v5842 = vsub.s32 0, %v5841
  %v5843 = vrot.slane %v5835, %v5842
  %v5844 = vmul.f32 %v5609, %v5839
  %v5845 = vmul.f32 %v5610, %v5843
  %v5846 = vmul.f32 %v5611, %v5839
  %v5847 = vmul.f32 %v5612, %v5843
  %v5848 = vmul.f32 %v5613, %v5839
  %v5849 = vmul.f32 %v5614, %v5843
  %v5850 = vmul.f32 %v5615, %v5839
  %v5851 = vmul.f32 %v5616, %v5843
  %v5852 = vmul.f32 %v5617, %v5839
  %v5853 = vmul.f32 %v5618, %v5843
  %v5854 = vmul.f32 %v5619, %v5839
  %v5855 = vmul.f32 %v5620, %v5843
  %v5856 = vmul.f32 %v5621, %v5839
  %v5857 = vmul.f32 %v5622, %v5843
  %v5858 = vmul.f32 %v5623, %v5839
  %v5859 = vmul.f32 %v5624, %v5843
  %v5860 = vlaneseq
  %v5861 = vshrl.u32 %v5860, 7
  %v5862 = vsub.s32 2, %v5861
  %v5863 = vrot.slane %v5337, %v5862
  %v5864 = vlaneseq
  %v5865 = vshrl.u32 %v5864, 7
  %v5866 = vsub.s32 6, %v5865
  %v5867 = vrot.slane %v5337, %v5866
  %v5870 = vlaneseq
  %v5871 = vshrl.u32 %v5870, 7
  %v5872 = vsub.s32 2, %v5871
  %v5873 = vrot.slane %v5863, %v5872
  %v5874 = vlaneseq
  %v5875 = vshrl.u32 %v5874, 7
  %v5876 = vsub.s32 2, %v5875
  %v5877 = vrot.slane %v5867, %v5876
  %v5878 = vadd.f32 %v5844, %v5873
  %v5879 = vadd.f32 %v5845, %v5877
  %v5880 = vadd.f32 %v5846, %v5873
  %v5881 = vadd.f32 %v5847, %v5877
  %v5882 = vadd.f32 %v5848, %v5873
  %v5883 = vadd.f32 %v5849, %v5877
  %v5884 = vadd.f32 %v5850, %v5873
  %v5885 = vadd.f32 %v5851, %v5877
  %v5886 = vadd.f32 %v5852, %v5873
  %v5887 = vadd.f32 %v5853, %v5877
  %v5888 = vadd.f32 %v5854, %v5873
  %v5889 = vadd.f32 %v5855, %v5877
  %v5890 = vadd.f32 %v5856, %v5873
  %v5891 = vadd.f32 %v5857, %v5877
  %v5892 = vadd.f32 %v5858, %v5873
  %v5893 = vadd.f32 %v5859, %v5877
  %s5894 = smul.u32 %s4294, 24
  %s5895 = smul.u32 %s5894, 1
  %s5896 = sshll.u32 %s5895, 4
  %5897 = dma.done %s1263, %s5896
  %v5898 = vpack.c.bf16 %v5880, %v5878
  %v5899 = vpack.c.bf16 %v5881, %v5879
  %v5900 = vpack.c.bf16 %v5884, %v5882
  %v5901 = vpack.c.bf16 %v5885, %v5883
  %v5902 = vpack.c.bf16 %v5888, %v5886
  %v5903 = vpack.c.bf16 %v5889, %v5887
  %v5904 = vpack.c.bf16 %v5892, %v5890
  %v5905 = vpack.c.bf16 %v5893, %v5891
  %v5906 = vld [vmem:[%s13] sm:$0xf]
  %v5907 = vld [vmem:[%s13 + $0x4] sm:$0xf]
  %v5908 = vld [vmem:[%s13 + $0x8] sm:$0xf]
  %v5909 = vld [vmem:[%s13 + $0xc] sm:$0xf]
  %v5910 = vld [vmem:[%s13 + $0x10] sm:$0xf]
  %v5911 = vld [vmem:[%s13 + $0x14] sm:$0xf]
  %v5912 = vld [vmem:[%s13 + $0x18] sm:$0xf]
  %v5913 = vld [vmem:[%s13 + $0x1c] sm:$0xf]
  %v5914 = vld [vmem:[%s13 + $0x20] sm:$0xf]
  %v5915 = vld [vmem:[%s13 + $0x24] sm:$0xf]
  %v5916 = vld [vmem:[%s13 + $0x28] sm:$0xf]
  %v5917 = vld [vmem:[%s13 + $0x2c] sm:$0xf]
  %v5930 = vunpack.c.l.b16 %v5906
  %v5931 = vunpack.c.l.b16 %v5907
  %v5932 = vunpack.c.l.b16 %v5908
  %v5933 = vunpack.c.l.b16 %v5909
  %v5934 = vunpack.c.l.b16 %v5910
  %v5935 = vunpack.c.l.b16 %v5911
  %v5936 = vunpack.c.l.b16 %v5912
  %v5937 = vunpack.c.l.b16 %v5913
  %v5938 = vunpack.c.l.b16 %v5914
  %v5939 = vunpack.c.l.b16 %v5915
  %v5940 = vunpack.c.l.b16 %v5916
  %v5941 = vunpack.c.l.b16 %v5917
  %v5942 = vpack.c.b16 %v5931, %v5930
  %v5943 = vpack.c.b16 %v5933, %v5932
  %v5944 = vpack.c.b16 %v5935, %v5934
  %v5945 = vpack.c.b16 %v5937, %v5936
  %v5946 = vpack.c.b16 %v5939, %v5938
  %v5947 = vpack.c.b16 %v5941, %v5940
  %v5949 = vsel %vm5402, %v5942, 0
  %v5952 = vsel %vm5402, %v5943, 0
  %v5955 = vsel %vm5402, %v5944, 0
  %v5958 = vsel %vm5402, %v5945, 0
  %v5961 = vsel %vm5402, %v5946, 0
  %v5964 = vsel %vm5402, %v5947, 0
  %5966 = vmatprep.subr.bf16.mxu0 %v5899
  %5967 = vmatpush1.bf16.msra.mxu0 %v5898
  %5968 = vmatprep.subr.bf16.mxu0 %v5901
  %5969 = vmatpush1.bf16.msra.mxu0 %v5900
  %5970 = vmatprep.subr.bf16.mxu0 %v5903
  %5971 = vmatpush1.bf16.msra.mxu0 %v5902
  %5972 = vmatprep.subr.bf16.mxu0 %v5905
  %5973 = vmatpush1.bf16.msra.mxu0 %v5904
  %5974 = vmatprep.subr.bf16.mxu0 0
  %5975 = vmatpush1.bf16.msra.mxu0 0
  %5976 = vmatprep.subr.bf16.mxu0 0
  %5977 = vmatpush1.bf16.msra.mxu0 0
  %5978 = vmatprep.subr.bf16.mxu0 0
  %5979 = vmatpush1.bf16.msra.mxu0 0
  %5980 = vmatprep.subr.bf16.mxu0 0
  %5981 = vmatpush1.bf16.msra.mxu0 0
  %5982 = vmatprep.subr.bf16.mxu0 0
  %5983 = vmatpush1.bf16.msra.mxu0 0
  %5984 = vmatprep.subr.bf16.mxu0 0
  %5985 = vmatpush1.bf16.msra.mxu0 0
  %5986 = vmatprep.subr.bf16.mxu0 0
  %5987 = vmatpush1.bf16.msra.mxu0 0
  %5988 = vmatprep.subr.bf16.mxu0 0
  %5989 = vmatpush1.bf16.msra.mxu0 0
  %5990 = vmatprep.subr.bf16.mxu0 0
  %5991 = vmatpush1.bf16.msra.mxu0 0
  %5992 = vmatprep.subr.bf16.mxu0 0
  %5993 = vmatpush1.bf16.msra.mxu0 0
  %5994 = vmatprep.subr.bf16.mxu0 0
  %5995 = vmatpush1.bf16.msra.mxu0 0
  %5996 = vmatprep.subr.bf16.mxu0 0
  %5997 = vmatpush1.bf16.msra.mxu0 0
  %5998 = vmatprep.mubr.bf16.mxu0 0
  %5999 = vmatmul.mubr.bf16.gmra.mrb[0].mxu0 %v5949
  %v6000 = vpop.f32.mrb[0].mxu0
  %v6001 = vadd.f32 0.0, %v6000
  %v6002 = vpop.f32.mrb[0].mxu0
  %v6003 = vadd.f32 0.0, %v6002
  %v6004 = vpop.f32.mrb[0].mxu0
  %v6005 = vadd.f32 0.0, %v6004
  %v6006 = vpop.f32.mrb[0].mxu0
  %v6007 = vadd.f32 0.0, %v6006
  %6008 = vmatprep.mubr.bf16.mxu0 0
  %6009 = vmatmul.mubr.bf16.gmra.mrb[0].mxu0 %v5952
  %v6010 = vpop.f32.mrb[0].mxu0
  %v6011 = vadd.f32 0.0, %v6010
  %v6012 = vpop.f32.mrb[0].mxu0
  %v6013 = vadd.f32 0.0, %v6012
  %v6014 = vpop.f32.mrb[0].mxu0
  %v6015 = vadd.f32 0.0, %v6014
  %v6016 = vpop.f32.mrb[0].mxu0
  %v6017 = vadd.f32 0.0, %v6016
  %6018 = vmatprep.mubr.bf16.mxu0 0
  %6019 = vmatmul.mubr.bf16.gmra.mrb[0].mxu0 %v5955
  %v6020 = vpop.f32.mrb[0].mxu0
  %v6021 = vadd.f32 0.0, %v6020
  %v6022 = vpop.f32.mrb[0].mxu0
  %v6023 = vadd.f32 0.0, %v6022
  %v6024 = vpop.f32.mrb[0].mxu0
  %v6025 = vadd.f32 0.0, %v6024
  %v6026 = vpop.f32.mrb[0].mxu0
  %v6027 = vadd.f32 0.0, %v6026
  %6028 = vmatprep.mubr.bf16.mxu0 0
  %6029 = vmatmul.mubr.bf16.gmra.mrb[0].mxu0 %v5958
  %v6030 = vpop.f32.mrb[0].mxu0
  %v6031 = vadd.f32 0.0, %v6030
  %v6032 = vpop.f32.mrb[0].mxu0
  %v6033 = vadd.f32 0.0, %v6032
  %v6034 = vpop.f32.mrb[0].mxu0
  %v6035 = vadd.f32 0.0, %v6034
  %v6036 = vpop.f32.mrb[0].mxu0
  %v6037 = vadd.f32 0.0, %v6036
  %6038 = vmatprep.mubr.bf16.mxu0 0
  %6039 = vmatmul.mubr.bf16.gmra.mrb[0].mxu0 %v5961
  %v6040 = vpop.f32.mrb[0].mxu0
  %v6041 = vadd.f32 0.0, %v6040
  %v6042 = vpop.f32.mrb[0].mxu0
  %v6043 = vadd.f32 0.0, %v6042
  %v6044 = vpop.f32.mrb[0].mxu0
  %v6045 = vadd.f32 0.0, %v6044
  %v6046 = vpop.f32.mrb[0].mxu0
  %v6047 = vadd.f32 0.0, %v6046
  %6048 = vmatprep.mubr.bf16.mxu0 0
  %6049 = vmatmul.mubr.bf16.gmra.mrb[0].mxu0 %v5964
  %v6050 = vpop.f32.mrb[0].mxu0
  %v6051 = vadd.f32 0.0, %v6050
  %v6052 = vpop.f32.mrb[0].mxu0
  %v6053 = vadd.f32 0.0, %v6052
  %v6054 = vpop.f32.mrb[0].mxu0
  %v6055 = vadd.f32 0.0, %v6054
  %v6056 = vpop.f32.mrb[0].mxu0
  %v6057 = vadd.f32 0.0, %v6056
  %6058 = vdwg.mxu0
  %v6059 = vpack.c.bf16 %v6005, %v6001
  %v6060 = vpack.c.bf16 %v6007, %v6003
  %v6061 = vpack.c.bf16 %v6015, %v6011
  %v6062 = vpack.c.bf16 %v6017, %v6013
  %v6063 = vld [vmem:[#allocation3] sm:$0xff]
  %v6064 = vld [vmem:[#allocation3 + $0x8] sm:$0xff]
  %v6065 = vld [vmem:[#allocation3 + $0x10] sm:$0xff]
  %v6066 = vld [vmem:[#allocation3 + $0x18] sm:$0xff]
  %v6067 = vld [vmem:[#allocation3 + $0x20] sm:$0xff]
  %v6068 = vld [vmem:[#allocation3 + $0x28] sm:$0xff]
  %v6069 = vld [vmem:[#allocation3 + $0x30] sm:$0xff]
  %v6070 = vld [vmem:[#allocation3 + $0x38] sm:$0xff]
  %v6071 = vld [vmem:[#allocation3 + $0x40] sm:$0xff]
  %v6072 = vld [vmem:[#allocation3 + $0x48] sm:$0xff]
  %v6073 = vld [vmem:[#allocation3 + $0x50] sm:$0xff]
  %v6074 = vld [vmem:[#allocation3 + $0x58] sm:$0xff]
  %v6075 = vpack.c.bf16 %v6025, %v6021
  %v6076 = vpack.c.bf16 %v6027, %v6023
  %v6077 = vpack.c.bf16 %v6035, %v6031
  %v6078 = vpack.c.bf16 %v6037, %v6033
  %s6079 = scalar_lea.vmem [#allocation3], 96
  %v6080 = vld [vmem:[%s6079] sm:$0xff]
  %v6081 = vld [vmem:[%s6079 + $0x8] sm:$0xff]
  %v6082 = vld [vmem:[%s6079 + $0x10] sm:$0xff]
  %v6083 = vld [vmem:[%s6079 + $0x18] sm:$0xff]
  %v6084 = vld [vmem:[%s6079 + $0x20] sm:$0xff]
  %v6085 = vld [vmem:[%s6079 + $0x28] sm:$0xff]
  %v6086 = vld [vmem:[%s6079 + $0x30] sm:$0xff]
  %v6087 = vld [vmem:[%s6079 + $0x38] sm:$0xff]
  %v6088 = vld [vmem:[%s6079 + $0x40] sm:$0xff]
  %v6089 = vld [vmem:[%s6079 + $0x48] sm:$0xff]
  %v6090 = vld [vmem:[%s6079 + $0x50] sm:$0xff]
  %v6091 = vld [vmem:[%s6079 + $0x58] sm:$0xff]
  %v6093 = vsel %vm5402, %v6076, 0
  %v6096 = vsel %vm5402, %v6078, 0
  %6098 = vmatprep.subr.bf16.mxu0 0
  %6099 = vmatpush1.bf16.msra.mxu0 %v6080
  %6100 = vmatprep.subr.bf16.mxu0 0
  %6101 = vmatpush1.bf16.msra.mxu0 %v6081
  %6102 = vmatprep.subr.bf16.mxu0 0
  %6103 = vmatpush1.bf16.msra.mxu0 %v6082
  %6104 = vmatprep.subr.bf16.mxu0 0
  %6105 = vmatpush1.bf16.msra.mxu0 %v6083
  %6106 = vmatprep.subr.bf16.mxu0 0
  %6107 = vmatpush1.bf16.msra.mxu0 %v6084
  %6108 = vmatprep.subr.bf16.mxu0 0
  %6109 = vmatpush1.bf16.msra.mxu0 %v6085
  %6110 = vmatprep.subr.bf16.mxu0 0
  %6111 = vmatpush1.bf16.msra.mxu0 %v6086
  %6112 = vmatprep.subr.bf16.mxu0 0
  %6113 = vmatpush1.bf16.msra.mxu0 %v6087
  %6114 = vmatprep.subr.bf16.mxu0 0
  %6115 = vmatpush1.bf16.msra.mxu0 %v6088
  %6116 = vmatprep.subr.bf16.mxu0 0
  %6117 = vmatpush1.bf16.msra.mxu0 %v6089
  %6118 = vmatprep.subr.bf16.mxu0 0
  %6119 = vmatpush1.bf16.msra.mxu0 %v6090
  %6120 = vmatprep.subr.bf16.mxu0 0
  %6121 = vmatpush1.bf16.msra.mxu0 %v6091
  %6122 = vmatprep.subr.bf16.mxu0 0
  %6123 = vmatpush1.bf16.msra.mxu0 0
  %6124 = vmatprep.subr.bf16.mxu0 0
  %6125 = vmatpush1.bf16.msra.mxu0 0
  %6126 = vmatprep.subr.bf16.mxu0 0
  %6127 = vmatpush1.bf16.msra.mxu0 0
  %6128 = vmatprep.subr.bf16.mxu0 0
  %6129 = vmatpush1.bf16.msra.mxu0 0
  %6130 = vmatprep.mubr.bf16.mxu0 %v6093
  %6131 = vmatmul.mubr.bf16.gmra.mrb[0].mxu0 %v6075
  %v6132 = vpop.f32.mrb[0].mxu0
  %v6133 = vadd.f32 0.0, %v6132
  %v6134 = vpop.f32.mrb[0].mxu0
  %v6135 = vpop.f32.mrb[0].mxu0
  %v6136 = vadd.f32 0.0, %v6135
  %v6137 = vpop.f32.mrb[0].mxu0
  %6138 = vmatprep.mubr.bf16.mxu0 %v6096
  %6139 = vmatmul.mubr.bf16.gmra.mrb[0].mxu0 %v6077
  %v6140 = vpop.f32.mrb[0].mxu0
  %v6141 = vadd.f32 0.0, %v6140
  %v6142 = vpop.f32.mrb[0].mxu0
  %v6143 = vpop.f32.mrb[0].mxu0
  %v6144 = vadd.f32 0.0, %v6143
  %v6145 = vpop.f32.mrb[0].mxu0
  %6146 = vdwg.mxu0
  %v6148 = vsel %vm5402, %v6060, 0
  %v6151 = vsel %vm5402, %v6062, 0
  %6153 = vmatprep.subr.bf16.mxu0 0
  %6154 = vmatpush1.bf16.msra.mxu0 %v6063
  %6155 = vmatprep.subr.bf16.mxu0 0
  %6156 = vmatpush1.bf16.msra.mxu0 %v6064
  %6157 = vmatprep.subr.bf16.mxu0 0
  %6158 = vmatpush1.bf16.msra.mxu0 %v6065
  %6159 = vmatprep.subr.bf16.mxu0 0
  %6160 = vmatpush1.bf16.msra.mxu0 %v6066
  %6161 = vmatprep.subr.bf16.mxu0 0
  %6162 = vmatpush1.bf16.msra.mxu0 %v6067
  %6163 = vmatprep.subr.bf16.mxu0 0
  %6164 = vmatpush1.bf16.msra.mxu0 %v6068
  %6165 = vmatprep.subr.bf16.mxu0 0
  %6166 = vmatpush1.bf16.msra.mxu0 %v6069
  %6167 = vmatprep.subr.bf16.mxu0 0
  %6168 = vmatpush1.bf16.msra.mxu0 %v6070
  %6169 = vmatprep.subr.bf16.mxu0 0
  %6170 = vmatpush1.bf16.msra.mxu0 %v6071
  %6171 = vmatprep.subr.bf16.mxu0 0
  %6172 = vmatpush1.bf16.msra.mxu0 %v6072
  %6173 = vmatprep.subr.bf16.mxu0 0
  %6174 = vmatpush1.bf16.msra.mxu0 %v6073
  %6175 = vmatprep.subr.bf16.mxu0 0
  %6176 = vmatpush1.bf16.msra.mxu0 %v6074
  %6177 = vmatprep.subr.bf16.mxu0 0
  %6178 = vmatpush1.bf16.msra.mxu0 0
  %6179 = vmatprep.subr.bf16.mxu0 0
  %6180 = vmatpush1.bf16.msra.mxu0 0
  %6181 = vmatprep.subr.bf16.mxu0 0
  %6182 = vmatpush1.bf16.msra.mxu0 0
  %6183 = vmatprep.subr.bf16.mxu0 0
  %6184 = vmatpush1.bf16.msra.mxu0 0
  %6185 = vmatprep.mubr.bf16.mxu0 %v6148
  %6186 = vmatmul.mubr.bf16.gmra.mrb[0].mxu0 %v6059
  %v6187 = vpop.f32.mrb[0].mxu0
  %v6188 = vadd.f32 %v6133, %v6187
  %v6189 = vpop.f32.mrb[0].mxu0
  %v6190 = vpop.f32.mrb[0].mxu0
  %v6191 = vadd.f32 %v6136, %v6190
  %v6192 = vpop.f32.mrb[0].mxu0
  %6193 = vmatprep.mubr.bf16.mxu0 %v6151
  %6194 = vmatmul.mubr.bf16.gmra.mrb[0].mxu0 %v6061
  %v6195 = vpop.f32.mrb[0].mxu0
  %v6196 = vadd.f32 %v6141, %v6195
  %v6197 = vpop.f32.mrb[0].mxu0
  %v6198 = vpop.f32.mrb[0].mxu0
  %v6199 = vadd.f32 %v6144, %v6198
  %v6200 = vpop.f32.mrb[0].mxu0
  %6201 = vdwg.mxu0
  %v6202 = vpack.c.bf16 %v6045, %v6041
  %v6203 = vpack.c.bf16 %v6047, %v6043
  %v6204 = vpack.c.bf16 %v6055, %v6051
  %v6205 = vpack.c.bf16 %v6057, %v6053
  %s6206 = scalar_lea.vmem [#allocation3], 192
  %v6207 = vld [vmem:[%s6206] sm:$0xff]
  %v6208 = vld [vmem:[%s6206 + $0x8] sm:$0xff]
  %v6209 = vld [vmem:[%s6206 + $0x10] sm:$0xff]
  %v6210 = vld [vmem:[%s6206 + $0x18] sm:$0xff]
  %v6211 = vld [vmem:[%s6206 + $0x20] sm:$0xff]
  %v6212 = vld [vmem:[%s6206 + $0x28] sm:$0xff]
  %v6213 = vld [vmem:[%s6206 + $0x30] sm:$0xff]
  %v6214 = vld [vmem:[%s6206 + $0x38] sm:$0xff]
  %v6215 = vld [vmem:[%s6206 + $0x40] sm:$0xff]
  %v6216 = vld [vmem:[%s6206 + $0x48] sm:$0xff]
  %v6217 = vld [vmem:[%s6206 + $0x50] sm:$0xff]
  %v6218 = vld [vmem:[%s6206 + $0x58] sm:$0xff]
  %v6220 = vsel %vm5402, %v6203, 0
  %v6223 = vsel %vm5402, %v6205, 0
  %6225 = vmatprep.subr.bf16.mxu0 0
  %6226 = vmatpush1.bf16.msra.mxu0 %v6207
  %6227 = vmatprep.subr.bf16.mxu0 0
  %6228 = vmatpush1.bf16.msra.mxu0 %v6208
  %6229 = vmatprep.subr.bf16.mxu0 0
  %6230 = vmatpush1.bf16.msra.mxu0 %v6209
  %6231 = vmatprep.subr.bf16.mxu0 0
  %6232 = vmatpush1.bf16.msra.mxu0 %v6210
  %6233 = vmatprep.subr.bf16.mxu0 0
  %6234 = vmatpush1.bf16.msra.mxu0 %v6211
  %6235 = vmatprep.subr.bf16.mxu0 0
  %6236 = vmatpush1.bf16.msra.mxu0 %v6212
  %6237 = vmatprep.subr.bf16.mxu0 0
  %6238 = vmatpush1.bf16.msra.mxu0 %v6213
  %6239 = vmatprep.subr.bf16.mxu0 0
  %6240 = vmatpush1.bf16.msra.mxu0 %v6214
  %6241 = vmatprep.subr.bf16.mxu0 0
  %6242 = vmatpush1.bf16.msra.mxu0 %v6215
  %6243 = vmatprep.subr.bf16.mxu0 0
  %6244 = vmatpush1.bf16.msra.mxu0 %v6216
  %6245 = vmatprep.subr.bf16.mxu0 0
  %6246 = vmatpush1.bf16.msra.mxu0 %v6217
  %6247 = vmatprep.subr.bf16.mxu0 0
  %6248 = vmatpush1.bf16.msra.mxu0 %v6218
  %6249 = vmatprep.subr.bf16.mxu0 0
  %6250 = vmatpush1.bf16.msra.mxu0 0
  %6251 = vmatprep.subr.bf16.mxu0 0
  %6252 = vmatpush1.bf16.msra.mxu0 0
  %6253 = vmatprep.subr.bf16.mxu0 0
  %6254 = vmatpush1.bf16.msra.mxu0 0
  %6255 = vmatprep.subr.bf16.mxu0 0
  %6256 = vmatpush1.bf16.msra.mxu0 0
  %6257 = vmatprep.mubr.bf16.mxu0 %v6220
  %6258 = vmatmul.mubr.bf16.gmra.mrb[0].mxu0 %v6202
  %v6259 = vpop.f32.mrb[0].mxu0
  %v6260 = vadd.f32 0.0, %v6259
  %v6261 = vpop.f32.mrb[0].mxu0
  %v6262 = vpop.f32.mrb[0].mxu0
  %v6263 = vadd.f32 0.0, %v6262
  %v6264 = vpop.f32.mrb[0].mxu0
  %6265 = vmatprep.mubr.bf16.mxu0 %v6223
  %6266 = vmatmul.mubr.bf16.gmra.mrb[0].mxu0 %v6204
  %v6267 = vpop.f32.mrb[0].mxu0
  %v6268 = vadd.f32 0.0, %v6267
  %v6269 = vpop.f32.mrb[0].mxu0
  %v6270 = vpop.f32.mrb[0].mxu0
  %v6271 = vadd.f32 0.0, %v6270
  %v6272 = vpop.f32.mrb[0].mxu0
  %6273 = vdwg.mxu0
  %v6274 = vadd.f32 %v6188, %v6260
  %v6275 = vadd.f32 %v6191, %v6263
  %v6276 = vadd.f32 %v6196, %v6268
  %v6277 = vadd.f32 %v6199, %v6271
  %v6278 = vld [vmem:[%s14] sm:$0x7]
  %v6279 = vlaneseq
  %v6280 = vshrl.u32 %v6279, 7
  %v6281 = vsub.s32 0, %v6280
  %v6282 = vrot.slane %v6278, %v6281
  %v6283 = vadd.f32 %v6274, %v6282
  %v6284 = vadd.f32 %v6275, %v6282
  %v6285 = vadd.f32 %v6276, %v6282
  %v6286 = vadd.f32 %v6277, %v6282
  %v6287 = vmax.f32 %v6283, 0.0
  %v6288 = vmax.f32 %v6284, 0.0
  %v6289 = vmax.f32 %v6285, 0.0
  %v6290 = vmax.f32 %v6286, 0.0
  %v6291 = vsel %vm2175, %v6287, 0.0
  %v6292 = vsel %vm2175, %v6288, 0.0
  %v6293 = vadd.f32 %v6291, %v6292
  %v6294 = vsel %vm2175, %v6289, 0.0
  %v6295 = vadd.f32 %v6293, %v6294
  %v6296 = vsel %vm2175, %v6290, 0.0
  %v6297 = vadd.f32 %v6295, %v6296
  %v6298 = vrot.slane %v6297, 4
  %v6299 = vadd.f32 %v6297, %v6298
  %v6300 = vrot.slane %v6299, 2
  %v6301 = vadd.f32 %v6299, %v6300
  %v6302 = vrot.slane %v6301, 1
  %v6303 = vadd.f32 %v6301, %v6302
  %v6304 = vld [vmem:[%s15] sm:$0xff]
  %v6305 = vld [vmem:[%s15 + $0x8] sm:$0xff]
  %v6306 = vld [vmem:[%s15 + $0x10] sm:$0xff]
  %v6307 = vld [vmem:[%s15 + $0x18] sm:$0xff]
  %v6308 = vld [vmem:[%s15 + $0x20] sm:$0xff]
  %v6309 = vld [vmem:[%s15 + $0x28] sm:$0xff]
  %v6310 = vld [vmem:[%s15 + $0x30] sm:$0xff]
  %v6311 = vld [vmem:[%s15 + $0x38] sm:$0xff]
  %v6312 = vld [vmem:[%s15 + $0x40] sm:$0xff]
  %v6313 = vld [vmem:[%s15 + $0x48] sm:$0xff]
  %v6314 = vld [vmem:[%s15 + $0x50] sm:$0xff]
  %v6315 = vld [vmem:[%s15 + $0x58] sm:$0xff]
  %v6317 = vsel %vm2175, %v6303, 0
  %6319 = vmatprep.subr.mxu0 0.0
  %6320 = vmatpush1.msra.mxu0 %v6304
  %6321 = vmatprep.subr.mxu0 0.0
  %6322 = vmatpush1.msra.mxu0 %v6305
  %6323 = vmatprep.subr.mxu0 0.0
  %6324 = vmatpush1.msra.mxu0 %v6306
  %6325 = vmatprep.subr.mxu0 0.0
  %6326 = vmatpush1.msra.mxu0 %v6307
  %6327 = vmatprep.subr.mxu0 0.0
  %6328 = vmatpush1.msra.mxu0 %v6308
  %6329 = vmatprep.subr.mxu0 0.0
  %6330 = vmatpush1.msra.mxu0 %v6309
  %6331 = vmatprep.subr.mxu0 0.0
  %6332 = vmatpush1.msra.mxu0 %v6310
  %6333 = vmatprep.subr.mxu0 0.0
  %6334 = vmatpush1.msra.mxu0 %v6311
  %6335 = vmatprep.subr.mxu0 0.0
  %6336 = vmatpush1.msra.mxu0 %v6312
  %6337 = vmatprep.subr.mxu0 0.0
  %6338 = vmatpush1.msra.mxu0 %v6313
  %6339 = vmatprep.subr.mxu0 0.0
  %6340 = vmatpush1.msra.mxu0 %v6314
  %6341 = vmatprep.subr.mxu0 0.0
  %6342 = vmatpush1.msra.mxu0 %v6315
  %6343 = vmatprep.subr.mxu0 0.0
  %6344 = vmatpush1.msra.mxu0 0.0
  %6345 = vmatprep.subr.mxu0 0.0
  %6346 = vmatpush1.msra.mxu0 0.0
  %6347 = vmatprep.subr.mxu0 0.0
  %6348 = vmatpush1.msra.mxu0 0.0
  %6349 = vmatprep.subr.mxu0 0.0
  %6350 = vmatpush1.msra.mxu0 0.0
  %6351 = vmatprep.subr.mxu0 0.0
  %6352 = vmatpush1.msra.mxu0 0.0
  %6353 = vmatprep.subr.mxu0 0.0
  %6354 = vmatpush1.msra.mxu0 0.0
  %6355 = vmatprep.subr.mxu0 0.0
  %6356 = vmatpush1.msra.mxu0 0.0
  %6357 = vmatprep.subr.mxu0 0.0
  %6358 = vmatpush1.msra.mxu0 0.0
  %6359 = vmatprep.subr.mxu0 0.0
  %6360 = vmatpush1.msra.mxu0 0.0
  %6361 = vmatprep.subr.mxu0 0.0
  %6362 = vmatpush1.msra.mxu0 0.0
  %6363 = vmatprep.subr.mxu0 0.0
  %6364 = vmatpush1.msra.mxu0 0.0
  %6365 = vmatprep.subr.mxu0 0.0
  %6366 = vmatpush1.msra.mxu0 0.0
  %6367 = vmatprep.subr.mxu0 0.0
  %6368 = vmatpush1.msra.mxu0 0.0
  %6369 = vmatprep.subr.mxu0 0.0
  %6370 = vmatpush1.msra.mxu0 0.0
  %6371 = vmatprep.subr.mxu0 0.0
  %6372 = vmatpush1.msra.mxu0 0.0
  %6373 = vmatprep.subr.mxu0 0.0
  %6374 = vmatpush1.msra.mxu0 0.0
  %6375 = vmatprep.subr.mxu0 0.0
  %6376 = vmatpush1.msra.mxu0 0.0
  %6377 = vmatprep.subr.mxu0 0.0
  %6378 = vmatpush1.msra.mxu0 0.0
  %6379 = vmatprep.subr.mxu0 0.0
  %6380 = vmatpush1.msra.mxu0 0.0
  %6381 = vmatprep.subr.mxu0 0.0
  %6382 = vmatpush1.msra.mxu0 0.0
  %6383 = vmatprep.mubr.f32.mxu0 0.0
  %6384 = vmatmul.mubr.f32.gmra.mrb[0].mxu0 %v6317
  %v6385 = vpop.f32.mrb[0].mxu0
  %v6386 = vadd.f32 0.0, %v6385
  %v6387 = vpop.f32.mrb[0].mxu0
  %6388 = vdwg.mxu0
  %v6389 = vld [vmem:[%s16] sm:$0xff]
  %v6390 = vld [vmem:[%s16 + $0x8] sm:$0xff]
  %v6391 = vld [vmem:[%s16 + $0x10] sm:$0xff]
  %v6393 = vsel %vm3538, %v6386, 0
  %6395 = vmatprep.subr.mxu0 0.0
  %6396 = vmatpush1.msra.mxu0 %v6389
  %6397 = vmatprep.subr.mxu0 0.0
  %6398 = vmatpush1.msra.mxu0 %v6390
  %6399 = vmatprep.subr.mxu0 0.0
  %6400 = vmatpush1.msra.mxu0 %v6391
  %6401 = vmatprep.subr.mxu0 0.0
  %6402 = vmatpush1.msra.mxu0 0.0
  %6403 = vmatprep.subr.mxu0 0.0
  %6404 = vmatpush1.msra.mxu0 0.0
  %6405 = vmatprep.subr.mxu0 0.0
  %6406 = vmatpush1.msra.mxu0 0.0
  %6407 = vmatprep.subr.mxu0 0.0
  %6408 = vmatpush1.msra.mxu0 0.0
  %6409 = vmatprep.subr.mxu0 0.0
  %6410 = vmatpush1.msra.mxu0 0.0
  %6411 = vmatprep.subr.mxu0 0.0
  %6412 = vmatpush1.msra.mxu0 0.0
  %6413 = vmatprep.subr.mxu0 0.0
  %6414 = vmatpush1.msra.mxu0 0.0
  %6415 = vmatprep.subr.mxu0 0.0
  %6416 = vmatpush1.msra.mxu0 0.0
  %6417 = vmatprep.subr.mxu0 0.0
  %6418 = vmatpush1.msra.mxu0 0.0
  %6419 = vmatprep.subr.mxu0 0.0
  %6420 = vmatpush1.msra.mxu0 0.0
  %6421 = vmatprep.subr.mxu0 0.0
  %6422 = vmatpush1.msra.mxu0 0.0
  %6423 = vmatprep.subr.mxu0 0.0
  %6424 = vmatpush1.msra.mxu0 0.0
  %6425 = vmatprep.subr.mxu0 0.0
  %6426 = vmatpush1.msra.mxu0 0.0
  %6427 = vmatprep.subr.mxu0 0.0
  %6428 = vmatpush1.msra.mxu0 0.0
  %6429 = vmatprep.subr.mxu0 0.0
  %6430 = vmatpush1.msra.mxu0 0.0
  %6431 = vmatprep.subr.mxu0 0.0
  %6432 = vmatpush1.msra.mxu0 0.0
  %6433 = vmatprep.subr.mxu0 0.0
  %6434 = vmatpush1.msra.mxu0 0.0
  %6435 = vmatprep.subr.mxu0 0.0
  %6436 = vmatpush1.msra.mxu0 0.0
  %6437 = vmatprep.subr.mxu0 0.0
  %6438 = vmatpush1.msra.mxu0 0.0
  %6439 = vmatprep.subr.mxu0 0.0
  %6440 = vmatpush1.msra.mxu0 0.0
  %6441 = vmatprep.subr.mxu0 0.0
  %6442 = vmatpush1.msra.mxu0 0.0
  %6443 = vmatprep.subr.mxu0 0.0
  %6444 = vmatpush1.msra.mxu0 0.0
  %6445 = vmatprep.subr.mxu0 0.0
  %6446 = vmatpush1.msra.mxu0 0.0
  %6447 = vmatprep.subr.mxu0 0.0
  %6448 = vmatpush1.msra.mxu0 0.0
  %6449 = vmatprep.subr.mxu0 0.0
  %6450 = vmatpush1.msra.mxu0 0.0
  %6451 = vmatprep.subr.mxu0 0.0
  %6452 = vmatpush1.msra.mxu0 0.0
  %6453 = vmatprep.subr.mxu0 0.0
  %6454 = vmatpush1.msra.mxu0 0.0
  %6455 = vmatprep.subr.mxu0 0.0
  %6456 = vmatpush1.msra.mxu0 0.0
  %6457 = vmatprep.subr.mxu0 0.0
  %6458 = vmatpush1.msra.mxu0 0.0
  %6459 = vmatprep.mubr.f32.mxu0 0.0
  %6460 = vmatmul.mubr.f32.gmra.mrb[0].mxu0 %v6393
  %v6461 = vpop.f32.mrb[0].mxu0
  %v6462 = vadd.f32 0.0, %v6461
  %v6463 = vpop.f32.mrb[0].mxu0
  %6464 = vdwg.mxu0
  %v6465 = vlaneseq
  %v6466 = vshrl.u32 %v6465, 7
  %v6467 = vsub.s32 0, %v6466
  %v6468 = vrot.slane %v6462, %v6467
  %v6469 = vsub.f32 %v6287, %v6468
  %v6470 = vsub.f32 %v6288, %v6468
  %v6471 = vsub.f32 %v6289, %v6468
  %v6472 = vsub.f32 %v6290, %v6468
  %v6473 = vmul.f32 %v6469, %v6469
  %v6474 = vmul.f32 %v6470, %v6470
  %v6475 = vmul.f32 %v6471, %v6471
  %v6476 = vmul.f32 %v6472, %v6472
  %v6477 = vsel %vm2175, %v6473, 0.0
  %v6478 = vsel %vm2175, %v6474, 0.0
  %v6479 = vadd.f32 %v6477, %v6478
  %v6480 = vsel %vm2175, %v6475, 0.0
  %v6481 = vadd.f32 %v6479, %v6480
  %v6482 = vsel %vm2175, %v6476, 0.0
  %v6483 = vadd.f32 %v6481, %v6482
  %v6484 = vrot.slane %v6483, 4
  %v6485 = vadd.f32 %v6483, %v6484
  %v6486 = vrot.slane %v6485, 2
  %v6487 = vadd.f32 %v6485, %v6486
  %v6488 = vrot.slane %v6487, 1
  %v6489 = vadd.f32 %v6487, %v6488
  %v6491 = vsel %vm2175, %v6489, 0
  %6493 = vmatprep.subr.mxu0 0.0
  %6494 = vmatpush1.msra.mxu0 %v6304
  %6495 = vmatprep.subr.mxu0 0.0
  %6496 = vmatpush1.msra.mxu0 %v6305
  %6497 = vmatprep.subr.mxu0 0.0
  %6498 = vmatpush1.msra.mxu0 %v6306
  %6499 = vmatprep.subr.mxu0 0.0
  %6500 = vmatpush1.msra.mxu0 %v6307
  %6501 = vmatprep.subr.mxu0 0.0
  %6502 = vmatpush1.msra.mxu0 %v6308
  %6503 = vmatprep.subr.mxu0 0.0
  %6504 = vmatpush1.msra.mxu0 %v6309
  %6505 = vmatprep.subr.mxu0 0.0
  %6506 = vmatpush1.msra.mxu0 %v6310
  %6507 = vmatprep.subr.mxu0 0.0
  %6508 = vmatpush1.msra.mxu0 %v6311
  %6509 = vmatprep.subr.mxu0 0.0
  %6510 = vmatpush1.msra.mxu0 %v6312
  %6511 = vmatprep.subr.mxu0 0.0
  %6512 = vmatpush1.msra.mxu0 %v6313
  %6513 = vmatprep.subr.mxu0 0.0
  %6514 = vmatpush1.msra.mxu0 %v6314
  %6515 = vmatprep.subr.mxu0 0.0
  %6516 = vmatpush1.msra.mxu0 %v6315
  %6517 = vmatprep.subr.mxu0 0.0
  %6518 = vmatpush1.msra.mxu0 0.0
  %6519 = vmatprep.subr.mxu0 0.0
  %6520 = vmatpush1.msra.mxu0 0.0
  %6521 = vmatprep.subr.mxu0 0.0
  %6522 = vmatpush1.msra.mxu0 0.0
  %6523 = vmatprep.subr.mxu0 0.0
  %6524 = vmatpush1.msra.mxu0 0.0
  %6525 = vmatprep.subr.mxu0 0.0
  %6526 = vmatpush1.msra.mxu0 0.0
  %6527 = vmatprep.subr.mxu0 0.0
  %6528 = vmatpush1.msra.mxu0 0.0
  %6529 = vmatprep.subr.mxu0 0.0
  %6530 = vmatpush1.msra.mxu0 0.0
  %6531 = vmatprep.subr.mxu0 0.0
  %6532 = vmatpush1.msra.mxu0 0.0
  %6533 = vmatprep.subr.mxu0 0.0
  %6534 = vmatpush1.msra.mxu0 0.0
  %6535 = vmatprep.subr.mxu0 0.0
  %6536 = vmatpush1.msra.mxu0 0.0
  %6537 = vmatprep.subr.mxu0 0.0
  %6538 = vmatpush1.msra.mxu0 0.0
  %6539 = vmatprep.subr.mxu0 0.0
  %6540 = vmatpush1.msra.mxu0 0.0
  %6541 = vmatprep.subr.mxu0 0.0
  %6542 = vmatpush1.msra.mxu0 0.0
  %6543 = vmatprep.subr.mxu0 0.0
  %6544 = vmatpush1.msra.mxu0 0.0
  %6545 = vmatprep.subr.mxu0 0.0
  %6546 = vmatpush1.msra.mxu0 0.0
  %6547 = vmatprep.subr.mxu0 0.0
  %6548 = vmatpush1.msra.mxu0 0.0
  %6549 = vmatprep.subr.mxu0 0.0
  %6550 = vmatpush1.msra.mxu0 0.0
  %6551 = vmatprep.subr.mxu0 0.0
  %6552 = vmatpush1.msra.mxu0 0.0
  %6553 = vmatprep.subr.mxu0 0.0
  %6554 = vmatpush1.msra.mxu0 0.0
  %6555 = vmatprep.subr.mxu0 0.0
  %6556 = vmatpush1.msra.mxu0 0.0
  %6557 = vmatprep.mubr.f32.mxu0 0.0
  %6558 = vmatmul.mubr.f32.gmra.mrb[0].mxu0 %v6491
  %v6559 = vpop.f32.mrb[0].mxu0
  %v6560 = vadd.f32 0.0, %v6559
  %v6561 = vpop.f32.mrb[0].mxu0
  %6562 = vdwg.mxu0
  %v6564 = vsel %vm3538, %v6560, 0
  %6566 = vmatprep.subr.mxu0 0.0
  %6567 = vmatpush1.msra.mxu0 %v6389
  %6568 = vmatprep.subr.mxu0 0.0
  %6569 = vmatpush1.msra.mxu0 %v6390
  %6570 = vmatprep.subr.mxu0 0.0
  %6571 = vmatpush1.msra.mxu0 %v6391
  %6572 = vmatprep.subr.mxu0 0.0
  %6573 = vmatpush1.msra.mxu0 0.0
  %6574 = vmatprep.subr.mxu0 0.0
  %6575 = vmatpush1.msra.mxu0 0.0
  %6576 = vmatprep.subr.mxu0 0.0
  %6577 = vmatpush1.msra.mxu0 0.0
  %6578 = vmatprep.subr.mxu0 0.0
  %6579 = vmatpush1.msra.mxu0 0.0
  %6580 = vmatprep.subr.mxu0 0.0
  %6581 = vmatpush1.msra.mxu0 0.0
  %6582 = vmatprep.subr.mxu0 0.0
  %6583 = vmatpush1.msra.mxu0 0.0
  %6584 = vmatprep.subr.mxu0 0.0
  %6585 = vmatpush1.msra.mxu0 0.0
  %6586 = vmatprep.subr.mxu0 0.0
  %6587 = vmatpush1.msra.mxu0 0.0
  %6588 = vmatprep.subr.mxu0 0.0
  %6589 = vmatpush1.msra.mxu0 0.0
  %6590 = vmatprep.subr.mxu0 0.0
  %6591 = vmatpush1.msra.mxu0 0.0
  %6592 = vmatprep.subr.mxu0 0.0
  %6593 = vmatpush1.msra.mxu0 0.0
  %6594 = vmatprep.subr.mxu0 0.0
  %6595 = vmatpush1.msra.mxu0 0.0
  %6596 = vmatprep.subr.mxu0 0.0
  %6597 = vmatpush1.msra.mxu0 0.0
  %6598 = vmatprep.subr.mxu0 0.0
  %6599 = vmatpush1.msra.mxu0 0.0
  %6600 = vmatprep.subr.mxu0 0.0
  %6601 = vmatpush1.msra.mxu0 0.0
  %6602 = vmatprep.subr.mxu0 0.0
  %6603 = vmatpush1.msra.mxu0 0.0
  %6604 = vmatprep.subr.mxu0 0.0
  %6605 = vmatpush1.msra.mxu0 0.0
  %6606 = vmatprep.subr.mxu0 0.0
  %6607 = vmatpush1.msra.mxu0 0.0
  %6608 = vmatprep.subr.mxu0 0.0
  %6609 = vmatpush1.msra.mxu0 0.0
  %6610 = vmatprep.subr.mxu0 0.0
  %6611 = vmatpush1.msra.mxu0 0.0
  %6612 = vmatprep.subr.mxu0 0.0
  %6613 = vmatpush1.msra.mxu0 0.0
  %6614 = vmatprep.subr.mxu0 0.0
  %6615 = vmatpush1.msra.mxu0 0.0
  %6616 = vmatprep.subr.mxu0 0.0
  %6617 = vmatpush1.msra.mxu0 0.0
  %6618 = vmatprep.subr.mxu0 0.0
  %6619 = vmatpush1.msra.mxu0 0.0
  %6620 = vmatprep.subr.mxu0 0.0
  %6621 = vmatpush1.msra.mxu0 0.0
  %6622 = vmatprep.subr.mxu0 0.0
  %6623 = vmatpush1.msra.mxu0 0.0
  %6624 = vmatprep.subr.mxu0 0.0
  %6625 = vmatpush1.msra.mxu0 0.0
  %6626 = vmatprep.subr.mxu0 0.0
  %6627 = vmatpush1.msra.mxu0 0.0
  %6628 = vmatprep.subr.mxu0 0.0
  %6629 = vmatpush1.msra.mxu0 0.0
  %6630 = vmatprep.mubr.f32.mxu0 0.0
  %6631 = vmatmul.mubr.f32.gmra.mrb[0].mxu0 %v6564
  %v6632 = vpop.f32.mrb[0].mxu0
  %v6633 = vadd.f32 1e-05, %v6632
  %v6634 = vpop.f32.mrb[0].mxu0
  %6635 = vdwg.mxu0
  %v6636 = vrsqrt.pop %v6633
  %v6638 = vrot.slane %v6278, 1
  %v6640 = vmul.f32 %v6636, %v6638
  %v6641 = vlaneseq
  %v6642 = vshrl.u32 %v6641, 7
  %v6643 = vsub.s32 0, %v6642
  %v6644 = vrot.slane %v6640, %v6643
  %v6645 = vmul.f32 %v6469, %v6644
  %v6646 = vmul.f32 %v6470, %v6644
  %v6647 = vmul.f32 %v6471, %v6644
  %v6648 = vmul.f32 %v6472, %v6644
  %v6649 = vlaneseq
  %v6650 = vshrl.u32 %v6649, 7
  %v6651 = vsub.s32 2, %v6650
  %v6652 = vrot.slane %v6278, %v6651
  %v6653 = vadd.f32 %v6645, %v6652
  %v6654 = vadd.f32 %v6646, %v6652
  %v6655 = vadd.f32 %v6647, %v6652
  %v6656 = vadd.f32 %v6648, %v6652
  %s6657 = smul.u32 %s4294, 12
  %s6658 = smul.u32 %s6657, 1
  %s6659 = sshll.u32 %s6658, 4
  %6660 = dma.done %s1376, %s6659
  %v6661 = vpack.c.bf16 %v6654, %v6653
  %v6662 = vpack.c.bf16 %v6656, %v6655
  %v6663 = vld [vmem:[%s17] sm:$0xf]
  %v6664 = vld [vmem:[%s17 + $0x4] sm:$0xf]
  %v6665 = vld [vmem:[%s17 + $0x8] sm:$0xf]
  %v6666 = vld [vmem:[%s17 + $0xc] sm:$0xf]
  %v6667 = vld [vmem:[%s17 + $0x10] sm:$0xf]
  %v6668 = vld [vmem:[%s17 + $0x14] sm:$0xf]
  %v6675 = vunpack.c.l.b16 %v6663
  %v6676 = vunpack.c.l.b16 %v6664
  %v6677 = vunpack.c.l.b16 %v6665
  %v6678 = vunpack.c.l.b16 %v6666
  %v6679 = vunpack.c.l.b16 %v6667
  %v6680 = vunpack.c.l.b16 %v6668
  %v6681 = vpack.c.b16 %v6676, %v6675
  %v6682 = vpack.c.b16 %v6678, %v6677
  %v6683 = vpack.c.b16 %v6680, %v6679
  %vm6684 = vcmask 261120
  %v6686 = vsel %vm6684, %v6681, 0
  %v6689 = vsel %vm6684, %v6682, 0
  %v6692 = vsel %vm6684, %v6683, 0
  %6694 = vmatprep.subr.bf16.mxu0 0
  %6695 = vmatpush1.bf16.msra.mxu0 %v6661
  %6696 = vmatprep.subr.bf16.mxu0 0
  %6697 = vmatpush1.bf16.msra.mxu0 %v6662
  %6698 = vmatprep.subr.bf16.mxu0 0
  %6699 = vmatpush1.bf16.msra.mxu0 0
  %6700 = vmatprep.subr.bf16.mxu0 0
  %6701 = vmatpush1.bf16.msra.mxu0 0
  %6702 = vmatprep.subr.bf16.mxu0 0
  %6703 = vmatpush1.bf16.msra.mxu0 0
  %6704 = vmatprep.subr.bf16.mxu0 0
  %6705 = vmatpush1.bf16.msra.mxu0 0
  %6706 = vmatprep.subr.bf16.mxu0 0
  %6707 = vmatpush1.bf16.msra.mxu0 0
  %6708 = vmatprep.subr.bf16.mxu0 0
  %6709 = vmatpush1.bf16.msra.mxu0 0
  %6710 = vmatprep.subr.bf16.mxu0 0
  %6711 = vmatpush1.bf16.msra.mxu0 0
  %6712 = vmatprep.subr.bf16.mxu0 0
  %6713 = vmatpush1.bf16.msra.mxu0 0
  %6714 = vmatprep.subr.bf16.mxu0 0
  %6715 = vmatpush1.bf16.msra.mxu0 0
  %6716 = vmatprep.subr.bf16.mxu0 0
  %6717 = vmatpush1.bf16.msra.mxu0 0
  %6718 = vmatprep.subr.bf16.mxu0 0
  %6719 = vmatpush1.bf16.msra.mxu0 0
  %6720 = vmatprep.subr.bf16.mxu0 0
  %6721 = vmatpush1.bf16.msra.mxu0 0
  %6722 = vmatprep.subr.bf16.mxu0 0
  %6723 = vmatpush1.bf16.msra.mxu0 0
  %6724 = vmatprep.subr.bf16.mxu0 0
  %6725 = vmatpush1.bf16.msra.mxu0 0
  %6726 = vmatprep.mubr.bf16.mxu0 0
  %6727 = vmatmul.mubr.bf16.gmra.mrb[0].mxu0 %v6686
  %v6728 = vpop.f32.mrb[0].mxu0
  %v6729 = vadd.f32 0.0, %v6728
  %v6730 = vpop.f32.mrb[0].mxu0
  %v6731 = vpop.f32.mrb[0].mxu0
  %v6732 = vadd.f32 0.0, %v6731
  %v6733 = vpop.f32.mrb[0].mxu0
  %6734 = vmatprep.mubr.bf16.mxu0 0
  %6735 = vmatmul.mubr.bf16.gmra.mrb[0].mxu0 %v6689
  %v6736 = vpop.f32.mrb[0].mxu0
  %v6737 = vadd.f32 0.0, %v6736
  %v6738 = vpop.f32.mrb[0].mxu0
  %v6739 = vpop.f32.mrb[0].mxu0
  %v6740 = vadd.f32 0.0, %v6739
  %v6741 = vpop.f32.mrb[0].mxu0
  %6742 = vmatprep.mubr.bf16.mxu0 0
  %6743 = vmatmul.mubr.bf16.gmra.mrb[0].mxu0 %v6692
  %v6744 = vpop.f32.mrb[0].mxu0
  %v6745 = vadd.f32 0.0, %v6744
  %v6746 = vpop.f32.mrb[0].mxu0
  %v6747 = vpop.f32.mrb[0].mxu0
  %v6748 = vadd.f32 0.0, %v6747
  %v6749 = vpop.f32.mrb[0].mxu0
  %6750 = vdwg.mxu0
  %v6751 = vpack.c.bf16 %v6732, %v6729
  %v6752 = vld [vmem:[#allocation4] sm:$0xff]
  %v6753 = vld [vmem:[#allocation4 + $0x8] sm:$0xff]
  %v6754 = vld [vmem:[#allocation4 + $0x10] sm:$0xff]
  %v6755 = vld [vmem:[#allocation4 + $0x18] sm:$0xff]
  %v6756 = vld [vmem:[#allocation4 + $0x20] sm:$0xff]
  %v6757 = vld [vmem:[#allocation4 + $0x28] sm:$0xff]
  %v6758 = vpack.c.bf16 %v6740, %v6737
  %s6759 = scalar_lea.vmem [#allocation4], 48
  %v6760 = vld [vmem:[%s6759] sm:$0xff]
  %v6761 = vld [vmem:[%s6759 + $0x8] sm:$0xff]
  %v6762 = vld [vmem:[%s6759 + $0x10] sm:$0xff]
  %v6763 = vld [vmem:[%s6759 + $0x18] sm:$0xff]
  %v6764 = vld [vmem:[%s6759 + $0x20] sm:$0xff]
  %v6765 = vld [vmem:[%s6759 + $0x28] sm:$0xff]
  %v6767 = vsel %vm2175, %v6758, 0
  %6769 = vmatprep.subr.bf16.mxu0 0
  %6770 = vmatpush1.bf16.msra.mxu0 %v6760
  %6771 = vmatprep.subr.bf16.mxu0 0
  %6772 = vmatpush1.bf16.msra.mxu0 %v6761
  %6773 = vmatprep.subr.bf16.mxu0 0
  %6774 = vmatpush1.bf16.msra.mxu0 %v6762
  %6775 = vmatprep.subr.bf16.mxu0 0
  %6776 = vmatpush1.bf16.msra.mxu0 %v6763
  %6777 = vmatprep.subr.bf16.mxu0 0
  %6778 = vmatpush1.bf16.msra.mxu0 %v6764
  %6779 = vmatprep.subr.bf16.mxu0 0
  %6780 = vmatpush1.bf16.msra.mxu0 %v6765
  %6781 = vmatprep.subr.bf16.mxu0 0
  %6782 = vmatpush1.bf16.msra.mxu0 0
  %6783 = vmatprep.subr.bf16.mxu0 0
  %6784 = vmatpush1.bf16.msra.mxu0 0
  %6785 = vmatprep.subr.bf16.mxu0 0
  %6786 = vmatpush1.bf16.msra.mxu0 0
  %6787 = vmatprep.subr.bf16.mxu0 0
  %6788 = vmatpush1.bf16.msra.mxu0 0
  %6789 = vmatprep.subr.bf16.mxu0 0
  %6790 = vmatpush1.bf16.msra.mxu0 0
  %6791 = vmatprep.subr.bf16.mxu0 0
  %6792 = vmatpush1.bf16.msra.mxu0 0
  %6793 = vmatprep.subr.bf16.mxu0 0
  %6794 = vmatpush1.bf16.msra.mxu0 0
  %6795 = vmatprep.subr.bf16.mxu0 0
  %6796 = vmatpush1.bf16.msra.mxu0 0
  %6797 = vmatprep.subr.bf16.mxu0 0
  %6798 = vmatpush1.bf16.msra.mxu0 0
  %6799 = vmatprep.subr.bf16.mxu0 0
  %6800 = vmatpush1.bf16.msra.mxu0 0
  %6801 = vmatprep.mubr.bf16.mxu0 0
  %6802 = vmatmul.mubr.bf16.gmra.mrb[0].mxu0 %v6767
  %v6803 = vpop.f32.mrb[0].mxu0
  %v6804 = vadd.f32 0.0, %v6803
  %v6805 = vpop.f32.mrb[0].mxu0
  %v6806 = vpop.f32.mrb[0].mxu0
  %v6807 = vadd.f32 0.0, %v6806
  %v6808 = vpop.f32.mrb[0].mxu0
  %6809 = vdwg.mxu0
  %v6811 = vsel %vm2175, %v6751, 0
  %6813 = vmatprep.subr.bf16.mxu0 0
  %6814 = vmatpush1.bf16.msra.mxu0 %v6752
  %6815 = vmatprep.subr.bf16.mxu0 0
  %6816 = vmatpush1.bf16.msra.mxu0 %v6753
  %6817 = vmatprep.subr.bf16.mxu0 0
  %6818 = vmatpush1.bf16.msra.mxu0 %v6754
  %6819 = vmatprep.subr.bf16.mxu0 0
  %6820 = vmatpush1.bf16.msra.mxu0 %v6755
  %6821 = vmatprep.subr.bf16.mxu0 0
  %6822 = vmatpush1.bf16.msra.mxu0 %v6756
  %6823 = vmatprep.subr.bf16.mxu0 0
  %6824 = vmatpush1.bf16.msra.mxu0 %v6757
  %6825 = vmatprep.subr.bf16.mxu0 0
  %6826 = vmatpush1.bf16.msra.mxu0 0
  %6827 = vmatprep.subr.bf16.mxu0 0
  %6828 = vmatpush1.bf16.msra.mxu0 0
  %6829 = vmatprep.subr.bf16.mxu0 0
  %6830 = vmatpush1.bf16.msra.mxu0 0
  %6831 = vmatprep.subr.bf16.mxu0 0
  %6832 = vmatpush1.bf16.msra.mxu0 0
  %6833 = vmatprep.subr.bf16.mxu0 0
  %6834 = vmatpush1.bf16.msra.mxu0 0
  %6835 = vmatprep.subr.bf16.mxu0 0
  %6836 = vmatpush1.bf16.msra.mxu0 0
  %6837 = vmatprep.subr.bf16.mxu0 0
  %6838 = vmatpush1.bf16.msra.mxu0 0
  %6839 = vmatprep.subr.bf16.mxu0 0
  %6840 = vmatpush1.bf16.msra.mxu0 0
  %6841 = vmatprep.subr.bf16.mxu0 0
  %6842 = vmatpush1.bf16.msra.mxu0 0
  %6843 = vmatprep.subr.bf16.mxu0 0
  %6844 = vmatpush1.bf16.msra.mxu0 0
  %6845 = vmatprep.mubr.bf16.mxu0 0
  %6846 = vmatmul.mubr.bf16.gmra.mrb[0].mxu0 %v6811
  %v6847 = vpop.f32.mrb[0].mxu0
  %v6848 = vadd.f32 %v6804, %v6847
  %v6849 = vpop.f32.mrb[0].mxu0
  %v6850 = vpop.f32.mrb[0].mxu0
  %v6851 = vadd.f32 %v6807, %v6850
  %v6852 = vpop.f32.mrb[0].mxu0
  %6853 = vdwg.mxu0
  %v6854 = vpack.c.bf16 %v6748, %v6745
  %s6855 = scalar_lea.vmem [#allocation4], 96
  %v6856 = vld [vmem:[%s6855] sm:$0xff]
  %v6857 = vld [vmem:[%s6855 + $0x8] sm:$0xff]
  %v6858 = vld [vmem:[%s6855 + $0x10] sm:$0xff]
  %v6859 = vld [vmem:[%s6855 + $0x18] sm:$0xff]
  %v6860 = vld [vmem:[%s6855 + $0x20] sm:$0xff]
  %v6861 = vld [vmem:[%s6855 + $0x28] sm:$0xff]
  %v6863 = vsel %vm2175, %v6854, 0
  %6865 = vmatprep.subr.bf16.mxu0 0
  %6866 = vmatpush1.bf16.msra.mxu0 %v6856
  %6867 = vmatprep.subr.bf16.mxu0 0
  %6868 = vmatpush1.bf16.msra.mxu0 %v6857
  %6869 = vmatprep.subr.bf16.mxu0 0
  %6870 = vmatpush1.bf16.msra.mxu0 %v6858
  %6871 = vmatprep.subr.bf16.mxu0 0
  %6872 = vmatpush1.bf16.msra.mxu0 %v6859
  %6873 = vmatprep.subr.bf16.mxu0 0
  %6874 = vmatpush1.bf16.msra.mxu0 %v6860
  %6875 = vmatprep.subr.bf16.mxu0 0
  %6876 = vmatpush1.bf16.msra.mxu0 %v6861
  %6877 = vmatprep.subr.bf16.mxu0 0
  %6878 = vmatpush1.bf16.msra.mxu0 0
  %6879 = vmatprep.subr.bf16.mxu0 0
  %6880 = vmatpush1.bf16.msra.mxu0 0
  %6881 = vmatprep.subr.bf16.mxu0 0
  %6882 = vmatpush1.bf16.msra.mxu0 0
  %6883 = vmatprep.subr.bf16.mxu0 0
  %6884 = vmatpush1.bf16.msra.mxu0 0
  %6885 = vmatprep.subr.bf16.mxu0 0
  %6886 = vmatpush1.bf16.msra.mxu0 0
  %6887 = vmatprep.subr.bf16.mxu0 0
  %6888 = vmatpush1.bf16.msra.mxu0 0
  %6889 = vmatprep.subr.bf16.mxu0 0
  %6890 = vmatpush1.bf16.msra.mxu0 0
  %6891 = vmatprep.subr.bf16.mxu0 0
  %6892 = vmatpush1.bf16.msra.mxu0 0
  %6893 = vmatprep.subr.bf16.mxu0 0
  %6894 = vmatpush1.bf16.msra.mxu0 0
  %6895 = vmatprep.subr.bf16.mxu0 0
  %6896 = vmatpush1.bf16.msra.mxu0 0
  %6897 = vmatprep.mubr.bf16.mxu0 0
  %6898 = vmatmul.mubr.bf16.gmra.mrb[0].mxu0 %v6863
  %v6899 = vpop.f32.mrb[0].mxu0
  %v6900 = vadd.f32 0.0, %v6899
  %v6901 = vpop.f32.mrb[0].mxu0
  %v6902 = vpop.f32.mrb[0].mxu0
  %v6903 = vadd.f32 0.0, %v6902
  %v6904 = vpop.f32.mrb[0].mxu0
  %6905 = vdwg.mxu0
  %v6906 = vadd.f32 %v6848, %v6900
  %v6907 = vadd.f32 %v6851, %v6903
  %v6908 = vld [vmem:[%s18] sm:$0x7]
  %v6909 = vlaneseq
  %v6910 = vshrl.u32 %v6909, 7
  %v6911 = vsub.s32 0, %v6910
  %v6912 = vrot.slane %v6908, %v6911
  %v6913 = vadd.f32 %v6906, %v6912
  %v6914 = vadd.f32 %v6907, %v6912
  %v6915 = vmax.f32 %v6913, 0.0
  %v6916 = vmax.f32 %v6914, 0.0
  %vm6917 = vcmask 392192
  %v6918 = vsel %vm6917, %v6915, 0.0
  %v6919 = vsel %vm6917, %v6916, 0.0
  %v6920 = vadd.f32 %v6918, %v6919
  %v6921 = vrot.slane %v6920, 4
  %v6922 = vadd.f32 %v6920, %v6921
  %v6923 = vrot.slane %v6922, 2
  %v6924 = vadd.f32 %v6922, %v6923
  %v6925 = vrot.slane %v6924, 1
  %v6926 = vadd.f32 %v6924, %v6925
  %v6927 = vld [vmem:[%s19] sm:$0xff]
  %v6928 = vld [vmem:[%s19 + $0x8] sm:$0xff]
  %v6929 = vld [vmem:[%s19 + $0x10] sm:$0xff]
  %v6930 = vld [vmem:[%s19 + $0x18] sm:$0xff]
  %v6931 = vld [vmem:[%s19 + $0x20] sm:$0xff]
  %v6932 = vld [vmem:[%s19 + $0x28] sm:$0xff]
  %v6934 = vsel %vm6917, %v6926, 0
  %6936 = vmatprep.subr.mxu0 0.0
  %6937 = vmatpush1.msra.mxu0 %v6927
  %6938 = vmatprep.subr.mxu0 0.0
  %6939 = vmatpush1.msra.mxu0 %v6928
  %6940 = vmatprep.subr.mxu0 0.0
  %6941 = vmatpush1.msra.mxu0 %v6929
  %6942 = vmatprep.subr.mxu0 0.0
  %6943 = vmatpush1.msra.mxu0 %v6930
  %6944 = vmatprep.subr.mxu0 0.0
  %6945 = vmatpush1.msra.mxu0 %v6931
  %6946 = vmatprep.subr.mxu0 0.0
  %6947 = vmatpush1.msra.mxu0 %v6932
  %6948 = vmatprep.subr.mxu0 0.0
  %6949 = vmatpush1.msra.mxu0 0.0
  %6950 = vmatprep.subr.mxu0 0.0
  %6951 = vmatpush1.msra.mxu0 0.0
  %6952 = vmatprep.subr.mxu0 0.0
  %6953 = vmatpush1.msra.mxu0 0.0
  %6954 = vmatprep.subr.mxu0 0.0
  %6955 = vmatpush1.msra.mxu0 0.0
  %6956 = vmatprep.subr.mxu0 0.0
  %6957 = vmatpush1.msra.mxu0 0.0
  %6958 = vmatprep.subr.mxu0 0.0
  %6959 = vmatpush1.msra.mxu0 0.0
  %6960 = vmatprep.subr.mxu0 0.0
  %6961 = vmatpush1.msra.mxu0 0.0
  %6962 = vmatprep.subr.mxu0 0.0
  %6963 = vmatpush1.msra.mxu0 0.0
  %6964 = vmatprep.subr.mxu0 0.0
  %6965 = vmatpush1.msra.mxu0 0.0
  %6966 = vmatprep.subr.mxu0 0.0
  %6967 = vmatpush1.msra.mxu0 0.0
  %6968 = vmatprep.subr.mxu0 0.0
  %6969 = vmatpush1.msra.mxu0 0.0
  %6970 = vmatprep.subr.mxu0 0.0
  %6971 = vmatpush1.msra.mxu0 0.0
  %6972 = vmatprep.subr.mxu0 0.0
  %6973 = vmatpush1.msra.mxu0 0.0
  %6974 = vmatprep.subr.mxu0 0.0
  %6975 = vmatpush1.msra.mxu0 0.0
  %6976 = vmatprep.subr.mxu0 0.0
  %6977 = vmatpush1.msra.mxu0 0.0
  %6978 = vmatprep.subr.mxu0 0.0
  %6979 = vmatpush1.msra.mxu0 0.0
  %6980 = vmatprep.subr.mxu0 0.0
  %6981 = vmatpush1.msra.mxu0 0.0
  %6982 = vmatprep.subr.mxu0 0.0
  %6983 = vmatpush1.msra.mxu0 0.0
  %6984 = vmatprep.subr.mxu0 0.0
  %6985 = vmatpush1.msra.mxu0 0.0
  %6986 = vmatprep.subr.mxu0 0.0
  %6987 = vmatpush1.msra.mxu0 0.0
  %6988 = vmatprep.subr.mxu0 0.0
  %6989 = vmatpush1.msra.mxu0 0.0
  %6990 = vmatprep.subr.mxu0 0.0
  %6991 = vmatpush1.msra.mxu0 0.0
  %6992 = vmatprep.subr.mxu0 0.0
  %6993 = vmatpush1.msra.mxu0 0.0
  %6994 = vmatprep.subr.mxu0 0.0
  %6995 = vmatpush1.msra.mxu0 0.0
  %6996 = vmatprep.subr.mxu0 0.0
  %6997 = vmatpush1.msra.mxu0 0.0
  %6998 = vmatprep.subr.mxu0 0.0
  %6999 = vmatpush1.msra.mxu0 0.0
  %7000 = vmatprep.mubr.f32.mxu0 0.0
  %7001 = vmatmul.mubr.f32.gmra.mrb[0].mxu0 %v6934
  %v7002 = vpop.f32.mrb[0].mxu0
  %v7003 = vadd.f32 0.0, %v7002
  %v7004 = vpop.f32.mrb[0].mxu0
  %7005 = vdwg.mxu0
  %v7006 = vld [vmem:[%s20] sm:$0xff]
  %v7007 = vld [vmem:[%s20 + $0x8] sm:$0xff]
  %v7008 = vld [vmem:[%s20 + $0x10] sm:$0xff]
  %v7010 = vsel %vm3538, %v7003, 0
  %7012 = vmatprep.subr.mxu0 0.0
  %7013 = vmatpush1.msra.mxu0 %v7006
  %7014 = vmatprep.subr.mxu0 0.0
  %7015 = vmatpush1.msra.mxu0 %v7007
  %7016 = vmatprep.subr.mxu0 0.0
  %7017 = vmatpush1.msra.mxu0 %v7008
  %7018 = vmatprep.subr.mxu0 0.0
  %7019 = vmatpush1.msra.mxu0 0.0
  %7020 = vmatprep.subr.mxu0 0.0
  %7021 = vmatpush1.msra.mxu0 0.0
  %7022 = vmatprep.subr.mxu0 0.0
  %7023 = vmatpush1.msra.mxu0 0.0
  %7024 = vmatprep.subr.mxu0 0.0
  %7025 = vmatpush1.msra.mxu0 0.0
  %7026 = vmatprep.subr.mxu0 0.0
  %7027 = vmatpush1.msra.mxu0 0.0
  %7028 = vmatprep.subr.mxu0 0.0
  %7029 = vmatpush1.msra.mxu0 0.0
  %7030 = vmatprep.subr.mxu0 0.0
  %7031 = vmatpush1.msra.mxu0 0.0
  %7032 = vmatprep.subr.mxu0 0.0
  %7033 = vmatpush1.msra.mxu0 0.0
  %7034 = vmatprep.subr.mxu0 0.0
  %7035 = vmatpush1.msra.mxu0 0.0
  %7036 = vmatprep.subr.mxu0 0.0
  %7037 = vmatpush1.msra.mxu0 0.0
  %7038 = vmatprep.subr.mxu0 0.0
  %7039 = vmatpush1.msra.mxu0 0.0
  %7040 = vmatprep.subr.mxu0 0.0
  %7041 = vmatpush1.msra.mxu0 0.0
  %7042 = vmatprep.subr.mxu0 0.0
  %7043 = vmatpush1.msra.mxu0 0.0
  %7044 = vmatprep.subr.mxu0 0.0
  %7045 = vmatpush1.msra.mxu0 0.0
  %7046 = vmatprep.subr.mxu0 0.0
  %7047 = vmatpush1.msra.mxu0 0.0
  %7048 = vmatprep.subr.mxu0 0.0
  %7049 = vmatpush1.msra.mxu0 0.0
  %7050 = vmatprep.subr.mxu0 0.0
  %7051 = vmatpush1.msra.mxu0 0.0
  %7052 = vmatprep.subr.mxu0 0.0
  %7053 = vmatpush1.msra.mxu0 0.0
  %7054 = vmatprep.subr.mxu0 0.0
  %7055 = vmatpush1.msra.mxu0 0.0
  %7056 = vmatprep.subr.mxu0 0.0
  %7057 = vmatpush1.msra.mxu0 0.0
  %7058 = vmatprep.subr.mxu0 0.0
  %7059 = vmatpush1.msra.mxu0 0.0
  %7060 = vmatprep.subr.mxu0 0.0
  %7061 = vmatpush1.msra.mxu0 0.0
  %7062 = vmatprep.subr.mxu0 0.0
  %7063 = vmatpush1.msra.mxu0 0.0
  %7064 = vmatprep.subr.mxu0 0.0
  %7065 = vmatpush1.msra.mxu0 0.0
  %7066 = vmatprep.subr.mxu0 0.0
  %7067 = vmatpush1.msra.mxu0 0.0
  %7068 = vmatprep.subr.mxu0 0.0
  %7069 = vmatpush1.msra.mxu0 0.0
  %7070 = vmatprep.subr.mxu0 0.0
  %7071 = vmatpush1.msra.mxu0 0.0
  %7072 = vmatprep.subr.mxu0 0.0
  %7073 = vmatpush1.msra.mxu0 0.0
  %7074 = vmatprep.subr.mxu0 0.0
  %7075 = vmatpush1.msra.mxu0 0.0
  %7076 = vmatprep.mubr.f32.mxu0 0.0
  %7077 = vmatmul.mubr.f32.gmra.mrb[0].mxu0 %v7010
  %v7078 = vpop.f32.mrb[0].mxu0
  %v7079 = vadd.f32 0.0, %v7078
  %v7080 = vpop.f32.mrb[0].mxu0
  %7081 = vdwg.mxu0
  %v7082 = vlaneseq
  %v7083 = vshrl.u32 %v7082, 7
  %v7084 = vsub.s32 0, %v7083
  %v7085 = vrot.slane %v7079, %v7084
  %v7086 = vsub.f32 %v6915, %v7085
  %v7087 = vsub.f32 %v6916, %v7085
  %v7088 = vmul.f32 %v7086, %v7086
  %v7089 = vmul.f32 %v7087, %v7087
  %v7090 = vsel %vm6917, %v7088, 0.0
  %v7091 = vsel %vm6917, %v7089, 0.0
  %v7092 = vadd.f32 %v7090, %v7091
  %v7093 = vrot.slane %v7092, 4
  %v7094 = vadd.f32 %v7092, %v7093
  %v7095 = vrot.slane %v7094, 2
  %v7096 = vadd.f32 %v7094, %v7095
  %v7097 = vrot.slane %v7096, 1
  %v7098 = vadd.f32 %v7096, %v7097
  %v7100 = vsel %vm6917, %v7098, 0
  %7102 = vmatprep.subr.mxu0 0.0
  %7103 = vmatpush1.msra.mxu0 %v6927
  %7104 = vmatprep.subr.mxu0 0.0
  %7105 = vmatpush1.msra.mxu0 %v6928
  %7106 = vmatprep.subr.mxu0 0.0
  %7107 = vmatpush1.msra.mxu0 %v6929
  %7108 = vmatprep.subr.mxu0 0.0
  %7109 = vmatpush1.msra.mxu0 %v6930
  %7110 = vmatprep.subr.mxu0 0.0
  %7111 = vmatpush1.msra.mxu0 %v6931
  %7112 = vmatprep.subr.mxu0 0.0
  %7113 = vmatpush1.msra.mxu0 %v6932
  %7114 = vmatprep.subr.mxu0 0.0
  %7115 = vmatpush1.msra.mxu0 0.0
  %7116 = vmatprep.subr.mxu0 0.0
  %7117 = vmatpush1.msra.mxu0 0.0
  %7118 = vmatprep.subr.mxu0 0.0
  %7119 = vmatpush1.msra.mxu0 0.0
  %7120 = vmatprep.subr.mxu0 0.0
  %7121 = vmatpush1.msra.mxu0 0.0
  %7122 = vmatprep.subr.mxu0 0.0
  %7123 = vmatpush1.msra.mxu0 0.0
  %7124 = vmatprep.subr.mxu0 0.0
  %7125 = vmatpush1.msra.mxu0 0.0
  %7126 = vmatprep.subr.mxu0 0.0
  %7127 = vmatpush1.msra.mxu0 0.0
  %7128 = vmatprep.subr.mxu0 0.0
  %7129 = vmatpush1.msra.mxu0 0.0
  %7130 = vmatprep.subr.mxu0 0.0
  %7131 = vmatpush1.msra.mxu0 0.0
  %7132 = vmatprep.subr.mxu0 0.0
  %7133 = vmatpush1.msra.mxu0 0.0
  %7134 = vmatprep.subr.mxu0 0.0
  %7135 = vmatpush1.msra.mxu0 0.0
  %7136 = vmatprep.subr.mxu0 0.0
  %7137 = vmatpush1.msra.mxu0 0.0
  %7138 = vmatprep.subr.mxu0 0.0
  %7139 = vmatpush1.msra.mxu0 0.0
  %7140 = vmatprep.subr.mxu0 0.0
  %7141 = vmatpush1.msra.mxu0 0.0
  %7142 = vmatprep.subr.mxu0 0.0
  %7143 = vmatpush1.msra.mxu0 0.0
  %7144 = vmatprep.subr.mxu0 0.0
  %7145 = vmatpush1.msra.mxu0 0.0
  %7146 = vmatprep.subr.mxu0 0.0
  %7147 = vmatpush1.msra.mxu0 0.0
  %7148 = vmatprep.subr.mxu0 0.0
  %7149 = vmatpush1.msra.mxu0 0.0
  %7150 = vmatprep.subr.mxu0 0.0
  %7151 = vmatpush1.msra.mxu0 0.0
  %7152 = vmatprep.subr.mxu0 0.0
  %7153 = vmatpush1.msra.mxu0 0.0
  %7154 = vmatprep.subr.mxu0 0.0
  %7155 = vmatpush1.msra.mxu0 0.0
  %7156 = vmatprep.subr.mxu0 0.0
  %7157 = vmatpush1.msra.mxu0 0.0
  %7158 = vmatprep.subr.mxu0 0.0
  %7159 = vmatpush1.msra.mxu0 0.0
  %7160 = vmatprep.subr.mxu0 0.0
  %7161 = vmatpush1.msra.mxu0 0.0
  %7162 = vmatprep.subr.mxu0 0.0
  %7163 = vmatpush1.msra.mxu0 0.0
  %7164 = vmatprep.subr.mxu0 0.0
  %7165 = vmatpush1.msra.mxu0 0.0
  %7166 = vmatprep.mubr.f32.mxu0 0.0
  %7167 = vmatmul.mubr.f32.gmra.mrb[0].mxu0 %v7100
  %v7168 = vpop.f32.mrb[0].mxu0
  %v7169 = vadd.f32 0.0, %v7168
  %v7170 = vpop.f32.mrb[0].mxu0
  %7171 = vdwg.mxu0
  %v7173 = vsel %vm3538, %v7169, 0
  %7175 = vmatprep.subr.mxu0 0.0
  %7176 = vmatpush1.msra.mxu0 %v7006
  %7177 = vmatprep.subr.mxu0 0.0
  %7178 = vmatpush1.msra.mxu0 %v7007
  %7179 = vmatprep.subr.mxu0 0.0
  %7180 = vmatpush1.msra.mxu0 %v7008
  %7181 = vmatprep.subr.mxu0 0.0
  %7182 = vmatpush1.msra.mxu0 0.0
  %7183 = vmatprep.subr.mxu0 0.0
  %7184 = vmatpush1.msra.mxu0 0.0
  %7185 = vmatprep.subr.mxu0 0.0
  %7186 = vmatpush1.msra.mxu0 0.0
  %7187 = vmatprep.subr.mxu0 0.0
  %7188 = vmatpush1.msra.mxu0 0.0
  %7189 = vmatprep.subr.mxu0 0.0
  %7190 = vmatpush1.msra.mxu0 0.0
  %7191 = vmatprep.subr.mxu0 0.0
  %7192 = vmatpush1.msra.mxu0 0.0
  %7193 = vmatprep.subr.mxu0 0.0
  %7194 = vmatpush1.msra.mxu0 0.0
  %7195 = vmatprep.subr.mxu0 0.0
  %7196 = vmatpush1.msra.mxu0 0.0
  %7197 = vmatprep.subr.mxu0 0.0
  %7198 = vmatpush1.msra.mxu0 0.0
  %7199 = vmatprep.subr.mxu0 0.0
  %7200 = vmatpush1.msra.mxu0 0.0
  %7201 = vmatprep.subr.mxu0 0.0
  %7202 = vmatpush1.msra.mxu0 0.0
  %7203 = vmatprep.subr.mxu0 0.0
  %7204 = vmatpush1.msra.mxu0 0.0
  %7205 = vmatprep.subr.mxu0 0.0
  %7206 = vmatpush1.msra.mxu0 0.0
  %7207 = vmatprep.subr.mxu0 0.0
  %7208 = vmatpush1.msra.mxu0 0.0
  %7209 = vmatprep.subr.mxu0 0.0
  %7210 = vmatpush1.msra.mxu0 0.0
  %7211 = vmatprep.subr.mxu0 0.0
  %7212 = vmatpush1.msra.mxu0 0.0
  %7213 = vmatprep.subr.mxu0 0.0
  %7214 = vmatpush1.msra.mxu0 0.0
  %7215 = vmatprep.subr.mxu0 0.0
  %7216 = vmatpush1.msra.mxu0 0.0
  %7217 = vmatprep.subr.mxu0 0.0
  %7218 = vmatpush1.msra.mxu0 0.0
  %7219 = vmatprep.subr.mxu0 0.0
  %7220 = vmatpush1.msra.mxu0 0.0
  %7221 = vmatprep.subr.mxu0 0.0
  %7222 = vmatpush1.msra.mxu0 0.0
  %7223 = vmatprep.subr.mxu0 0.0
  %7224 = vmatpush1.msra.mxu0 0.0
  %7225 = vmatprep.subr.mxu0 0.0
  %7226 = vmatpush1.msra.mxu0 0.0
  %7227 = vmatprep.subr.mxu0 0.0
  %7228 = vmatpush1.msra.mxu0 0.0
  %7229 = vmatprep.subr.mxu0 0.0
  %7230 = vmatpush1.msra.mxu0 0.0
  %7231 = vmatprep.subr.mxu0 0.0
  %7232 = vmatpush1.msra.mxu0 0.0
  %7233 = vmatprep.subr.mxu0 0.0
  %7234 = vmatpush1.msra.mxu0 0.0
  %7235 = vmatprep.subr.mxu0 0.0
  %7236 = vmatpush1.msra.mxu0 0.0
  %7237 = vmatprep.subr.mxu0 0.0
  %7238 = vmatpush1.msra.mxu0 0.0
  %7239 = vmatprep.mubr.f32.mxu0 0.0
  %7240 = vmatmul.mubr.f32.gmra.mrb[0].mxu0 %v7173
  %v7241 = vpop.f32.mrb[0].mxu0
  %v7242 = vadd.f32 1e-05, %v7241
  %v7243 = vpop.f32.mrb[0].mxu0
  %7244 = vdwg.mxu0
  %v7245 = vrsqrt.pop %v7242
  %v7247 = vrot.slane %v6908, 1
  %v7249 = vmul.f32 %v7245, %v7247
  %v7250 = vlaneseq
  %v7251 = vshrl.u32 %v7250, 7
  %v7252 = vsub.s32 0, %v7251
  %v7253 = vrot.slane %v7249, %v7252
  %v7254 = vmul.f32 %v7086, %v7253
  %v7255 = vmul.f32 %v7087, %v7253
  %v7256 = vlaneseq
  %v7257 = vshrl.u32 %v7256, 7
  %v7258 = vsub.s32 2, %v7257
  %v7259 = vrot.slane %v6908, %v7258
  %v7260 = vadd.f32 %v7254, %v7259
  %v7261 = vadd.f32 %v7255, %v7259
  %7262 = vst.msk [vmem:[%s21] sm:$0xff] %vm6917, %v7260
  %7263 = vst.msk [vmem:[%s21 + $0x8] sm:$0xff] %vm6917, %v7261
  // Predicated region
  $region179: #{conv_input_model.1} parent=0 // pred_check
    _
  $region180: #{conv_input_model.1} parent=0 // pred_check_branch
    %7265 = sbr.rel (0) target = $region182
  $region181: #{conv_input_model.1} parent=0 // pred_region
    _
  $region182: #{conv_input_model.1} parent=0 // pred_fallthru
    _
  // Predicated region
  $region183: #{conv_input_model.1} parent=0 // pred_check
    _
  $region184: #{conv_input_model.1} parent=0 // pred_check_branch
    %7267 = sbr.rel (0) target = $region186
  $region185: #{conv_input_model.1} parent=0 // pred_region
    _
  $region186: #{conv_input_model.1} parent=0 // pred_fallthru
    _
  %7268 = vsyncmov [#allocation5]
  %s7269 = vpop.sfrf %7268
  %p7270 = scmp.eq.s32.totalorder %s7269, 0
  %p7271 = pneg %p7270
  %7273 = shalt.err (%p7271)
  %s7274 = scalar_lea.sflag [#allocation5], 1
  %7275 = vsyncmov %s7274
  %s7276 = vpop.sfrf %7275
  %p7277 = scmp.eq.s32.totalorder %s7276, 0
  %p7278 = pneg %p7277
  %7280 = shalt.err (%p7278)
  %s7281 = scalar_lea.sflag [#allocation5], 2
  %7282 = vsyncmov %s7281
  %s7283 = vpop.sfrf %7282
  %p7284 = scmp.eq.s32.totalorder %s7283, 0
  %p7285 = pneg %p7284
  %7287 = shalt.err (%p7285)

</llo_original>
